<compile_context>
chip_gen: v7x
topology: tpu7x:2x2x1
jax: 0.10.0
libtpu: 0.0.40
codegen_flags: <defaults>
</compile_context>

<pallas_src>
import jax
import jax.numpy as jnp
from jax.experimental import pallas as pl
from jax.experimental.pallas import tpu as pltpu

_LANE = 128


def _resblock_kernel(x_ref, w1_ref, w2_ref,
                     s1_ref, b1_ref, s2_ref, b2_ref,
                     o_ref, xs_ref, mid_ref):
    # x_ref  : (1, H+2, W+2, C)  bf16  spatially zero-padded input (real C channels)
    # w1/w2  : (9, Cp, Cp)       bf16  per-tap packed 3x3 kernels
    # s*/b*  : (1, Cp)           f32   folded BN scale / bias
    # o_ref  : (1, H, W, C)      f32   output block (real C channels)
    # xs_ref : (H+2, W+2, Cp)    bf16  channel-padded (lane-dense) staging of x
    # mid_ref: (H+2, W+2, Cp)    bf16  zero-ringed conv1 output (conv2 input)
    _, Hp2, Wp2, C = x_ref.shape
    H, W = Hp2 - 2, Wp2 - 2
    Cp = xs_ref.shape[-1]
    HW = H * W

    # ---- Stage the narrow-channel input into a lane-dense VMEM buffer.
    # (Scratch persists across grid steps and each megacore shard has its own
    #  instance, so the pad lanes are refreshed every step.)
    xs_ref[...] = jnp.zeros((Hp2, Wp2, Cp), jnp.bfloat16)
    xs_ref[:, :, :C] = x_ref[0, :, :, :]

    # ---- 3x3 conv as 9 accumulating per-tap MXU matmuls (no im2col). ----
    # For v6e/v7x a further ~2x MXU-fill win is available by concatenating
    # pairs of taps to K=2*Cp=256; omitted (memory-bound at these sizes).
    def conv3x3(src_ref, w_ref):
        acc = None
        for ky in range(3):
            for kx in range(3):
                patch = src_ref[ky:ky + H, kx:kx + W, :].reshape(HW, Cp)
                part = jnp.dot(patch, w_ref[ky * 3 + kx],
                               preferred_element_type=jnp.float32)
                acc = part if acc is None else acc + part
        return acc

    # ---- conv1 -> BN1 -> ReLU (f32) ----
    out1 = jnp.maximum(conv3x3(xs_ref, w1_ref) * s1_ref[...] + b1_ref[...], 0.0)

    # ---- padded intermediate (bf16): re-zero only the 1-wide border ring,
    # interior is fully overwritten every step.
    zr = jnp.zeros((1, Wp2, Cp), jnp.bfloat16)
    zc = jnp.zeros((H, 1, Cp), jnp.bfloat16)
    mid_ref[0:1, :, :] = zr
    mid_ref[H + 1:H + 2, :, :] = zr
    mid_ref[1:H + 1, 0:1, :] = zc
    mid_ref[1:H + 1, W + 1:W + 2, :] = zc
    mid_ref[1:H + 1, 1:W + 1, :] = out1.reshape(H, W, Cp).astype(jnp.bfloat16)

    # ---- conv2 -> BN2 ----
    out2 = conv3x3(mid_ref, w2_ref) * s2_ref[...] + b2_ref[...]

    # ---- residual add (identity from the staged input interior) + ReLU ----
    ident = xs_ref[1:1 + H, 1:1 + W, :].reshape(HW, Cp).astype(jnp.float32)
    res = jnp.maximum(out2 + ident, 0.0).reshape(H, W, Cp)

    # Emit only the real C channels (avoids 16x-inflated HBM writes at C=8).
    o_ref[...] = res[:, :, :C].reshape(1, H, W, C)


def residual_block_pallas(x_nchw, w1, w2, bn1, bn2, eps=1e-5):
    """x_nchw: (N,C,H,W) f32; w1/w2: (C,C,3,3) OIHW; bn*: dict gamma/beta/mean/var."""
    N, C, H, W = x_nchw.shape
    Cp = max(_LANE, ((C + _LANE - 1) // _LANE) * _LANE)   # lane-dense compute width

    # NCHW -> NHWC, spatial halo pad only (NO channel padding in HBM), bf16 stream.
    x = jnp.transpose(x_nchw, (0, 2, 3, 1))
    x_pad = jnp.pad(x, ((0, 0), (1, 1), (1, 1), (0, 0))).astype(jnp.bfloat16)

    # OIHW -> (ky,kx,Cin,Cout) -> channel-pad -> (9, Cp, Cp), bf16 for the MXU.
    def pack_w(w):
        wt = jnp.transpose(w, (2, 3, 1, 0)).astype(jnp.float32)      # (3,3,Ci,Co)
        wt = jnp.pad(wt, ((0, 0), (0, 0), (0, Cp - C), (0, Cp - C)))
        return wt.reshape(9, Cp, Cp).astype(jnp.bfloat16)

    w1k, w2k = pack_w(w1), pack_w(w2)

    # Fold BN running stats into per-channel scale/bias (zero for pad channels).
    def fold(bn):
        scale = bn["gamma"] / jnp.sqrt(bn["var"] + eps)
        bias = bn["beta"] - bn["mean"] * scale
        pad = (0, Cp - C)
        return (jnp.pad(scale, pad).reshape(1, Cp).astype(jnp.float32),
                jnp.pad(bias, pad).reshape(1, Cp).astype(jnp.float32))

    s1, b1 = fold(bn1)
    s2, b2 = fold(bn2)

    # Whole image per grid step (fine at these sizes).  For real ResNet shapes
    # (e.g. C=256, 56x56) add a halo'd H-row tile grid axis and re-size
    # vmem_limit_bytes per generation (<=48 MiB on v7x, up to ~96 MiB on v6e).
    out_nhwc = pl.pallas_call(
        _resblock_kernel,
        out_shape=jax.ShapeDtypeStruct((N, H, W, C), jnp.float32),
        grid_spec=pl.GridSpec(
            grid=(N,),
            in_specs=[
                pl.BlockSpec((1, H + 2, W + 2, C), lambda n: (n, 0, 0, 0)),
                pl.BlockSpec((9, Cp, Cp), lambda n: (0, 0, 0)),
                pl.BlockSpec((9, Cp, Cp), lambda n: (0, 0, 0)),
                pl.BlockSpec((1, Cp), lambda n: (0, 0)),
                pl.BlockSpec((1, Cp), lambda n: (0, 0)),
                pl.BlockSpec((1, Cp), lambda n: (0, 0)),
                pl.BlockSpec((1, Cp), lambda n: (0, 0)),
            ],
            out_specs=pl.BlockSpec((1, H, W, C), lambda n: (n, 0, 0, 0)),
            scratch_shapes=[
                pltpu.VMEM((H + 2, W + 2, Cp), jnp.bfloat16),   # staged input
                pltpu.VMEM((H + 2, W + 2, Cp), jnp.bfloat16),   # padded conv1 out
            ],
        ),
        compiler_params=pltpu.CompilerParams(
            dimension_semantics=("parallel",),
            vmem_limit_bytes=32 * 1024 * 1024),
    )(x_pad, w1k, w2k, s1, b1, s2, b2)

    # Back to NCHW (no channel slice needed: kernel already emits C channels).
    return jnp.transpose(out_nhwc, (0, 3, 1, 2))


def residual_block_ref(x_nchw, w1, w2, bn1, bn2, eps=1e-5):
    """Pure-JAX f32 reference mirroring the PyTorch forward (inference BN)."""
    def conv(x, w):
        return jax.lax.conv_general_dilated(
            x, w, window_strides=(1, 1), padding=((1, 1), (1, 1)),
            dimension_numbers=("NCHW", "OIHW", "NCHW"))

    def bn(x, p):
        scale = p["gamma"] / jnp.sqrt(p["var"] + eps)
        bias = p["beta"] - p["mean"] * scale
        return x * scale.reshape(1, -1, 1, 1) + bias.reshape(1, -1, 1, 1)

    out = jax.nn.relu(bn(conv(x_nchw, w1), bn1))
    out = bn(conv(out, w2), bn2)
    return jax.nn.relu(out + x_nchw)


if __name__ == "__main__":
    N, C, H, W = 2, 8, 16, 16
    key = jax.random.PRNGKey(0)
    keys = jax.random.split(key, 11)

    x = jax.random.normal(keys[0], (N, C, H, W), jnp.float32)
    w1 = jax.random.normal(keys[1], (C, C, 3, 3), jnp.float32) * 0.1
    w2 = jax.random.normal(keys[2], (C, C, 3, 3), jnp.float32) * 0.1
    bn1 = dict(
        gamma=1.0 + 0.1 * jax.random.normal(keys[3], (C,), jnp.float32),
        beta=0.1 * jax.random.normal(keys[4], (C,), jnp.float32),
        mean=0.1 * jax.random.normal(keys[5], (C,), jnp.float32),
        var=jax.random.uniform(keys[6], (C,), jnp.float32, 0.5, 1.5),
    )
    bn2 = dict(
        gamma=1.0 + 0.1 * jax.random.normal(keys[7], (C,), jnp.float32),
        beta=0.1 * jax.random.normal(keys[8], (C,), jnp.float32),
        mean=0.1 * jax.random.normal(keys[9], (C,), jnp.float32),
        var=jax.random.uniform(keys[10], (C,), jnp.float32, 0.5, 1.5),
    )

    out = residual_block_pallas(x, w1, w2, bn1, bn2)
    out = jax.block_until_ready(out)

    ref = jax.block_until_ready(residual_block_ref(x, w1, w2, bn1, bn2))
    assert out.shape == (N, C, H, W)
    # bf16 MXU operands + bf16 input stream (f32 accumulate / BN / residual):
    # observed worst-case error ~1e-2..2e-2 vs the pure-f32 reference.
    err = float(jnp.max(jnp.abs(out - ref)))
    assert err < 6e-2, f"mismatch vs reference: max abs err = {err}"

    print("KERNEL_OK")
</pallas_src>

<mosaic_0001>
module attributes {stable_mosaic.version = 11 : i64} {
  func.func @_resblock_kernel(%arg0: i32, %arg1: memref<1x18x18x8xbf16, #tpu.memory_space<vmem>>, %arg2: memref<9x128x128xbf16, #tpu.memory_space<vmem>>, %arg3: memref<9x128x128xbf16, #tpu.memory_space<vmem>>, %arg4: memref<1x128xf32, #tpu.memory_space<vmem>>, %arg5: memref<1x128xf32, #tpu.memory_space<vmem>>, %arg6: memref<1x128xf32, #tpu.memory_space<vmem>>, %arg7: memref<1x128xf32, #tpu.memory_space<vmem>>, %arg8: memref<1x16x16x8xf32, #tpu.memory_space<vmem>>, %arg9: memref<18x18x128xbf16, #tpu.memory_space<vmem>>, %arg10: memref<18x18x128xbf16, #tpu.memory_space<vmem>>) attributes {dimension_semantics = [#tpu.dimension_semantics<parallel>], iteration_bounds = array<i64: 2>, scalar_prefetch = 0 : i64, scratch_operands = 2 : i64, tpu.core_type = #tpu.core_type<tc>, window_params = [{transform_indices = @transform_0, window_bounds = array<i64: 1, 18, 18, 8>}, {pipeline_mode = #tpu.pipeline_mode<synchronous>, transform_indices = @transform_1, window_bounds = array<i64: 9, 128, 128>}, {pipeline_mode = #tpu.pipeline_mode<synchronous>, transform_indices = @transform_2, window_bounds = array<i64: 9, 128, 128>}, {pipeline_mode = #tpu.pipeline_mode<synchronous>, transform_indices = @transform_3, window_bounds = array<i64: 1, 128>}, {pipeline_mode = #tpu.pipeline_mode<synchronous>, transform_indices = @transform_4, window_bounds = array<i64: 1, 128>}, {pipeline_mode = #tpu.pipeline_mode<synchronous>, transform_indices = @transform_5, window_bounds = array<i64: 1, 128>}, {pipeline_mode = #tpu.pipeline_mode<synchronous>, transform_indices = @transform_6, window_bounds = array<i64: 1, 128>}, {transform_indices = @transform_7, window_bounds = array<i64: 1, 16, 16, 8>}]} {
    %cst = arith.constant 0.000000e+00 : bf16
    %0 = vector.broadcast %cst : bf16 to vector<18x18x128xbf16>
    %c0 = arith.constant 0 : index
    %c0_0 = arith.constant 0 : index
    %c0_1 = arith.constant 0 : index
    %1 = vector.load %arg9[%c0, %c0_0, %c0_1] : memref<18x18x128xbf16, #tpu.memory_space<vmem>>, vector<18x18x128xbf16>
    tpu.vector_store %arg9[%c0, %c0_0, %c0_1], %0 {strides = array<i32>} : memref<18x18x128xbf16, #tpu.memory_space<vmem>>, vector<18x18x128xbf16>,
    %c0_2 = arith.constant 0 : index
    %c0_3 = arith.constant 0 : index
    %c0_4 = arith.constant 0 : index
    %c0_5 = arith.constant 0 : index
    %2 = vector.load %arg1[%c0_2, %c0_3, %c0_4, %c0_5] : memref<1x18x18x8xbf16, #tpu.memory_space<vmem>>, vector<1x18x18x8xbf16>
    %3 = vector.shape_cast %2 : vector<1x18x18x8xbf16> to vector<18x18x8xbf16>
    %c0_6 = arith.constant 0 : index
    %c0_7 = arith.constant 0 : index
    %c0_8 = arith.constant 0 : index
    %4 = vector.load %arg9[%c0_6, %c0_7, %c0_8] : memref<18x18x128xbf16, #tpu.memory_space<vmem>>, vector<18x18x8xbf16>
    tpu.vector_store %arg9[%c0_6, %c0_7, %c0_8], %3 {strides = array<i32>} : memref<18x18x128xbf16, #tpu.memory_space<vmem>>, vector<18x18x8xbf16>,
    %c0_9 = arith.constant 0 : index
    %c0_10 = arith.constant 0 : index
    %c0_11 = arith.constant 0 : index
    %5 = vector.load %arg9[%c0_9, %c0_10, %c0_11] : memref<18x18x128xbf16, #tpu.memory_space<vmem>>, vector<16x16x128xbf16>
    %6 = vector.shape_cast %5 : vector<16x16x128xbf16> to vector<256x128xbf16>
    %c0_12 = arith.constant 0 : index
    %c0_13 = arith.constant 0 : index
    %c0_14 = arith.constant 0 : index
    %7 = vector.load %arg2[%c0_12, %c0_13, %c0_14] : memref<9x128x128xbf16, #tpu.memory_space<vmem>>, vector<1x128x128xbf16>
    %8 = vector.shape_cast %7 : vector<1x128x128xbf16> to vector<128x128xbf16>
    %cst_15 = arith.constant dense<0.000000e+00> : vector<256x128xf32>
    %9 = tpu.matmul %6, %8, %cst_15 {dimension_numbers = #tpu.dot_dimension_numbers<[1], [0], [0], [1], [0, 0, 1, 1], [], []>} : vector<256x128xbf16>, vector<128x128xbf16>, vector<256x128xf32> -> vector<256x128xf32>
    %c0_16 = arith.constant 0 : index
    %c1 = arith.constant 1 : index
    %c0_17 = arith.constant 0 : index
    %10 = vector.load %arg9[%c0_16, %c1, %c0_17] : memref<18x18x128xbf16, #tpu.memory_space<vmem>>, vector<16x16x128xbf16>
    %11 = vector.shape_cast %10 : vector<16x16x128xbf16> to vector<256x128xbf16>
    %c1_18 = arith.constant 1 : index
    %c0_19 = arith.constant 0 : index
    %c0_20 = arith.constant 0 : index
    %12 = vector.load %arg2[%c1_18, %c0_19, %c0_20] : memref<9x128x128xbf16, #tpu.memory_space<vmem>>, vector<1x128x128xbf16>
    %13 = vector.shape_cast %12 : vector<1x128x128xbf16> to vector<128x128xbf16>
    %cst_21 = arith.constant dense<0.000000e+00> : vector<256x128xf32>
    %14 = tpu.matmul %11, %13, %cst_21 {dimension_numbers = #tpu.dot_dimension_numbers<[1], [0], [0], [1], [0, 0, 1, 1], [], []>} : vector<256x128xbf16>, vector<128x128xbf16>, vector<256x128xf32> -> vector<256x128xf32>
    %15 = arith.addf %9, %14 : vector<256x128xf32>
    %c0_22 = arith.constant 0 : index
    %c2 = arith.constant 2 : index
    %c0_23 = arith.constant 0 : index
    %16 = vector.load %arg9[%c0_22, %c2, %c0_23] : memref<18x18x128xbf16, #tpu.memory_space<vmem>>, vector<16x16x128xbf16>
    %17 = vector.shape_cast %16 : vector<16x16x128xbf16> to vector<256x128xbf16>
    %c2_24 = arith.constant 2 : index
    %c0_25 = arith.constant 0 : index
    %c0_26 = arith.constant 0 : index
    %18 = vector.load %arg2[%c2_24, %c0_25, %c0_26] : memref<9x128x128xbf16, #tpu.memory_space<vmem>>, vector<1x128x128xbf16>
    %19 = vector.shape_cast %18 : vector<1x128x128xbf16> to vector<128x128xbf16>
    %cst_27 = arith.constant dense<0.000000e+00> : vector<256x128xf32>
    %20 = tpu.matmul %17, %19, %cst_27 {dimension_numbers = #tpu.dot_dimension_numbers<[1], [0], [0], [1], [0, 0, 1, 1], [], []>} : vector<256x128xbf16>, vector<128x128xbf16>, vector<256x128xf32> -> vector<256x128xf32>
    %21 = arith.addf %15, %20 : vector<256x128xf32>
    %c1_28 = arith.constant 1 : index
    %c0_29 = arith.constant 0 : index
    %c0_30 = arith.constant 0 : index
    %22 = vector.load %arg9[%c1_28, %c0_29, %c0_30] : memref<18x18x128xbf16, #tpu.memory_space<vmem>>, vector<16x16x128xbf16>
    %23 = vector.shape_cast %22 : vector<16x16x128xbf16> to vector<256x128xbf16>
    %c3 = arith.constant 3 : index
    %c0_31 = arith.constant 0 : index
    %c0_32 = arith.constant 0 : index
    %24 = vector.load %arg2[%c3, %c0_31, %c0_32] : memref<9x128x128xbf16, #tpu.memory_space<vmem>>, vector<1x128x128xbf16>
    %25 = vector.shape_cast %24 : vector<1x128x128xbf16> to vector<128x128xbf16>
    %cst_33 = arith.constant dense<0.000000e+00> : vector<256x128xf32>
    %26 = tpu.matmul %23, %25, %cst_33 {dimension_numbers = #tpu.dot_dimension_numbers<[1], [0], [0], [1], [0, 0, 1, 1], [], []>} : vector<256x128xbf16>, vector<128x128xbf16>, vector<256x128xf32> -> vector<256x128xf32>
    %27 = arith.addf %21, %26 : vector<256x128xf32>
    %c1_34 = arith.constant 1 : index
    %c1_35 = arith.constant 1 : index
    %c0_36 = arith.constant 0 : index
    %28 = vector.load %arg9[%c1_34, %c1_35, %c0_36] : memref<18x18x128xbf16, #tpu.memory_space<vmem>>, vector<16x16x128xbf16>
    %29 = vector.shape_cast %28 : vector<16x16x128xbf16> to vector<256x128xbf16>
    %c4 = arith.constant 4 : index
    %c0_37 = arith.constant 0 : index
    %c0_38 = arith.constant 0 : index
    %30 = vector.load %arg2[%c4, %c0_37, %c0_38] : memref<9x128x128xbf16, #tpu.memory_space<vmem>>, vector<1x128x128xbf16>
    %31 = vector.shape_cast %30 : vector<1x128x128xbf16> to vector<128x128xbf16>
    %cst_39 = arith.constant dense<0.000000e+00> : vector<256x128xf32>
    %32 = tpu.matmul %29, %31, %cst_39 {dimension_numbers = #tpu.dot_dimension_numbers<[1], [0], [0], [1], [0, 0, 1, 1], [], []>} : vector<256x128xbf16>, vector<128x128xbf16>, vector<256x128xf32> -> vector<256x128xf32>
    %33 = arith.addf %27, %32 : vector<256x128xf32>
    %c1_40 = arith.constant 1 : index
    %c2_41 = arith.constant 2 : index
    %c0_42 = arith.constant 0 : index
    %34 = vector.load %arg9[%c1_40, %c2_41, %c0_42] : memref<18x18x128xbf16, #tpu.memory_space<vmem>>, vector<16x16x128xbf16>
    %35 = vector.shape_cast %34 : vector<16x16x128xbf16> to vector<256x128xbf16>
    %c5 = arith.constant 5 : index
    %c0_43 = arith.constant 0 : index
    %c0_44 = arith.constant 0 : index
    %36 = vector.load %arg2[%c5, %c0_43, %c0_44] : memref<9x128x128xbf16, #tpu.memory_space<vmem>>, vector<1x128x128xbf16>
    %37 = vector.shape_cast %36 : vector<1x128x128xbf16> to vector<128x128xbf16>
    %cst_45 = arith.constant dense<0.000000e+00> : vector<256x128xf32>
    %38 = tpu.matmul %35, %37, %cst_45 {dimension_numbers = #tpu.dot_dimension_numbers<[1], [0], [0], [1], [0, 0, 1, 1], [], []>} : vector<256x128xbf16>, vector<128x128xbf16>, vector<256x128xf32> -> vector<256x128xf32>
    %39 = arith.addf %33, %38 : vector<256x128xf32>
    %c2_46 = arith.constant 2 : index
    %c0_47 = arith.constant 0 : index
    %c0_48 = arith.constant 0 : index
    %40 = vector.load %arg9[%c2_46, %c0_47, %c0_48] : memref<18x18x128xbf16, #tpu.memory_space<vmem>>, vector<16x16x128xbf16>
    %41 = vector.shape_cast %40 : vector<16x16x128xbf16> to vector<256x128xbf16>
    %c6 = arith.constant 6 : index
    %c0_49 = arith.constant 0 : index
    %c0_50 = arith.constant 0 : index
    %42 = vector.load %arg2[%c6, %c0_49, %c0_50] : memref<9x128x128xbf16, #tpu.memory_space<vmem>>, vector<1x128x128xbf16>
    %43 = vector.shape_cast %42 : vector<1x128x128xbf16> to vector<128x128xbf16>
    %cst_51 = arith.constant dense<0.000000e+00> : vector<256x128xf32>
    %44 = tpu.matmul %41, %43, %cst_51 {dimension_numbers = #tpu.dot_dimension_numbers<[1], [0], [0], [1], [0, 0, 1, 1], [], []>} : vector<256x128xbf16>, vector<128x128xbf16>, vector<256x128xf32> -> vector<256x128xf32>
    %45 = arith.addf %39, %44 : vector<256x128xf32>
    %c2_52 = arith.constant 2 : index
    %c1_53 = arith.constant 1 : index
    %c0_54 = arith.constant 0 : index
    %46 = vector.load %arg9[%c2_52, %c1_53, %c0_54] : memref<18x18x128xbf16, #tpu.memory_space<vmem>>, vector<16x16x128xbf16>
    %47 = vector.shape_cast %46 : vector<16x16x128xbf16> to vector<256x128xbf16>
    %c7 = arith.constant 7 : index
    %c0_55 = arith.constant 0 : index
    %c0_56 = arith.constant 0 : index
    %48 = vector.load %arg2[%c7, %c0_55, %c0_56] : memref<9x128x128xbf16, #tpu.memory_space<vmem>>, vector<1x128x128xbf16>
    %49 = vector.shape_cast %48 : vector<1x128x128xbf16> to vector<128x128xbf16>
    %cst_57 = arith.constant dense<0.000000e+00> : vector<256x128xf32>
    %50 = tpu.matmul %47, %49, %cst_57 {dimension_numbers = #tpu.dot_dimension_numbers<[1], [0], [0], [1], [0, 0, 1, 1], [], []>} : vector<256x128xbf16>, vector<128x128xbf16>, vector<256x128xf32> -> vector<256x128xf32>
    %51 = arith.addf %45, %50 : vector<256x128xf32>
    %c2_58 = arith.constant 2 : index
    %c2_59 = arith.constant 2 : index
    %c0_60 = arith.constant 0 : index
    %52 = vector.load %arg9[%c2_58, %c2_59, %c0_60] : memref<18x18x128xbf16, #tpu.memory_space<vmem>>, vector<16x16x128xbf16>
    %53 = vector.shape_cast %52 : vector<16x16x128xbf16> to vector<256x128xbf16>
    %c8 = arith.constant 8 : index
    %c0_61 = arith.constant 0 : index
    %c0_62 = arith.constant 0 : index
    %54 = vector.load %arg2[%c8, %c0_61, %c0_62] : memref<9x128x128xbf16, #tpu.memory_space<vmem>>, vector<1x128x128xbf16>
    %55 = vector.shape_cast %54 : vector<1x128x128xbf16> to vector<128x128xbf16>
    %cst_63 = arith.constant dense<0.000000e+00> : vector<256x128xf32>
    %56 = tpu.matmul %53, %55, %cst_63 {dimension_numbers = #tpu.dot_dimension_numbers<[1], [0], [0], [1], [0, 0, 1, 1], [], []>} : vector<256x128xbf16>, vector<128x128xbf16>, vector<256x128xf32> -> vector<256x128xf32>
    %57 = arith.addf %51, %56 : vector<256x128xf32>
    %c0_64 = arith.constant 0 : index
    %c0_65 = arith.constant 0 : index
    %58 = vector.load %arg4[%c0_64, %c0_65] : memref<1x128xf32, #tpu.memory_space<vmem>>, vector<1x128xf32>
    %59 = vector.broadcast %58 : vector<1x128xf32> to vector<256x128xf32>
    %60 = arith.mulf %57, %59 : vector<256x128xf32>
    %c0_66 = arith.constant 0 : index
    %c0_67 = arith.constant 0 : index
    %61 = vector.load %arg5[%c0_66, %c0_67] : memref<1x128xf32, #tpu.memory_space<vmem>>, vector<1x128xf32>
    %62 = vector.broadcast %61 : vector<1x128xf32> to vector<256x128xf32>
    %63 = arith.addf %60, %62 : vector<256x128xf32>
    %cst_68 = arith.constant 0.000000e+00 : f32
    %64 = vector.broadcast %cst_68 : f32 to vector<256x128xf32>
    %65 = arith.maximumf %63, %64 : vector<256x128xf32>
    %cst_69 = arith.constant 0.000000e+00 : bf16
    %66 = vector.broadcast %cst_69 : bf16 to vector<1x18x128xbf16>
    %cst_70 = arith.constant 0.000000e+00 : bf16
    %67 = vector.broadcast %cst_70 : bf16 to vector<16x1x128xbf16>
    %c0_71 = arith.constant 0 : index
    %c0_72 = arith.constant 0 : index
    %c0_73 = arith.constant 0 : index
    %68 = vector.load %arg10[%c0_71, %c0_72, %c0_73] : memref<18x18x128xbf16, #tpu.memory_space<vmem>>, vector<1x18x128xbf16>
    tpu.vector_store %arg10[%c0_71, %c0_72, %c0_73], %66 {strides = array<i32>} : memref<18x18x128xbf16, #tpu.memory_space<vmem>>, vector<1x18x128xbf16>,
    %c17 = arith.constant 17 : index
    %c0_74 = arith.constant 0 : index
    %c0_75 = arith.constant 0 : index
    %69 = vector.load %arg10[%c17, %c0_74, %c0_75] : memref<18x18x128xbf16, #tpu.memory_space<vmem>>, vector<1x18x128xbf16>
    tpu.vector_store %arg10[%c17, %c0_74, %c0_75], %66 {strides = array<i32>} : memref<18x18x128xbf16, #tpu.memory_space<vmem>>, vector<1x18x128xbf16>,
    %c1_76 = arith.constant 1 : index
    %c0_77 = arith.constant 0 : index
    %c0_78 = arith.constant 0 : index
    %70 = vector.load %arg10[%c1_76, %c0_77, %c0_78] : memref<18x18x128xbf16, #tpu.memory_space<vmem>>, vector<16x1x128xbf16>
    tpu.vector_store %arg10[%c1_76, %c0_77, %c0_78], %67 {strides = array<i32>} : memref<18x18x128xbf16, #tpu.memory_space<vmem>>, vector<16x1x128xbf16>,
    %c1_79 = arith.constant 1 : index
    %c17_80 = arith.constant 17 : index
    %c0_81 = arith.constant 0 : index
    %71 = vector.load %arg10[%c1_79, %c17_80, %c0_81] : memref<18x18x128xbf16, #tpu.memory_space<vmem>>, vector<16x1x128xbf16>
    tpu.vector_store %arg10[%c1_79, %c17_80, %c0_81], %67 {strides = array<i32>} : memref<18x18x128xbf16, #tpu.memory_space<vmem>>, vector<16x1x128xbf16>,
    %72 = vector.shape_cast %65 : vector<256x128xf32> to vector<16x16x128xf32>
    %73 = arith.truncf %72 : vector<16x16x128xf32> to vector<16x16x128xbf16>
    %c1_82 = arith.constant 1 : index
    %c1_83 = arith.constant 1 : index
    %c0_84 = arith.constant 0 : index
    %74 = vector.load %arg10[%c1_82, %c1_83, %c0_84] : memref<18x18x128xbf16, #tpu.memory_space<vmem>>, vector<16x16x128xbf16>
    tpu.vector_store %arg10[%c1_82, %c1_83, %c0_84], %73 {strides = array<i32>} : memref<18x18x128xbf16, #tpu.memory_space<vmem>>, vector<16x16x128xbf16>,
    %c0_85 = arith.constant 0 : index
    %c0_86 = arith.constant 0 : index
    %c0_87 = arith.constant 0 : index
    %75 = vector.load %arg10[%c0_85, %c0_86, %c0_87] : memref<18x18x128xbf16, #tpu.memory_space<vmem>>, vector<16x16x128xbf16>
    %76 = vector.shape_cast %75 : vector<16x16x128xbf16> to vector<256x128xbf16>
    %c0_88 = arith.constant 0 : index
    %c0_89 = arith.constant 0 : index
    %c0_90 = arith.constant 0 : index
    %77 = vector.load %arg3[%c0_88, %c0_89, %c0_90] : memref<9x128x128xbf16, #tpu.memory_space<vmem>>, vector<1x128x128xbf16>
    %78 = vector.shape_cast %77 : vector<1x128x128xbf16> to vector<128x128xbf16>
    %cst_91 = arith.constant dense<0.000000e+00> : vector<256x128xf32>
    %79 = tpu.matmul %76, %78, %cst_91 {dimension_numbers = #tpu.dot_dimension_numbers<[1], [0], [0], [1], [0, 0, 1, 1], [], []>} : vector<256x128xbf16>, vector<128x128xbf16>, vector<256x128xf32> -> vector<256x128xf32>
    %c0_92 = arith.constant 0 : index
    %c1_93 = arith.constant 1 : index
    %c0_94 = arith.constant 0 : index
    %80 = vector.load %arg10[%c0_92, %c1_93, %c0_94] : memref<18x18x128xbf16, #tpu.memory_space<vmem>>, vector<16x16x128xbf16>
    %81 = vector.shape_cast %80 : vector<16x16x128xbf16> to vector<256x128xbf16>
    %c1_95 = arith.constant 1 : index
    %c0_96 = arith.constant 0 : index
    %c0_97 = arith.constant 0 : index
    %82 = vector.load %arg3[%c1_95, %c0_96, %c0_97] : memref<9x128x128xbf16, #tpu.memory_space<vmem>>, vector<1x128x128xbf16>
    %83 = vector.shape_cast %82 : vector<1x128x128xbf16> to vector<128x128xbf16>
    %cst_98 = arith.constant dense<0.000000e+00> : vector<256x128xf32>
    %84 = tpu.matmul %81, %83, %cst_98 {dimension_numbers = #tpu.dot_dimension_numbers<[1], [0], [0], [1], [0, 0, 1, 1], [], []>} : vector<256x128xbf16>, vector<128x128xbf16>, vector<256x128xf32> -> vector<256x128xf32>
    %85 = arith.addf %79, %84 : vector<256x128xf32>
    %c0_99 = arith.constant 0 : index
    %c2_100 = arith.constant 2 : index
    %c0_101 = arith.constant 0 : index
    %86 = vector.load %arg10[%c0_99, %c2_100, %c0_101] : memref<18x18x128xbf16, #tpu.memory_space<vmem>>, vector<16x16x128xbf16>
    %87 = vector.shape_cast %86 : vector<16x16x128xbf16> to vector<256x128xbf16>
    %c2_102 = arith.constant 2 : index
    %c0_103 = arith.constant 0 : index
    %c0_104 = arith.constant 0 : index
    %88 = vector.load %arg3[%c2_102, %c0_103, %c0_104] : memref<9x128x128xbf16, #tpu.memory_space<vmem>>, vector<1x128x128xbf16>
    %89 = vector.shape_cast %88 : vector<1x128x128xbf16> to vector<128x128xbf16>
    %cst_105 = arith.constant dense<0.000000e+00> : vector<256x128xf32>
    %90 = tpu.matmul %87, %89, %cst_105 {dimension_numbers = #tpu.dot_dimension_numbers<[1], [0], [0], [1], [0, 0, 1, 1], [], []>} : vector<256x128xbf16>, vector<128x128xbf16>, vector<256x128xf32> -> vector<256x128xf32>
    %91 = arith.addf %85, %90 : vector<256x128xf32>
    %c1_106 = arith.constant 1 : index
    %c0_107 = arith.constant 0 : index
    %c0_108 = arith.constant 0 : index
    %92 = vector.load %arg10[%c1_106, %c0_107, %c0_108] : memref<18x18x128xbf16, #tpu.memory_space<vmem>>, vector<16x16x128xbf16>
    %93 = vector.shape_cast %92 : vector<16x16x128xbf16> to vector<256x128xbf16>
    %c3_109 = arith.constant 3 : index
    %c0_110 = arith.constant 0 : index
    %c0_111 = arith.constant 0 : index
    %94 = vector.load %arg3[%c3_109, %c0_110, %c0_111] : memref<9x128x128xbf16, #tpu.memory_space<vmem>>, vector<1x128x128xbf16>
    %95 = vector.shape_cast %94 : vector<1x128x128xbf16> to vector<128x128xbf16>
    %cst_112 = arith.constant dense<0.000000e+00> : vector<256x128xf32>
    %96 = tpu.matmul %93, %95, %cst_112 {dimension_numbers = #tpu.dot_dimension_numbers<[1], [0], [0], [1], [0, 0, 1, 1], [], []>} : vector<256x128xbf16>, vector<128x128xbf16>, vector<256x128xf32> -> vector<256x128xf32>
    %97 = arith.addf %91, %96 : vector<256x128xf32>
    %c1_113 = arith.constant 1 : index
    %c1_114 = arith.constant 1 : index
    %c0_115 = arith.constant 0 : index
    %98 = vector.load %arg10[%c1_113, %c1_114, %c0_115] : memref<18x18x128xbf16, #tpu.memory_space<vmem>>, vector<16x16x128xbf16>
    %99 = vector.shape_cast %98 : vector<16x16x128xbf16> to vector<256x128xbf16>
    %c4_116 = arith.constant 4 : index
    %c0_117 = arith.constant 0 : index
    %c0_118 = arith.constant 0 : index
    %100 = vector.load %arg3[%c4_116, %c0_117, %c0_118] : memref<9x128x128xbf16, #tpu.memory_space<vmem>>, vector<1x128x128xbf16>
    %101 = vector.shape_cast %100 : vector<1x128x128xbf16> to vector<128x128xbf16>
    %cst_119 = arith.constant dense<0.000000e+00> : vector<256x128xf32>
    %102 = tpu.matmul %99, %101, %cst_119 {dimension_numbers = #tpu.dot_dimension_numbers<[1], [0], [0], [1], [0, 0, 1, 1], [], []>} : vector<256x128xbf16>, vector<128x128xbf16>, vector<256x128xf32> -> vector<256x128xf32>
    %103 = arith.addf %97, %102 : vector<256x128xf32>
    %c1_120 = arith.constant 1 : index
    %c2_121 = arith.constant 2 : index
    %c0_122 = arith.constant 0 : index
    %104 = vector.load %arg10[%c1_120, %c2_121, %c0_122] : memref<18x18x128xbf16, #tpu.memory_space<vmem>>, vector<16x16x128xbf16>
    %105 = vector.shape_cast %104 : vector<16x16x128xbf16> to vector<256x128xbf16>
    %c5_123 = arith.constant 5 : index
    %c0_124 = arith.constant 0 : index
    %c0_125 = arith.constant 0 : index
    %106 = vector.load %arg3[%c5_123, %c0_124, %c0_125] : memref<9x128x128xbf16, #tpu.memory_space<vmem>>, vector<1x128x128xbf16>
    %107 = vector.shape_cast %106 : vector<1x128x128xbf16> to vector<128x128xbf16>
    %cst_126 = arith.constant dense<0.000000e+00> : vector<256x128xf32>
    %108 = tpu.matmul %105, %107, %cst_126 {dimension_numbers = #tpu.dot_dimension_numbers<[1], [0], [0], [1], [0, 0, 1, 1], [], []>} : vector<256x128xbf16>, vector<128x128xbf16>, vector<256x128xf32> -> vector<256x128xf32>
    %109 = arith.addf %103, %108 : vector<256x128xf32>
    %c2_127 = arith.constant 2 : index
    %c0_128 = arith.constant 0 : index
    %c0_129 = arith.constant 0 : index
    %110 = vector.load %arg10[%c2_127, %c0_128, %c0_129] : memref<18x18x128xbf16, #tpu.memory_space<vmem>>, vector<16x16x128xbf16>
    %111 = vector.shape_cast %110 : vector<16x16x128xbf16> to vector<256x128xbf16>
    %c6_130 = arith.constant 6 : index
    %c0_131 = arith.constant 0 : index
    %c0_132 = arith.constant 0 : index
    %112 = vector.load %arg3[%c6_130, %c0_131, %c0_132] : memref<9x128x128xbf16, #tpu.memory_space<vmem>>, vector<1x128x128xbf16>
    %113 = vector.shape_cast %112 : vector<1x128x128xbf16> to vector<128x128xbf16>
    %cst_133 = arith.constant dense<0.000000e+00> : vector<256x128xf32>
    %114 = tpu.matmul %111, %113, %cst_133 {dimension_numbers = #tpu.dot_dimension_numbers<[1], [0], [0], [1], [0, 0, 1, 1], [], []>} : vector<256x128xbf16>, vector<128x128xbf16>, vector<256x128xf32> -> vector<256x128xf32>
    %115 = arith.addf %109, %114 : vector<256x128xf32>
    %c2_134 = arith.constant 2 : index
    %c1_135 = arith.constant 1 : index
    %c0_136 = arith.constant 0 : index
    %116 = vector.load %arg10[%c2_134, %c1_135, %c0_136] : memref<18x18x128xbf16, #tpu.memory_space<vmem>>, vector<16x16x128xbf16>
    %117 = vector.shape_cast %116 : vector<16x16x128xbf16> to vector<256x128xbf16>
    %c7_137 = arith.constant 7 : index
    %c0_138 = arith.constant 0 : index
    %c0_139 = arith.constant 0 : index
    %118 = vector.load %arg3[%c7_137, %c0_138, %c0_139] : memref<9x128x128xbf16, #tpu.memory_space<vmem>>, vector<1x128x128xbf16>
    %119 = vector.shape_cast %118 : vector<1x128x128xbf16> to vector<128x128xbf16>
    %cst_140 = arith.constant dense<0.000000e+00> : vector<256x128xf32>
    %120 = tpu.matmul %117, %119, %cst_140 {dimension_numbers = #tpu.dot_dimension_numbers<[1], [0], [0], [1], [0, 0, 1, 1], [], []>} : vector<256x128xbf16>, vector<128x128xbf16>, vector<256x128xf32> -> vector<256x128xf32>
    %121 = arith.addf %115, %120 : vector<256x128xf32>
    %c2_141 = arith.constant 2 : index
    %c2_142 = arith.constant 2 : index
    %c0_143 = arith.constant 0 : index
    %122 = vector.load %arg10[%c2_141, %c2_142, %c0_143] : memref<18x18x128xbf16, #tpu.memory_space<vmem>>, vector<16x16x128xbf16>
    %123 = vector.shape_cast %122 : vector<16x16x128xbf16> to vector<256x128xbf16>
    %c8_144 = arith.constant 8 : index
    %c0_145 = arith.constant 0 : index
    %c0_146 = arith.constant 0 : index
    %124 = vector.load %arg3[%c8_144, %c0_145, %c0_146] : memref<9x128x128xbf16, #tpu.memory_space<vmem>>, vector<1x128x128xbf16>
    %125 = vector.shape_cast %124 : vector<1x128x128xbf16> to vector<128x128xbf16>
    %cst_147 = arith.constant dense<0.000000e+00> : vector<256x128xf32>
    %126 = tpu.matmul %123, %125, %cst_147 {dimension_numbers = #tpu.dot_dimension_numbers<[1], [0], [0], [1], [0, 0, 1, 1], [], []>} : vector<256x128xbf16>, vector<128x128xbf16>, vector<256x128xf32> -> vector<256x128xf32>
    %127 = arith.addf %121, %126 : vector<256x128xf32>
    %c0_148 = arith.constant 0 : index
    %c0_149 = arith.constant 0 : index
    %128 = vector.load %arg6[%c0_148, %c0_149] : memref<1x128xf32, #tpu.memory_space<vmem>>, vector<1x128xf32>
    %129 = vector.broadcast %128 : vector<1x128xf32> to vector<256x128xf32>
    %130 = arith.mulf %127, %129 : vector<256x128xf32>
    %c0_150 = arith.constant 0 : index
    %c0_151 = arith.constant 0 : index
    %131 = vector.load %arg7[%c0_150, %c0_151] : memref<1x128xf32, #tpu.memory_space<vmem>>, vector<1x128xf32>
    %132 = vector.broadcast %131 : vector<1x128xf32> to vector<256x128xf32>
    %133 = arith.addf %130, %132 : vector<256x128xf32>
    %c1_152 = arith.constant 1 : index
    %c1_153 = arith.constant 1 : index
    %c0_154 = arith.constant 0 : index
    %134 = vector.load %arg9[%c1_152, %c1_153, %c0_154] : memref<18x18x128xbf16, #tpu.memory_space<vmem>>, vector<16x16x128xbf16>
    %135 = vector.shape_cast %134 : vector<16x16x128xbf16> to vector<256x128xbf16>
    %136 = arith.extf %135 : vector<256x128xbf16> to vector<256x128xf32>
    %137 = arith.addf %133, %136 : vector<256x128xf32>
    %cst_155 = arith.constant 0.000000e+00 : f32
    %138 = vector.broadcast %cst_155 : f32 to vector<256x128xf32>
    %139 = arith.maximumf %137, %138 : vector<256x128xf32>
    %140 = vector.shape_cast %139 : vector<256x128xf32> to vector<16x16x128xf32>
    %141 = vector.extract_strided_slice %140 {offsets = [0, 0, 0], sizes = [16, 16, 8], strides = [1, 1, 1]} : vector<16x16x128xf32> to vector<16x16x8xf32>
    %142 = vector.shape_cast %141 : vector<16x16x8xf32> to vector<1x16x16x8xf32>
    %c0_156 = arith.constant 0 : index
    %c0_157 = arith.constant 0 : index
    %c0_158 = arith.constant 0 : index
    %c0_159 = arith.constant 0 : index
    %143 = vector.load %arg8[%c0_156, %c0_157, %c0_158, %c0_159] : memref<1x16x16x8xf32, #tpu.memory_space<vmem>>, vector<1x16x16x8xf32>
    tpu.vector_store %arg8[%c0_156, %c0_157, %c0_158, %c0_159], %142 {strides = array<i32>} : memref<1x16x16x8xf32, #tpu.memory_space<vmem>>, vector<1x16x16x8xf32>,
    return
  }
  func.func @transform_0(%arg0: i32) -> (i32, i32, i32, i32) {
    %c0_i32 = arith.constant 0 : i32
    %c0_i32_0 = arith.constant 0 : i32
    %c0_i32_1 = arith.constant 0 : i32
    %c0_i32_2 = arith.constant 0 : i32
    return %arg0, %c0_i32, %c0_i32_0, %c0_i32_1 : i32, i32, i32, i32
  }
  func.func @transform_1(%arg0: i32) -> (i32, i32, i32) {
    %c0_i32 = arith.constant 0 : i32
    %c0_i32_0 = arith.constant 0 : i32
    %c0_i32_1 = arith.constant 0 : i32
    %c0_i32_2 = arith.constant 0 : i32
    return %c0_i32, %c0_i32_0, %c0_i32_1 : i32, i32, i32
  }
  func.func @transform_2(%arg0: i32) -> (i32, i32, i32) {
    %c0_i32 = arith.constant 0 : i32
    %c0_i32_0 = arith.constant 0 : i32
    %c0_i32_1 = arith.constant 0 : i32
    %c0_i32_2 = arith.constant 0 : i32
    return %c0_i32, %c0_i32_0, %c0_i32_1 : i32, i32, i32
  }
  func.func @transform_3(%arg0: i32) -> (i32, i32) {
    %c0_i32 = arith.constant 0 : i32
    %c0_i32_0 = arith.constant 0 : i32
    %c0_i32_1 = arith.constant 0 : i32
    return %c0_i32, %c0_i32_0 : i32, i32
  }
  func.func @transform_4(%arg0: i32) -> (i32, i32) {
    %c0_i32 = arith.constant 0 : i32
    %c0_i32_0 = arith.constant 0 : i32
    %c0_i32_1 = arith.constant 0 : i32
    return %c0_i32, %c0_i32_0 : i32, i32
  }
  func.func @transform_5(%arg0: i32) -> (i32, i32) {
    %c0_i32 = arith.constant 0 : i32
    %c0_i32_0 = arith.constant 0 : i32
    %c0_i32_1 = arith.constant 0 : i32
    return %c0_i32, %c0_i32_0 : i32, i32
  }
  func.func @transform_6(%arg0: i32) -> (i32, i32) {
    %c0_i32 = arith.constant 0 : i32
    %c0_i32_0 = arith.constant 0 : i32
    %c0_i32_1 = arith.constant 0 : i32
    return %c0_i32, %c0_i32_0 : i32, i32
  }
  func.func @transform_7(%arg0: i32) -> (i32, i32, i32, i32) {
    %c0_i32 = arith.constant 0 : i32
    %c0_i32_0 = arith.constant 0 : i32
    %c0_i32_1 = arith.constant 0 : i32
    %c0_i32_2 = arith.constant 0 : i32
    return %arg0, %c0_i32, %c0_i32_0, %c0_i32_1 : i32, i32, i32, i32
  }
}

</mosaic_0001>

<llo_original>
// kernel: tpu_custom_call.1
$region0: #{tpu_custom_call.1}
  #allocation0 [shape = 'u32[]', space=smem, size = 0x4, offset = 0x4, fixed_abs, tag = 'smem constant byte address 0x4 - core index']
  #allocation1 [shape = 'u32[144,128]{1,0:T(1,128)}', space=vmem, size = 0x12000, scoped, tag = 'internal scratch']
  #allocation2 [shape = 'bf16[18,18,128]{2,1,0:T(8,128)(2,1)}', space=vmem, size = 0x1b000, scoped, tag = 'scratch operand']
  #allocation3 [shape = 'bf16[18,18,128]{2,1,0:T(8,128)(2,1)}', space=vmem, size = 0x1b000, scoped, tag = 'scratch operand']
  %s0 = inlined_call_operand.vmem [shape: bf16[2,18,18,8], index: 0, kind: input, shape index: {}]
  %s1 = inlined_call_operand.vmem [shape: bf16[9,128,128], index: 1, kind: input, shape index: {}]
  %s2 = inlined_call_operand.hbm [shape: bf16[9,128,128], index: 2, kind: input, shape index: {}]
  %s3 = inlined_call_operand.vmem [shape: f32[1,128], index: 3, kind: input, shape index: {}]
  %s4 = inlined_call_operand.vmem [shape: f32[1,128], index: 4, kind: input, shape index: {}]
  %s5 = inlined_call_operand.vmem [shape: f32[1,128], index: 5, kind: input, shape index: {}]
  %s6 = inlined_call_operand.vmem [shape: f32[1,128], index: 6, kind: input, shape index: {}]
  %s7 = inlined_call_operand.vmem [shape: f32[2,16,16,8], index: 7, kind: output, shape index: {}]
  %s8 = sld [smem:[#allocation0]]
  $region65: #{tpu_custom_call.1} parent=0
    _
  %s10 = ssub.s32 1, %s8
  %s11 = scalar_select 0, %s10, %s8
  $region1: #{tpu_custom_call.1} parent=0
    #allocation4 [shape = 'u8[294912]{0}', space=vmem, size = 0x48000, scoped, tag = 'input window, operand 2, single buffered']
    #allocation5 [shape = 's32[2]{0}', space=sflag, size = 0x8, scoped, tag = 'scoped memory for tpu_custom_call.1']
    %12 = vsyncpa [#allocation5], 0
    loop: start=0, step=1, limit=4
    $region2: #{tpu_custom_call.1} parent=1 // loop_pre_header
      _
    $region3: #{tpu_custom_call.1} parent=1 // loop_header
      %s14 = sphi 0, %s18
      %p15 = scmp.ge.s32.totalorder %s14, 4
      %s24 = sphi 0, %s26
      %s27 = sphi 0, %s24
      %s28 = sphi 0, %s27
      %s44 = sphi 0, %s28
      %s48 = sphi 0, %s48
      %s50 = sphi 0, %s48
      %s51 = sphi 0, %s50
      %s65 = sphi 0, %s51
      %s69 = sphi 0, %s69
      %s71 = sphi 0, %s69
      %s72 = sphi 0, %s71
      %s86 = sphi 0, %s72
      %s90 = sphi 0, %s90
      %s92 = sphi 0, %s90
      %s93 = sphi 0, %s92
      %s107 = sphi 0, %s93
      %s111 = sphi 0, %s111
      %s113 = sphi 0, %s111
      %s114 = sphi 0, %s113
      %s128 = sphi 0, %s114
      %s132 = sphi 0, %s132
      %s134 = sphi 0, %s132
      %s135 = sphi 0, %s134
      %s149 = sphi 0, %s135
      %s153 = sphi 0, %s153
      %s155 = sphi 0, %s153
      %s156 = sphi 0, %s155
      %s170 = sphi 0, %s156
      %s176 = sphi 0, %s178
      %s179 = sphi 0, %s176
      %s180 = sphi 0, %s179
      %s196 = sphi 0, %s180
    $region4: #{tpu_custom_call.1} parent=1 // loop_header_branch
      %17 = sbr.rel (%p15) target = $region8
    $region5: #{tpu_custom_call.1} parent=1 // loop_body
      %s19 = ssub.s32 %s14, 1
      %s20 = ssub.s32 %s14, 2
      %s21 = sadd.s32 %s14, 1
      %s22 = ssub.s32 %s14, %s21
      %p23 = scmp.eq.s32.totalorder %s22, 0
      %s25 = sadd.s32 %s24, 1
      %s26 = scalar_select %p23, %s24, %s25
      %p29 = pneg %p23
      %p30 = scmp.eq.s32.totalorder %s14, 1
      %p31 = por %p29, %p30
      %p32 = scmp.ne.s32.totalorder %s24, %s27
      %p33 = scmp.eq.s32.totalorder %s14, 0
      %p34 = por %p32, %p33
      %p35 = scmp.ne.s32.totalorder %s24, %s27
      %p36 = scmp.eq.s32.totalorder %s19, 1
      %p37 = por %p35, %p36
      %p38 = scmp.ne.s32.totalorder %s27, %s28
      %p39 = scmp.eq.s32.totalorder %s19, 0
      %p40 = por %p38, %p39
      %p41 = scmp.ne.s32.totalorder %s27, %s28
      %p42 = scmp.eq.s32.totalorder %s20, 1
      %p43 = por %p41, %p42
      %p45 = scmp.ne.s32.totalorder %s28, %s44
      %p46 = scmp.eq.s32.totalorder %s20, 0
      %p47 = por %p45, %p46
      %s49 = sadd.s32 %s48, 1
      %p52 = scmp.eq.s32.totalorder %s14, 1
      %p53 = scmp.ne.s32.totalorder %s48, %s50
      %p54 = scmp.eq.s32.totalorder %s14, 0
      %p55 = por %p53, %p54
      %p56 = scmp.ne.s32.totalorder %s48, %s50
      %p57 = scmp.eq.s32.totalorder %s19, 1
      %p58 = por %p56, %p57
      %p59 = scmp.ne.s32.totalorder %s50, %s51
      %p60 = scmp.eq.s32.totalorder %s19, 0
      %p61 = por %p59, %p60
      %p62 = scmp.ne.s32.totalorder %s50, %s51
      %p63 = scmp.eq.s32.totalorder %s20, 1
      %p64 = por %p62, %p63
      %p66 = scmp.ne.s32.totalorder %s51, %s65
      %p67 = scmp.eq.s32.totalorder %s20, 0
      %p68 = por %p66, %p67
      %s70 = sadd.s32 %s69, 1
      %p73 = scmp.eq.s32.totalorder %s14, 1
      %p74 = scmp.ne.s32.totalorder %s69, %s71
      %p75 = scmp.eq.s32.totalorder %s14, 0
      %p76 = por %p74, %p75
      %p77 = scmp.ne.s32.totalorder %s69, %s71
      %p78 = scmp.eq.s32.totalorder %s19, 1
      %p79 = por %p77, %p78
      %p80 = scmp.ne.s32.totalorder %s71, %s72
      %p81 = scmp.eq.s32.totalorder %s19, 0
      %p82 = por %p80, %p81
      %p83 = scmp.ne.s32.totalorder %s71, %s72
      %p84 = scmp.eq.s32.totalorder %s20, 1
      %p85 = por %p83, %p84
      %p87 = scmp.ne.s32.totalorder %s72, %s86
      %p88 = scmp.eq.s32.totalorder %s20, 0
      %p89 = por %p87, %p88
      %s91 = sadd.s32 %s90, 1
      %p94 = scmp.eq.s32.totalorder %s14, 1
      %p95 = scmp.ne.s32.totalorder %s90, %s92
      %p96 = scmp.eq.s32.totalorder %s14, 0
      %p97 = por %p95, %p96
      %p98 = scmp.ne.s32.totalorder %s90, %s92
      %p99 = scmp.eq.s32.totalorder %s19, 1
      %p100 = por %p98, %p99
      %p101 = scmp.ne.s32.totalorder %s92, %s93
      %p102 = scmp.eq.s32.totalorder %s19, 0
      %p103 = por %p101, %p102
      %p104 = scmp.ne.s32.totalorder %s92, %s93
      %p105 = scmp.eq.s32.totalorder %s20, 1
      %p106 = por %p104, %p105
      %p108 = scmp.ne.s32.totalorder %s93, %s107
      %p109 = scmp.eq.s32.totalorder %s20, 0
      %p110 = por %p108, %p109
      %s112 = sadd.s32 %s111, 1
      %p115 = scmp.eq.s32.totalorder %s14, 1
      %p116 = scmp.ne.s32.totalorder %s111, %s113
      %p117 = scmp.eq.s32.totalorder %s14, 0
      %p118 = por %p116, %p117
      %p119 = scmp.ne.s32.totalorder %s111, %s113
      %p120 = scmp.eq.s32.totalorder %s19, 1
      %p121 = por %p119, %p120
      %p122 = scmp.ne.s32.totalorder %s113, %s114
      %p123 = scmp.eq.s32.totalorder %s19, 0
      %p124 = por %p122, %p123
      %p125 = scmp.ne.s32.totalorder %s113, %s114
      %p126 = scmp.eq.s32.totalorder %s20, 1
      %p127 = por %p125, %p126
      %p129 = scmp.ne.s32.totalorder %s114, %s128
      %p130 = scmp.eq.s32.totalorder %s20, 0
      %p131 = por %p129, %p130
      %s133 = sadd.s32 %s132, 1
      %p136 = scmp.eq.s32.totalorder %s14, 1
      %p137 = scmp.ne.s32.totalorder %s132, %s134
      %p138 = scmp.eq.s32.totalorder %s14, 0
      %p139 = por %p137, %p138
      %p140 = scmp.ne.s32.totalorder %s132, %s134
      %p141 = scmp.eq.s32.totalorder %s19, 1
      %p142 = por %p140, %p141
      %p143 = scmp.ne.s32.totalorder %s134, %s135
      %p144 = scmp.eq.s32.totalorder %s19, 0
      %p145 = por %p143, %p144
      %p146 = scmp.ne.s32.totalorder %s134, %s135
      %p147 = scmp.eq.s32.totalorder %s20, 1
      %p148 = por %p146, %p147
      %p150 = scmp.ne.s32.totalorder %s135, %s149
      %p151 = scmp.eq.s32.totalorder %s20, 0
      %p152 = por %p150, %p151
      %s154 = sadd.s32 %s153, 1
      %p157 = scmp.eq.s32.totalorder %s14, 1
      %p158 = scmp.ne.s32.totalorder %s153, %s155
      %p159 = scmp.eq.s32.totalorder %s14, 0
      %p160 = por %p158, %p159
      %p161 = scmp.ne.s32.totalorder %s153, %s155
      %p162 = scmp.eq.s32.totalorder %s19, 1
      %p163 = por %p161, %p162
      %p164 = scmp.ne.s32.totalorder %s155, %s156
      %p165 = scmp.eq.s32.totalorder %s19, 0
      %p166 = por %p164, %p165
      %p167 = scmp.ne.s32.totalorder %s155, %s156
      %p168 = scmp.eq.s32.totalorder %s20, 1
      %p169 = por %p167, %p168
      %p171 = scmp.ne.s32.totalorder %s156, %s170
      %p172 = scmp.eq.s32.totalorder %s20, 0
      %p173 = por %p171, %p172
      %s174 = ssub.s32 %s14, %s21
      %p175 = scmp.eq.s32.totalorder %s174, 0
      %s177 = sadd.s32 %s176, 1
      %s178 = scalar_select %p175, %s176, %s177
      %p181 = pneg %p175
      %p182 = scmp.eq.s32.totalorder %s14, 1
      %p183 = por %p181, %p182
      %p184 = scmp.ne.s32.totalorder %s176, %s179
      %p185 = scmp.eq.s32.totalorder %s14, 0
      %p186 = por %p184, %p185
      %p187 = scmp.ne.s32.totalorder %s176, %s179
      %p188 = scmp.eq.s32.totalorder %s19, 1
      %p189 = por %p187, %p188
      %p190 = scmp.ne.s32.totalorder %s179, %s180
      %p191 = scmp.eq.s32.totalorder %s19, 0
      %p192 = por %p190, %p191
      %p193 = scmp.ne.s32.totalorder %s179, %s180
      %p194 = scmp.eq.s32.totalorder %s20, 1
      %p195 = por %p193, %p194
      %p197 = scmp.ne.s32.totalorder %s180, %s196
      %p198 = scmp.eq.s32.totalorder %s20, 0
      %p199 = por %p197, %p198
      %p200 = scmp.le.s32.totalorder 1, %s14
      %p201 = scmp.lt.s32.totalorder %s14, 3
      %p202 = pnand %p200, %p201
      %p203 = pneg %p202
      // Predicated region
      $region9: #{tpu_custom_call.1} parent=5 // pred_check
        _
      $region10: #{tpu_custom_call.1} parent=5 // pred_check_branch
        %205 = sbr.rel (%p202) target = $region12
      $region11: #{tpu_custom_call.1} parent=5 // pred_region
        %s206 = ssub.s32 %s14, 1
        // Predicated region
        $region13: #{tpu_custom_call.1} parent=11 // pred_check
          %p207 = pneg %p61
        $region14: #{tpu_custom_call.1} parent=11 // pred_check_branch
          %209 = sbr.rel (%p207) target = $region16
        $region15: #{tpu_custom_call.1} parent=11 // pred_region
          _
        $region16: #{tpu_custom_call.1} parent=11 // pred_fallthru
          _
        // Predicated region
        $region17: #{tpu_custom_call.1} parent=11 // pred_check
          %p210 = pneg %p82
        $region18: #{tpu_custom_call.1} parent=11 // pred_check_branch
          %212 = sbr.rel (%p210) target = $region20
        $region19: #{tpu_custom_call.1} parent=11 // pred_region
          %s214 = ssub.s32 9216, 9216
          %215 = vsyncadd [#allocation5], %s214
          %s216 = sshll.u32 [#allocation4], 4
          %s217 = int_to_ptr.vmem [resolvable:$true] %s216
          %222 = dma.hbm_to_vmem [thread:$0]  %s2, 9216, %s217, [#allocation5], 64, 64, 4
        $region20: #{tpu_custom_call.1} parent=11 // pred_fallthru
          _
        // Predicated region
        $region21: #{tpu_custom_call.1} parent=11 // pred_check
          %p223 = pneg %p103
        $region22: #{tpu_custom_call.1} parent=11 // pred_check_branch
          %225 = sbr.rel (%p223) target = $region24
        $region23: #{tpu_custom_call.1} parent=11 // pred_region
          _
        $region24: #{tpu_custom_call.1} parent=11 // pred_fallthru
          _
        // Predicated region
        $region25: #{tpu_custom_call.1} parent=11 // pred_check
          %p226 = pneg %p124
        $region26: #{tpu_custom_call.1} parent=11 // pred_check_branch
          %228 = sbr.rel (%p226) target = $region28
        $region27: #{tpu_custom_call.1} parent=11 // pred_region
          _
        $region28: #{tpu_custom_call.1} parent=11 // pred_fallthru
          _
        // Predicated region
        $region29: #{tpu_custom_call.1} parent=11 // pred_check
          %p229 = pneg %p145
        $region30: #{tpu_custom_call.1} parent=11 // pred_check_branch
          %231 = sbr.rel (%p229) target = $region32
        $region31: #{tpu_custom_call.1} parent=11 // pred_region
          _
        $region32: #{tpu_custom_call.1} parent=11 // pred_fallthru
          _
        // Predicated region
        $region33: #{tpu_custom_call.1} parent=11 // pred_check
          %p232 = pneg %p166
        $region34: #{tpu_custom_call.1} parent=11 // pred_check_branch
          %234 = sbr.rel (%p232) target = $region36
        $region35: #{tpu_custom_call.1} parent=11 // pred_region
          _
        $region36: #{tpu_custom_call.1} parent=11 // pred_fallthru
          _
      $region12: #{tpu_custom_call.1} parent=5 // pred_fallthru
        _
      %p235 = scmp.lt.s32.totalorder %s14, 2
      // Predicated region
      $region37: #{tpu_custom_call.1} parent=5 // pred_check
        %p236 = pneg %p235
      $region38: #{tpu_custom_call.1} parent=5 // pred_check_branch
        %238 = sbr.rel (%p236) target = $region40
      $region39: #{tpu_custom_call.1} parent=5 // pred_region
        // Predicated region
        $region41: #{tpu_custom_call.1} parent=39 // pred_check
          %p239 = pneg %p34
        $region42: #{tpu_custom_call.1} parent=39 // pred_check_branch
          %241 = sbr.rel (%p239) target = $region44
        $region43: #{tpu_custom_call.1} parent=39 // pred_region
          %p242 = scmp.lt.s32.totalorder %s14, 1
          %s243 = scalar_select %p242, %s14, 1
          %s244 = smul.addr %s243, 54
          %s245 = smul.addr %s244, 4
          %s246 = scalar_lea.vmem %s0, %s245
        $region44: #{tpu_custom_call.1} parent=39 // pred_fallthru
          _
      $region40: #{tpu_custom_call.1} parent=5 // pred_fallthru
        _
      %p247 = scmp.le.s32.totalorder 1, %s14
      %p248 = scmp.lt.s32.totalorder %s14, 3
      %p249 = pnand %p247, %p248
      %p250 = pneg %p249
      // Predicated region
      $region45: #{tpu_custom_call.1} parent=5 // pred_check
        _
      $region46: #{tpu_custom_call.1} parent=5 // pred_check_branch
        %252 = sbr.rel (%p249) target = $region48
      $region47: #{tpu_custom_call.1} parent=5 // pred_region
        %s253 = ssub.s32 %s14, 1
        // Predicated region
        $region49: #{tpu_custom_call.1} parent=47 // pred_check
          %p254 = pneg %p82
        $region50: #{tpu_custom_call.1} parent=47 // pred_check_branch
          %256 = sbr.rel (%p254) target = $region52
        $region51: #{tpu_custom_call.1} parent=47 // pred_region
          %257 = dma.done [#allocation5], 9216
        $region52: #{tpu_custom_call.1} parent=47 // pred_fallthru
          _
        %p258 = scmp.lt.s32.totalorder %s19, 1
        %s259 = scalar_select %p258, %s19, 1
        %s260 = smul.addr %s259, 54
        %s261 = smul.addr %s260, 4
        %s262 = scalar_lea.vmem %s0, %s261
        %p263 = pneg %p40
        %p264 = pneg %p37
        %p265 = pneg %p61
        %p266 = pneg %p58
        %p267 = pneg %p82
        %p268 = pneg %p79
        %p269 = pneg %p103
        %p270 = pneg %p100
        %p271 = pneg %p124
        %p272 = pneg %p121
        %p273 = pneg %p145
        %p274 = pneg %p142
        %p275 = pneg %p166
        %p276 = pneg %p163
        %p277 = pneg %p192
        %p278 = pneg %p189
        %p279 = scmp.lt.s32.totalorder %s19, 1
        %s280 = scalar_select %p279, %s19, 1
        %s281 = smul.addr %s280, 32
        %s282 = smul.addr %s281, 8
        %s283 = scalar_lea.vmem %s7, %s282
        %p284 = scmp.lt.s32.totalorder %s19, 1
        %s285 = scalar_select %p284, %s19, 1
        %s286 = smul.addr %s285, 54
        %s287 = smul.addr %s286, 4
        %s288 = scalar_lea.vmem %s0, %s287
        %p289 = scmp.lt.s32.totalorder %s19, 1
        %s290 = scalar_select %p289, %s19, 1
        %s291 = smul.addr %s290, 32
        %s292 = smul.addr %s291, 8
        %s293 = scalar_lea.vmem %s7, %s292
        %295 = vst [vmem:[#allocation2] sm:$0xf] 0
        %296 = vst [vmem:[#allocation2 + $0x4] sm:$0xf] 0
        %297 = vst [vmem:[#allocation2 + $0x8] sm:$0x1] 0
        %298 = vst [vmem:[#allocation2 + $0xc] sm:$0xf] 0
        %299 = vst [vmem:[#allocation2 + $0x10] sm:$0xf] 0
        %300 = vst [vmem:[#allocation2 + $0x14] sm:$0x1] 0
        %301 = vst [vmem:[#allocation2 + $0x18] sm:$0xf] 0
        %302 = vst [vmem:[#allocation2 + $0x1c] sm:$0xf] 0
        %303 = vst [vmem:[#allocation2 + $0x20] sm:$0x1] 0
        %304 = vst [vmem:[#allocation2 + $0x24] sm:$0xf] 0
        %305 = vst [vmem:[#allocation2 + $0x28] sm:$0xf] 0
        %306 = vst [vmem:[#allocation2 + $0x2c] sm:$0x1] 0
        %307 = vst [vmem:[#allocation2 + $0x30] sm:$0xf] 0
        %308 = vst [vmem:[#allocation2 + $0x34] sm:$0xf] 0
        %309 = vst [vmem:[#allocation2 + $0x38] sm:$0x1] 0
        %310 = vst [vmem:[#allocation2 + $0x3c] sm:$0xf] 0
        %311 = vst [vmem:[#allocation2 + $0x40] sm:$0xf] 0
        %312 = vst [vmem:[#allocation2 + $0x44] sm:$0x1] 0
        %313 = vst [vmem:[#allocation2 + $0x48] sm:$0xf] 0
        %314 = vst [vmem:[#allocation2 + $0x4c] sm:$0xf] 0
        %315 = vst [vmem:[#allocation2 + $0x50] sm:$0x1] 0
        %316 = vst [vmem:[#allocation2 + $0x54] sm:$0xf] 0
        %317 = vst [vmem:[#allocation2 + $0x58] sm:$0xf] 0
        %318 = vst [vmem:[#allocation2 + $0x5c] sm:$0x1] 0
        %319 = vst [vmem:[#allocation2 + $0x60] sm:$0xf] 0
        %320 = vst [vmem:[#allocation2 + $0x64] sm:$0xf] 0
        %321 = vst [vmem:[#allocation2 + $0x68] sm:$0x1] 0
        %322 = vst [vmem:[#allocation2 + $0x6c] sm:$0xf] 0
        %323 = vst [vmem:[#allocation2 + $0x70] sm:$0xf] 0
        %324 = vst [vmem:[#allocation2 + $0x74] sm:$0x1] 0
        %325 = vst [vmem:[#allocation2 + $0x78] sm:$0xf] 0
        %326 = vst [vmem:[#allocation2 + $0x7c] sm:$0xf] 0
        %327 = vst [vmem:[#allocation2 + $0x80] sm:$0x1] 0
        %328 = vst [vmem:[#allocation2 + $0x84] sm:$0xf] 0
        %329 = vst [vmem:[#allocation2 + $0x88] sm:$0xf] 0
        %330 = vst [vmem:[#allocation2 + $0x8c] sm:$0x1] 0
        %331 = vst [vmem:[#allocation2 + $0x90] sm:$0xf] 0
        %332 = vst [vmem:[#allocation2 + $0x94] sm:$0xf] 0
        %333 = vst [vmem:[#allocation2 + $0x98] sm:$0x1] 0
        %334 = vst [vmem:[#allocation2 + $0x9c] sm:$0xf] 0
        %335 = vst [vmem:[#allocation2 + $0xa0] sm:$0xf] 0
        %336 = vst [vmem:[#allocation2 + $0xa4] sm:$0x1] 0
        %337 = vst [vmem:[#allocation2 + $0xa8] sm:$0xf] 0
        %338 = vst [vmem:[#allocation2 + $0xac] sm:$0xf] 0
        %339 = vst [vmem:[#allocation2 + $0xb0] sm:$0x1] 0
        %340 = vst [vmem:[#allocation2 + $0xb4] sm:$0xf] 0
        %341 = vst [vmem:[#allocation2 + $0xb8] sm:$0xf] 0
        %342 = vst [vmem:[#allocation2 + $0xbc] sm:$0x1] 0
        %343 = vst [vmem:[#allocation2 + $0xc0] sm:$0xf] 0
        %344 = vst [vmem:[#allocation2 + $0xc4] sm:$0xf] 0
        %345 = vst [vmem:[#allocation2 + $0xc8] sm:$0x1] 0
        %346 = vst [vmem:[#allocation2 + $0xcc] sm:$0xf] 0
        %347 = vst [vmem:[#allocation2 + $0xd0] sm:$0xf] 0
        %348 = vst [vmem:[#allocation2 + $0xd4] sm:$0x1] 0
        %v349 = vld [vmem:[%s288] sm:$0xf]
        %v350 = vld [vmem:[%s288 + $0x4] sm:$0xf]
        %v351 = vld [vmem:[%s288 + $0x8] sm:$0x1]
        %v352 = vld [vmem:[%s288 + $0xc] sm:$0xf]
        %v353 = vld [vmem:[%s288 + $0x10] sm:$0xf]
        %v354 = vld [vmem:[%s288 + $0x14] sm:$0x1]
        %v355 = vld [vmem:[%s288 + $0x18] sm:$0xf]
        %v356 = vld [vmem:[%s288 + $0x1c] sm:$0xf]
        %v357 = vld [vmem:[%s288 + $0x20] sm:$0x1]
        %v358 = vld [vmem:[%s288 + $0x24] sm:$0xf]
        %v359 = vld [vmem:[%s288 + $0x28] sm:$0xf]
        %v360 = vld [vmem:[%s288 + $0x2c] sm:$0x1]
        %v361 = vld [vmem:[%s288 + $0x30] sm:$0xf]
        %v362 = vld [vmem:[%s288 + $0x34] sm:$0xf]
        %v363 = vld [vmem:[%s288 + $0x38] sm:$0x1]
        %v364 = vld [vmem:[%s288 + $0x3c] sm:$0xf]
        %v365 = vld [vmem:[%s288 + $0x40] sm:$0xf]
        %v366 = vld [vmem:[%s288 + $0x44] sm:$0x1]
        %v367 = vld [vmem:[%s288 + $0x48] sm:$0xf]
        %v368 = vld [vmem:[%s288 + $0x4c] sm:$0xf]
        %v369 = vld [vmem:[%s288 + $0x50] sm:$0x1]
        %v370 = vld [vmem:[%s288 + $0x54] sm:$0xf]
        %v371 = vld [vmem:[%s288 + $0x58] sm:$0xf]
        %v372 = vld [vmem:[%s288 + $0x5c] sm:$0x1]
        %v373 = vld [vmem:[%s288 + $0x60] sm:$0xf]
        %v374 = vld [vmem:[%s288 + $0x64] sm:$0xf]
        %v375 = vld [vmem:[%s288 + $0x68] sm:$0x1]
        %v376 = vld [vmem:[%s288 + $0x6c] sm:$0xf]
        %v377 = vld [vmem:[%s288 + $0x70] sm:$0xf]
        %v378 = vld [vmem:[%s288 + $0x74] sm:$0x1]
        %v379 = vld [vmem:[%s288 + $0x78] sm:$0xf]
        %v380 = vld [vmem:[%s288 + $0x7c] sm:$0xf]
        %v381 = vld [vmem:[%s288 + $0x80] sm:$0x1]
        %v382 = vld [vmem:[%s288 + $0x84] sm:$0xf]
        %v383 = vld [vmem:[%s288 + $0x88] sm:$0xf]
        %v384 = vld [vmem:[%s288 + $0x8c] sm:$0x1]
        %v385 = vld [vmem:[%s288 + $0x90] sm:$0xf]
        %v386 = vld [vmem:[%s288 + $0x94] sm:$0xf]
        %v387 = vld [vmem:[%s288 + $0x98] sm:$0x1]
        %v388 = vld [vmem:[%s288 + $0x9c] sm:$0xf]
        %v389 = vld [vmem:[%s288 + $0xa0] sm:$0xf]
        %v390 = vld [vmem:[%s288 + $0xa4] sm:$0x1]
        %v391 = vld [vmem:[%s288 + $0xa8] sm:$0xf]
        %v392 = vld [vmem:[%s288 + $0xac] sm:$0xf]
        %v393 = vld [vmem:[%s288 + $0xb0] sm:$0x1]
        %v394 = vld [vmem:[%s288 + $0xb4] sm:$0xf]
        %v395 = vld [vmem:[%s288 + $0xb8] sm:$0xf]
        %v396 = vld [vmem:[%s288 + $0xbc] sm:$0x1]
        %v397 = vld [vmem:[%s288 + $0xc0] sm:$0xf]
        %v398 = vld [vmem:[%s288 + $0xc4] sm:$0xf]
        %v399 = vld [vmem:[%s288 + $0xc8] sm:$0x1]
        %v400 = vld [vmem:[%s288 + $0xcc] sm:$0xf]
        %v401 = vld [vmem:[%s288 + $0xd0] sm:$0xf]
        %v402 = vld [vmem:[%s288 + $0xd4] sm:$0x1]
        %vm403 = vcmask 60416
        %404 = vst.msk [vmem:[#allocation2] sm:$0xf] %vm403, %v349
        %405 = vst.msk [vmem:[#allocation2 + $0x4] sm:$0xf] %vm403, %v350
        %vm406 = vcmask 57344
        %407 = vst.msk [vmem:[#allocation2 + $0x8] sm:$0x1] %vm406, %v351
        %408 = vst.msk [vmem:[#allocation2 + $0xc] sm:$0xf] %vm403, %v352
        %409 = vst.msk [vmem:[#allocation2 + $0x10] sm:$0xf] %vm403, %v353
        %410 = vst.msk [vmem:[#allocation2 + $0x14] sm:$0x1] %vm406, %v354
        %411 = vst.msk [vmem:[#allocation2 + $0x18] sm:$0xf] %vm403, %v355
        %412 = vst.msk [vmem:[#allocation2 + $0x1c] sm:$0xf] %vm403, %v356
        %413 = vst.msk [vmem:[#allocation2 + $0x20] sm:$0x1] %vm406, %v357
        %414 = vst.msk [vmem:[#allocation2 + $0x24] sm:$0xf] %vm403, %v358
        %415 = vst.msk [vmem:[#allocation2 + $0x28] sm:$0xf] %vm403, %v359
        %416 = vst.msk [vmem:[#allocation2 + $0x2c] sm:$0x1] %vm406, %v360
        %417 = vst.msk [vmem:[#allocation2 + $0x30] sm:$0xf] %vm403, %v361
        %418 = vst.msk [vmem:[#allocation2 + $0x34] sm:$0xf] %vm403, %v362
        %419 = vst.msk [vmem:[#allocation2 + $0x38] sm:$0x1] %vm406, %v363
        %420 = vst.msk [vmem:[#allocation2 + $0x3c] sm:$0xf] %vm403, %v364
        %421 = vst.msk [vmem:[#allocation2 + $0x40] sm:$0xf] %vm403, %v365
        %422 = vst.msk [vmem:[#allocation2 + $0x44] sm:$0x1] %vm406, %v366
        %423 = vst.msk [vmem:[#allocation2 + $0x48] sm:$0xf] %vm403, %v367
        %424 = vst.msk [vmem:[#allocation2 + $0x4c] sm:$0xf] %vm403, %v368
        %425 = vst.msk [vmem:[#allocation2 + $0x50] sm:$0x1] %vm406, %v369
        %426 = vst.msk [vmem:[#allocation2 + $0x54] sm:$0xf] %vm403, %v370
        %427 = vst.msk [vmem:[#allocation2 + $0x58] sm:$0xf] %vm403, %v371
        %428 = vst.msk [vmem:[#allocation2 + $0x5c] sm:$0x1] %vm406, %v372
        %429 = vst.msk [vmem:[#allocation2 + $0x60] sm:$0xf] %vm403, %v373
        %430 = vst.msk [vmem:[#allocation2 + $0x64] sm:$0xf] %vm403, %v374
        %431 = vst.msk [vmem:[#allocation2 + $0x68] sm:$0x1] %vm406, %v375
        %432 = vst.msk [vmem:[#allocation2 + $0x6c] sm:$0xf] %vm403, %v376
        %433 = vst.msk [vmem:[#allocation2 + $0x70] sm:$0xf] %vm403, %v377
        %434 = vst.msk [vmem:[#allocation2 + $0x74] sm:$0x1] %vm406, %v378
        %435 = vst.msk [vmem:[#allocation2 + $0x78] sm:$0xf] %vm403, %v379
        %436 = vst.msk [vmem:[#allocation2 + $0x7c] sm:$0xf] %vm403, %v380
        %437 = vst.msk [vmem:[#allocation2 + $0x80] sm:$0x1] %vm406, %v381
        %438 = vst.msk [vmem:[#allocation2 + $0x84] sm:$0xf] %vm403, %v382
        %439 = vst.msk [vmem:[#allocation2 + $0x88] sm:$0xf] %vm403, %v383
        %440 = vst.msk [vmem:[#allocation2 + $0x8c] sm:$0x1] %vm406, %v384
        %441 = vst.msk [vmem:[#allocation2 + $0x90] sm:$0xf] %vm403, %v385
        %442 = vst.msk [vmem:[#allocation2 + $0x94] sm:$0xf] %vm403, %v386
        %443 = vst.msk [vmem:[#allocation2 + $0x98] sm:$0x1] %vm406, %v387
        %444 = vst.msk [vmem:[#allocation2 + $0x9c] sm:$0xf] %vm403, %v388
        %445 = vst.msk [vmem:[#allocation2 + $0xa0] sm:$0xf] %vm403, %v389
        %446 = vst.msk [vmem:[#allocation2 + $0xa4] sm:$0x1] %vm406, %v390
        %447 = vst.msk [vmem:[#allocation2 + $0xa8] sm:$0xf] %vm403, %v391
        %448 = vst.msk [vmem:[#allocation2 + $0xac] sm:$0xf] %vm403, %v392
        %449 = vst.msk [vmem:[#allocation2 + $0xb0] sm:$0x1] %vm406, %v393
        %450 = vst.msk [vmem:[#allocation2 + $0xb4] sm:$0xf] %vm403, %v394
        %451 = vst.msk [vmem:[#allocation2 + $0xb8] sm:$0xf] %vm403, %v395
        %452 = vst.msk [vmem:[#allocation2 + $0xbc] sm:$0x1] %vm406, %v396
        %453 = vst.msk [vmem:[#allocation2 + $0xc0] sm:$0xf] %vm403, %v397
        %454 = vst.msk [vmem:[#allocation2 + $0xc4] sm:$0xf] %vm403, %v398
        %455 = vst.msk [vmem:[#allocation2 + $0xc8] sm:$0x1] %vm406, %v399
        %456 = vst.msk [vmem:[#allocation2 + $0xcc] sm:$0xf] %vm403, %v400
        %457 = vst.msk [vmem:[#allocation2 + $0xd0] sm:$0xf] %vm403, %v401
        %458 = vst.msk [vmem:[#allocation2 + $0xd4] sm:$0x1] %vm406, %v402
        %v459 = vld [vmem:[#allocation2] sm:$0xf]
        %v460 = vld [vmem:[#allocation2 + $0x4] sm:$0xf]
        %v461 = vld [vmem:[#allocation2 + $0xc] sm:$0xf]
        %v462 = vld [vmem:[#allocation2 + $0x10] sm:$0xf]
        %v463 = vld [vmem:[#allocation2 + $0x18] sm:$0xf]
        %v464 = vld [vmem:[#allocation2 + $0x1c] sm:$0xf]
        %v465 = vld [vmem:[#allocation2 + $0x24] sm:$0xf]
        %v466 = vld [vmem:[#allocation2 + $0x28] sm:$0xf]
        %v467 = vld [vmem:[#allocation2 + $0x30] sm:$0xf]
        %v468 = vld [vmem:[#allocation2 + $0x34] sm:$0xf]
        %v469 = vld [vmem:[#allocation2 + $0x3c] sm:$0xf]
        %v470 = vld [vmem:[#allocation2 + $0x40] sm:$0xf]
        %v471 = vld [vmem:[#allocation2 + $0x48] sm:$0xf]
        %v472 = vld [vmem:[#allocation2 + $0x4c] sm:$0xf]
        %v473 = vld [vmem:[#allocation2 + $0x54] sm:$0xf]
        %v474 = vld [vmem:[#allocation2 + $0x58] sm:$0xf]
        %v475 = vld [vmem:[#allocation2 + $0x60] sm:$0xf]
        %v476 = vld [vmem:[#allocation2 + $0x64] sm:$0xf]
        %v477 = vld [vmem:[#allocation2 + $0x6c] sm:$0xf]
        %v478 = vld [vmem:[#allocation2 + $0x70] sm:$0xf]
        %v479 = vld [vmem:[#allocation2 + $0x78] sm:$0xf]
        %v480 = vld [vmem:[#allocation2 + $0x7c] sm:$0xf]
        %v481 = vld [vmem:[#allocation2 + $0x84] sm:$0xf]
        %v482 = vld [vmem:[#allocation2 + $0x88] sm:$0xf]
        %v483 = vld [vmem:[#allocation2 + $0x90] sm:$0xf]
        %v484 = vld [vmem:[#allocation2 + $0x94] sm:$0xf]
        %v485 = vld [vmem:[#allocation2 + $0x9c] sm:$0xf]
        %v486 = vld [vmem:[#allocation2 + $0xa0] sm:$0xf]
        %v487 = vld [vmem:[#allocation2 + $0xa8] sm:$0xf]
        %v488 = vld [vmem:[#allocation2 + $0xac] sm:$0xf]
        %v489 = vld [vmem:[#allocation2 + $0xb4] sm:$0xf]
        %v490 = vld [vmem:[#allocation2 + $0xb8] sm:$0xf]
        %v491 = vld [vmem:[%s1] sm:$0xf]
        %v492 = vld [vmem:[%s1 + $0x4] sm:$0xf]
        %v493 = vld [vmem:[%s1 + $0x8] sm:$0xf]
        %v494 = vld [vmem:[%s1 + $0xc] sm:$0xf]
        %v495 = vld [vmem:[%s1 + $0x10] sm:$0xf]
        %v496 = vld [vmem:[%s1 + $0x14] sm:$0xf]
        %v497 = vld [vmem:[%s1 + $0x18] sm:$0xf]
        %v498 = vld [vmem:[%s1 + $0x1c] sm:$0xf]
        %v499 = vld [vmem:[%s1 + $0x20] sm:$0xf]
        %v500 = vld [vmem:[%s1 + $0x24] sm:$0xf]
        %v501 = vld [vmem:[%s1 + $0x28] sm:$0xf]
        %v502 = vld [vmem:[%s1 + $0x2c] sm:$0xf]
        %v503 = vld [vmem:[%s1 + $0x30] sm:$0xf]
        %v504 = vld [vmem:[%s1 + $0x34] sm:$0xf]
        %v505 = vld [vmem:[%s1 + $0x38] sm:$0xf]
        %v506 = vld [vmem:[%s1 + $0x3c] sm:$0xf]
        %v507 = vld [vmem:[#allocation2 + $0x8] sm:$0x1]
        %v508 = vld [vmem:[#allocation2 + $0x14] sm:$0x1]
        %v509 = vld [vmem:[#allocation2 + $0x20] sm:$0x1]
        %v510 = vld [vmem:[#allocation2 + $0x2c] sm:$0x1]
        %v511 = vld [vmem:[#allocation2 + $0x38] sm:$0x1]
        %v512 = vld [vmem:[#allocation2 + $0x44] sm:$0x1]
        %v513 = vld [vmem:[#allocation2 + $0x50] sm:$0x1]
        %v514 = vld [vmem:[#allocation2 + $0x5c] sm:$0x1]
        %v515 = vld [vmem:[#allocation2 + $0x68] sm:$0x1]
        %v516 = vld [vmem:[#allocation2 + $0x74] sm:$0x1]
        %v517 = vld [vmem:[#allocation2 + $0x80] sm:$0x1]
        %v518 = vld [vmem:[#allocation2 + $0x8c] sm:$0x1]
        %v519 = vld [vmem:[#allocation2 + $0x98] sm:$0x1]
        %v520 = vld [vmem:[#allocation2 + $0xa4] sm:$0x1]
        %v521 = vld [vmem:[#allocation2 + $0xb0] sm:$0x1]
        %v522 = vld [vmem:[#allocation2 + $0xbc] sm:$0x1]
        %vm523 = vsmask.f32 3328
        %vm524 = vsmask.f32 7440
        %vm525 = vmor %vm523, %vm524
        %v527 = vshrl.u32 %v459, 16
        %v529 = vrot.slane %v527, 4
        %v530 = vshll.u32 %v459, 16
        %v532 = vrot.slane %v530, 5
        %v533 = vor.u32 %v529, %v532
        %v534 = vrot.slane %v533, 4
        %v536 = vshll.u32 %v460, 16
        %v538 = vrot.slane %v536, 5
        %v539 = vsel %vm525, %v534, %v538
        %v540 = vshrl.u32 %v460, 16
        %v542 = vrot.slane %v540, 4
        %v543 = vor.u32 %v542, %v538
        %v544 = vrot.slane %v543, 4
        %v546 = vshll.u32 %v507, 16
        %v548 = vrot.slane %v546, 5
        %v549 = vsel %vm525, %v544, %v548
        %v551 = vshrl.u32 %v461, 16
        %v553 = vrot.slane %v551, 4
        %v554 = vshll.u32 %v461, 16
        %v556 = vrot.slane %v554, 5
        %v557 = vor.u32 %v553, %v556
        %v558 = vrot.slane %v557, 4
        %v560 = vshll.u32 %v462, 16
        %v562 = vrot.slane %v560, 5
        %v563 = vsel %vm525, %v558, %v562
        %v564 = vshrl.u32 %v462, 16
        %v566 = vrot.slane %v564, 4
        %v567 = vor.u32 %v566, %v562
        %v568 = vrot.slane %v567, 4
        %v570 = vshll.u32 %v508, 16
        %v572 = vrot.slane %v570, 5
        %v573 = vsel %vm525, %v568, %v572
        %v575 = vshrl.u32 %v463, 16
        %v577 = vrot.slane %v575, 4
        %v578 = vshll.u32 %v463, 16
        %v580 = vrot.slane %v578, 5
        %v581 = vor.u32 %v577, %v580
        %v582 = vrot.slane %v581, 4
        %v584 = vshll.u32 %v464, 16
        %v586 = vrot.slane %v584, 5
        %v587 = vsel %vm525, %v582, %v586
        %v588 = vshrl.u32 %v464, 16
        %v590 = vrot.slane %v588, 4
        %v591 = vor.u32 %v590, %v586
        %v592 = vrot.slane %v591, 4
        %v594 = vshll.u32 %v509, 16
        %v596 = vrot.slane %v594, 5
        %v597 = vsel %vm525, %v592, %v596
        %v599 = vshrl.u32 %v465, 16
        %v601 = vrot.slane %v599, 4
        %v602 = vshll.u32 %v465, 16
        %v604 = vrot.slane %v602, 5
        %v605 = vor.u32 %v601, %v604
        %v606 = vrot.slane %v605, 4
        %v608 = vshll.u32 %v466, 16
        %v610 = vrot.slane %v608, 5
        %v611 = vsel %vm525, %v606, %v610
        %v612 = vshrl.u32 %v466, 16
        %v614 = vrot.slane %v612, 4
        %v615 = vor.u32 %v614, %v610
        %v616 = vrot.slane %v615, 4
        %v618 = vshll.u32 %v510, 16
        %v620 = vrot.slane %v618, 5
        %v621 = vsel %vm525, %v616, %v620
        %v623 = vshrl.u32 %v467, 16
        %v625 = vrot.slane %v623, 4
        %v626 = vshll.u32 %v467, 16
        %v628 = vrot.slane %v626, 5
        %v629 = vor.u32 %v625, %v628
        %v630 = vrot.slane %v629, 4
        %v632 = vshll.u32 %v468, 16
        %v634 = vrot.slane %v632, 5
        %v635 = vsel %vm525, %v630, %v634
        %v636 = vshrl.u32 %v468, 16
        %v638 = vrot.slane %v636, 4
        %v639 = vor.u32 %v638, %v634
        %v640 = vrot.slane %v639, 4
        %v642 = vshll.u32 %v511, 16
        %v644 = vrot.slane %v642, 5
        %v645 = vsel %vm525, %v640, %v644
        %v647 = vshrl.u32 %v469, 16
        %v649 = vrot.slane %v647, 4
        %v650 = vshll.u32 %v469, 16
        %v652 = vrot.slane %v650, 5
        %v653 = vor.u32 %v649, %v652
        %v654 = vrot.slane %v653, 4
        %v656 = vshll.u32 %v470, 16
        %v658 = vrot.slane %v656, 5
        %v659 = vsel %vm525, %v654, %v658
        %v660 = vshrl.u32 %v470, 16
        %v662 = vrot.slane %v660, 4
        %v663 = vor.u32 %v662, %v658
        %v664 = vrot.slane %v663, 4
        %v666 = vshll.u32 %v512, 16
        %v668 = vrot.slane %v666, 5
        %v669 = vsel %vm525, %v664, %v668
        %v671 = vshrl.u32 %v471, 16
        %v673 = vrot.slane %v671, 4
        %v674 = vshll.u32 %v471, 16
        %v676 = vrot.slane %v674, 5
        %v677 = vor.u32 %v673, %v676
        %v678 = vrot.slane %v677, 4
        %v680 = vshll.u32 %v472, 16
        %v682 = vrot.slane %v680, 5
        %v683 = vsel %vm525, %v678, %v682
        %v684 = vshrl.u32 %v472, 16
        %v686 = vrot.slane %v684, 4
        %v687 = vor.u32 %v686, %v682
        %v688 = vrot.slane %v687, 4
        %v690 = vshll.u32 %v513, 16
        %v692 = vrot.slane %v690, 5
        %v693 = vsel %vm525, %v688, %v692
        %v695 = vshrl.u32 %v473, 16
        %v697 = vrot.slane %v695, 4
        %v698 = vshll.u32 %v473, 16
        %v700 = vrot.slane %v698, 5
        %v701 = vor.u32 %v697, %v700
        %v702 = vrot.slane %v701, 4
        %v704 = vshll.u32 %v474, 16
        %v706 = vrot.slane %v704, 5
        %v707 = vsel %vm525, %v702, %v706
        %v708 = vshrl.u32 %v474, 16
        %v710 = vrot.slane %v708, 4
        %v711 = vor.u32 %v710, %v706
        %v712 = vrot.slane %v711, 4
        %v714 = vshll.u32 %v514, 16
        %v716 = vrot.slane %v714, 5
        %v717 = vsel %vm525, %v712, %v716
        %v719 = vshrl.u32 %v475, 16
        %v721 = vrot.slane %v719, 4
        %v722 = vshll.u32 %v475, 16
        %v724 = vrot.slane %v722, 5
        %v725 = vor.u32 %v721, %v724
        %v726 = vrot.slane %v725, 4
        %v728 = vshll.u32 %v476, 16
        %v730 = vrot.slane %v728, 5
        %v731 = vsel %vm525, %v726, %v730
        %v732 = vshrl.u32 %v476, 16
        %v734 = vrot.slane %v732, 4
        %v735 = vor.u32 %v734, %v730
        %v736 = vrot.slane %v735, 4
        %v738 = vshll.u32 %v515, 16
        %v740 = vrot.slane %v738, 5
        %v741 = vsel %vm525, %v736, %v740
        %v743 = vshrl.u32 %v477, 16
        %v745 = vrot.slane %v743, 4
        %v746 = vshll.u32 %v477, 16
        %v748 = vrot.slane %v746, 5
        %v749 = vor.u32 %v745, %v748
        %v750 = vrot.slane %v749, 4
        %v752 = vshll.u32 %v478, 16
        %v754 = vrot.slane %v752, 5
        %v755 = vsel %vm525, %v750, %v754
        %v756 = vshrl.u32 %v478, 16
        %v758 = vrot.slane %v756, 4
        %v759 = vor.u32 %v758, %v754
        %v760 = vrot.slane %v759, 4
        %v762 = vshll.u32 %v516, 16
        %v764 = vrot.slane %v762, 5
        %v765 = vsel %vm525, %v760, %v764
        %v767 = vshrl.u32 %v479, 16
        %v769 = vrot.slane %v767, 4
        %v770 = vshll.u32 %v479, 16
        %v772 = vrot.slane %v770, 5
        %v773 = vor.u32 %v769, %v772
        %v774 = vrot.slane %v773, 4
        %v776 = vshll.u32 %v480, 16
        %v778 = vrot.slane %v776, 5
        %v779 = vsel %vm525, %v774, %v778
        %v780 = vshrl.u32 %v480, 16
        %v782 = vrot.slane %v780, 4
        %v783 = vor.u32 %v782, %v778
        %v784 = vrot.slane %v783, 4
        %v786 = vshll.u32 %v517, 16
        %v788 = vrot.slane %v786, 5
        %v789 = vsel %vm525, %v784, %v788
        %v791 = vshrl.u32 %v481, 16
        %v793 = vrot.slane %v791, 4
        %v794 = vshll.u32 %v481, 16
        %v796 = vrot.slane %v794, 5
        %v797 = vor.u32 %v793, %v796
        %v798 = vrot.slane %v797, 4
        %v800 = vshll.u32 %v482, 16
        %v802 = vrot.slane %v800, 5
        %v803 = vsel %vm525, %v798, %v802
        %v804 = vshrl.u32 %v482, 16
        %v806 = vrot.slane %v804, 4
        %v807 = vor.u32 %v806, %v802
        %v808 = vrot.slane %v807, 4
        %v810 = vshll.u32 %v518, 16
        %v812 = vrot.slane %v810, 5
        %v813 = vsel %vm525, %v808, %v812
        %v815 = vshrl.u32 %v483, 16
        %v817 = vrot.slane %v815, 4
        %v818 = vshll.u32 %v483, 16
        %v820 = vrot.slane %v818, 5
        %v821 = vor.u32 %v817, %v820
        %v822 = vrot.slane %v821, 4
        %v824 = vshll.u32 %v484, 16
        %v826 = vrot.slane %v824, 5
        %v827 = vsel %vm525, %v822, %v826
        %v828 = vshrl.u32 %v484, 16
        %v830 = vrot.slane %v828, 4
        %v831 = vor.u32 %v830, %v826
        %v832 = vrot.slane %v831, 4
        %v834 = vshll.u32 %v519, 16
        %v836 = vrot.slane %v834, 5
        %v837 = vsel %vm525, %v832, %v836
        %v839 = vshrl.u32 %v485, 16
        %v841 = vrot.slane %v839, 4
        %v842 = vshll.u32 %v485, 16
        %v844 = vrot.slane %v842, 5
        %v845 = vor.u32 %v841, %v844
        %v846 = vrot.slane %v845, 4
        %v848 = vshll.u32 %v486, 16
        %v850 = vrot.slane %v848, 5
        %v851 = vsel %vm525, %v846, %v850
        %v852 = vshrl.u32 %v486, 16
        %v854 = vrot.slane %v852, 4
        %v855 = vor.u32 %v854, %v850
        %v856 = vrot.slane %v855, 4
        %v858 = vshll.u32 %v520, 16
        %v860 = vrot.slane %v858, 5
        %v861 = vsel %vm525, %v856, %v860
        %v863 = vshrl.u32 %v487, 16
        %v865 = vrot.slane %v863, 4
        %v866 = vshll.u32 %v487, 16
        %v868 = vrot.slane %v866, 5
        %v869 = vor.u32 %v865, %v868
        %v870 = vrot.slane %v869, 4
        %v872 = vshll.u32 %v488, 16
        %v874 = vrot.slane %v872, 5
        %v875 = vsel %vm525, %v870, %v874
        %v876 = vshrl.u32 %v488, 16
        %v878 = vrot.slane %v876, 4
        %v879 = vor.u32 %v878, %v874
        %v880 = vrot.slane %v879, 4
        %v882 = vshll.u32 %v521, 16
        %v884 = vrot.slane %v882, 5
        %v885 = vsel %vm525, %v880, %v884
        %v887 = vshrl.u32 %v489, 16
        %v889 = vrot.slane %v887, 4
        %v890 = vshll.u32 %v489, 16
        %v892 = vrot.slane %v890, 5
        %v893 = vor.u32 %v889, %v892
        %v894 = vrot.slane %v893, 4
        %v896 = vshll.u32 %v490, 16
        %v898 = vrot.slane %v896, 5
        %v899 = vsel %vm525, %v894, %v898
        %v900 = vshrl.u32 %v490, 16
        %v902 = vrot.slane %v900, 4
        %v903 = vor.u32 %v902, %v898
        %v904 = vrot.slane %v903, 4
        %v906 = vshll.u32 %v522, 16
        %v908 = vrot.slane %v906, 5
        %v909 = vsel %vm525, %v904, %v908
        %s910 = scalar_lea.vmem %s1, 64
        %v911 = vld [vmem:[%s910] sm:$0xf]
        %v912 = vld [vmem:[%s910 + $0x4] sm:$0xf]
        %v913 = vld [vmem:[%s910 + $0x8] sm:$0xf]
        %v914 = vld [vmem:[%s910 + $0xc] sm:$0xf]
        %v915 = vld [vmem:[%s910 + $0x10] sm:$0xf]
        %v916 = vld [vmem:[%s910 + $0x14] sm:$0xf]
        %v917 = vld [vmem:[%s910 + $0x18] sm:$0xf]
        %v918 = vld [vmem:[%s910 + $0x1c] sm:$0xf]
        %v919 = vld [vmem:[%s910 + $0x20] sm:$0xf]
        %v920 = vld [vmem:[%s910 + $0x24] sm:$0xf]
        %v921 = vld [vmem:[%s910 + $0x28] sm:$0xf]
        %v922 = vld [vmem:[%s910 + $0x2c] sm:$0xf]
        %v923 = vld [vmem:[%s910 + $0x30] sm:$0xf]
        %v924 = vld [vmem:[%s910 + $0x34] sm:$0xf]
        %v925 = vld [vmem:[%s910 + $0x38] sm:$0xf]
        %v926 = vld [vmem:[%s910 + $0x3c] sm:$0xf]
        %v927 = vunpack.c.l.b16 %v539
        %v928 = vunpack.c.l.b16 %v549
        %v929 = vunpack.c.l.b16 %v563
        %v930 = vunpack.c.l.b16 %v573
        %v931 = vunpack.c.l.b16 %v587
        %v932 = vunpack.c.l.b16 %v597
        %v933 = vunpack.c.l.b16 %v611
        %v934 = vunpack.c.l.b16 %v621
        %v935 = vunpack.c.l.b16 %v635
        %v936 = vunpack.c.l.b16 %v645
        %v937 = vunpack.c.l.b16 %v659
        %v938 = vunpack.c.l.b16 %v669
        %v939 = vunpack.c.l.b16 %v683
        %v940 = vunpack.c.l.b16 %v693
        %v941 = vunpack.c.l.b16 %v707
        %v942 = vunpack.c.l.b16 %v717
        %v943 = vunpack.c.l.b16 %v731
        %v944 = vunpack.c.l.b16 %v741
        %v945 = vunpack.c.l.b16 %v755
        %v946 = vunpack.c.l.b16 %v765
        %v947 = vunpack.c.l.b16 %v779
        %v948 = vunpack.c.l.b16 %v789
        %v949 = vunpack.c.l.b16 %v803
        %v950 = vunpack.c.l.b16 %v813
        %v951 = vunpack.c.l.b16 %v827
        %v952 = vunpack.c.l.b16 %v837
        %v953 = vunpack.c.l.b16 %v851
        %v954 = vunpack.c.l.b16 %v861
        %v955 = vunpack.c.l.b16 %v875
        %v956 = vunpack.c.l.b16 %v885
        %v957 = vunpack.c.l.b16 %v899
        %v958 = vunpack.c.l.b16 %v909
        %v959 = vpack.c.b16 %v928, %v927
        %v960 = vpack.c.b16 %v930, %v929
        %v961 = vpack.c.b16 %v932, %v931
        %v962 = vpack.c.b16 %v934, %v933
        %v963 = vpack.c.b16 %v936, %v935
        %v964 = vpack.c.b16 %v938, %v937
        %v965 = vpack.c.b16 %v940, %v939
        %v966 = vpack.c.b16 %v942, %v941
        %v967 = vpack.c.b16 %v944, %v943
        %v968 = vpack.c.b16 %v946, %v945
        %v969 = vpack.c.b16 %v948, %v947
        %v970 = vpack.c.b16 %v950, %v949
        %v971 = vpack.c.b16 %v952, %v951
        %v972 = vpack.c.b16 %v954, %v953
        %v973 = vpack.c.b16 %v956, %v955
        %v974 = vpack.c.b16 %v958, %v957
        %v1007 = vunpack.c.l.b16 %v911
        %v1008 = vunpack.c.l.b16 %v912
        %v1009 = vunpack.c.l.b16 %v913
        %v1010 = vunpack.c.l.b16 %v914
        %v1011 = vunpack.c.l.b16 %v915
        %v1012 = vunpack.c.l.b16 %v916
        %v1013 = vunpack.c.l.b16 %v917
        %v1014 = vunpack.c.l.b16 %v918
        %v1015 = vunpack.c.l.b16 %v919
        %v1016 = vunpack.c.l.b16 %v920
        %v1017 = vunpack.c.l.b16 %v921
        %v1018 = vunpack.c.l.b16 %v922
        %v1019 = vunpack.c.l.b16 %v923
        %v1020 = vunpack.c.l.b16 %v924
        %v1021 = vunpack.c.l.b16 %v925
        %v1022 = vunpack.c.l.b16 %v926
        %v1023 = vpack.c.b16 %v1008, %v1007
        %v1024 = vpack.c.b16 %v1010, %v1009
        %v1025 = vpack.c.b16 %v1012, %v1011
        %v1026 = vpack.c.b16 %v1014, %v1013
        %v1027 = vpack.c.b16 %v1016, %v1015
        %v1028 = vpack.c.b16 %v1018, %v1017
        %v1029 = vpack.c.b16 %v1020, %v1019
        %v1030 = vpack.c.b16 %v1022, %v1021
        %1039 = vmatprep.subr.bf16.mxu0 0
        %1040 = vmatpush1.bf16.msra.mxu0 %v1023
        %1041 = vmatprep.subr.bf16.mxu0 0
        %1042 = vmatpush1.bf16.msra.mxu0 %v1024
        %1043 = vmatprep.subr.bf16.mxu0 0
        %1044 = vmatpush1.bf16.msra.mxu0 %v1025
        %1045 = vmatprep.subr.bf16.mxu0 0
        %1046 = vmatpush1.bf16.msra.mxu0 %v1026
        %1047 = vmatprep.subr.bf16.mxu0 0
        %1048 = vmatpush1.bf16.msra.mxu0 %v1027
        %1049 = vmatprep.subr.bf16.mxu0 0
        %1050 = vmatpush1.bf16.msra.mxu0 %v1028
        %1051 = vmatprep.subr.bf16.mxu0 0
        %1052 = vmatpush1.bf16.msra.mxu0 %v1029
        %1053 = vmatprep.subr.bf16.mxu0 0
        %1054 = vmatpush1.bf16.msra.mxu0 %v1030
        %1055 = vmatprep.subr.bf16.mxu0 0
        %1056 = vmatpush1.bf16.msra.mxu0 0
        %1057 = vmatprep.subr.bf16.mxu0 0
        %1058 = vmatpush1.bf16.msra.mxu0 0
        %1059 = vmatprep.subr.bf16.mxu0 0
        %1060 = vmatpush1.bf16.msra.mxu0 0
        %1061 = vmatprep.subr.bf16.mxu0 0
        %1062 = vmatpush1.bf16.msra.mxu0 0
        %1063 = vmatprep.subr.bf16.mxu0 0
        %1064 = vmatpush1.bf16.msra.mxu0 0
        %1065 = vmatprep.subr.bf16.mxu0 0
        %1066 = vmatpush1.bf16.msra.mxu0 0
        %1067 = vmatprep.subr.bf16.mxu0 0
        %1068 = vmatpush1.bf16.msra.mxu0 0
        %1069 = vmatprep.subr.bf16.mxu0 0
        %1070 = vmatpush1.bf16.msra.mxu0 0
        %1071 = vmatprep.mubr.bf16.mxu0 0
        %1072 = vmatmul.mubr.bf16.gmra.mrb[0].mxu0 %v959
        %v1073 = vpop.f32.mrb[0].mxu0
        %v1074 = vadd.f32 0.0, %v1073
        %v1075 = vpop.f32.mrb[0].mxu0
        %v1076 = vpop.f32.mrb[0].mxu0
        %v1077 = vadd.f32 0.0, %v1076
        %v1078 = vpop.f32.mrb[0].mxu0
        %1079 = vmatprep.mubr.bf16.mxu0 0
        %1080 = vmatmul.mubr.bf16.gmra.mrb[0].mxu0 %v960
        %v1081 = vpop.f32.mrb[0].mxu0
        %v1082 = vadd.f32 0.0, %v1081
        %v1083 = vpop.f32.mrb[0].mxu0
        %v1084 = vpop.f32.mrb[0].mxu0
        %v1085 = vadd.f32 0.0, %v1084
        %v1086 = vpop.f32.mrb[0].mxu0
        %1087 = vmatprep.mubr.bf16.mxu0 0
        %1088 = vmatmul.mubr.bf16.gmra.mrb[0].mxu0 %v961
        %v1089 = vpop.f32.mrb[0].mxu0
        %v1090 = vadd.f32 0.0, %v1089
        %v1091 = vpop.f32.mrb[0].mxu0
        %v1092 = vpop.f32.mrb[0].mxu0
        %v1093 = vadd.f32 0.0, %v1092
        %v1094 = vpop.f32.mrb[0].mxu0
        %1095 = vmatprep.mubr.bf16.mxu0 0
        %1096 = vmatmul.mubr.bf16.gmra.mrb[0].mxu0 %v962
        %v1097 = vpop.f32.mrb[0].mxu0
        %v1098 = vadd.f32 0.0, %v1097
        %v1099 = vpop.f32.mrb[0].mxu0
        %v1100 = vpop.f32.mrb[0].mxu0
        %v1101 = vadd.f32 0.0, %v1100
        %v1102 = vpop.f32.mrb[0].mxu0
        %1103 = vmatprep.mubr.bf16.mxu0 0
        %1104 = vmatmul.mubr.bf16.gmra.mrb[0].mxu0 %v963
        %v1105 = vpop.f32.mrb[0].mxu0
        %v1106 = vadd.f32 0.0, %v1105
        %v1107 = vpop.f32.mrb[0].mxu0
        %v1108 = vpop.f32.mrb[0].mxu0
        %v1109 = vadd.f32 0.0, %v1108
        %v1110 = vpop.f32.mrb[0].mxu0
        %1111 = vmatprep.mubr.bf16.mxu0 0
        %1112 = vmatmul.mubr.bf16.gmra.mrb[0].mxu0 %v964
        %v1113 = vpop.f32.mrb[0].mxu0
        %v1114 = vadd.f32 0.0, %v1113
        %v1115 = vpop.f32.mrb[0].mxu0
        %v1116 = vpop.f32.mrb[0].mxu0
        %v1117 = vadd.f32 0.0, %v1116
        %v1118 = vpop.f32.mrb[0].mxu0
        %1119 = vmatprep.mubr.bf16.mxu0 0
        %1120 = vmatmul.mubr.bf16.gmra.mrb[0].mxu0 %v965
        %v1121 = vpop.f32.mrb[0].mxu0
        %v1122 = vadd.f32 0.0, %v1121
        %v1123 = vpop.f32.mrb[0].mxu0
        %v1124 = vpop.f32.mrb[0].mxu0
        %v1125 = vadd.f32 0.0, %v1124
        %v1126 = vpop.f32.mrb[0].mxu0
        %1127 = vmatprep.mubr.bf16.mxu0 0
        %1128 = vmatmul.mubr.bf16.gmra.mrb[0].mxu0 %v966
        %v1129 = vpop.f32.mrb[0].mxu0
        %v1130 = vadd.f32 0.0, %v1129
        %v1131 = vpop.f32.mrb[0].mxu0
        %v1132 = vpop.f32.mrb[0].mxu0
        %v1133 = vadd.f32 0.0, %v1132
        %v1134 = vpop.f32.mrb[0].mxu0
        %1135 = vmatprep.mubr.bf16.mxu0 0
        %1136 = vmatmul.mubr.bf16.gmra.mrb[0].mxu0 %v967
        %v1137 = vpop.f32.mrb[0].mxu0
        %v1138 = vadd.f32 0.0, %v1137
        %v1139 = vpop.f32.mrb[0].mxu0
        %v1140 = vpop.f32.mrb[0].mxu0
        %v1141 = vadd.f32 0.0, %v1140
        %v1142 = vpop.f32.mrb[0].mxu0
        %1143 = vmatprep.mubr.bf16.mxu0 0
        %1144 = vmatmul.mubr.bf16.gmra.mrb[0].mxu0 %v968
        %v1145 = vpop.f32.mrb[0].mxu0
        %v1146 = vadd.f32 0.0, %v1145
        %v1147 = vpop.f32.mrb[0].mxu0
        %v1148 = vpop.f32.mrb[0].mxu0
        %v1149 = vadd.f32 0.0, %v1148
        %v1150 = vpop.f32.mrb[0].mxu0
        %1151 = vmatprep.mubr.bf16.mxu0 0
        %1152 = vmatmul.mubr.bf16.gmra.mrb[0].mxu0 %v969
        %v1153 = vpop.f32.mrb[0].mxu0
        %v1154 = vadd.f32 0.0, %v1153
        %v1155 = vpop.f32.mrb[0].mxu0
        %v1156 = vpop.f32.mrb[0].mxu0
        %v1157 = vadd.f32 0.0, %v1156
        %v1158 = vpop.f32.mrb[0].mxu0
        %1159 = vmatprep.mubr.bf16.mxu0 0
        %1160 = vmatmul.mubr.bf16.gmra.mrb[0].mxu0 %v970
        %v1161 = vpop.f32.mrb[0].mxu0
        %v1162 = vadd.f32 0.0, %v1161
        %v1163 = vpop.f32.mrb[0].mxu0
        %v1164 = vpop.f32.mrb[0].mxu0
        %v1165 = vadd.f32 0.0, %v1164
        %v1166 = vpop.f32.mrb[0].mxu0
        %1167 = vmatprep.mubr.bf16.mxu0 0
        %1168 = vmatmul.mubr.bf16.gmra.mrb[0].mxu0 %v971
        %v1169 = vpop.f32.mrb[0].mxu0
        %v1170 = vadd.f32 0.0, %v1169
        %v1171 = vpop.f32.mrb[0].mxu0
        %v1172 = vpop.f32.mrb[0].mxu0
        %v1173 = vadd.f32 0.0, %v1172
        %v1174 = vpop.f32.mrb[0].mxu0
        %1175 = vmatprep.mubr.bf16.mxu0 0
        %1176 = vmatmul.mubr.bf16.gmra.mrb[0].mxu0 %v972
        %v1177 = vpop.f32.mrb[0].mxu0
        %v1178 = vadd.f32 0.0, %v1177
        %v1179 = vpop.f32.mrb[0].mxu0
        %v1180 = vpop.f32.mrb[0].mxu0
        %v1181 = vadd.f32 0.0, %v1180
        %v1182 = vpop.f32.mrb[0].mxu0
        %1183 = vmatprep.mubr.bf16.mxu0 0
        %1184 = vmatmul.mubr.bf16.gmra.mrb[0].mxu0 %v973
        %v1185 = vpop.f32.mrb[0].mxu0
        %v1186 = vadd.f32 0.0, %v1185
        %v1187 = vpop.f32.mrb[0].mxu0
        %v1188 = vpop.f32.mrb[0].mxu0
        %v1189 = vadd.f32 0.0, %v1188
        %v1190 = vpop.f32.mrb[0].mxu0
        %1191 = vmatprep.mubr.bf16.mxu0 0
        %1192 = vmatmul.mubr.bf16.gmra.mrb[0].mxu0 %v974
        %v1193 = vpop.f32.mrb[0].mxu0
        %v1194 = vadd.f32 0.0, %v1193
        %v1195 = vpop.f32.mrb[0].mxu0
        %v1196 = vpop.f32.mrb[0].mxu0
        %v1197 = vadd.f32 0.0, %v1196
        %v1198 = vpop.f32.mrb[0].mxu0
        %1199 = vdwg.mxu0
        %v1232 = vunpack.c.l.b16 %v459
        %v1233 = vunpack.c.l.b16 %v460
        %v1234 = vunpack.c.l.b16 %v461
        %v1235 = vunpack.c.l.b16 %v462
        %v1236 = vunpack.c.l.b16 %v463
        %v1237 = vunpack.c.l.b16 %v464
        %v1238 = vunpack.c.l.b16 %v465
        %v1239 = vunpack.c.l.b16 %v466
        %v1240 = vunpack.c.l.b16 %v467
        %v1241 = vunpack.c.l.b16 %v468
        %v1242 = vunpack.c.l.b16 %v469
        %v1243 = vunpack.c.l.b16 %v470
        %v1244 = vunpack.c.l.b16 %v471
        %v1245 = vunpack.c.l.b16 %v472
        %v1246 = vunpack.c.l.b16 %v473
        %v1247 = vunpack.c.l.b16 %v474
        %v1248 = vunpack.c.l.b16 %v475
        %v1249 = vunpack.c.l.b16 %v476
        %v1250 = vunpack.c.l.b16 %v477
        %v1251 = vunpack.c.l.b16 %v478
        %v1252 = vunpack.c.l.b16 %v479
        %v1253 = vunpack.c.l.b16 %v480
        %v1254 = vunpack.c.l.b16 %v481
        %v1255 = vunpack.c.l.b16 %v482
        %v1256 = vunpack.c.l.b16 %v483
        %v1257 = vunpack.c.l.b16 %v484
        %v1258 = vunpack.c.l.b16 %v485
        %v1259 = vunpack.c.l.b16 %v486
        %v1260 = vunpack.c.l.b16 %v487
        %v1261 = vunpack.c.l.b16 %v488
        %v1262 = vunpack.c.l.b16 %v489
        %v1263 = vunpack.c.l.b16 %v490
        %v1264 = vpack.c.b16 %v1233, %v1232
        %v1265 = vpack.c.b16 %v1235, %v1234
        %v1266 = vpack.c.b16 %v1237, %v1236
        %v1267 = vpack.c.b16 %v1239, %v1238
        %v1268 = vpack.c.b16 %v1241, %v1240
        %v1269 = vpack.c.b16 %v1243, %v1242
        %v1270 = vpack.c.b16 %v1245, %v1244
        %v1271 = vpack.c.b16 %v1247, %v1246
        %v1272 = vpack.c.b16 %v1249, %v1248
        %v1273 = vpack.c.b16 %v1251, %v1250
        %v1274 = vpack.c.b16 %v1253, %v1252
        %v1275 = vpack.c.b16 %v1255, %v1254
        %v1276 = vpack.c.b16 %v1257, %v1256
        %v1277 = vpack.c.b16 %v1259, %v1258
        %v1278 = vpack.c.b16 %v1261, %v1260
        %v1279 = vpack.c.b16 %v1263, %v1262
        %v1312 = vunpack.c.l.b16 %v491
        %v1313 = vunpack.c.l.b16 %v492
        %v1314 = vunpack.c.l.b16 %v493
        %v1315 = vunpack.c.l.b16 %v494
        %v1316 = vunpack.c.l.b16 %v495
        %v1317 = vunpack.c.l.b16 %v496
        %v1318 = vunpack.c.l.b16 %v497
        %v1319 = vunpack.c.l.b16 %v498
        %v1320 = vunpack.c.l.b16 %v499
        %v1321 = vunpack.c.l.b16 %v500
        %v1322 = vunpack.c.l.b16 %v501
        %v1323 = vunpack.c.l.b16 %v502
        %v1324 = vunpack.c.l.b16 %v503
        %v1325 = vunpack.c.l.b16 %v504
        %v1326 = vunpack.c.l.b16 %v505
        %v1327 = vunpack.c.l.b16 %v506
        %v1328 = vpack.c.b16 %v1313, %v1312
        %v1329 = vpack.c.b16 %v1315, %v1314
        %v1330 = vpack.c.b16 %v1317, %v1316
        %v1331 = vpack.c.b16 %v1319, %v1318
        %v1332 = vpack.c.b16 %v1321, %v1320
        %v1333 = vpack.c.b16 %v1323, %v1322
        %v1334 = vpack.c.b16 %v1325, %v1324
        %v1335 = vpack.c.b16 %v1327, %v1326
        %1344 = vmatprep.subr.bf16.mxu0 0
        %1345 = vmatpush1.bf16.msra.mxu0 %v1328
        %1346 = vmatprep.subr.bf16.mxu0 0
        %1347 = vmatpush1.bf16.msra.mxu0 %v1329
        %1348 = vmatprep.subr.bf16.mxu0 0
        %1349 = vmatpush1.bf16.msra.mxu0 %v1330
        %1350 = vmatprep.subr.bf16.mxu0 0
        %1351 = vmatpush1.bf16.msra.mxu0 %v1331
        %1352 = vmatprep.subr.bf16.mxu0 0
        %1353 = vmatpush1.bf16.msra.mxu0 %v1332
        %1354 = vmatprep.subr.bf16.mxu0 0
        %1355 = vmatpush1.bf16.msra.mxu0 %v1333
        %1356 = vmatprep.subr.bf16.mxu0 0
        %1357 = vmatpush1.bf16.msra.mxu0 %v1334
        %1358 = vmatprep.subr.bf16.mxu0 0
        %1359 = vmatpush1.bf16.msra.mxu0 %v1335
        %1360 = vmatprep.subr.bf16.mxu0 0
        %1361 = vmatpush1.bf16.msra.mxu0 0
        %1362 = vmatprep.subr.bf16.mxu0 0
        %1363 = vmatpush1.bf16.msra.mxu0 0
        %1364 = vmatprep.subr.bf16.mxu0 0
        %1365 = vmatpush1.bf16.msra.mxu0 0
        %1366 = vmatprep.subr.bf16.mxu0 0
        %1367 = vmatpush1.bf16.msra.mxu0 0
        %1368 = vmatprep.subr.bf16.mxu0 0
        %1369 = vmatpush1.bf16.msra.mxu0 0
        %1370 = vmatprep.subr.bf16.mxu0 0
        %1371 = vmatpush1.bf16.msra.mxu0 0
        %1372 = vmatprep.subr.bf16.mxu0 0
        %1373 = vmatpush1.bf16.msra.mxu0 0
        %1374 = vmatprep.subr.bf16.mxu0 0
        %1375 = vmatpush1.bf16.msra.mxu0 0
        %1376 = vmatprep.mubr.bf16.mxu0 0
        %1377 = vmatmul.mubr.bf16.gmra.mrb[0].mxu0 %v1264
        %v1378 = vpop.f32.mrb[0].mxu0
        %v1379 = vadd.f32 %v1074, %v1378
        %v1380 = vpop.f32.mrb[0].mxu0
        %v1381 = vpop.f32.mrb[0].mxu0
        %v1382 = vadd.f32 %v1077, %v1381
        %v1383 = vpop.f32.mrb[0].mxu0
        %1384 = vmatprep.mubr.bf16.mxu0 0
        %1385 = vmatmul.mubr.bf16.gmra.mrb[0].mxu0 %v1265
        %v1386 = vpop.f32.mrb[0].mxu0
        %v1387 = vadd.f32 %v1082, %v1386
        %v1388 = vpop.f32.mrb[0].mxu0
        %v1389 = vpop.f32.mrb[0].mxu0
        %v1390 = vadd.f32 %v1085, %v1389
        %v1391 = vpop.f32.mrb[0].mxu0
        %1392 = vmatprep.mubr.bf16.mxu0 0
        %1393 = vmatmul.mubr.bf16.gmra.mrb[0].mxu0 %v1266
        %v1394 = vpop.f32.mrb[0].mxu0
        %v1395 = vadd.f32 %v1090, %v1394
        %v1396 = vpop.f32.mrb[0].mxu0
        %v1397 = vpop.f32.mrb[0].mxu0
        %v1398 = vadd.f32 %v1093, %v1397
        %v1399 = vpop.f32.mrb[0].mxu0
        %1400 = vmatprep.mubr.bf16.mxu0 0
        %1401 = vmatmul.mubr.bf16.gmra.mrb[0].mxu0 %v1267
        %v1402 = vpop.f32.mrb[0].mxu0
        %v1403 = vadd.f32 %v1098, %v1402
        %v1404 = vpop.f32.mrb[0].mxu0
        %v1405 = vpop.f32.mrb[0].mxu0
        %v1406 = vadd.f32 %v1101, %v1405
        %v1407 = vpop.f32.mrb[0].mxu0
        %1408 = vmatprep.mubr.bf16.mxu0 0
        %1409 = vmatmul.mubr.bf16.gmra.mrb[0].mxu0 %v1268
        %v1410 = vpop.f32.mrb[0].mxu0
        %v1411 = vadd.f32 %v1106, %v1410
        %v1412 = vpop.f32.mrb[0].mxu0
        %v1413 = vpop.f32.mrb[0].mxu0
        %v1414 = vadd.f32 %v1109, %v1413
        %v1415 = vpop.f32.mrb[0].mxu0
        %1416 = vmatprep.mubr.bf16.mxu0 0
        %1417 = vmatmul.mubr.bf16.gmra.mrb[0].mxu0 %v1269
        %v1418 = vpop.f32.mrb[0].mxu0
        %v1419 = vadd.f32 %v1114, %v1418
        %v1420 = vpop.f32.mrb[0].mxu0
        %v1421 = vpop.f32.mrb[0].mxu0
        %v1422 = vadd.f32 %v1117, %v1421
        %v1423 = vpop.f32.mrb[0].mxu0
        %1424 = vmatprep.mubr.bf16.mxu0 0
        %1425 = vmatmul.mubr.bf16.gmra.mrb[0].mxu0 %v1270
        %v1426 = vpop.f32.mrb[0].mxu0
        %v1427 = vadd.f32 %v1122, %v1426
        %v1428 = vpop.f32.mrb[0].mxu0
        %v1429 = vpop.f32.mrb[0].mxu0
        %v1430 = vadd.f32 %v1125, %v1429
        %v1431 = vpop.f32.mrb[0].mxu0
        %1432 = vmatprep.mubr.bf16.mxu0 0
        %1433 = vmatmul.mubr.bf16.gmra.mrb[0].mxu0 %v1271
        %v1434 = vpop.f32.mrb[0].mxu0
        %v1435 = vadd.f32 %v1130, %v1434
        %v1436 = vpop.f32.mrb[0].mxu0
        %v1437 = vpop.f32.mrb[0].mxu0
        %v1438 = vadd.f32 %v1133, %v1437
        %v1439 = vpop.f32.mrb[0].mxu0
        %1440 = vmatprep.mubr.bf16.mxu0 0
        %1441 = vmatmul.mubr.bf16.gmra.mrb[0].mxu0 %v1272
        %v1442 = vpop.f32.mrb[0].mxu0
        %v1443 = vadd.f32 %v1138, %v1442
        %v1444 = vpop.f32.mrb[0].mxu0
        %v1445 = vpop.f32.mrb[0].mxu0
        %v1446 = vadd.f32 %v1141, %v1445
        %v1447 = vpop.f32.mrb[0].mxu0
        %1448 = vmatprep.mubr.bf16.mxu0 0
        %1449 = vmatmul.mubr.bf16.gmra.mrb[0].mxu0 %v1273
        %v1450 = vpop.f32.mrb[0].mxu0
        %v1451 = vadd.f32 %v1146, %v1450
        %v1452 = vpop.f32.mrb[0].mxu0
        %v1453 = vpop.f32.mrb[0].mxu0
        %v1454 = vadd.f32 %v1149, %v1453
        %v1455 = vpop.f32.mrb[0].mxu0
        %1456 = vmatprep.mubr.bf16.mxu0 0
        %1457 = vmatmul.mubr.bf16.gmra.mrb[0].mxu0 %v1274
        %v1458 = vpop.f32.mrb[0].mxu0
        %v1459 = vadd.f32 %v1154, %v1458
        %v1460 = vpop.f32.mrb[0].mxu0
        %v1461 = vpop.f32.mrb[0].mxu0
        %v1462 = vadd.f32 %v1157, %v1461
        %v1463 = vpop.f32.mrb[0].mxu0
        %1464 = vmatprep.mubr.bf16.mxu0 0
        %1465 = vmatmul.mubr.bf16.gmra.mrb[0].mxu0 %v1275
        %v1466 = vpop.f32.mrb[0].mxu0
        %v1467 = vadd.f32 %v1162, %v1466
        %v1468 = vpop.f32.mrb[0].mxu0
        %v1469 = vpop.f32.mrb[0].mxu0
        %v1470 = vadd.f32 %v1165, %v1469
        %v1471 = vpop.f32.mrb[0].mxu0
        %1472 = vmatprep.mubr.bf16.mxu0 0
        %1473 = vmatmul.mubr.bf16.gmra.mrb[0].mxu0 %v1276
        %v1474 = vpop.f32.mrb[0].mxu0
        %v1475 = vadd.f32 %v1170, %v1474
        %v1476 = vpop.f32.mrb[0].mxu0
        %v1477 = vpop.f32.mrb[0].mxu0
        %v1478 = vadd.f32 %v1173, %v1477
        %v1479 = vpop.f32.mrb[0].mxu0
        %1480 = vmatprep.mubr.bf16.mxu0 0
        %1481 = vmatmul.mubr.bf16.gmra.mrb[0].mxu0 %v1277
        %v1482 = vpop.f32.mrb[0].mxu0
        %v1483 = vadd.f32 %v1178, %v1482
        %v1484 = vpop.f32.mrb[0].mxu0
        %v1485 = vpop.f32.mrb[0].mxu0
        %v1486 = vadd.f32 %v1181, %v1485
        %v1487 = vpop.f32.mrb[0].mxu0
        %1488 = vmatprep.mubr.bf16.mxu0 0
        %1489 = vmatmul.mubr.bf16.gmra.mrb[0].mxu0 %v1278
        %v1490 = vpop.f32.mrb[0].mxu0
        %v1491 = vadd.f32 %v1186, %v1490
        %v1492 = vpop.f32.mrb[0].mxu0
        %v1493 = vpop.f32.mrb[0].mxu0
        %v1494 = vadd.f32 %v1189, %v1493
        %v1495 = vpop.f32.mrb[0].mxu0
        %1496 = vmatprep.mubr.bf16.mxu0 0
        %1497 = vmatmul.mubr.bf16.gmra.mrb[0].mxu0 %v1279
        %v1498 = vpop.f32.mrb[0].mxu0
        %v1499 = vadd.f32 %v1194, %v1498
        %v1500 = vpop.f32.mrb[0].mxu0
        %v1501 = vpop.f32.mrb[0].mxu0
        %v1502 = vadd.f32 %v1197, %v1501
        %v1503 = vpop.f32.mrb[0].mxu0
        %1504 = vdwg.mxu0
        %v1505 = vld [vmem:[#allocation2] sm:$0xe]
        %v1506 = vld [vmem:[#allocation2 + $0xc] sm:$0xe]
        %v1507 = vld [vmem:[#allocation2 + $0x18] sm:$0xe]
        %v1508 = vld [vmem:[#allocation2 + $0x24] sm:$0xe]
        %v1509 = vld [vmem:[#allocation2 + $0x30] sm:$0xe]
        %v1510 = vld [vmem:[#allocation2 + $0x3c] sm:$0xe]
        %v1511 = vld [vmem:[#allocation2 + $0x48] sm:$0xe]
        %v1512 = vld [vmem:[#allocation2 + $0x54] sm:$0xe]
        %v1513 = vld [vmem:[#allocation2 + $0x60] sm:$0xe]
        %v1514 = vld [vmem:[#allocation2 + $0x6c] sm:$0xe]
        %v1515 = vld [vmem:[#allocation2 + $0x78] sm:$0xe]
        %v1516 = vld [vmem:[#allocation2 + $0x84] sm:$0xe]
        %v1517 = vld [vmem:[#allocation2 + $0x90] sm:$0xe]
        %v1518 = vld [vmem:[#allocation2 + $0x9c] sm:$0xe]
        %v1519 = vld [vmem:[#allocation2 + $0xa8] sm:$0xe]
        %v1520 = vld [vmem:[#allocation2 + $0xb4] sm:$0xe]
        %vm1553 = vcmask 1042432
        %vm1554 = vcmask 1046532
        %vm1555 = vmor %vm1553, %vm1554
        %v1556 = vrot.slane %v1505, 5
        %v1557 = vrot.slane %v1556, 4
        %v1558 = vrot.slane %v460, 5
        %v1559 = vsel %vm1555, %v1557, %v1558
        %v1560 = vrot.slane %v1558, 4
        %v1561 = vrot.slane %v507, 5
        %v1562 = vsel %vm1555, %v1560, %v1561
        %v1563 = vrot.slane %v1506, 5
        %v1564 = vrot.slane %v1563, 4
        %v1565 = vrot.slane %v462, 5
        %v1566 = vsel %vm1555, %v1564, %v1565
        %v1567 = vrot.slane %v1565, 4
        %v1568 = vrot.slane %v508, 5
        %v1569 = vsel %vm1555, %v1567, %v1568
        %v1570 = vrot.slane %v1507, 5
        %v1571 = vrot.slane %v1570, 4
        %v1572 = vrot.slane %v464, 5
        %v1573 = vsel %vm1555, %v1571, %v1572
        %v1574 = vrot.slane %v1572, 4
        %v1575 = vrot.slane %v509, 5
        %v1576 = vsel %vm1555, %v1574, %v1575
        %v1577 = vrot.slane %v1508, 5
        %v1578 = vrot.slane %v1577, 4
        %v1579 = vrot.slane %v466, 5
        %v1580 = vsel %vm1555, %v1578, %v1579
        %v1581 = vrot.slane %v1579, 4
        %v1582 = vrot.slane %v510, 5
        %v1583 = vsel %vm1555, %v1581, %v1582
        %v1584 = vrot.slane %v1509, 5
        %v1585 = vrot.slane %v1584, 4
        %v1586 = vrot.slane %v468, 5
        %v1587 = vsel %vm1555, %v1585, %v1586
        %v1588 = vrot.slane %v1586, 4
        %v1589 = vrot.slane %v511, 5
        %v1590 = vsel %vm1555, %v1588, %v1589
        %v1591 = vrot.slane %v1510, 5
        %v1592 = vrot.slane %v1591, 4
        %v1593 = vrot.slane %v470, 5
        %v1594 = vsel %vm1555, %v1592, %v1593
        %v1595 = vrot.slane %v1593, 4
        %v1596 = vrot.slane %v512, 5
        %v1597 = vsel %vm1555, %v1595, %v1596
        %v1598 = vrot.slane %v1511, 5
        %v1599 = vrot.slane %v1598, 4
        %v1600 = vrot.slane %v472, 5
        %v1601 = vsel %vm1555, %v1599, %v1600
        %v1602 = vrot.slane %v1600, 4
        %v1603 = vrot.slane %v513, 5
        %v1604 = vsel %vm1555, %v1602, %v1603
        %v1605 = vrot.slane %v1512, 5
        %v1606 = vrot.slane %v1605, 4
        %v1607 = vrot.slane %v474, 5
        %v1608 = vsel %vm1555, %v1606, %v1607
        %v1609 = vrot.slane %v1607, 4
        %v1610 = vrot.slane %v514, 5
        %v1611 = vsel %vm1555, %v1609, %v1610
        %v1612 = vrot.slane %v1513, 5
        %v1613 = vrot.slane %v1612, 4
        %v1614 = vrot.slane %v476, 5
        %v1615 = vsel %vm1555, %v1613, %v1614
        %v1616 = vrot.slane %v1614, 4
        %v1617 = vrot.slane %v515, 5
        %v1618 = vsel %vm1555, %v1616, %v1617
        %v1619 = vrot.slane %v1514, 5
        %v1620 = vrot.slane %v1619, 4
        %v1621 = vrot.slane %v478, 5
        %v1622 = vsel %vm1555, %v1620, %v1621
        %v1623 = vrot.slane %v1621, 4
        %v1624 = vrot.slane %v516, 5
        %v1625 = vsel %vm1555, %v1623, %v1624
        %v1626 = vrot.slane %v1515, 5
        %v1627 = vrot.slane %v1626, 4
        %v1628 = vrot.slane %v480, 5
        %v1629 = vsel %vm1555, %v1627, %v1628
        %v1630 = vrot.slane %v1628, 4
        %v1631 = vrot.slane %v517, 5
        %v1632 = vsel %vm1555, %v1630, %v1631
        %v1633 = vrot.slane %v1516, 5
        %v1634 = vrot.slane %v1633, 4
        %v1635 = vrot.slane %v482, 5
        %v1636 = vsel %vm1555, %v1634, %v1635
        %v1637 = vrot.slane %v1635, 4
        %v1638 = vrot.slane %v518, 5
        %v1639 = vsel %vm1555, %v1637, %v1638
        %v1640 = vrot.slane %v1517, 5
        %v1641 = vrot.slane %v1640, 4
        %v1642 = vrot.slane %v484, 5
        %v1643 = vsel %vm1555, %v1641, %v1642
        %v1644 = vrot.slane %v1642, 4
        %v1645 = vrot.slane %v519, 5
        %v1646 = vsel %vm1555, %v1644, %v1645
        %v1647 = vrot.slane %v1518, 5
        %v1648 = vrot.slane %v1647, 4
        %v1649 = vrot.slane %v486, 5
        %v1650 = vsel %vm1555, %v1648, %v1649
        %v1651 = vrot.slane %v1649, 4
        %v1652 = vrot.slane %v520, 5
        %v1653 = vsel %vm1555, %v1651, %v1652
        %v1654 = vrot.slane %v1519, 5
        %v1655 = vrot.slane %v1654, 4
        %v1656 = vrot.slane %v488, 5
        %v1657 = vsel %vm1555, %v1655, %v1656
        %v1658 = vrot.slane %v1656, 4
        %v1659 = vrot.slane %v521, 5
        %v1660 = vsel %vm1555, %v1658, %v1659
        %v1661 = vrot.slane %v1520, 5
        %v1662 = vrot.slane %v1661, 4
        %v1663 = vrot.slane %v490, 5
        %v1664 = vsel %vm1555, %v1662, %v1663
        %v1665 = vrot.slane %v1663, 4
        %v1666 = vrot.slane %v522, 5
        %v1667 = vsel %vm1555, %v1665, %v1666
        %s1668 = scalar_lea.vmem %s1, 128
        %v1669 = vld [vmem:[%s1668] sm:$0xf]
        %v1670 = vld [vmem:[%s1668 + $0x4] sm:$0xf]
        %v1671 = vld [vmem:[%s1668 + $0x8] sm:$0xf]
        %v1672 = vld [vmem:[%s1668 + $0xc] sm:$0xf]
        %v1673 = vld [vmem:[%s1668 + $0x10] sm:$0xf]
        %v1674 = vld [vmem:[%s1668 + $0x14] sm:$0xf]
        %v1675 = vld [vmem:[%s1668 + $0x18] sm:$0xf]
        %v1676 = vld [vmem:[%s1668 + $0x1c] sm:$0xf]
        %v1677 = vld [vmem:[%s1668 + $0x20] sm:$0xf]
        %v1678 = vld [vmem:[%s1668 + $0x24] sm:$0xf]
        %v1679 = vld [vmem:[%s1668 + $0x28] sm:$0xf]
        %v1680 = vld [vmem:[%s1668 + $0x2c] sm:$0xf]
        %v1681 = vld [vmem:[%s1668 + $0x30] sm:$0xf]
        %v1682 = vld [vmem:[%s1668 + $0x34] sm:$0xf]
        %v1683 = vld [vmem:[%s1668 + $0x38] sm:$0xf]
        %v1684 = vld [vmem:[%s1668 + $0x3c] sm:$0xf]
        %v1685 = vunpack.c.l.b16 %v1559
        %v1686 = vunpack.c.l.b16 %v1562
        %v1687 = vunpack.c.l.b16 %v1566
        %v1688 = vunpack.c.l.b16 %v1569
        %v1689 = vunpack.c.l.b16 %v1573
        %v1690 = vunpack.c.l.b16 %v1576
        %v1691 = vunpack.c.l.b16 %v1580
        %v1692 = vunpack.c.l.b16 %v1583
        %v1693 = vunpack.c.l.b16 %v1587
        %v1694 = vunpack.c.l.b16 %v1590
        %v1695 = vunpack.c.l.b16 %v1594
        %v1696 = vunpack.c.l.b16 %v1597
        %v1697 = vunpack.c.l.b16 %v1601
        %v1698 = vunpack.c.l.b16 %v1604
        %v1699 = vunpack.c.l.b16 %v1608
        %v1700 = vunpack.c.l.b16 %v1611
        %v1701 = vunpack.c.l.b16 %v1615
        %v1702 = vunpack.c.l.b16 %v1618
        %v1703 = vunpack.c.l.b16 %v1622
        %v1704 = vunpack.c.l.b16 %v1625
        %v1705 = vunpack.c.l.b16 %v1629
        %v1706 = vunpack.c.l.b16 %v1632
        %v1707 = vunpack.c.l.b16 %v1636
        %v1708 = vunpack.c.l.b16 %v1639
        %v1709 = vunpack.c.l.b16 %v1643
        %v1710 = vunpack.c.l.b16 %v1646
        %v1711 = vunpack.c.l.b16 %v1650
        %v1712 = vunpack.c.l.b16 %v1653
        %v1713 = vunpack.c.l.b16 %v1657
        %v1714 = vunpack.c.l.b16 %v1660
        %v1715 = vunpack.c.l.b16 %v1664
        %v1716 = vunpack.c.l.b16 %v1667
        %v1717 = vpack.c.b16 %v1686, %v1685
        %v1718 = vpack.c.b16 %v1688, %v1687
        %v1719 = vpack.c.b16 %v1690, %v1689
        %v1720 = vpack.c.b16 %v1692, %v1691
        %v1721 = vpack.c.b16 %v1694, %v1693
        %v1722 = vpack.c.b16 %v1696, %v1695
        %v1723 = vpack.c.b16 %v1698, %v1697
        %v1724 = vpack.c.b16 %v1700, %v1699
        %v1725 = vpack.c.b16 %v1702, %v1701
        %v1726 = vpack.c.b16 %v1704, %v1703
        %v1727 = vpack.c.b16 %v1706, %v1705
        %v1728 = vpack.c.b16 %v1708, %v1707
        %v1729 = vpack.c.b16 %v1710, %v1709
        %v1730 = vpack.c.b16 %v1712, %v1711
        %v1731 = vpack.c.b16 %v1714, %v1713
        %v1732 = vpack.c.b16 %v1716, %v1715
        %v1765 = vunpack.c.l.b16 %v1669
        %v1766 = vunpack.c.l.b16 %v1670
        %v1767 = vunpack.c.l.b16 %v1671
        %v1768 = vunpack.c.l.b16 %v1672
        %v1769 = vunpack.c.l.b16 %v1673
        %v1770 = vunpack.c.l.b16 %v1674
        %v1771 = vunpack.c.l.b16 %v1675
        %v1772 = vunpack.c.l.b16 %v1676
        %v1773 = vunpack.c.l.b16 %v1677
        %v1774 = vunpack.c.l.b16 %v1678
        %v1775 = vunpack.c.l.b16 %v1679
        %v1776 = vunpack.c.l.b16 %v1680
        %v1777 = vunpack.c.l.b16 %v1681
        %v1778 = vunpack.c.l.b16 %v1682
        %v1779 = vunpack.c.l.b16 %v1683
        %v1780 = vunpack.c.l.b16 %v1684
        %v1781 = vpack.c.b16 %v1766, %v1765
        %v1782 = vpack.c.b16 %v1768, %v1767
        %v1783 = vpack.c.b16 %v1770, %v1769
        %v1784 = vpack.c.b16 %v1772, %v1771
        %v1785 = vpack.c.b16 %v1774, %v1773
        %v1786 = vpack.c.b16 %v1776, %v1775
        %v1787 = vpack.c.b16 %v1778, %v1777
        %v1788 = vpack.c.b16 %v1780, %v1779
        %1797 = vmatprep.subr.bf16.mxu0 0
        %1798 = vmatpush1.bf16.msra.mxu0 %v1781
        %1799 = vmatprep.subr.bf16.mxu0 0
        %1800 = vmatpush1.bf16.msra.mxu0 %v1782
        %1801 = vmatprep.subr.bf16.mxu0 0
        %1802 = vmatpush1.bf16.msra.mxu0 %v1783
        %1803 = vmatprep.subr.bf16.mxu0 0
        %1804 = vmatpush1.bf16.msra.mxu0 %v1784
        %1805 = vmatprep.subr.bf16.mxu0 0
        %1806 = vmatpush1.bf16.msra.mxu0 %v1785
        %1807 = vmatprep.subr.bf16.mxu0 0
        %1808 = vmatpush1.bf16.msra.mxu0 %v1786
        %1809 = vmatprep.subr.bf16.mxu0 0
        %1810 = vmatpush1.bf16.msra.mxu0 %v1787
        %1811 = vmatprep.subr.bf16.mxu0 0
        %1812 = vmatpush1.bf16.msra.mxu0 %v1788
        %1813 = vmatprep.subr.bf16.mxu0 0
        %1814 = vmatpush1.bf16.msra.mxu0 0
        %1815 = vmatprep.subr.bf16.mxu0 0
        %1816 = vmatpush1.bf16.msra.mxu0 0
        %1817 = vmatprep.subr.bf16.mxu0 0
        %1818 = vmatpush1.bf16.msra.mxu0 0
        %1819 = vmatprep.subr.bf16.mxu0 0
        %1820 = vmatpush1.bf16.msra.mxu0 0
        %1821 = vmatprep.subr.bf16.mxu0 0
        %1822 = vmatpush1.bf16.msra.mxu0 0
        %1823 = vmatprep.subr.bf16.mxu0 0
        %1824 = vmatpush1.bf16.msra.mxu0 0
        %1825 = vmatprep.subr.bf16.mxu0 0
        %1826 = vmatpush1.bf16.msra.mxu0 0
        %1827 = vmatprep.subr.bf16.mxu0 0
        %1828 = vmatpush1.bf16.msra.mxu0 0
        %1829 = vmatprep.mubr.bf16.mxu0 0
        %1830 = vmatmul.mubr.bf16.gmra.mrb[0].mxu0 %v1717
        %v1831 = vpop.f32.mrb[0].mxu0
        %v1832 = vadd.f32 0.0, %v1831
        %v1833 = vpop.f32.mrb[0].mxu0
        %v1834 = vpop.f32.mrb[0].mxu0
        %v1835 = vadd.f32 0.0, %v1834
        %v1836 = vpop.f32.mrb[0].mxu0
        %1837 = vmatprep.mubr.bf16.mxu0 0
        %1838 = vmatmul.mubr.bf16.gmra.mrb[0].mxu0 %v1718
        %v1839 = vpop.f32.mrb[0].mxu0
        %v1840 = vadd.f32 0.0, %v1839
        %v1841 = vpop.f32.mrb[0].mxu0
        %v1842 = vpop.f32.mrb[0].mxu0
        %v1843 = vadd.f32 0.0, %v1842
        %v1844 = vpop.f32.mrb[0].mxu0
        %1845 = vmatprep.mubr.bf16.mxu0 0
        %1846 = vmatmul.mubr.bf16.gmra.mrb[0].mxu0 %v1719
        %v1847 = vpop.f32.mrb[0].mxu0
        %v1848 = vadd.f32 0.0, %v1847
        %v1849 = vpop.f32.mrb[0].mxu0
        %v1850 = vpop.f32.mrb[0].mxu0
        %v1851 = vadd.f32 0.0, %v1850
        %v1852 = vpop.f32.mrb[0].mxu0
        %1853 = vmatprep.mubr.bf16.mxu0 0
        %1854 = vmatmul.mubr.bf16.gmra.mrb[0].mxu0 %v1720
        %v1855 = vpop.f32.mrb[0].mxu0
        %v1856 = vadd.f32 0.0, %v1855
        %v1857 = vpop.f32.mrb[0].mxu0
        %v1858 = vpop.f32.mrb[0].mxu0
        %v1859 = vadd.f32 0.0, %v1858
        %v1860 = vpop.f32.mrb[0].mxu0
        %1861 = vmatprep.mubr.bf16.mxu0 0
        %1862 = vmatmul.mubr.bf16.gmra.mrb[0].mxu0 %v1721
        %v1863 = vpop.f32.mrb[0].mxu0
        %v1864 = vadd.f32 0.0, %v1863
        %v1865 = vpop.f32.mrb[0].mxu0
        %v1866 = vpop.f32.mrb[0].mxu0
        %v1867 = vadd.f32 0.0, %v1866
        %v1868 = vpop.f32.mrb[0].mxu0
        %1869 = vmatprep.mubr.bf16.mxu0 0
        %1870 = vmatmul.mubr.bf16.gmra.mrb[0].mxu0 %v1722
        %v1871 = vpop.f32.mrb[0].mxu0
        %v1872 = vadd.f32 0.0, %v1871
        %v1873 = vpop.f32.mrb[0].mxu0
        %v1874 = vpop.f32.mrb[0].mxu0
        %v1875 = vadd.f32 0.0, %v1874
        %v1876 = vpop.f32.mrb[0].mxu0
        %1877 = vmatprep.mubr.bf16.mxu0 0
        %1878 = vmatmul.mubr.bf16.gmra.mrb[0].mxu0 %v1723
        %v1879 = vpop.f32.mrb[0].mxu0
        %v1880 = vadd.f32 0.0, %v1879
        %v1881 = vpop.f32.mrb[0].mxu0
        %v1882 = vpop.f32.mrb[0].mxu0
        %v1883 = vadd.f32 0.0, %v1882
        %v1884 = vpop.f32.mrb[0].mxu0
        %1885 = vmatprep.mubr.bf16.mxu0 0
        %1886 = vmatmul.mubr.bf16.gmra.mrb[0].mxu0 %v1724
        %v1887 = vpop.f32.mrb[0].mxu0
        %v1888 = vadd.f32 0.0, %v1887
        %v1889 = vpop.f32.mrb[0].mxu0
        %v1890 = vpop.f32.mrb[0].mxu0
        %v1891 = vadd.f32 0.0, %v1890
        %v1892 = vpop.f32.mrb[0].mxu0
        %1893 = vmatprep.mubr.bf16.mxu0 0
        %1894 = vmatmul.mubr.bf16.gmra.mrb[0].mxu0 %v1725
        %v1895 = vpop.f32.mrb[0].mxu0
        %v1896 = vadd.f32 0.0, %v1895
        %v1897 = vpop.f32.mrb[0].mxu0
        %v1898 = vpop.f32.mrb[0].mxu0
        %v1899 = vadd.f32 0.0, %v1898
        %v1900 = vpop.f32.mrb[0].mxu0
        %1901 = vmatprep.mubr.bf16.mxu0 0
        %1902 = vmatmul.mubr.bf16.gmra.mrb[0].mxu0 %v1726
        %v1903 = vpop.f32.mrb[0].mxu0
        %v1904 = vadd.f32 0.0, %v1903
        %v1905 = vpop.f32.mrb[0].mxu0
        %v1906 = vpop.f32.mrb[0].mxu0
        %v1907 = vadd.f32 0.0, %v1906
        %v1908 = vpop.f32.mrb[0].mxu0
        %1909 = vmatprep.mubr.bf16.mxu0 0
        %1910 = vmatmul.mubr.bf16.gmra.mrb[0].mxu0 %v1727
        %v1911 = vpop.f32.mrb[0].mxu0
        %v1912 = vadd.f32 0.0, %v1911
        %v1913 = vpop.f32.mrb[0].mxu0
        %v1914 = vpop.f32.mrb[0].mxu0
        %v1915 = vadd.f32 0.0, %v1914
        %v1916 = vpop.f32.mrb[0].mxu0
        %1917 = vmatprep.mubr.bf16.mxu0 0
        %1918 = vmatmul.mubr.bf16.gmra.mrb[0].mxu0 %v1728
        %v1919 = vpop.f32.mrb[0].mxu0
        %v1920 = vadd.f32 0.0, %v1919
        %v1921 = vpop.f32.mrb[0].mxu0
        %v1922 = vpop.f32.mrb[0].mxu0
        %v1923 = vadd.f32 0.0, %v1922
        %v1924 = vpop.f32.mrb[0].mxu0
        %1925 = vmatprep.mubr.bf16.mxu0 0
        %1926 = vmatmul.mubr.bf16.gmra.mrb[0].mxu0 %v1729
        %v1927 = vpop.f32.mrb[0].mxu0
        %v1928 = vadd.f32 0.0, %v1927
        %v1929 = vpop.f32.mrb[0].mxu0
        %v1930 = vpop.f32.mrb[0].mxu0
        %v1931 = vadd.f32 0.0, %v1930
        %v1932 = vpop.f32.mrb[0].mxu0
        %1933 = vmatprep.mubr.bf16.mxu0 0
        %1934 = vmatmul.mubr.bf16.gmra.mrb[0].mxu0 %v1730
        %v1935 = vpop.f32.mrb[0].mxu0
        %v1936 = vadd.f32 0.0, %v1935
        %v1937 = vpop.f32.mrb[0].mxu0
        %v1938 = vpop.f32.mrb[0].mxu0
        %v1939 = vadd.f32 0.0, %v1938
        %v1940 = vpop.f32.mrb[0].mxu0
        %1941 = vmatprep.mubr.bf16.mxu0 0
        %1942 = vmatmul.mubr.bf16.gmra.mrb[0].mxu0 %v1731
        %v1943 = vpop.f32.mrb[0].mxu0
        %v1944 = vadd.f32 0.0, %v1943
        %v1945 = vpop.f32.mrb[0].mxu0
        %v1946 = vpop.f32.mrb[0].mxu0
        %v1947 = vadd.f32 0.0, %v1946
        %v1948 = vpop.f32.mrb[0].mxu0
        %1949 = vmatprep.mubr.bf16.mxu0 0
        %1950 = vmatmul.mubr.bf16.gmra.mrb[0].mxu0 %v1732
        %v1951 = vpop.f32.mrb[0].mxu0
        %v1952 = vadd.f32 0.0, %v1951
        %v1953 = vpop.f32.mrb[0].mxu0
        %v1954 = vpop.f32.mrb[0].mxu0
        %v1955 = vadd.f32 0.0, %v1954
        %v1956 = vpop.f32.mrb[0].mxu0
        %1957 = vdwg.mxu0
        %v1958 = vadd.f32 %v1379, %v1832
        %v1959 = vadd.f32 %v1382, %v1835
        %v1960 = vadd.f32 %v1387, %v1840
        %v1961 = vadd.f32 %v1390, %v1843
        %v1962 = vadd.f32 %v1395, %v1848
        %v1963 = vadd.f32 %v1398, %v1851
        %v1964 = vadd.f32 %v1403, %v1856
        %v1965 = vadd.f32 %v1406, %v1859
        %v1966 = vadd.f32 %v1411, %v1864
        %v1967 = vadd.f32 %v1414, %v1867
        %v1968 = vadd.f32 %v1419, %v1872
        %v1969 = vadd.f32 %v1422, %v1875
        %v1970 = vadd.f32 %v1427, %v1880
        %v1971 = vadd.f32 %v1430, %v1883
        %v1972 = vadd.f32 %v1435, %v1888
        %v1973 = vadd.f32 %v1438, %v1891
        %v1974 = vadd.f32 %v1443, %v1896
        %v1975 = vadd.f32 %v1446, %v1899
        %v1976 = vadd.f32 %v1451, %v1904
        %v1977 = vadd.f32 %v1454, %v1907
        %v1978 = vadd.f32 %v1459, %v1912
        %v1979 = vadd.f32 %v1462, %v1915
        %v1980 = vadd.f32 %v1467, %v1920
        %v1981 = vadd.f32 %v1470, %v1923
        %v1982 = vadd.f32 %v1475, %v1928
        %v1983 = vadd.f32 %v1478, %v1931
        %v1984 = vadd.f32 %v1483, %v1936
        %v1985 = vadd.f32 %v1486, %v1939
        %v1986 = vadd.f32 %v1491, %v1944
        %v1987 = vadd.f32 %v1494, %v1947
        %v1988 = vadd.f32 %v1499, %v1952
        %v1989 = vadd.f32 %v1502, %v1955
        %s1990 = scalar_lea.vmem [#allocation2], 12
        %v1991 = vld [vmem:[%s1990] sm:$0xf]
        %v1992 = vld [vmem:[%s1990 + $0x4] sm:$0xf]
        %v1993 = vld [vmem:[%s1990 + $0xc] sm:$0xf]
        %v1994 = vld [vmem:[%s1990 + $0x10] sm:$0xf]
        %v1995 = vld [vmem:[%s1990 + $0x18] sm:$0xf]
        %v1996 = vld [vmem:[%s1990 + $0x1c] sm:$0xf]
        %v1997 = vld [vmem:[%s1990 + $0x24] sm:$0xf]
        %v1998 = vld [vmem:[%s1990 + $0x28] sm:$0xf]
        %v1999 = vld [vmem:[%s1990 + $0x30] sm:$0xf]
        %v2000 = vld [vmem:[%s1990 + $0x34] sm:$0xf]
        %v2001 = vld [vmem:[%s1990 + $0x3c] sm:$0xf]
        %v2002 = vld [vmem:[%s1990 + $0x40] sm:$0xf]
        %v2003 = vld [vmem:[%s1990 + $0x48] sm:$0xf]
        %v2004 = vld [vmem:[%s1990 + $0x4c] sm:$0xf]
        %v2005 = vld [vmem:[%s1990 + $0x54] sm:$0xf]
        %v2006 = vld [vmem:[%s1990 + $0x58] sm:$0xf]
        %v2007 = vld [vmem:[%s1990 + $0x60] sm:$0xf]
        %v2008 = vld [vmem:[%s1990 + $0x64] sm:$0xf]
        %v2009 = vld [vmem:[%s1990 + $0x6c] sm:$0xf]
        %v2010 = vld [vmem:[%s1990 + $0x70] sm:$0xf]
        %v2011 = vld [vmem:[%s1990 + $0x78] sm:$0xf]
        %v2012 = vld [vmem:[%s1990 + $0x7c] sm:$0xf]
        %v2013 = vld [vmem:[%s1990 + $0x84] sm:$0xf]
        %v2014 = vld [vmem:[%s1990 + $0x88] sm:$0xf]
        %v2015 = vld [vmem:[%s1990 + $0x90] sm:$0xf]
        %v2016 = vld [vmem:[%s1990 + $0x94] sm:$0xf]
        %v2017 = vld [vmem:[%s1990 + $0x9c] sm:$0xf]
        %v2018 = vld [vmem:[%s1990 + $0xa0] sm:$0xf]
        %v2019 = vld [vmem:[%s1990 + $0xa8] sm:$0xf]
        %v2020 = vld [vmem:[%s1990 + $0xac] sm:$0xf]
        %v2021 = vld [vmem:[%s1990 + $0xb4] sm:$0xf]
        %v2022 = vld [vmem:[%s1990 + $0xb8] sm:$0xf]
        %s2023 = scalar_lea.vmem %s1, 192
        %v2024 = vld [vmem:[%s2023] sm:$0xf]
        %v2025 = vld [vmem:[%s2023 + $0x4] sm:$0xf]
        %v2026 = vld [vmem:[%s2023 + $0x8] sm:$0xf]
        %v2027 = vld [vmem:[%s2023 + $0xc] sm:$0xf]
        %v2028 = vld [vmem:[%s2023 + $0x10] sm:$0xf]
        %v2029 = vld [vmem:[%s2023 + $0x14] sm:$0xf]
        %v2030 = vld [vmem:[%s2023 + $0x18] sm:$0xf]
        %v2031 = vld [vmem:[%s2023 + $0x1c] sm:$0xf]
        %v2032 = vld [vmem:[%s2023 + $0x20] sm:$0xf]
        %v2033 = vld [vmem:[%s2023 + $0x24] sm:$0xf]
        %v2034 = vld [vmem:[%s2023 + $0x28] sm:$0xf]
        %v2035 = vld [vmem:[%s2023 + $0x2c] sm:$0xf]
        %v2036 = vld [vmem:[%s2023 + $0x30] sm:$0xf]
        %v2037 = vld [vmem:[%s2023 + $0x34] sm:$0xf]
        %v2038 = vld [vmem:[%s2023 + $0x38] sm:$0xf]
        %v2039 = vld [vmem:[%s2023 + $0x3c] sm:$0xf]
        %v2072 = vunpack.c.l.b16 %v1991
        %v2073 = vunpack.c.l.b16 %v1992
        %v2074 = vunpack.c.l.b16 %v1993
        %v2075 = vunpack.c.l.b16 %v1994
        %v2076 = vunpack.c.l.b16 %v1995
        %v2077 = vunpack.c.l.b16 %v1996
        %v2078 = vunpack.c.l.b16 %v1997
        %v2079 = vunpack.c.l.b16 %v1998
        %v2080 = vunpack.c.l.b16 %v1999
        %v2081 = vunpack.c.l.b16 %v2000
        %v2082 = vunpack.c.l.b16 %v2001
        %v2083 = vunpack.c.l.b16 %v2002
        %v2084 = vunpack.c.l.b16 %v2003
        %v2085 = vunpack.c.l.b16 %v2004
        %v2086 = vunpack.c.l.b16 %v2005
        %v2087 = vunpack.c.l.b16 %v2006
        %v2088 = vunpack.c.l.b16 %v2007
        %v2089 = vunpack.c.l.b16 %v2008
        %v2090 = vunpack.c.l.b16 %v2009
        %v2091 = vunpack.c.l.b16 %v2010
        %v2092 = vunpack.c.l.b16 %v2011
        %v2093 = vunpack.c.l.b16 %v2012
        %v2094 = vunpack.c.l.b16 %v2013
        %v2095 = vunpack.c.l.b16 %v2014
        %v2096 = vunpack.c.l.b16 %v2015
        %v2097 = vunpack.c.l.b16 %v2016
        %v2098 = vunpack.c.l.b16 %v2017
        %v2099 = vunpack.c.l.b16 %v2018
        %v2100 = vunpack.c.l.b16 %v2019
        %v2101 = vunpack.c.l.b16 %v2020
        %v2102 = vunpack.c.l.b16 %v2021
        %v2103 = vunpack.c.l.b16 %v2022
        %v2104 = vpack.c.b16 %v2073, %v2072
        %v2105 = vpack.c.b16 %v2075, %v2074
        %v2106 = vpack.c.b16 %v2077, %v2076
        %v2107 = vpack.c.b16 %v2079, %v2078
        %v2108 = vpack.c.b16 %v2081, %v2080
        %v2109 = vpack.c.b16 %v2083, %v2082
        %v2110 = vpack.c.b16 %v2085, %v2084
        %v2111 = vpack.c.b16 %v2087, %v2086
        %v2112 = vpack.c.b16 %v2089, %v2088
        %v2113 = vpack.c.b16 %v2091, %v2090
        %v2114 = vpack.c.b16 %v2093, %v2092
        %v2115 = vpack.c.b16 %v2095, %v2094
        %v2116 = vpack.c.b16 %v2097, %v2096
        %v2117 = vpack.c.b16 %v2099, %v2098
        %v2118 = vpack.c.b16 %v2101, %v2100
        %v2119 = vpack.c.b16 %v2103, %v2102
        %v2152 = vunpack.c.l.b16 %v2024
        %v2153 = vunpack.c.l.b16 %v2025
        %v2154 = vunpack.c.l.b16 %v2026
        %v2155 = vunpack.c.l.b16 %v2027
        %v2156 = vunpack.c.l.b16 %v2028
        %v2157 = vunpack.c.l.b16 %v2029
        %v2158 = vunpack.c.l.b16 %v2030
        %v2159 = vunpack.c.l.b16 %v2031
        %v2160 = vunpack.c.l.b16 %v2032
        %v2161 = vunpack.c.l.b16 %v2033
        %v2162 = vunpack.c.l.b16 %v2034
        %v2163 = vunpack.c.l.b16 %v2035
        %v2164 = vunpack.c.l.b16 %v2036
        %v2165 = vunpack.c.l.b16 %v2037
        %v2166 = vunpack.c.l.b16 %v2038
        %v2167 = vunpack.c.l.b16 %v2039
        %v2168 = vpack.c.b16 %v2153, %v2152
        %v2169 = vpack.c.b16 %v2155, %v2154
        %v2170 = vpack.c.b16 %v2157, %v2156
        %v2171 = vpack.c.b16 %v2159, %v2158
        %v2172 = vpack.c.b16 %v2161, %v2160
        %v2173 = vpack.c.b16 %v2163, %v2162
        %v2174 = vpack.c.b16 %v2165, %v2164
        %v2175 = vpack.c.b16 %v2167, %v2166
        %2184 = vmatprep.subr.bf16.mxu0 0
        %2185 = vmatpush1.bf16.msra.mxu0 %v2168
        %2186 = vmatprep.subr.bf16.mxu0 0
        %2187 = vmatpush1.bf16.msra.mxu0 %v2169
        %2188 = vmatprep.subr.bf16.mxu0 0
        %2189 = vmatpush1.bf16.msra.mxu0 %v2170
        %2190 = vmatprep.subr.bf16.mxu0 0
        %2191 = vmatpush1.bf16.msra.mxu0 %v2171
        %2192 = vmatprep.subr.bf16.mxu0 0
        %2193 = vmatpush1.bf16.msra.mxu0 %v2172
        %2194 = vmatprep.subr.bf16.mxu0 0
        %2195 = vmatpush1.bf16.msra.mxu0 %v2173
        %2196 = vmatprep.subr.bf16.mxu0 0
        %2197 = vmatpush1.bf16.msra.mxu0 %v2174
        %2198 = vmatprep.subr.bf16.mxu0 0
        %2199 = vmatpush1.bf16.msra.mxu0 %v2175
        %2200 = vmatprep.subr.bf16.mxu0 0
        %2201 = vmatpush1.bf16.msra.mxu0 0
        %2202 = vmatprep.subr.bf16.mxu0 0
        %2203 = vmatpush1.bf16.msra.mxu0 0
        %2204 = vmatprep.subr.bf16.mxu0 0
        %2205 = vmatpush1.bf16.msra.mxu0 0
        %2206 = vmatprep.subr.bf16.mxu0 0
        %2207 = vmatpush1.bf16.msra.mxu0 0
        %2208 = vmatprep.subr.bf16.mxu0 0
        %2209 = vmatpush1.bf16.msra.mxu0 0
        %2210 = vmatprep.subr.bf16.mxu0 0
        %2211 = vmatpush1.bf16.msra.mxu0 0
        %2212 = vmatprep.subr.bf16.mxu0 0
        %2213 = vmatpush1.bf16.msra.mxu0 0
        %2214 = vmatprep.subr.bf16.mxu0 0
        %2215 = vmatpush1.bf16.msra.mxu0 0
        %2216 = vmatprep.mubr.bf16.mxu0 0
        %2217 = vmatmul.mubr.bf16.gmra.mrb[0].mxu0 %v2104
        %v2218 = vpop.f32.mrb[0].mxu0
        %v2219 = vadd.f32 0.0, %v2218
        %v2220 = vpop.f32.mrb[0].mxu0
        %v2221 = vpop.f32.mrb[0].mxu0
        %v2222 = vadd.f32 0.0, %v2221
        %v2223 = vpop.f32.mrb[0].mxu0
        %2224 = vmatprep.mubr.bf16.mxu0 0
        %2225 = vmatmul.mubr.bf16.gmra.mrb[0].mxu0 %v2105
        %v2226 = vpop.f32.mrb[0].mxu0
        %v2227 = vadd.f32 0.0, %v2226
        %v2228 = vpop.f32.mrb[0].mxu0
        %v2229 = vpop.f32.mrb[0].mxu0
        %v2230 = vadd.f32 0.0, %v2229
        %v2231 = vpop.f32.mrb[0].mxu0
        %2232 = vmatprep.mubr.bf16.mxu0 0
        %2233 = vmatmul.mubr.bf16.gmra.mrb[0].mxu0 %v2106
        %v2234 = vpop.f32.mrb[0].mxu0
        %v2235 = vadd.f32 0.0, %v2234
        %v2236 = vpop.f32.mrb[0].mxu0
        %v2237 = vpop.f32.mrb[0].mxu0
        %v2238 = vadd.f32 0.0, %v2237
        %v2239 = vpop.f32.mrb[0].mxu0
        %2240 = vmatprep.mubr.bf16.mxu0 0
        %2241 = vmatmul.mubr.bf16.gmra.mrb[0].mxu0 %v2107
        %v2242 = vpop.f32.mrb[0].mxu0
        %v2243 = vadd.f32 0.0, %v2242
        %v2244 = vpop.f32.mrb[0].mxu0
        %v2245 = vpop.f32.mrb[0].mxu0
        %v2246 = vadd.f32 0.0, %v2245
        %v2247 = vpop.f32.mrb[0].mxu0
        %2248 = vmatprep.mubr.bf16.mxu0 0
        %2249 = vmatmul.mubr.bf16.gmra.mrb[0].mxu0 %v2108
        %v2250 = vpop.f32.mrb[0].mxu0
        %v2251 = vadd.f32 0.0, %v2250
        %v2252 = vpop.f32.mrb[0].mxu0
        %v2253 = vpop.f32.mrb[0].mxu0
        %v2254 = vadd.f32 0.0, %v2253
        %v2255 = vpop.f32.mrb[0].mxu0
        %2256 = vmatprep.mubr.bf16.mxu0 0
        %2257 = vmatmul.mubr.bf16.gmra.mrb[0].mxu0 %v2109
        %v2258 = vpop.f32.mrb[0].mxu0
        %v2259 = vadd.f32 0.0, %v2258
        %v2260 = vpop.f32.mrb[0].mxu0
        %v2261 = vpop.f32.mrb[0].mxu0
        %v2262 = vadd.f32 0.0, %v2261
        %v2263 = vpop.f32.mrb[0].mxu0
        %2264 = vmatprep.mubr.bf16.mxu0 0
        %2265 = vmatmul.mubr.bf16.gmra.mrb[0].mxu0 %v2110
        %v2266 = vpop.f32.mrb[0].mxu0
        %v2267 = vadd.f32 0.0, %v2266
        %v2268 = vpop.f32.mrb[0].mxu0
        %v2269 = vpop.f32.mrb[0].mxu0
        %v2270 = vadd.f32 0.0, %v2269
        %v2271 = vpop.f32.mrb[0].mxu0
        %2272 = vmatprep.mubr.bf16.mxu0 0
        %2273 = vmatmul.mubr.bf16.gmra.mrb[0].mxu0 %v2111
        %v2274 = vpop.f32.mrb[0].mxu0
        %v2275 = vadd.f32 0.0, %v2274
        %v2276 = vpop.f32.mrb[0].mxu0
        %v2277 = vpop.f32.mrb[0].mxu0
        %v2278 = vadd.f32 0.0, %v2277
        %v2279 = vpop.f32.mrb[0].mxu0
        %2280 = vmatprep.mubr.bf16.mxu0 0
        %2281 = vmatmul.mubr.bf16.gmra.mrb[0].mxu0 %v2112
        %v2282 = vpop.f32.mrb[0].mxu0
        %v2283 = vadd.f32 0.0, %v2282
        %v2284 = vpop.f32.mrb[0].mxu0
        %v2285 = vpop.f32.mrb[0].mxu0
        %v2286 = vadd.f32 0.0, %v2285
        %v2287 = vpop.f32.mrb[0].mxu0
        %2288 = vmatprep.mubr.bf16.mxu0 0
        %2289 = vmatmul.mubr.bf16.gmra.mrb[0].mxu0 %v2113
        %v2290 = vpop.f32.mrb[0].mxu0
        %v2291 = vadd.f32 0.0, %v2290
        %v2292 = vpop.f32.mrb[0].mxu0
        %v2293 = vpop.f32.mrb[0].mxu0
        %v2294 = vadd.f32 0.0, %v2293
        %v2295 = vpop.f32.mrb[0].mxu0
        %2296 = vmatprep.mubr.bf16.mxu0 0
        %2297 = vmatmul.mubr.bf16.gmra.mrb[0].mxu0 %v2114
        %v2298 = vpop.f32.mrb[0].mxu0
        %v2299 = vadd.f32 0.0, %v2298
        %v2300 = vpop.f32.mrb[0].mxu0
        %v2301 = vpop.f32.mrb[0].mxu0
        %v2302 = vadd.f32 0.0, %v2301
        %v2303 = vpop.f32.mrb[0].mxu0
        %2304 = vmatprep.mubr.bf16.mxu0 0
        %2305 = vmatmul.mubr.bf16.gmra.mrb[0].mxu0 %v2115
        %v2306 = vpop.f32.mrb[0].mxu0
        %v2307 = vadd.f32 0.0, %v2306
        %v2308 = vpop.f32.mrb[0].mxu0
        %v2309 = vpop.f32.mrb[0].mxu0
        %v2310 = vadd.f32 0.0, %v2309
        %v2311 = vpop.f32.mrb[0].mxu0
        %2312 = vmatprep.mubr.bf16.mxu0 0
        %2313 = vmatmul.mubr.bf16.gmra.mrb[0].mxu0 %v2116
        %v2314 = vpop.f32.mrb[0].mxu0
        %v2315 = vadd.f32 0.0, %v2314
        %v2316 = vpop.f32.mrb[0].mxu0
        %v2317 = vpop.f32.mrb[0].mxu0
        %v2318 = vadd.f32 0.0, %v2317
        %v2319 = vpop.f32.mrb[0].mxu0
        %2320 = vmatprep.mubr.bf16.mxu0 0
        %2321 = vmatmul.mubr.bf16.gmra.mrb[0].mxu0 %v2117
        %v2322 = vpop.f32.mrb[0].mxu0
        %v2323 = vadd.f32 0.0, %v2322
        %v2324 = vpop.f32.mrb[0].mxu0
        %v2325 = vpop.f32.mrb[0].mxu0
        %v2326 = vadd.f32 0.0, %v2325
        %v2327 = vpop.f32.mrb[0].mxu0
        %2328 = vmatprep.mubr.bf16.mxu0 0
        %2329 = vmatmul.mubr.bf16.gmra.mrb[0].mxu0 %v2118
        %v2330 = vpop.f32.mrb[0].mxu0
        %v2331 = vadd.f32 0.0, %v2330
        %v2332 = vpop.f32.mrb[0].mxu0
        %v2333 = vpop.f32.mrb[0].mxu0
        %v2334 = vadd.f32 0.0, %v2333
        %v2335 = vpop.f32.mrb[0].mxu0
        %2336 = vmatprep.mubr.bf16.mxu0 0
        %2337 = vmatmul.mubr.bf16.gmra.mrb[0].mxu0 %v2119
        %v2338 = vpop.f32.mrb[0].mxu0
        %v2339 = vadd.f32 0.0, %v2338
        %v2340 = vpop.f32.mrb[0].mxu0
        %v2341 = vpop.f32.mrb[0].mxu0
        %v2342 = vadd.f32 0.0, %v2341
        %v2343 = vpop.f32.mrb[0].mxu0
        %2344 = vdwg.mxu0
        %v2345 = vadd.f32 %v1958, %v2219
        %v2346 = vadd.f32 %v1959, %v2222
        %v2347 = vadd.f32 %v1960, %v2227
        %v2348 = vadd.f32 %v1961, %v2230
        %v2349 = vadd.f32 %v1962, %v2235
        %v2350 = vadd.f32 %v1963, %v2238
        %v2351 = vadd.f32 %v1964, %v2243
        %v2352 = vadd.f32 %v1965, %v2246
        %v2353 = vadd.f32 %v1966, %v2251
        %v2354 = vadd.f32 %v1967, %v2254
        %v2355 = vadd.f32 %v1968, %v2259
        %v2356 = vadd.f32 %v1969, %v2262
        %v2357 = vadd.f32 %v1970, %v2267
        %v2358 = vadd.f32 %v1971, %v2270
        %v2359 = vadd.f32 %v1972, %v2275
        %v2360 = vadd.f32 %v1973, %v2278
        %v2361 = vadd.f32 %v1974, %v2283
        %v2362 = vadd.f32 %v1975, %v2286
        %v2363 = vadd.f32 %v1976, %v2291
        %v2364 = vadd.f32 %v1977, %v2294
        %v2365 = vadd.f32 %v1978, %v2299
        %v2366 = vadd.f32 %v1979, %v2302
        %v2367 = vadd.f32 %v1980, %v2307
        %v2368 = vadd.f32 %v1981, %v2310
        %v2369 = vadd.f32 %v1982, %v2315
        %v2370 = vadd.f32 %v1983, %v2318
        %v2371 = vadd.f32 %v1984, %v2323
        %v2372 = vadd.f32 %v1985, %v2326
        %v2373 = vadd.f32 %v1986, %v2331
        %v2374 = vadd.f32 %v1987, %v2334
        %v2375 = vadd.f32 %v1988, %v2339
        %v2376 = vadd.f32 %v1989, %v2342
        %v2377 = vld [vmem:[%s1990] sm:$0xf]
        %v2378 = vld [vmem:[%s1990 + $0x4] sm:$0xf]
        %v2379 = vld [vmem:[%s1990 + $0x8] sm:$0x1]
        %v2380 = vld [vmem:[%s1990 + $0xc] sm:$0xf]
        %v2381 = vld [vmem:[%s1990 + $0x10] sm:$0xf]
        %v2382 = vld [vmem:[%s1990 + $0x14] sm:$0x1]
        %v2383 = vld [vmem:[%s1990 + $0x18] sm:$0xf]
        %v2384 = vld [vmem:[%s1990 + $0x1c] sm:$0xf]
        %v2385 = vld [vmem:[%s1990 + $0x20] sm:$0x1]
        %v2386 = vld [vmem:[%s1990 + $0x24] sm:$0xf]
        %v2387 = vld [vmem:[%s1990 + $0x28] sm:$0xf]
        %v2388 = vld [vmem:[%s1990 + $0x2c] sm:$0x1]
        %v2389 = vld [vmem:[%s1990 + $0x30] sm:$0xf]
        %v2390 = vld [vmem:[%s1990 + $0x34] sm:$0xf]
        %v2391 = vld [vmem:[%s1990 + $0x38] sm:$0x1]
        %v2392 = vld [vmem:[%s1990 + $0x3c] sm:$0xf]
        %v2393 = vld [vmem:[%s1990 + $0x40] sm:$0xf]
        %v2394 = vld [vmem:[%s1990 + $0x44] sm:$0x1]
        %v2395 = vld [vmem:[%s1990 + $0x48] sm:$0xf]
        %v2396 = vld [vmem:[%s1990 + $0x4c] sm:$0xf]
        %v2397 = vld [vmem:[%s1990 + $0x50] sm:$0x1]
        %v2398 = vld [vmem:[%s1990 + $0x54] sm:$0xf]
        %v2399 = vld [vmem:[%s1990 + $0x58] sm:$0xf]
        %v2400 = vld [vmem:[%s1990 + $0x5c] sm:$0x1]
        %v2401 = vld [vmem:[%s1990 + $0x60] sm:$0xf]
        %v2402 = vld [vmem:[%s1990 + $0x64] sm:$0xf]
        %v2403 = vld [vmem:[%s1990 + $0x68] sm:$0x1]
        %v2404 = vld [vmem:[%s1990 + $0x6c] sm:$0xf]
        %v2405 = vld [vmem:[%s1990 + $0x70] sm:$0xf]
        %v2406 = vld [vmem:[%s1990 + $0x74] sm:$0x1]
        %v2407 = vld [vmem:[%s1990 + $0x78] sm:$0xf]
        %v2408 = vld [vmem:[%s1990 + $0x7c] sm:$0xf]
        %v2409 = vld [vmem:[%s1990 + $0x80] sm:$0x1]
        %v2410 = vld [vmem:[%s1990 + $0x84] sm:$0xf]
        %v2411 = vld [vmem:[%s1990 + $0x88] sm:$0xf]
        %v2412 = vld [vmem:[%s1990 + $0x8c] sm:$0x1]
        %v2413 = vld [vmem:[%s1990 + $0x90] sm:$0xf]
        %v2414 = vld [vmem:[%s1990 + $0x94] sm:$0xf]
        %v2415 = vld [vmem:[%s1990 + $0x98] sm:$0x1]
        %v2416 = vld [vmem:[%s1990 + $0x9c] sm:$0xf]
        %v2417 = vld [vmem:[%s1990 + $0xa0] sm:$0xf]
        %v2418 = vld [vmem:[%s1990 + $0xa4] sm:$0x1]
        %v2419 = vld [vmem:[%s1990 + $0xa8] sm:$0xf]
        %v2420 = vld [vmem:[%s1990 + $0xac] sm:$0xf]
        %v2421 = vld [vmem:[%s1990 + $0xb0] sm:$0x1]
        %v2422 = vld [vmem:[%s1990 + $0xb4] sm:$0xf]
        %v2423 = vld [vmem:[%s1990 + $0xb8] sm:$0xf]
        %v2424 = vld [vmem:[%s1990 + $0xbc] sm:$0x1]
        %v2426 = vshrl.u32 %v2377, 16
        %v2428 = vrot.slane %v2426, 4
        %v2429 = vshll.u32 %v2377, 16
        %v2431 = vrot.slane %v2429, 5
        %v2432 = vor.u32 %v2428, %v2431
        %v2433 = vrot.slane %v2432, 4
        %v2435 = vshll.u32 %v2378, 16
        %v2437 = vrot.slane %v2435, 5
        %v2438 = vsel %vm525, %v2433, %v2437
        %v2439 = vshrl.u32 %v2378, 16
        %v2441 = vrot.slane %v2439, 4
        %v2442 = vor.u32 %v2441, %v2437
        %v2443 = vrot.slane %v2442, 4
        %v2445 = vshll.u32 %v2379, 16
        %v2447 = vrot.slane %v2445, 5
        %v2448 = vsel %vm525, %v2443, %v2447
        %v2450 = vshrl.u32 %v2380, 16
        %v2452 = vrot.slane %v2450, 4
        %v2453 = vshll.u32 %v2380, 16
        %v2455 = vrot.slane %v2453, 5
        %v2456 = vor.u32 %v2452, %v2455
        %v2457 = vrot.slane %v2456, 4
        %v2459 = vshll.u32 %v2381, 16
        %v2461 = vrot.slane %v2459, 5
        %v2462 = vsel %vm525, %v2457, %v2461
        %v2463 = vshrl.u32 %v2381, 16
        %v2465 = vrot.slane %v2463, 4
        %v2466 = vor.u32 %v2465, %v2461
        %v2467 = vrot.slane %v2466, 4
        %v2469 = vshll.u32 %v2382, 16
        %v2471 = vrot.slane %v2469, 5
        %v2472 = vsel %vm525, %v2467, %v2471
        %v2474 = vshrl.u32 %v2383, 16
        %v2476 = vrot.slane %v2474, 4
        %v2477 = vshll.u32 %v2383, 16
        %v2479 = vrot.slane %v2477, 5
        %v2480 = vor.u32 %v2476, %v2479
        %v2481 = vrot.slane %v2480, 4
        %v2483 = vshll.u32 %v2384, 16
        %v2485 = vrot.slane %v2483, 5
        %v2486 = vsel %vm525, %v2481, %v2485
        %v2487 = vshrl.u32 %v2384, 16
        %v2489 = vrot.slane %v2487, 4
        %v2490 = vor.u32 %v2489, %v2485
        %v2491 = vrot.slane %v2490, 4
        %v2493 = vshll.u32 %v2385, 16
        %v2495 = vrot.slane %v2493, 5
        %v2496 = vsel %vm525, %v2491, %v2495
        %v2498 = vshrl.u32 %v2386, 16
        %v2500 = vrot.slane %v2498, 4
        %v2501 = vshll.u32 %v2386, 16
        %v2503 = vrot.slane %v2501, 5
        %v2504 = vor.u32 %v2500, %v2503
        %v2505 = vrot.slane %v2504, 4
        %v2507 = vshll.u32 %v2387, 16
        %v2509 = vrot.slane %v2507, 5
        %v2510 = vsel %vm525, %v2505, %v2509
        %v2511 = vshrl.u32 %v2387, 16
        %v2513 = vrot.slane %v2511, 4
        %v2514 = vor.u32 %v2513, %v2509
        %v2515 = vrot.slane %v2514, 4
        %v2517 = vshll.u32 %v2388, 16
        %v2519 = vrot.slane %v2517, 5
        %v2520 = vsel %vm525, %v2515, %v2519
        %v2522 = vshrl.u32 %v2389, 16
        %v2524 = vrot.slane %v2522, 4
        %v2525 = vshll.u32 %v2389, 16
        %v2527 = vrot.slane %v2525, 5
        %v2528 = vor.u32 %v2524, %v2527
        %v2529 = vrot.slane %v2528, 4
        %v2531 = vshll.u32 %v2390, 16
        %v2533 = vrot.slane %v2531, 5
        %v2534 = vsel %vm525, %v2529, %v2533
        %v2535 = vshrl.u32 %v2390, 16
        %v2537 = vrot.slane %v2535, 4
        %v2538 = vor.u32 %v2537, %v2533
        %v2539 = vrot.slane %v2538, 4
        %v2541 = vshll.u32 %v2391, 16
        %v2543 = vrot.slane %v2541, 5
        %v2544 = vsel %vm525, %v2539, %v2543
        %v2546 = vshrl.u32 %v2392, 16
        %v2548 = vrot.slane %v2546, 4
        %v2549 = vshll.u32 %v2392, 16
        %v2551 = vrot.slane %v2549, 5
        %v2552 = vor.u32 %v2548, %v2551
        %v2553 = vrot.slane %v2552, 4
        %v2555 = vshll.u32 %v2393, 16
        %v2557 = vrot.slane %v2555, 5
        %v2558 = vsel %vm525, %v2553, %v2557
        %v2559 = vshrl.u32 %v2393, 16
        %v2561 = vrot.slane %v2559, 4
        %v2562 = vor.u32 %v2561, %v2557
        %v2563 = vrot.slane %v2562, 4
        %v2565 = vshll.u32 %v2394, 16
        %v2567 = vrot.slane %v2565, 5
        %v2568 = vsel %vm525, %v2563, %v2567
        %v2570 = vshrl.u32 %v2395, 16
        %v2572 = vrot.slane %v2570, 4
        %v2573 = vshll.u32 %v2395, 16
        %v2575 = vrot.slane %v2573, 5
        %v2576 = vor.u32 %v2572, %v2575
        %v2577 = vrot.slane %v2576, 4
        %v2579 = vshll.u32 %v2396, 16
        %v2581 = vrot.slane %v2579, 5
        %v2582 = vsel %vm525, %v2577, %v2581
        %v2583 = vshrl.u32 %v2396, 16
        %v2585 = vrot.slane %v2583, 4
        %v2586 = vor.u32 %v2585, %v2581
        %v2587 = vrot.slane %v2586, 4
        %v2589 = vshll.u32 %v2397, 16
        %v2591 = vrot.slane %v2589, 5
        %v2592 = vsel %vm525, %v2587, %v2591
        %v2594 = vshrl.u32 %v2398, 16
        %v2596 = vrot.slane %v2594, 4
        %v2597 = vshll.u32 %v2398, 16
        %v2599 = vrot.slane %v2597, 5
        %v2600 = vor.u32 %v2596, %v2599
        %v2601 = vrot.slane %v2600, 4
        %v2603 = vshll.u32 %v2399, 16
        %v2605 = vrot.slane %v2603, 5
        %v2606 = vsel %vm525, %v2601, %v2605
        %v2607 = vshrl.u32 %v2399, 16
        %v2609 = vrot.slane %v2607, 4
        %v2610 = vor.u32 %v2609, %v2605
        %v2611 = vrot.slane %v2610, 4
        %v2613 = vshll.u32 %v2400, 16
        %v2615 = vrot.slane %v2613, 5
        %v2616 = vsel %vm525, %v2611, %v2615
        %v2618 = vshrl.u32 %v2401, 16
        %v2620 = vrot.slane %v2618, 4
        %v2621 = vshll.u32 %v2401, 16
        %v2623 = vrot.slane %v2621, 5
        %v2624 = vor.u32 %v2620, %v2623
        %v2625 = vrot.slane %v2624, 4
        %v2627 = vshll.u32 %v2402, 16
        %v2629 = vrot.slane %v2627, 5
        %v2630 = vsel %vm525, %v2625, %v2629
        %v2631 = vshrl.u32 %v2402, 16
        %v2633 = vrot.slane %v2631, 4
        %v2634 = vor.u32 %v2633, %v2629
        %v2635 = vrot.slane %v2634, 4
        %v2637 = vshll.u32 %v2403, 16
        %v2639 = vrot.slane %v2637, 5
        %v2640 = vsel %vm525, %v2635, %v2639
        %v2642 = vshrl.u32 %v2404, 16
        %v2644 = vrot.slane %v2642, 4
        %v2645 = vshll.u32 %v2404, 16
        %v2647 = vrot.slane %v2645, 5
        %v2648 = vor.u32 %v2644, %v2647
        %v2649 = vrot.slane %v2648, 4
        %v2651 = vshll.u32 %v2405, 16
        %v2653 = vrot.slane %v2651, 5
        %v2654 = vsel %vm525, %v2649, %v2653
        %v2655 = vshrl.u32 %v2405, 16
        %v2657 = vrot.slane %v2655, 4
        %v2658 = vor.u32 %v2657, %v2653
        %v2659 = vrot.slane %v2658, 4
        %v2661 = vshll.u32 %v2406, 16
        %v2663 = vrot.slane %v2661, 5
        %v2664 = vsel %vm525, %v2659, %v2663
        %v2666 = vshrl.u32 %v2407, 16
        %v2668 = vrot.slane %v2666, 4
        %v2669 = vshll.u32 %v2407, 16
        %v2671 = vrot.slane %v2669, 5
        %v2672 = vor.u32 %v2668, %v2671
        %v2673 = vrot.slane %v2672, 4
        %v2675 = vshll.u32 %v2408, 16
        %v2677 = vrot.slane %v2675, 5
        %v2678 = vsel %vm525, %v2673, %v2677
        %v2679 = vshrl.u32 %v2408, 16
        %v2681 = vrot.slane %v2679, 4
        %v2682 = vor.u32 %v2681, %v2677
        %v2683 = vrot.slane %v2682, 4
        %v2685 = vshll.u32 %v2409, 16
        %v2687 = vrot.slane %v2685, 5
        %v2688 = vsel %vm525, %v2683, %v2687
        %v2690 = vshrl.u32 %v2410, 16
        %v2692 = vrot.slane %v2690, 4
        %v2693 = vshll.u32 %v2410, 16
        %v2695 = vrot.slane %v2693, 5
        %v2696 = vor.u32 %v2692, %v2695
        %v2697 = vrot.slane %v2696, 4
        %v2699 = vshll.u32 %v2411, 16
        %v2701 = vrot.slane %v2699, 5
        %v2702 = vsel %vm525, %v2697, %v2701
        %v2703 = vshrl.u32 %v2411, 16
        %v2705 = vrot.slane %v2703, 4
        %v2706 = vor.u32 %v2705, %v2701
        %v2707 = vrot.slane %v2706, 4
        %v2709 = vshll.u32 %v2412, 16
        %v2711 = vrot.slane %v2709, 5
        %v2712 = vsel %vm525, %v2707, %v2711
        %v2714 = vshrl.u32 %v2413, 16
        %v2716 = vrot.slane %v2714, 4
        %v2717 = vshll.u32 %v2413, 16
        %v2719 = vrot.slane %v2717, 5
        %v2720 = vor.u32 %v2716, %v2719
        %v2721 = vrot.slane %v2720, 4
        %v2723 = vshll.u32 %v2414, 16
        %v2725 = vrot.slane %v2723, 5
        %v2726 = vsel %vm525, %v2721, %v2725
        %v2727 = vshrl.u32 %v2414, 16
        %v2729 = vrot.slane %v2727, 4
        %v2730 = vor.u32 %v2729, %v2725
        %v2731 = vrot.slane %v2730, 4
        %v2733 = vshll.u32 %v2415, 16
        %v2735 = vrot.slane %v2733, 5
        %v2736 = vsel %vm525, %v2731, %v2735
        %v2738 = vshrl.u32 %v2416, 16
        %v2740 = vrot.slane %v2738, 4
        %v2741 = vshll.u32 %v2416, 16
        %v2743 = vrot.slane %v2741, 5
        %v2744 = vor.u32 %v2740, %v2743
        %v2745 = vrot.slane %v2744, 4
        %v2747 = vshll.u32 %v2417, 16
        %v2749 = vrot.slane %v2747, 5
        %v2750 = vsel %vm525, %v2745, %v2749
        %v2751 = vshrl.u32 %v2417, 16
        %v2753 = vrot.slane %v2751, 4
        %v2754 = vor.u32 %v2753, %v2749
        %v2755 = vrot.slane %v2754, 4
        %v2757 = vshll.u32 %v2418, 16
        %v2759 = vrot.slane %v2757, 5
        %v2760 = vsel %vm525, %v2755, %v2759
        %v2762 = vshrl.u32 %v2419, 16
        %v2764 = vrot.slane %v2762, 4
        %v2765 = vshll.u32 %v2419, 16
        %v2767 = vrot.slane %v2765, 5
        %v2768 = vor.u32 %v2764, %v2767
        %v2769 = vrot.slane %v2768, 4
        %v2771 = vshll.u32 %v2420, 16
        %v2773 = vrot.slane %v2771, 5
        %v2774 = vsel %vm525, %v2769, %v2773
        %v2775 = vshrl.u32 %v2420, 16
        %v2777 = vrot.slane %v2775, 4
        %v2778 = vor.u32 %v2777, %v2773
        %v2779 = vrot.slane %v2778, 4
        %v2781 = vshll.u32 %v2421, 16
        %v2783 = vrot.slane %v2781, 5
        %v2784 = vsel %vm525, %v2779, %v2783
        %v2786 = vshrl.u32 %v2422, 16
        %v2788 = vrot.slane %v2786, 4
        %v2789 = vshll.u32 %v2422, 16
        %v2791 = vrot.slane %v2789, 5
        %v2792 = vor.u32 %v2788, %v2791
        %v2793 = vrot.slane %v2792, 4
        %v2795 = vshll.u32 %v2423, 16
        %v2797 = vrot.slane %v2795, 5
        %v2798 = vsel %vm525, %v2793, %v2797
        %v2799 = vshrl.u32 %v2423, 16
        %v2801 = vrot.slane %v2799, 4
        %v2802 = vor.u32 %v2801, %v2797
        %v2803 = vrot.slane %v2802, 4
        %v2805 = vshll.u32 %v2424, 16
        %v2807 = vrot.slane %v2805, 5
        %v2808 = vsel %vm525, %v2803, %v2807
        %s2809 = scalar_lea.vmem %s1, 256
        %v2810 = vld [vmem:[%s2809] sm:$0xf]
        %v2811 = vld [vmem:[%s2809 + $0x4] sm:$0xf]
        %v2812 = vld [vmem:[%s2809 + $0x8] sm:$0xf]
        %v2813 = vld [vmem:[%s2809 + $0xc] sm:$0xf]
        %v2814 = vld [vmem:[%s2809 + $0x10] sm:$0xf]
        %v2815 = vld [vmem:[%s2809 + $0x14] sm:$0xf]
        %v2816 = vld [vmem:[%s2809 + $0x18] sm:$0xf]
        %v2817 = vld [vmem:[%s2809 + $0x1c] sm:$0xf]
        %v2818 = vld [vmem:[%s2809 + $0x20] sm:$0xf]
        %v2819 = vld [vmem:[%s2809 + $0x24] sm:$0xf]
        %v2820 = vld [vmem:[%s2809 + $0x28] sm:$0xf]
        %v2821 = vld [vmem:[%s2809 + $0x2c] sm:$0xf]
        %v2822 = vld [vmem:[%s2809 + $0x30] sm:$0xf]
        %v2823 = vld [vmem:[%s2809 + $0x34] sm:$0xf]
        %v2824 = vld [vmem:[%s2809 + $0x38] sm:$0xf]
        %v2825 = vld [vmem:[%s2809 + $0x3c] sm:$0xf]
        %v2826 = vunpack.c.l.b16 %v2438
        %v2827 = vunpack.c.l.b16 %v2448
        %v2828 = vunpack.c.l.b16 %v2462
        %v2829 = vunpack.c.l.b16 %v2472
        %v2830 = vunpack.c.l.b16 %v2486
        %v2831 = vunpack.c.l.b16 %v2496
        %v2832 = vunpack.c.l.b16 %v2510
        %v2833 = vunpack.c.l.b16 %v2520
        %v2834 = vunpack.c.l.b16 %v2534
        %v2835 = vunpack.c.l.b16 %v2544
        %v2836 = vunpack.c.l.b16 %v2558
        %v2837 = vunpack.c.l.b16 %v2568
        %v2838 = vunpack.c.l.b16 %v2582
        %v2839 = vunpack.c.l.b16 %v2592
        %v2840 = vunpack.c.l.b16 %v2606
        %v2841 = vunpack.c.l.b16 %v2616
        %v2842 = vunpack.c.l.b16 %v2630
        %v2843 = vunpack.c.l.b16 %v2640
        %v2844 = vunpack.c.l.b16 %v2654
        %v2845 = vunpack.c.l.b16 %v2664
        %v2846 = vunpack.c.l.b16 %v2678
        %v2847 = vunpack.c.l.b16 %v2688
        %v2848 = vunpack.c.l.b16 %v2702
        %v2849 = vunpack.c.l.b16 %v2712
        %v2850 = vunpack.c.l.b16 %v2726
        %v2851 = vunpack.c.l.b16 %v2736
        %v2852 = vunpack.c.l.b16 %v2750
        %v2853 = vunpack.c.l.b16 %v2760
        %v2854 = vunpack.c.l.b16 %v2774
        %v2855 = vunpack.c.l.b16 %v2784
        %v2856 = vunpack.c.l.b16 %v2798
        %v2857 = vunpack.c.l.b16 %v2808
        %v2858 = vpack.c.b16 %v2827, %v2826
        %v2859 = vpack.c.b16 %v2829, %v2828
        %v2860 = vpack.c.b16 %v2831, %v2830
        %v2861 = vpack.c.b16 %v2833, %v2832
        %v2862 = vpack.c.b16 %v2835, %v2834
        %v2863 = vpack.c.b16 %v2837, %v2836
        %v2864 = vpack.c.b16 %v2839, %v2838
        %v2865 = vpack.c.b16 %v2841, %v2840
        %v2866 = vpack.c.b16 %v2843, %v2842
        %v2867 = vpack.c.b16 %v2845, %v2844
        %v2868 = vpack.c.b16 %v2847, %v2846
        %v2869 = vpack.c.b16 %v2849, %v2848
        %v2870 = vpack.c.b16 %v2851, %v2850
        %v2871 = vpack.c.b16 %v2853, %v2852
        %v2872 = vpack.c.b16 %v2855, %v2854
        %v2873 = vpack.c.b16 %v2857, %v2856
        %v2906 = vunpack.c.l.b16 %v2810
        %v2907 = vunpack.c.l.b16 %v2811
        %v2908 = vunpack.c.l.b16 %v2812
        %v2909 = vunpack.c.l.b16 %v2813
        %v2910 = vunpack.c.l.b16 %v2814
        %v2911 = vunpack.c.l.b16 %v2815
        %v2912 = vunpack.c.l.b16 %v2816
        %v2913 = vunpack.c.l.b16 %v2817
        %v2914 = vunpack.c.l.b16 %v2818
        %v2915 = vunpack.c.l.b16 %v2819
        %v2916 = vunpack.c.l.b16 %v2820
        %v2917 = vunpack.c.l.b16 %v2821
        %v2918 = vunpack.c.l.b16 %v2822
        %v2919 = vunpack.c.l.b16 %v2823
        %v2920 = vunpack.c.l.b16 %v2824
        %v2921 = vunpack.c.l.b16 %v2825
        %v2922 = vpack.c.b16 %v2907, %v2906
        %v2923 = vpack.c.b16 %v2909, %v2908
        %v2924 = vpack.c.b16 %v2911, %v2910
        %v2925 = vpack.c.b16 %v2913, %v2912
        %v2926 = vpack.c.b16 %v2915, %v2914
        %v2927 = vpack.c.b16 %v2917, %v2916
        %v2928 = vpack.c.b16 %v2919, %v2918
        %v2929 = vpack.c.b16 %v2921, %v2920
        %2938 = vmatprep.subr.bf16.mxu0 0
        %2939 = vmatpush1.bf16.msra.mxu0 %v2922
        %2940 = vmatprep.subr.bf16.mxu0 0
        %2941 = vmatpush1.bf16.msra.mxu0 %v2923
        %2942 = vmatprep.subr.bf16.mxu0 0
        %2943 = vmatpush1.bf16.msra.mxu0 %v2924
        %2944 = vmatprep.subr.bf16.mxu0 0
        %2945 = vmatpush1.bf16.msra.mxu0 %v2925
        %2946 = vmatprep.subr.bf16.mxu0 0
        %2947 = vmatpush1.bf16.msra.mxu0 %v2926
        %2948 = vmatprep.subr.bf16.mxu0 0
        %2949 = vmatpush1.bf16.msra.mxu0 %v2927
        %2950 = vmatprep.subr.bf16.mxu0 0
        %2951 = vmatpush1.bf16.msra.mxu0 %v2928
        %2952 = vmatprep.subr.bf16.mxu0 0
        %2953 = vmatpush1.bf16.msra.mxu0 %v2929
        %2954 = vmatprep.subr.bf16.mxu0 0
        %2955 = vmatpush1.bf16.msra.mxu0 0
        %2956 = vmatprep.subr.bf16.mxu0 0
        %2957 = vmatpush1.bf16.msra.mxu0 0
        %2958 = vmatprep.subr.bf16.mxu0 0
        %2959 = vmatpush1.bf16.msra.mxu0 0
        %2960 = vmatprep.subr.bf16.mxu0 0
        %2961 = vmatpush1.bf16.msra.mxu0 0
        %2962 = vmatprep.subr.bf16.mxu0 0
        %2963 = vmatpush1.bf16.msra.mxu0 0
        %2964 = vmatprep.subr.bf16.mxu0 0
        %2965 = vmatpush1.bf16.msra.mxu0 0
        %2966 = vmatprep.subr.bf16.mxu0 0
        %2967 = vmatpush1.bf16.msra.mxu0 0
        %2968 = vmatprep.subr.bf16.mxu0 0
        %2969 = vmatpush1.bf16.msra.mxu0 0
        %2970 = vmatprep.mubr.bf16.mxu0 0
        %2971 = vmatmul.mubr.bf16.gmra.mrb[0].mxu0 %v2858
        %v2972 = vpop.f32.mrb[0].mxu0
        %v2973 = vadd.f32 0.0, %v2972
        %v2974 = vpop.f32.mrb[0].mxu0
        %v2975 = vpop.f32.mrb[0].mxu0
        %v2976 = vadd.f32 0.0, %v2975
        %v2977 = vpop.f32.mrb[0].mxu0
        %2978 = vmatprep.mubr.bf16.mxu0 0
        %2979 = vmatmul.mubr.bf16.gmra.mrb[0].mxu0 %v2859
        %v2980 = vpop.f32.mrb[0].mxu0
        %v2981 = vadd.f32 0.0, %v2980
        %v2982 = vpop.f32.mrb[0].mxu0
        %v2983 = vpop.f32.mrb[0].mxu0
        %v2984 = vadd.f32 0.0, %v2983
        %v2985 = vpop.f32.mrb[0].mxu0
        %2986 = vmatprep.mubr.bf16.mxu0 0
        %2987 = vmatmul.mubr.bf16.gmra.mrb[0].mxu0 %v2860
        %v2988 = vpop.f32.mrb[0].mxu0
        %v2989 = vadd.f32 0.0, %v2988
        %v2990 = vpop.f32.mrb[0].mxu0
        %v2991 = vpop.f32.mrb[0].mxu0
        %v2992 = vadd.f32 0.0, %v2991
        %v2993 = vpop.f32.mrb[0].mxu0
        %2994 = vmatprep.mubr.bf16.mxu0 0
        %2995 = vmatmul.mubr.bf16.gmra.mrb[0].mxu0 %v2861
        %v2996 = vpop.f32.mrb[0].mxu0
        %v2997 = vadd.f32 0.0, %v2996
        %v2998 = vpop.f32.mrb[0].mxu0
        %v2999 = vpop.f32.mrb[0].mxu0
        %v3000 = vadd.f32 0.0, %v2999
        %v3001 = vpop.f32.mrb[0].mxu0
        %3002 = vmatprep.mubr.bf16.mxu0 0
        %3003 = vmatmul.mubr.bf16.gmra.mrb[0].mxu0 %v2862
        %v3004 = vpop.f32.mrb[0].mxu0
        %v3005 = vadd.f32 0.0, %v3004
        %v3006 = vpop.f32.mrb[0].mxu0
        %v3007 = vpop.f32.mrb[0].mxu0
        %v3008 = vadd.f32 0.0, %v3007
        %v3009 = vpop.f32.mrb[0].mxu0
        %3010 = vmatprep.mubr.bf16.mxu0 0
        %3011 = vmatmul.mubr.bf16.gmra.mrb[0].mxu0 %v2863
        %v3012 = vpop.f32.mrb[0].mxu0
        %v3013 = vadd.f32 0.0, %v3012
        %v3014 = vpop.f32.mrb[0].mxu0
        %v3015 = vpop.f32.mrb[0].mxu0
        %v3016 = vadd.f32 0.0, %v3015
        %v3017 = vpop.f32.mrb[0].mxu0
        %3018 = vmatprep.mubr.bf16.mxu0 0
        %3019 = vmatmul.mubr.bf16.gmra.mrb[0].mxu0 %v2864
        %v3020 = vpop.f32.mrb[0].mxu0
        %v3021 = vadd.f32 0.0, %v3020
        %v3022 = vpop.f32.mrb[0].mxu0
        %v3023 = vpop.f32.mrb[0].mxu0
        %v3024 = vadd.f32 0.0, %v3023
        %v3025 = vpop.f32.mrb[0].mxu0
        %3026 = vmatprep.mubr.bf16.mxu0 0
        %3027 = vmatmul.mubr.bf16.gmra.mrb[0].mxu0 %v2865
        %v3028 = vpop.f32.mrb[0].mxu0
        %v3029 = vadd.f32 0.0, %v3028
        %v3030 = vpop.f32.mrb[0].mxu0
        %v3031 = vpop.f32.mrb[0].mxu0
        %v3032 = vadd.f32 0.0, %v3031
        %v3033 = vpop.f32.mrb[0].mxu0
        %3034 = vmatprep.mubr.bf16.mxu0 0
        %3035 = vmatmul.mubr.bf16.gmra.mrb[0].mxu0 %v2866
        %v3036 = vpop.f32.mrb[0].mxu0
        %v3037 = vadd.f32 0.0, %v3036
        %v3038 = vpop.f32.mrb[0].mxu0
        %v3039 = vpop.f32.mrb[0].mxu0
        %v3040 = vadd.f32 0.0, %v3039
        %v3041 = vpop.f32.mrb[0].mxu0
        %3042 = vmatprep.mubr.bf16.mxu0 0
        %3043 = vmatmul.mubr.bf16.gmra.mrb[0].mxu0 %v2867
        %v3044 = vpop.f32.mrb[0].mxu0
        %v3045 = vadd.f32 0.0, %v3044
        %v3046 = vpop.f32.mrb[0].mxu0
        %v3047 = vpop.f32.mrb[0].mxu0
        %v3048 = vadd.f32 0.0, %v3047
        %v3049 = vpop.f32.mrb[0].mxu0
        %3050 = vmatprep.mubr.bf16.mxu0 0
        %3051 = vmatmul.mubr.bf16.gmra.mrb[0].mxu0 %v2868
        %v3052 = vpop.f32.mrb[0].mxu0
        %v3053 = vadd.f32 0.0, %v3052
        %v3054 = vpop.f32.mrb[0].mxu0
        %v3055 = vpop.f32.mrb[0].mxu0
        %v3056 = vadd.f32 0.0, %v3055
        %v3057 = vpop.f32.mrb[0].mxu0
        %3058 = vmatprep.mubr.bf16.mxu0 0
        %3059 = vmatmul.mubr.bf16.gmra.mrb[0].mxu0 %v2869
        %v3060 = vpop.f32.mrb[0].mxu0
        %v3061 = vadd.f32 0.0, %v3060
        %v3062 = vpop.f32.mrb[0].mxu0
        %v3063 = vpop.f32.mrb[0].mxu0
        %v3064 = vadd.f32 0.0, %v3063
        %v3065 = vpop.f32.mrb[0].mxu0
        %3066 = vmatprep.mubr.bf16.mxu0 0
        %3067 = vmatmul.mubr.bf16.gmra.mrb[0].mxu0 %v2870
        %v3068 = vpop.f32.mrb[0].mxu0
        %v3069 = vadd.f32 0.0, %v3068
        %v3070 = vpop.f32.mrb[0].mxu0
        %v3071 = vpop.f32.mrb[0].mxu0
        %v3072 = vadd.f32 0.0, %v3071
        %v3073 = vpop.f32.mrb[0].mxu0
        %3074 = vmatprep.mubr.bf16.mxu0 0
        %3075 = vmatmul.mubr.bf16.gmra.mrb[0].mxu0 %v2871
        %v3076 = vpop.f32.mrb[0].mxu0
        %v3077 = vadd.f32 0.0, %v3076
        %v3078 = vpop.f32.mrb[0].mxu0
        %v3079 = vpop.f32.mrb[0].mxu0
        %v3080 = vadd.f32 0.0, %v3079
        %v3081 = vpop.f32.mrb[0].mxu0
        %3082 = vmatprep.mubr.bf16.mxu0 0
        %3083 = vmatmul.mubr.bf16.gmra.mrb[0].mxu0 %v2872
        %v3084 = vpop.f32.mrb[0].mxu0
        %v3085 = vadd.f32 0.0, %v3084
        %v3086 = vpop.f32.mrb[0].mxu0
        %v3087 = vpop.f32.mrb[0].mxu0
        %v3088 = vadd.f32 0.0, %v3087
        %v3089 = vpop.f32.mrb[0].mxu0
        %3090 = vmatprep.mubr.bf16.mxu0 0
        %3091 = vmatmul.mubr.bf16.gmra.mrb[0].mxu0 %v2873
        %v3092 = vpop.f32.mrb[0].mxu0
        %v3093 = vadd.f32 0.0, %v3092
        %v3094 = vpop.f32.mrb[0].mxu0
        %v3095 = vpop.f32.mrb[0].mxu0
        %v3096 = vadd.f32 0.0, %v3095
        %v3097 = vpop.f32.mrb[0].mxu0
        %3098 = vdwg.mxu0
        %v3099 = vadd.f32 %v2345, %v2973
        %v3100 = vadd.f32 %v2346, %v2976
        %v3101 = vadd.f32 %v2347, %v2981
        %v3102 = vadd.f32 %v2348, %v2984
        %v3103 = vadd.f32 %v2349, %v2989
        %v3104 = vadd.f32 %v2350, %v2992
        %v3105 = vadd.f32 %v2351, %v2997
        %v3106 = vadd.f32 %v2352, %v3000
        %v3107 = vadd.f32 %v2353, %v3005
        %v3108 = vadd.f32 %v2354, %v3008
        %v3109 = vadd.f32 %v2355, %v3013
        %v3110 = vadd.f32 %v2356, %v3016
        %v3111 = vadd.f32 %v2357, %v3021
        %v3112 = vadd.f32 %v2358, %v3024
        %v3113 = vadd.f32 %v2359, %v3029
        %v3114 = vadd.f32 %v2360, %v3032
        %v3115 = vadd.f32 %v2361, %v3037
        %v3116 = vadd.f32 %v2362, %v3040
        %v3117 = vadd.f32 %v2363, %v3045
        %v3118 = vadd.f32 %v2364, %v3048
        %v3119 = vadd.f32 %v2365, %v3053
        %v3120 = vadd.f32 %v2366, %v3056
        %v3121 = vadd.f32 %v2367, %v3061
        %v3122 = vadd.f32 %v2368, %v3064
        %v3123 = vadd.f32 %v2369, %v3069
        %v3124 = vadd.f32 %v2370, %v3072
        %v3125 = vadd.f32 %v2371, %v3077
        %v3126 = vadd.f32 %v2372, %v3080
        %v3127 = vadd.f32 %v2373, %v3085
        %v3128 = vadd.f32 %v2374, %v3088
        %v3129 = vadd.f32 %v2375, %v3093
        %v3130 = vadd.f32 %v2376, %v3096
        %v3131 = vld [vmem:[%s1990] sm:$0xe]
        %v3132 = vld [vmem:[%s1990 + $0xc] sm:$0xe]
        %v3133 = vld [vmem:[%s1990 + $0x18] sm:$0xe]
        %v3134 = vld [vmem:[%s1990 + $0x24] sm:$0xe]
        %v3135 = vld [vmem:[%s1990 + $0x30] sm:$0xe]
        %v3136 = vld [vmem:[%s1990 + $0x3c] sm:$0xe]
        %v3137 = vld [vmem:[%s1990 + $0x48] sm:$0xe]
        %v3138 = vld [vmem:[%s1990 + $0x54] sm:$0xe]
        %v3139 = vld [vmem:[%s1990 + $0x60] sm:$0xe]
        %v3140 = vld [vmem:[%s1990 + $0x6c] sm:$0xe]
        %v3141 = vld [vmem:[%s1990 + $0x78] sm:$0xe]
        %v3142 = vld [vmem:[%s1990 + $0x84] sm:$0xe]
        %v3143 = vld [vmem:[%s1990 + $0x90] sm:$0xe]
        %v3144 = vld [vmem:[%s1990 + $0x9c] sm:$0xe]
        %v3145 = vld [vmem:[%s1990 + $0xa8] sm:$0xe]
        %v3146 = vld [vmem:[%s1990 + $0xb4] sm:$0xe]
        %v3195 = vrot.slane %v3131, 5
        %v3196 = vrot.slane %v3195, 4
        %v3197 = vrot.slane %v2378, 5
        %v3198 = vsel %vm1555, %v3196, %v3197
        %v3199 = vrot.slane %v3197, 4
        %v3200 = vrot.slane %v2379, 5
        %v3201 = vsel %vm1555, %v3199, %v3200
        %v3202 = vrot.slane %v3132, 5
        %v3203 = vrot.slane %v3202, 4
        %v3204 = vrot.slane %v2381, 5
        %v3205 = vsel %vm1555, %v3203, %v3204
        %v3206 = vrot.slane %v3204, 4
        %v3207 = vrot.slane %v2382, 5
        %v3208 = vsel %vm1555, %v3206, %v3207
        %v3209 = vrot.slane %v3133, 5
        %v3210 = vrot.slane %v3209, 4
        %v3211 = vrot.slane %v2384, 5
        %v3212 = vsel %vm1555, %v3210, %v3211
        %v3213 = vrot.slane %v3211, 4
        %v3214 = vrot.slane %v2385, 5
        %v3215 = vsel %vm1555, %v3213, %v3214
        %v3216 = vrot.slane %v3134, 5
        %v3217 = vrot.slane %v3216, 4
        %v3218 = vrot.slane %v2387, 5
        %v3219 = vsel %vm1555, %v3217, %v3218
        %v3220 = vrot.slane %v3218, 4
        %v3221 = vrot.slane %v2388, 5
        %v3222 = vsel %vm1555, %v3220, %v3221
        %v3223 = vrot.slane %v3135, 5
        %v3224 = vrot.slane %v3223, 4
        %v3225 = vrot.slane %v2390, 5
        %v3226 = vsel %vm1555, %v3224, %v3225
        %v3227 = vrot.slane %v3225, 4
        %v3228 = vrot.slane %v2391, 5
        %v3229 = vsel %vm1555, %v3227, %v3228
        %v3230 = vrot.slane %v3136, 5
        %v3231 = vrot.slane %v3230, 4
        %v3232 = vrot.slane %v2393, 5
        %v3233 = vsel %vm1555, %v3231, %v3232
        %v3234 = vrot.slane %v3232, 4
        %v3235 = vrot.slane %v2394, 5
        %v3236 = vsel %vm1555, %v3234, %v3235
        %v3237 = vrot.slane %v3137, 5
        %v3238 = vrot.slane %v3237, 4
        %v3239 = vrot.slane %v2396, 5
        %v3240 = vsel %vm1555, %v3238, %v3239
        %v3241 = vrot.slane %v3239, 4
        %v3242 = vrot.slane %v2397, 5
        %v3243 = vsel %vm1555, %v3241, %v3242
        %v3244 = vrot.slane %v3138, 5
        %v3245 = vrot.slane %v3244, 4
        %v3246 = vrot.slane %v2399, 5
        %v3247 = vsel %vm1555, %v3245, %v3246
        %v3248 = vrot.slane %v3246, 4
        %v3249 = vrot.slane %v2400, 5
        %v3250 = vsel %vm1555, %v3248, %v3249
        %v3251 = vrot.slane %v3139, 5
        %v3252 = vrot.slane %v3251, 4
        %v3253 = vrot.slane %v2402, 5
        %v3254 = vsel %vm1555, %v3252, %v3253
        %v3255 = vrot.slane %v3253, 4
        %v3256 = vrot.slane %v2403, 5
        %v3257 = vsel %vm1555, %v3255, %v3256
        %v3258 = vrot.slane %v3140, 5
        %v3259 = vrot.slane %v3258, 4
        %v3260 = vrot.slane %v2405, 5
        %v3261 = vsel %vm1555, %v3259, %v3260
        %v3262 = vrot.slane %v3260, 4
        %v3263 = vrot.slane %v2406, 5
        %v3264 = vsel %vm1555, %v3262, %v3263
        %v3265 = vrot.slane %v3141, 5
        %v3266 = vrot.slane %v3265, 4
        %v3267 = vrot.slane %v2408, 5
        %v3268 = vsel %vm1555, %v3266, %v3267
        %v3269 = vrot.slane %v3267, 4
        %v3270 = vrot.slane %v2409, 5
        %v3271 = vsel %vm1555, %v3269, %v3270
        %v3272 = vrot.slane %v3142, 5
        %v3273 = vrot.slane %v3272, 4
        %v3274 = vrot.slane %v2411, 5
        %v3275 = vsel %vm1555, %v3273, %v3274
        %v3276 = vrot.slane %v3274, 4
        %v3277 = vrot.slane %v2412, 5
        %v3278 = vsel %vm1555, %v3276, %v3277
        %v3279 = vrot.slane %v3143, 5
        %v3280 = vrot.slane %v3279, 4
        %v3281 = vrot.slane %v2414, 5
        %v3282 = vsel %vm1555, %v3280, %v3281
        %v3283 = vrot.slane %v3281, 4
        %v3284 = vrot.slane %v2415, 5
        %v3285 = vsel %vm1555, %v3283, %v3284
        %v3286 = vrot.slane %v3144, 5
        %v3287 = vrot.slane %v3286, 4
        %v3288 = vrot.slane %v2417, 5
        %v3289 = vsel %vm1555, %v3287, %v3288
        %v3290 = vrot.slane %v3288, 4
        %v3291 = vrot.slane %v2418, 5
        %v3292 = vsel %vm1555, %v3290, %v3291
        %v3293 = vrot.slane %v3145, 5
        %v3294 = vrot.slane %v3293, 4
        %v3295 = vrot.slane %v2420, 5
        %v3296 = vsel %vm1555, %v3294, %v3295
        %v3297 = vrot.slane %v3295, 4
        %v3298 = vrot.slane %v2421, 5
        %v3299 = vsel %vm1555, %v3297, %v3298
        %v3300 = vrot.slane %v3146, 5
        %v3301 = vrot.slane %v3300, 4
        %v3302 = vrot.slane %v2423, 5
        %v3303 = vsel %vm1555, %v3301, %v3302
        %v3304 = vrot.slane %v3302, 4
        %v3305 = vrot.slane %v2424, 5
        %v3306 = vsel %vm1555, %v3304, %v3305
        %s3307 = scalar_lea.vmem %s1, 320
        %v3308 = vld [vmem:[%s3307] sm:$0xf]
        %v3309 = vld [vmem:[%s3307 + $0x4] sm:$0xf]
        %v3310 = vld [vmem:[%s3307 + $0x8] sm:$0xf]
        %v3311 = vld [vmem:[%s3307 + $0xc] sm:$0xf]
        %v3312 = vld [vmem:[%s3307 + $0x10] sm:$0xf]
        %v3313 = vld [vmem:[%s3307 + $0x14] sm:$0xf]
        %v3314 = vld [vmem:[%s3307 + $0x18] sm:$0xf]
        %v3315 = vld [vmem:[%s3307 + $0x1c] sm:$0xf]
        %v3316 = vld [vmem:[%s3307 + $0x20] sm:$0xf]
        %v3317 = vld [vmem:[%s3307 + $0x24] sm:$0xf]
        %v3318 = vld [vmem:[%s3307 + $0x28] sm:$0xf]
        %v3319 = vld [vmem:[%s3307 + $0x2c] sm:$0xf]
        %v3320 = vld [vmem:[%s3307 + $0x30] sm:$0xf]
        %v3321 = vld [vmem:[%s3307 + $0x34] sm:$0xf]
        %v3322 = vld [vmem:[%s3307 + $0x38] sm:$0xf]
        %v3323 = vld [vmem:[%s3307 + $0x3c] sm:$0xf]
        %v3324 = vunpack.c.l.b16 %v3198
        %v3325 = vunpack.c.l.b16 %v3201
        %v3326 = vunpack.c.l.b16 %v3205
        %v3327 = vunpack.c.l.b16 %v3208
        %v3328 = vunpack.c.l.b16 %v3212
        %v3329 = vunpack.c.l.b16 %v3215
        %v3330 = vunpack.c.l.b16 %v3219
        %v3331 = vunpack.c.l.b16 %v3222
        %v3332 = vunpack.c.l.b16 %v3226
        %v3333 = vunpack.c.l.b16 %v3229
        %v3334 = vunpack.c.l.b16 %v3233
        %v3335 = vunpack.c.l.b16 %v3236
        %v3336 = vunpack.c.l.b16 %v3240
        %v3337 = vunpack.c.l.b16 %v3243
        %v3338 = vunpack.c.l.b16 %v3247
        %v3339 = vunpack.c.l.b16 %v3250
        %v3340 = vunpack.c.l.b16 %v3254
        %v3341 = vunpack.c.l.b16 %v3257
        %v3342 = vunpack.c.l.b16 %v3261
        %v3343 = vunpack.c.l.b16 %v3264
        %v3344 = vunpack.c.l.b16 %v3268
        %v3345 = vunpack.c.l.b16 %v3271
        %v3346 = vunpack.c.l.b16 %v3275
        %v3347 = vunpack.c.l.b16 %v3278
        %v3348 = vunpack.c.l.b16 %v3282
        %v3349 = vunpack.c.l.b16 %v3285
        %v3350 = vunpack.c.l.b16 %v3289
        %v3351 = vunpack.c.l.b16 %v3292
        %v3352 = vunpack.c.l.b16 %v3296
        %v3353 = vunpack.c.l.b16 %v3299
        %v3354 = vunpack.c.l.b16 %v3303
        %v3355 = vunpack.c.l.b16 %v3306
        %v3356 = vpack.c.b16 %v3325, %v3324
        %v3357 = vpack.c.b16 %v3327, %v3326
        %v3358 = vpack.c.b16 %v3329, %v3328
        %v3359 = vpack.c.b16 %v3331, %v3330
        %v3360 = vpack.c.b16 %v3333, %v3332
        %v3361 = vpack.c.b16 %v3335, %v3334
        %v3362 = vpack.c.b16 %v3337, %v3336
        %v3363 = vpack.c.b16 %v3339, %v3338
        %v3364 = vpack.c.b16 %v3341, %v3340
        %v3365 = vpack.c.b16 %v3343, %v3342
        %v3366 = vpack.c.b16 %v3345, %v3344
        %v3367 = vpack.c.b16 %v3347, %v3346
        %v3368 = vpack.c.b16 %v3349, %v3348
        %v3369 = vpack.c.b16 %v3351, %v3350
        %v3370 = vpack.c.b16 %v3353, %v3352
        %v3371 = vpack.c.b16 %v3355, %v3354
        %v3404 = vunpack.c.l.b16 %v3308
        %v3405 = vunpack.c.l.b16 %v3309
        %v3406 = vunpack.c.l.b16 %v3310
        %v3407 = vunpack.c.l.b16 %v3311
        %v3408 = vunpack.c.l.b16 %v3312
        %v3409 = vunpack.c.l.b16 %v3313
        %v3410 = vunpack.c.l.b16 %v3314
        %v3411 = vunpack.c.l.b16 %v3315
        %v3412 = vunpack.c.l.b16 %v3316
        %v3413 = vunpack.c.l.b16 %v3317
        %v3414 = vunpack.c.l.b16 %v3318
        %v3415 = vunpack.c.l.b16 %v3319
        %v3416 = vunpack.c.l.b16 %v3320
        %v3417 = vunpack.c.l.b16 %v3321
        %v3418 = vunpack.c.l.b16 %v3322
        %v3419 = vunpack.c.l.b16 %v3323
        %v3420 = vpack.c.b16 %v3405, %v3404
        %v3421 = vpack.c.b16 %v3407, %v3406
        %v3422 = vpack.c.b16 %v3409, %v3408
        %v3423 = vpack.c.b16 %v3411, %v3410
        %v3424 = vpack.c.b16 %v3413, %v3412
        %v3425 = vpack.c.b16 %v3415, %v3414
        %v3426 = vpack.c.b16 %v3417, %v3416
        %v3427 = vpack.c.b16 %v3419, %v3418
        %3436 = vmatprep.subr.bf16.mxu0 0
        %3437 = vmatpush1.bf16.msra.mxu0 %v3420
        %3438 = vmatprep.subr.bf16.mxu0 0
        %3439 = vmatpush1.bf16.msra.mxu0 %v3421
        %3440 = vmatprep.subr.bf16.mxu0 0
        %3441 = vmatpush1.bf16.msra.mxu0 %v3422
        %3442 = vmatprep.subr.bf16.mxu0 0
        %3443 = vmatpush1.bf16.msra.mxu0 %v3423
        %3444 = vmatprep.subr.bf16.mxu0 0
        %3445 = vmatpush1.bf16.msra.mxu0 %v3424
        %3446 = vmatprep.subr.bf16.mxu0 0
        %3447 = vmatpush1.bf16.msra.mxu0 %v3425
        %3448 = vmatprep.subr.bf16.mxu0 0
        %3449 = vmatpush1.bf16.msra.mxu0 %v3426
        %3450 = vmatprep.subr.bf16.mxu0 0
        %3451 = vmatpush1.bf16.msra.mxu0 %v3427
        %3452 = vmatprep.subr.bf16.mxu0 0
        %3453 = vmatpush1.bf16.msra.mxu0 0
        %3454 = vmatprep.subr.bf16.mxu0 0
        %3455 = vmatpush1.bf16.msra.mxu0 0
        %3456 = vmatprep.subr.bf16.mxu0 0
        %3457 = vmatpush1.bf16.msra.mxu0 0
        %3458 = vmatprep.subr.bf16.mxu0 0
        %3459 = vmatpush1.bf16.msra.mxu0 0
        %3460 = vmatprep.subr.bf16.mxu0 0
        %3461 = vmatpush1.bf16.msra.mxu0 0
        %3462 = vmatprep.subr.bf16.mxu0 0
        %3463 = vmatpush1.bf16.msra.mxu0 0
        %3464 = vmatprep.subr.bf16.mxu0 0
        %3465 = vmatpush1.bf16.msra.mxu0 0
        %3466 = vmatprep.subr.bf16.mxu0 0
        %3467 = vmatpush1.bf16.msra.mxu0 0
        %3468 = vmatprep.mubr.bf16.mxu0 0
        %3469 = vmatmul.mubr.bf16.gmra.mrb[0].mxu0 %v3356
        %v3470 = vpop.f32.mrb[0].mxu0
        %v3471 = vadd.f32 0.0, %v3470
        %v3472 = vpop.f32.mrb[0].mxu0
        %v3473 = vpop.f32.mrb[0].mxu0
        %v3474 = vadd.f32 0.0, %v3473
        %v3475 = vpop.f32.mrb[0].mxu0
        %3476 = vmatprep.mubr.bf16.mxu0 0
        %3477 = vmatmul.mubr.bf16.gmra.mrb[0].mxu0 %v3357
        %v3478 = vpop.f32.mrb[0].mxu0
        %v3479 = vadd.f32 0.0, %v3478
        %v3480 = vpop.f32.mrb[0].mxu0
        %v3481 = vpop.f32.mrb[0].mxu0
        %v3482 = vadd.f32 0.0, %v3481
        %v3483 = vpop.f32.mrb[0].mxu0
        %3484 = vmatprep.mubr.bf16.mxu0 0
        %3485 = vmatmul.mubr.bf16.gmra.mrb[0].mxu0 %v3358
        %v3486 = vpop.f32.mrb[0].mxu0
        %v3487 = vadd.f32 0.0, %v3486
        %v3488 = vpop.f32.mrb[0].mxu0
        %v3489 = vpop.f32.mrb[0].mxu0
        %v3490 = vadd.f32 0.0, %v3489
        %v3491 = vpop.f32.mrb[0].mxu0
        %3492 = vmatprep.mubr.bf16.mxu0 0
        %3493 = vmatmul.mubr.bf16.gmra.mrb[0].mxu0 %v3359
        %v3494 = vpop.f32.mrb[0].mxu0
        %v3495 = vadd.f32 0.0, %v3494
        %v3496 = vpop.f32.mrb[0].mxu0
        %v3497 = vpop.f32.mrb[0].mxu0
        %v3498 = vadd.f32 0.0, %v3497
        %v3499 = vpop.f32.mrb[0].mxu0
        %3500 = vmatprep.mubr.bf16.mxu0 0
        %3501 = vmatmul.mubr.bf16.gmra.mrb[0].mxu0 %v3360
        %v3502 = vpop.f32.mrb[0].mxu0
        %v3503 = vadd.f32 0.0, %v3502
        %v3504 = vpop.f32.mrb[0].mxu0
        %v3505 = vpop.f32.mrb[0].mxu0
        %v3506 = vadd.f32 0.0, %v3505
        %v3507 = vpop.f32.mrb[0].mxu0
        %3508 = vmatprep.mubr.bf16.mxu0 0
        %3509 = vmatmul.mubr.bf16.gmra.mrb[0].mxu0 %v3361
        %v3510 = vpop.f32.mrb[0].mxu0
        %v3511 = vadd.f32 0.0, %v3510
        %v3512 = vpop.f32.mrb[0].mxu0
        %v3513 = vpop.f32.mrb[0].mxu0
        %v3514 = vadd.f32 0.0, %v3513
        %v3515 = vpop.f32.mrb[0].mxu0
        %3516 = vmatprep.mubr.bf16.mxu0 0
        %3517 = vmatmul.mubr.bf16.gmra.mrb[0].mxu0 %v3362
        %v3518 = vpop.f32.mrb[0].mxu0
        %v3519 = vadd.f32 0.0, %v3518
        %v3520 = vpop.f32.mrb[0].mxu0
        %v3521 = vpop.f32.mrb[0].mxu0
        %v3522 = vadd.f32 0.0, %v3521
        %v3523 = vpop.f32.mrb[0].mxu0
        %3524 = vmatprep.mubr.bf16.mxu0 0
        %3525 = vmatmul.mubr.bf16.gmra.mrb[0].mxu0 %v3363
        %v3526 = vpop.f32.mrb[0].mxu0
        %v3527 = vadd.f32 0.0, %v3526
        %v3528 = vpop.f32.mrb[0].mxu0
        %v3529 = vpop.f32.mrb[0].mxu0
        %v3530 = vadd.f32 0.0, %v3529
        %v3531 = vpop.f32.mrb[0].mxu0
        %3532 = vmatprep.mubr.bf16.mxu0 0
        %3533 = vmatmul.mubr.bf16.gmra.mrb[0].mxu0 %v3364
        %v3534 = vpop.f32.mrb[0].mxu0
        %v3535 = vadd.f32 0.0, %v3534
        %v3536 = vpop.f32.mrb[0].mxu0
        %v3537 = vpop.f32.mrb[0].mxu0
        %v3538 = vadd.f32 0.0, %v3537
        %v3539 = vpop.f32.mrb[0].mxu0
        %3540 = vmatprep.mubr.bf16.mxu0 0
        %3541 = vmatmul.mubr.bf16.gmra.mrb[0].mxu0 %v3365
        %v3542 = vpop.f32.mrb[0].mxu0
        %v3543 = vadd.f32 0.0, %v3542
        %v3544 = vpop.f32.mrb[0].mxu0
        %v3545 = vpop.f32.mrb[0].mxu0
        %v3546 = vadd.f32 0.0, %v3545
        %v3547 = vpop.f32.mrb[0].mxu0
        %3548 = vmatprep.mubr.bf16.mxu0 0
        %3549 = vmatmul.mubr.bf16.gmra.mrb[0].mxu0 %v3366
        %v3550 = vpop.f32.mrb[0].mxu0
        %v3551 = vadd.f32 0.0, %v3550
        %v3552 = vpop.f32.mrb[0].mxu0
        %v3553 = vpop.f32.mrb[0].mxu0
        %v3554 = vadd.f32 0.0, %v3553
        %v3555 = vpop.f32.mrb[0].mxu0
        %3556 = vmatprep.mubr.bf16.mxu0 0
        %3557 = vmatmul.mubr.bf16.gmra.mrb[0].mxu0 %v3367
        %v3558 = vpop.f32.mrb[0].mxu0
        %v3559 = vadd.f32 0.0, %v3558
        %v3560 = vpop.f32.mrb[0].mxu0
        %v3561 = vpop.f32.mrb[0].mxu0
        %v3562 = vadd.f32 0.0, %v3561
        %v3563 = vpop.f32.mrb[0].mxu0
        %3564 = vmatprep.mubr.bf16.mxu0 0
        %3565 = vmatmul.mubr.bf16.gmra.mrb[0].mxu0 %v3368
        %v3566 = vpop.f32.mrb[0].mxu0
        %v3567 = vadd.f32 0.0, %v3566
        %v3568 = vpop.f32.mrb[0].mxu0
        %v3569 = vpop.f32.mrb[0].mxu0
        %v3570 = vadd.f32 0.0, %v3569
        %v3571 = vpop.f32.mrb[0].mxu0
        %3572 = vmatprep.mubr.bf16.mxu0 0
        %3573 = vmatmul.mubr.bf16.gmra.mrb[0].mxu0 %v3369
        %v3574 = vpop.f32.mrb[0].mxu0
        %v3575 = vadd.f32 0.0, %v3574
        %v3576 = vpop.f32.mrb[0].mxu0
        %v3577 = vpop.f32.mrb[0].mxu0
        %v3578 = vadd.f32 0.0, %v3577
        %v3579 = vpop.f32.mrb[0].mxu0
        %3580 = vmatprep.mubr.bf16.mxu0 0
        %3581 = vmatmul.mubr.bf16.gmra.mrb[0].mxu0 %v3370
        %v3582 = vpop.f32.mrb[0].mxu0
        %v3583 = vadd.f32 0.0, %v3582
        %v3584 = vpop.f32.mrb[0].mxu0
        %v3585 = vpop.f32.mrb[0].mxu0
        %v3586 = vadd.f32 0.0, %v3585
        %v3587 = vpop.f32.mrb[0].mxu0
        %3588 = vmatprep.mubr.bf16.mxu0 0
        %3589 = vmatmul.mubr.bf16.gmra.mrb[0].mxu0 %v3371
        %v3590 = vpop.f32.mrb[0].mxu0
        %v3591 = vadd.f32 0.0, %v3590
        %v3592 = vpop.f32.mrb[0].mxu0
        %v3593 = vpop.f32.mrb[0].mxu0
        %v3594 = vadd.f32 0.0, %v3593
        %v3595 = vpop.f32.mrb[0].mxu0
        %3596 = vdwg.mxu0
        %v3597 = vadd.f32 %v3099, %v3471
        %v3598 = vadd.f32 %v3100, %v3474
        %v3599 = vadd.f32 %v3101, %v3479
        %v3600 = vadd.f32 %v3102, %v3482
        %v3601 = vadd.f32 %v3103, %v3487
        %v3602 = vadd.f32 %v3104, %v3490
        %v3603 = vadd.f32 %v3105, %v3495
        %v3604 = vadd.f32 %v3106, %v3498
        %v3605 = vadd.f32 %v3107, %v3503
        %v3606 = vadd.f32 %v3108, %v3506
        %v3607 = vadd.f32 %v3109, %v3511
        %v3608 = vadd.f32 %v3110, %v3514
        %v3609 = vadd.f32 %v3111, %v3519
        %v3610 = vadd.f32 %v3112, %v3522
        %v3611 = vadd.f32 %v3113, %v3527
        %v3612 = vadd.f32 %v3114, %v3530
        %v3613 = vadd.f32 %v3115, %v3535
        %v3614 = vadd.f32 %v3116, %v3538
        %v3615 = vadd.f32 %v3117, %v3543
        %v3616 = vadd.f32 %v3118, %v3546
        %v3617 = vadd.f32 %v3119, %v3551
        %v3618 = vadd.f32 %v3120, %v3554
        %v3619 = vadd.f32 %v3121, %v3559
        %v3620 = vadd.f32 %v3122, %v3562
        %v3621 = vadd.f32 %v3123, %v3567
        %v3622 = vadd.f32 %v3124, %v3570
        %v3623 = vadd.f32 %v3125, %v3575
        %v3624 = vadd.f32 %v3126, %v3578
        %v3625 = vadd.f32 %v3127, %v3583
        %v3626 = vadd.f32 %v3128, %v3586
        %v3627 = vadd.f32 %v3129, %v3591
        %v3628 = vadd.f32 %v3130, %v3594
        %s3629 = scalar_lea.vmem [#allocation2], 24
        %v3630 = vld [vmem:[%s3629] sm:$0xf]
        %v3631 = vld [vmem:[%s3629 + $0x4] sm:$0xf]
        %v3632 = vld [vmem:[%s3629 + $0xc] sm:$0xf]
        %v3633 = vld [vmem:[%s3629 + $0x10] sm:$0xf]
        %v3634 = vld [vmem:[%s3629 + $0x18] sm:$0xf]
        %v3635 = vld [vmem:[%s3629 + $0x1c] sm:$0xf]
        %v3636 = vld [vmem:[%s3629 + $0x24] sm:$0xf]
        %v3637 = vld [vmem:[%s3629 + $0x28] sm:$0xf]
        %v3638 = vld [vmem:[%s3629 + $0x30] sm:$0xf]
        %v3639 = vld [vmem:[%s3629 + $0x34] sm:$0xf]
        %v3640 = vld [vmem:[%s3629 + $0x3c] sm:$0xf]
        %v3641 = vld [vmem:[%s3629 + $0x40] sm:$0xf]
        %v3642 = vld [vmem:[%s3629 + $0x48] sm:$0xf]
        %v3643 = vld [vmem:[%s3629 + $0x4c] sm:$0xf]
        %v3644 = vld [vmem:[%s3629 + $0x54] sm:$0xf]
        %v3645 = vld [vmem:[%s3629 + $0x58] sm:$0xf]
        %v3646 = vld [vmem:[%s3629 + $0x60] sm:$0xf]
        %v3647 = vld [vmem:[%s3629 + $0x64] sm:$0xf]
        %v3648 = vld [vmem:[%s3629 + $0x6c] sm:$0xf]
        %v3649 = vld [vmem:[%s3629 + $0x70] sm:$0xf]
        %v3650 = vld [vmem:[%s3629 + $0x78] sm:$0xf]
        %v3651 = vld [vmem:[%s3629 + $0x7c] sm:$0xf]
        %v3652 = vld [vmem:[%s3629 + $0x84] sm:$0xf]
        %v3653 = vld [vmem:[%s3629 + $0x88] sm:$0xf]
        %v3654 = vld [vmem:[%s3629 + $0x90] sm:$0xf]
        %v3655 = vld [vmem:[%s3629 + $0x94] sm:$0xf]
        %v3656 = vld [vmem:[%s3629 + $0x9c] sm:$0xf]
        %v3657 = vld [vmem:[%s3629 + $0xa0] sm:$0xf]
        %v3658 = vld [vmem:[%s3629 + $0xa8] sm:$0xf]
        %v3659 = vld [vmem:[%s3629 + $0xac] sm:$0xf]
        %v3660 = vld [vmem:[%s3629 + $0xb4] sm:$0xf]
        %v3661 = vld [vmem:[%s3629 + $0xb8] sm:$0xf]
        %s3662 = scalar_lea.vmem %s1, 384
        %v3663 = vld [vmem:[%s3662] sm:$0xf]
        %v3664 = vld [vmem:[%s3662 + $0x4] sm:$0xf]
        %v3665 = vld [vmem:[%s3662 + $0x8] sm:$0xf]
        %v3666 = vld [vmem:[%s3662 + $0xc] sm:$0xf]
        %v3667 = vld [vmem:[%s3662 + $0x10] sm:$0xf]
        %v3668 = vld [vmem:[%s3662 + $0x14] sm:$0xf]
        %v3669 = vld [vmem:[%s3662 + $0x18] sm:$0xf]
        %v3670 = vld [vmem:[%s3662 + $0x1c] sm:$0xf]
        %v3671 = vld [vmem:[%s3662 + $0x20] sm:$0xf]
        %v3672 = vld [vmem:[%s3662 + $0x24] sm:$0xf]
        %v3673 = vld [vmem:[%s3662 + $0x28] sm:$0xf]
        %v3674 = vld [vmem:[%s3662 + $0x2c] sm:$0xf]
        %v3675 = vld [vmem:[%s3662 + $0x30] sm:$0xf]
        %v3676 = vld [vmem:[%s3662 + $0x34] sm:$0xf]
        %v3677 = vld [vmem:[%s3662 + $0x38] sm:$0xf]
        %v3678 = vld [vmem:[%s3662 + $0x3c] sm:$0xf]
        %v3711 = vunpack.c.l.b16 %v3630
        %v3712 = vunpack.c.l.b16 %v3631
        %v3713 = vunpack.c.l.b16 %v3632
        %v3714 = vunpack.c.l.b16 %v3633
        %v3715 = vunpack.c.l.b16 %v3634
        %v3716 = vunpack.c.l.b16 %v3635
        %v3717 = vunpack.c.l.b16 %v3636
        %v3718 = vunpack.c.l.b16 %v3637
        %v3719 = vunpack.c.l.b16 %v3638
        %v3720 = vunpack.c.l.b16 %v3639
        %v3721 = vunpack.c.l.b16 %v3640
        %v3722 = vunpack.c.l.b16 %v3641
        %v3723 = vunpack.c.l.b16 %v3642
        %v3724 = vunpack.c.l.b16 %v3643
        %v3725 = vunpack.c.l.b16 %v3644
        %v3726 = vunpack.c.l.b16 %v3645
        %v3727 = vunpack.c.l.b16 %v3646
        %v3728 = vunpack.c.l.b16 %v3647
        %v3729 = vunpack.c.l.b16 %v3648
        %v3730 = vunpack.c.l.b16 %v3649
        %v3731 = vunpack.c.l.b16 %v3650
        %v3732 = vunpack.c.l.b16 %v3651
        %v3733 = vunpack.c.l.b16 %v3652
        %v3734 = vunpack.c.l.b16 %v3653
        %v3735 = vunpack.c.l.b16 %v3654
        %v3736 = vunpack.c.l.b16 %v3655
        %v3737 = vunpack.c.l.b16 %v3656
        %v3738 = vunpack.c.l.b16 %v3657
        %v3739 = vunpack.c.l.b16 %v3658
        %v3740 = vunpack.c.l.b16 %v3659
        %v3741 = vunpack.c.l.b16 %v3660
        %v3742 = vunpack.c.l.b16 %v3661
        %v3743 = vpack.c.b16 %v3712, %v3711
        %v3744 = vpack.c.b16 %v3714, %v3713
        %v3745 = vpack.c.b16 %v3716, %v3715
        %v3746 = vpack.c.b16 %v3718, %v3717
        %v3747 = vpack.c.b16 %v3720, %v3719
        %v3748 = vpack.c.b16 %v3722, %v3721
        %v3749 = vpack.c.b16 %v3724, %v3723
        %v3750 = vpack.c.b16 %v3726, %v3725
        %v3751 = vpack.c.b16 %v3728, %v3727
        %v3752 = vpack.c.b16 %v3730, %v3729
        %v3753 = vpack.c.b16 %v3732, %v3731
        %v3754 = vpack.c.b16 %v3734, %v3733
        %v3755 = vpack.c.b16 %v3736, %v3735
        %v3756 = vpack.c.b16 %v3738, %v3737
        %v3757 = vpack.c.b16 %v3740, %v3739
        %v3758 = vpack.c.b16 %v3742, %v3741
        %v3791 = vunpack.c.l.b16 %v3663
        %v3792 = vunpack.c.l.b16 %v3664
        %v3793 = vunpack.c.l.b16 %v3665
        %v3794 = vunpack.c.l.b16 %v3666
        %v3795 = vunpack.c.l.b16 %v3667
        %v3796 = vunpack.c.l.b16 %v3668
        %v3797 = vunpack.c.l.b16 %v3669
        %v3798 = vunpack.c.l.b16 %v3670
        %v3799 = vunpack.c.l.b16 %v3671
        %v3800 = vunpack.c.l.b16 %v3672
        %v3801 = vunpack.c.l.b16 %v3673
        %v3802 = vunpack.c.l.b16 %v3674
        %v3803 = vunpack.c.l.b16 %v3675
        %v3804 = vunpack.c.l.b16 %v3676
        %v3805 = vunpack.c.l.b16 %v3677
        %v3806 = vunpack.c.l.b16 %v3678
        %v3807 = vpack.c.b16 %v3792, %v3791
        %v3808 = vpack.c.b16 %v3794, %v3793
        %v3809 = vpack.c.b16 %v3796, %v3795
        %v3810 = vpack.c.b16 %v3798, %v3797
        %v3811 = vpack.c.b16 %v3800, %v3799
        %v3812 = vpack.c.b16 %v3802, %v3801
        %v3813 = vpack.c.b16 %v3804, %v3803
        %v3814 = vpack.c.b16 %v3806, %v3805
        %3823 = vmatprep.subr.bf16.mxu0 0
        %3824 = vmatpush1.bf16.msra.mxu0 %v3807
        %3825 = vmatprep.subr.bf16.mxu0 0
        %3826 = vmatpush1.bf16.msra.mxu0 %v3808
        %3827 = vmatprep.subr.bf16.mxu0 0
        %3828 = vmatpush1.bf16.msra.mxu0 %v3809
        %3829 = vmatprep.subr.bf16.mxu0 0
        %3830 = vmatpush1.bf16.msra.mxu0 %v3810
        %3831 = vmatprep.subr.bf16.mxu0 0
        %3832 = vmatpush1.bf16.msra.mxu0 %v3811
        %3833 = vmatprep.subr.bf16.mxu0 0
        %3834 = vmatpush1.bf16.msra.mxu0 %v3812
        %3835 = vmatprep.subr.bf16.mxu0 0
        %3836 = vmatpush1.bf16.msra.mxu0 %v3813
        %3837 = vmatprep.subr.bf16.mxu0 0
        %3838 = vmatpush1.bf16.msra.mxu0 %v3814
        %3839 = vmatprep.subr.bf16.mxu0 0
        %3840 = vmatpush1.bf16.msra.mxu0 0
        %3841 = vmatprep.subr.bf16.mxu0 0
        %3842 = vmatpush1.bf16.msra.mxu0 0
        %3843 = vmatprep.subr.bf16.mxu0 0
        %3844 = vmatpush1.bf16.msra.mxu0 0
        %3845 = vmatprep.subr.bf16.mxu0 0
        %3846 = vmatpush1.bf16.msra.mxu0 0
        %3847 = vmatprep.subr.bf16.mxu0 0
        %3848 = vmatpush1.bf16.msra.mxu0 0
        %3849 = vmatprep.subr.bf16.mxu0 0
        %3850 = vmatpush1.bf16.msra.mxu0 0
        %3851 = vmatprep.subr.bf16.mxu0 0
        %3852 = vmatpush1.bf16.msra.mxu0 0
        %3853 = vmatprep.subr.bf16.mxu0 0
        %3854 = vmatpush1.bf16.msra.mxu0 0
        %3855 = vmatprep.mubr.bf16.mxu0 0
        %3856 = vmatmul.mubr.bf16.gmra.mrb[0].mxu0 %v3743
        %v3857 = vpop.f32.mrb[0].mxu0
        %v3858 = vadd.f32 0.0, %v3857
        %v3859 = vpop.f32.mrb[0].mxu0
        %v3860 = vpop.f32.mrb[0].mxu0
        %v3861 = vadd.f32 0.0, %v3860
        %v3862 = vpop.f32.mrb[0].mxu0
        %3863 = vmatprep.mubr.bf16.mxu0 0
        %3864 = vmatmul.mubr.bf16.gmra.mrb[0].mxu0 %v3744
        %v3865 = vpop.f32.mrb[0].mxu0
        %v3866 = vadd.f32 0.0, %v3865
        %v3867 = vpop.f32.mrb[0].mxu0
        %v3868 = vpop.f32.mrb[0].mxu0
        %v3869 = vadd.f32 0.0, %v3868
        %v3870 = vpop.f32.mrb[0].mxu0
        %3871 = vmatprep.mubr.bf16.mxu0 0
        %3872 = vmatmul.mubr.bf16.gmra.mrb[0].mxu0 %v3745
        %v3873 = vpop.f32.mrb[0].mxu0
        %v3874 = vadd.f32 0.0, %v3873
        %v3875 = vpop.f32.mrb[0].mxu0
        %v3876 = vpop.f32.mrb[0].mxu0
        %v3877 = vadd.f32 0.0, %v3876
        %v3878 = vpop.f32.mrb[0].mxu0
        %3879 = vmatprep.mubr.bf16.mxu0 0
        %3880 = vmatmul.mubr.bf16.gmra.mrb[0].mxu0 %v3746
        %v3881 = vpop.f32.mrb[0].mxu0
        %v3882 = vadd.f32 0.0, %v3881
        %v3883 = vpop.f32.mrb[0].mxu0
        %v3884 = vpop.f32.mrb[0].mxu0
        %v3885 = vadd.f32 0.0, %v3884
        %v3886 = vpop.f32.mrb[0].mxu0
        %3887 = vmatprep.mubr.bf16.mxu0 0
        %3888 = vmatmul.mubr.bf16.gmra.mrb[0].mxu0 %v3747
        %v3889 = vpop.f32.mrb[0].mxu0
        %v3890 = vadd.f32 0.0, %v3889
        %v3891 = vpop.f32.mrb[0].mxu0
        %v3892 = vpop.f32.mrb[0].mxu0
        %v3893 = vadd.f32 0.0, %v3892
        %v3894 = vpop.f32.mrb[0].mxu0
        %3895 = vmatprep.mubr.bf16.mxu0 0
        %3896 = vmatmul.mubr.bf16.gmra.mrb[0].mxu0 %v3748
        %v3897 = vpop.f32.mrb[0].mxu0
        %v3898 = vadd.f32 0.0, %v3897
        %v3899 = vpop.f32.mrb[0].mxu0
        %v3900 = vpop.f32.mrb[0].mxu0
        %v3901 = vadd.f32 0.0, %v3900
        %v3902 = vpop.f32.mrb[0].mxu0
        %3903 = vmatprep.mubr.bf16.mxu0 0
        %3904 = vmatmul.mubr.bf16.gmra.mrb[0].mxu0 %v3749
        %v3905 = vpop.f32.mrb[0].mxu0
        %v3906 = vadd.f32 0.0, %v3905
        %v3907 = vpop.f32.mrb[0].mxu0
        %v3908 = vpop.f32.mrb[0].mxu0
        %v3909 = vadd.f32 0.0, %v3908
        %v3910 = vpop.f32.mrb[0].mxu0
        %3911 = vmatprep.mubr.bf16.mxu0 0
        %3912 = vmatmul.mubr.bf16.gmra.mrb[0].mxu0 %v3750
        %v3913 = vpop.f32.mrb[0].mxu0
        %v3914 = vadd.f32 0.0, %v3913
        %v3915 = vpop.f32.mrb[0].mxu0
        %v3916 = vpop.f32.mrb[0].mxu0
        %v3917 = vadd.f32 0.0, %v3916
        %v3918 = vpop.f32.mrb[0].mxu0
        %3919 = vmatprep.mubr.bf16.mxu0 0
        %3920 = vmatmul.mubr.bf16.gmra.mrb[0].mxu0 %v3751
        %v3921 = vpop.f32.mrb[0].mxu0
        %v3922 = vadd.f32 0.0, %v3921
        %v3923 = vpop.f32.mrb[0].mxu0
        %v3924 = vpop.f32.mrb[0].mxu0
        %v3925 = vadd.f32 0.0, %v3924
        %v3926 = vpop.f32.mrb[0].mxu0
        %3927 = vmatprep.mubr.bf16.mxu0 0
        %3928 = vmatmul.mubr.bf16.gmra.mrb[0].mxu0 %v3752
        %v3929 = vpop.f32.mrb[0].mxu0
        %v3930 = vadd.f32 0.0, %v3929
        %v3931 = vpop.f32.mrb[0].mxu0
        %v3932 = vpop.f32.mrb[0].mxu0
        %v3933 = vadd.f32 0.0, %v3932
        %v3934 = vpop.f32.mrb[0].mxu0
        %3935 = vmatprep.mubr.bf16.mxu0 0
        %3936 = vmatmul.mubr.bf16.gmra.mrb[0].mxu0 %v3753
        %v3937 = vpop.f32.mrb[0].mxu0
        %v3938 = vadd.f32 0.0, %v3937
        %v3939 = vpop.f32.mrb[0].mxu0
        %v3940 = vpop.f32.mrb[0].mxu0
        %v3941 = vadd.f32 0.0, %v3940
        %v3942 = vpop.f32.mrb[0].mxu0
        %3943 = vmatprep.mubr.bf16.mxu0 0
        %3944 = vmatmul.mubr.bf16.gmra.mrb[0].mxu0 %v3754
        %v3945 = vpop.f32.mrb[0].mxu0
        %v3946 = vadd.f32 0.0, %v3945
        %v3947 = vpop.f32.mrb[0].mxu0
        %v3948 = vpop.f32.mrb[0].mxu0
        %v3949 = vadd.f32 0.0, %v3948
        %v3950 = vpop.f32.mrb[0].mxu0
        %3951 = vmatprep.mubr.bf16.mxu0 0
        %3952 = vmatmul.mubr.bf16.gmra.mrb[0].mxu0 %v3755
        %v3953 = vpop.f32.mrb[0].mxu0
        %v3954 = vadd.f32 0.0, %v3953
        %v3955 = vpop.f32.mrb[0].mxu0
        %v3956 = vpop.f32.mrb[0].mxu0
        %v3957 = vadd.f32 0.0, %v3956
        %v3958 = vpop.f32.mrb[0].mxu0
        %3959 = vmatprep.mubr.bf16.mxu0 0
        %3960 = vmatmul.mubr.bf16.gmra.mrb[0].mxu0 %v3756
        %v3961 = vpop.f32.mrb[0].mxu0
        %v3962 = vadd.f32 0.0, %v3961
        %v3963 = vpop.f32.mrb[0].mxu0
        %v3964 = vpop.f32.mrb[0].mxu0
        %v3965 = vadd.f32 0.0, %v3964
        %v3966 = vpop.f32.mrb[0].mxu0
        %3967 = vmatprep.mubr.bf16.mxu0 0
        %3968 = vmatmul.mubr.bf16.gmra.mrb[0].mxu0 %v3757
        %v3969 = vpop.f32.mrb[0].mxu0
        %v3970 = vadd.f32 0.0, %v3969
        %v3971 = vpop.f32.mrb[0].mxu0
        %v3972 = vpop.f32.mrb[0].mxu0
        %v3973 = vadd.f32 0.0, %v3972
        %v3974 = vpop.f32.mrb[0].mxu0
        %3975 = vmatprep.mubr.bf16.mxu0 0
        %3976 = vmatmul.mubr.bf16.gmra.mrb[0].mxu0 %v3758
        %v3977 = vpop.f32.mrb[0].mxu0
        %v3978 = vadd.f32 0.0, %v3977
        %v3979 = vpop.f32.mrb[0].mxu0
        %v3980 = vpop.f32.mrb[0].mxu0
        %v3981 = vadd.f32 0.0, %v3980
        %v3982 = vpop.f32.mrb[0].mxu0
        %3983 = vdwg.mxu0
        %v3984 = vadd.f32 %v3597, %v3858
        %v3985 = vadd.f32 %v3598, %v3861
        %v3986 = vadd.f32 %v3599, %v3866
        %v3987 = vadd.f32 %v3600, %v3869
        %v3988 = vadd.f32 %v3601, %v3874
        %v3989 = vadd.f32 %v3602, %v3877
        %v3990 = vadd.f32 %v3603, %v3882
        %v3991 = vadd.f32 %v3604, %v3885
        %v3992 = vadd.f32 %v3605, %v3890
        %v3993 = vadd.f32 %v3606, %v3893
        %v3994 = vadd.f32 %v3607, %v3898
        %v3995 = vadd.f32 %v3608, %v3901
        %v3996 = vadd.f32 %v3609, %v3906
        %v3997 = vadd.f32 %v3610, %v3909
        %v3998 = vadd.f32 %v3611, %v3914
        %v3999 = vadd.f32 %v3612, %v3917
        %v4000 = vadd.f32 %v3613, %v3922
        %v4001 = vadd.f32 %v3614, %v3925
        %v4002 = vadd.f32 %v3615, %v3930
        %v4003 = vadd.f32 %v3616, %v3933
        %v4004 = vadd.f32 %v3617, %v3938
        %v4005 = vadd.f32 %v3618, %v3941
        %v4006 = vadd.f32 %v3619, %v3946
        %v4007 = vadd.f32 %v3620, %v3949
        %v4008 = vadd.f32 %v3621, %v3954
        %v4009 = vadd.f32 %v3622, %v3957
        %v4010 = vadd.f32 %v3623, %v3962
        %v4011 = vadd.f32 %v3624, %v3965
        %v4012 = vadd.f32 %v3625, %v3970
        %v4013 = vadd.f32 %v3626, %v3973
        %v4014 = vadd.f32 %v3627, %v3978
        %v4015 = vadd.f32 %v3628, %v3981
        %v4016 = vld [vmem:[%s3629] sm:$0xf]
        %v4017 = vld [vmem:[%s3629 + $0x4] sm:$0xf]
        %v4018 = vld [vmem:[%s3629 + $0x8] sm:$0x1]
        %v4019 = vld [vmem:[%s3629 + $0xc] sm:$0xf]
        %v4020 = vld [vmem:[%s3629 + $0x10] sm:$0xf]
        %v4021 = vld [vmem:[%s3629 + $0x14] sm:$0x1]
        %v4022 = vld [vmem:[%s3629 + $0x18] sm:$0xf]
        %v4023 = vld [vmem:[%s3629 + $0x1c] sm:$0xf]
        %v4024 = vld [vmem:[%s3629 + $0x20] sm:$0x1]
        %v4025 = vld [vmem:[%s3629 + $0x24] sm:$0xf]
        %v4026 = vld [vmem:[%s3629 + $0x28] sm:$0xf]
        %v4027 = vld [vmem:[%s3629 + $0x2c] sm:$0x1]
        %v4028 = vld [vmem:[%s3629 + $0x30] sm:$0xf]
        %v4029 = vld [vmem:[%s3629 + $0x34] sm:$0xf]
        %v4030 = vld [vmem:[%s3629 + $0x38] sm:$0x1]
        %v4031 = vld [vmem:[%s3629 + $0x3c] sm:$0xf]
        %v4032 = vld [vmem:[%s3629 + $0x40] sm:$0xf]
        %v4033 = vld [vmem:[%s3629 + $0x44] sm:$0x1]
        %v4034 = vld [vmem:[%s3629 + $0x48] sm:$0xf]
        %v4035 = vld [vmem:[%s3629 + $0x4c] sm:$0xf]
        %v4036 = vld [vmem:[%s3629 + $0x50] sm:$0x1]
        %v4037 = vld [vmem:[%s3629 + $0x54] sm:$0xf]
        %v4038 = vld [vmem:[%s3629 + $0x58] sm:$0xf]
        %v4039 = vld [vmem:[%s3629 + $0x5c] sm:$0x1]
        %v4040 = vld [vmem:[%s3629 + $0x60] sm:$0xf]
        %v4041 = vld [vmem:[%s3629 + $0x64] sm:$0xf]
        %v4042 = vld [vmem:[%s3629 + $0x68] sm:$0x1]
        %v4043 = vld [vmem:[%s3629 + $0x6c] sm:$0xf]
        %v4044 = vld [vmem:[%s3629 + $0x70] sm:$0xf]
        %v4045 = vld [vmem:[%s3629 + $0x74] sm:$0x1]
        %v4046 = vld [vmem:[%s3629 + $0x78] sm:$0xf]
        %v4047 = vld [vmem:[%s3629 + $0x7c] sm:$0xf]
        %v4048 = vld [vmem:[%s3629 + $0x80] sm:$0x1]
        %v4049 = vld [vmem:[%s3629 + $0x84] sm:$0xf]
        %v4050 = vld [vmem:[%s3629 + $0x88] sm:$0xf]
        %v4051 = vld [vmem:[%s3629 + $0x8c] sm:$0x1]
        %v4052 = vld [vmem:[%s3629 + $0x90] sm:$0xf]
        %v4053 = vld [vmem:[%s3629 + $0x94] sm:$0xf]
        %v4054 = vld [vmem:[%s3629 + $0x98] sm:$0x1]
        %v4055 = vld [vmem:[%s3629 + $0x9c] sm:$0xf]
        %v4056 = vld [vmem:[%s3629 + $0xa0] sm:$0xf]
        %v4057 = vld [vmem:[%s3629 + $0xa4] sm:$0x1]
        %v4058 = vld [vmem:[%s3629 + $0xa8] sm:$0xf]
        %v4059 = vld [vmem:[%s3629 + $0xac] sm:$0xf]
        %v4060 = vld [vmem:[%s3629 + $0xb0] sm:$0x1]
        %v4061 = vld [vmem:[%s3629 + $0xb4] sm:$0xf]
        %v4062 = vld [vmem:[%s3629 + $0xb8] sm:$0xf]
        %v4063 = vld [vmem:[%s3629 + $0xbc] sm:$0x1]
        %v4065 = vshrl.u32 %v4016, 16
        %v4067 = vrot.slane %v4065, 4
        %v4068 = vshll.u32 %v4016, 16
        %v4070 = vrot.slane %v4068, 5
        %v4071 = vor.u32 %v4067, %v4070
        %v4072 = vrot.slane %v4071, 4
        %v4074 = vshll.u32 %v4017, 16
        %v4076 = vrot.slane %v4074, 5
        %v4077 = vsel %vm525, %v4072, %v4076
        %v4078 = vshrl.u32 %v4017, 16
        %v4080 = vrot.slane %v4078, 4
        %v4081 = vor.u32 %v4080, %v4076
        %v4082 = vrot.slane %v4081, 4
        %v4084 = vshll.u32 %v4018, 16
        %v4086 = vrot.slane %v4084, 5
        %v4087 = vsel %vm525, %v4082, %v4086
        %v4089 = vshrl.u32 %v4019, 16
        %v4091 = vrot.slane %v4089, 4
        %v4092 = vshll.u32 %v4019, 16
        %v4094 = vrot.slane %v4092, 5
        %v4095 = vor.u32 %v4091, %v4094
        %v4096 = vrot.slane %v4095, 4
        %v4098 = vshll.u32 %v4020, 16
        %v4100 = vrot.slane %v4098, 5
        %v4101 = vsel %vm525, %v4096, %v4100
        %v4102 = vshrl.u32 %v4020, 16
        %v4104 = vrot.slane %v4102, 4
        %v4105 = vor.u32 %v4104, %v4100
        %v4106 = vrot.slane %v4105, 4
        %v4108 = vshll.u32 %v4021, 16
        %v4110 = vrot.slane %v4108, 5
        %v4111 = vsel %vm525, %v4106, %v4110
        %v4113 = vshrl.u32 %v4022, 16
        %v4115 = vrot.slane %v4113, 4
        %v4116 = vshll.u32 %v4022, 16
        %v4118 = vrot.slane %v4116, 5
        %v4119 = vor.u32 %v4115, %v4118
        %v4120 = vrot.slane %v4119, 4
        %v4122 = vshll.u32 %v4023, 16
        %v4124 = vrot.slane %v4122, 5
        %v4125 = vsel %vm525, %v4120, %v4124
        %v4126 = vshrl.u32 %v4023, 16
        %v4128 = vrot.slane %v4126, 4
        %v4129 = vor.u32 %v4128, %v4124
        %v4130 = vrot.slane %v4129, 4
        %v4132 = vshll.u32 %v4024, 16
        %v4134 = vrot.slane %v4132, 5
        %v4135 = vsel %vm525, %v4130, %v4134
        %v4137 = vshrl.u32 %v4025, 16
        %v4139 = vrot.slane %v4137, 4
        %v4140 = vshll.u32 %v4025, 16
        %v4142 = vrot.slane %v4140, 5
        %v4143 = vor.u32 %v4139, %v4142
        %v4144 = vrot.slane %v4143, 4
        %v4146 = vshll.u32 %v4026, 16
        %v4148 = vrot.slane %v4146, 5
        %v4149 = vsel %vm525, %v4144, %v4148
        %v4150 = vshrl.u32 %v4026, 16
        %v4152 = vrot.slane %v4150, 4
        %v4153 = vor.u32 %v4152, %v4148
        %v4154 = vrot.slane %v4153, 4
        %v4156 = vshll.u32 %v4027, 16
        %v4158 = vrot.slane %v4156, 5
        %v4159 = vsel %vm525, %v4154, %v4158
        %v4161 = vshrl.u32 %v4028, 16
        %v4163 = vrot.slane %v4161, 4
        %v4164 = vshll.u32 %v4028, 16
        %v4166 = vrot.slane %v4164, 5
        %v4167 = vor.u32 %v4163, %v4166
        %v4168 = vrot.slane %v4167, 4
        %v4170 = vshll.u32 %v4029, 16
        %v4172 = vrot.slane %v4170, 5
        %v4173 = vsel %vm525, %v4168, %v4172
        %v4174 = vshrl.u32 %v4029, 16
        %v4176 = vrot.slane %v4174, 4
        %v4177 = vor.u32 %v4176, %v4172
        %v4178 = vrot.slane %v4177, 4
        %v4180 = vshll.u32 %v4030, 16
        %v4182 = vrot.slane %v4180, 5
        %v4183 = vsel %vm525, %v4178, %v4182
        %v4185 = vshrl.u32 %v4031, 16
        %v4187 = vrot.slane %v4185, 4
        %v4188 = vshll.u32 %v4031, 16
        %v4190 = vrot.slane %v4188, 5
        %v4191 = vor.u32 %v4187, %v4190
        %v4192 = vrot.slane %v4191, 4
        %v4194 = vshll.u32 %v4032, 16
        %v4196 = vrot.slane %v4194, 5
        %v4197 = vsel %vm525, %v4192, %v4196
        %v4198 = vshrl.u32 %v4032, 16
        %v4200 = vrot.slane %v4198, 4
        %v4201 = vor.u32 %v4200, %v4196
        %v4202 = vrot.slane %v4201, 4
        %v4204 = vshll.u32 %v4033, 16
        %v4206 = vrot.slane %v4204, 5
        %v4207 = vsel %vm525, %v4202, %v4206
        %v4209 = vshrl.u32 %v4034, 16
        %v4211 = vrot.slane %v4209, 4
        %v4212 = vshll.u32 %v4034, 16
        %v4214 = vrot.slane %v4212, 5
        %v4215 = vor.u32 %v4211, %v4214
        %v4216 = vrot.slane %v4215, 4
        %v4218 = vshll.u32 %v4035, 16
        %v4220 = vrot.slane %v4218, 5
        %v4221 = vsel %vm525, %v4216, %v4220
        %v4222 = vshrl.u32 %v4035, 16
        %v4224 = vrot.slane %v4222, 4
        %v4225 = vor.u32 %v4224, %v4220
        %v4226 = vrot.slane %v4225, 4
        %v4228 = vshll.u32 %v4036, 16
        %v4230 = vrot.slane %v4228, 5
        %v4231 = vsel %vm525, %v4226, %v4230
        %v4233 = vshrl.u32 %v4037, 16
        %v4235 = vrot.slane %v4233, 4
        %v4236 = vshll.u32 %v4037, 16
        %v4238 = vrot.slane %v4236, 5
        %v4239 = vor.u32 %v4235, %v4238
        %v4240 = vrot.slane %v4239, 4
        %v4242 = vshll.u32 %v4038, 16
        %v4244 = vrot.slane %v4242, 5
        %v4245 = vsel %vm525, %v4240, %v4244
        %v4246 = vshrl.u32 %v4038, 16
        %v4248 = vrot.slane %v4246, 4
        %v4249 = vor.u32 %v4248, %v4244
        %v4250 = vrot.slane %v4249, 4
        %v4252 = vshll.u32 %v4039, 16
        %v4254 = vrot.slane %v4252, 5
        %v4255 = vsel %vm525, %v4250, %v4254
        %v4257 = vshrl.u32 %v4040, 16
        %v4259 = vrot.slane %v4257, 4
        %v4260 = vshll.u32 %v4040, 16
        %v4262 = vrot.slane %v4260, 5
        %v4263 = vor.u32 %v4259, %v4262
        %v4264 = vrot.slane %v4263, 4
        %v4266 = vshll.u32 %v4041, 16
        %v4268 = vrot.slane %v4266, 5
        %v4269 = vsel %vm525, %v4264, %v4268
        %v4270 = vshrl.u32 %v4041, 16
        %v4272 = vrot.slane %v4270, 4
        %v4273 = vor.u32 %v4272, %v4268
        %v4274 = vrot.slane %v4273, 4
        %v4276 = vshll.u32 %v4042, 16
        %v4278 = vrot.slane %v4276, 5
        %v4279 = vsel %vm525, %v4274, %v4278
        %v4281 = vshrl.u32 %v4043, 16
        %v4283 = vrot.slane %v4281, 4
        %v4284 = vshll.u32 %v4043, 16
        %v4286 = vrot.slane %v4284, 5
        %v4287 = vor.u32 %v4283, %v4286
        %v4288 = vrot.slane %v4287, 4
        %v4290 = vshll.u32 %v4044, 16
        %v4292 = vrot.slane %v4290, 5
        %v4293 = vsel %vm525, %v4288, %v4292
        %v4294 = vshrl.u32 %v4044, 16
        %v4296 = vrot.slane %v4294, 4
        %v4297 = vor.u32 %v4296, %v4292
        %v4298 = vrot.slane %v4297, 4
        %v4300 = vshll.u32 %v4045, 16
        %v4302 = vrot.slane %v4300, 5
        %v4303 = vsel %vm525, %v4298, %v4302
        %v4305 = vshrl.u32 %v4046, 16
        %v4307 = vrot.slane %v4305, 4
        %v4308 = vshll.u32 %v4046, 16
        %v4310 = vrot.slane %v4308, 5
        %v4311 = vor.u32 %v4307, %v4310
        %v4312 = vrot.slane %v4311, 4
        %v4314 = vshll.u32 %v4047, 16
        %v4316 = vrot.slane %v4314, 5
        %v4317 = vsel %vm525, %v4312, %v4316
        %v4318 = vshrl.u32 %v4047, 16
        %v4320 = vrot.slane %v4318, 4
        %v4321 = vor.u32 %v4320, %v4316
        %v4322 = vrot.slane %v4321, 4
        %v4324 = vshll.u32 %v4048, 16
        %v4326 = vrot.slane %v4324, 5
        %v4327 = vsel %vm525, %v4322, %v4326
        %v4329 = vshrl.u32 %v4049, 16
        %v4331 = vrot.slane %v4329, 4
        %v4332 = vshll.u32 %v4049, 16
        %v4334 = vrot.slane %v4332, 5
        %v4335 = vor.u32 %v4331, %v4334
        %v4336 = vrot.slane %v4335, 4
        %v4338 = vshll.u32 %v4050, 16
        %v4340 = vrot.slane %v4338, 5
        %v4341 = vsel %vm525, %v4336, %v4340
        %v4342 = vshrl.u32 %v4050, 16
        %v4344 = vrot.slane %v4342, 4
        %v4345 = vor.u32 %v4344, %v4340
        %v4346 = vrot.slane %v4345, 4
        %v4348 = vshll.u32 %v4051, 16
        %v4350 = vrot.slane %v4348, 5
        %v4351 = vsel %vm525, %v4346, %v4350
        %v4353 = vshrl.u32 %v4052, 16
        %v4355 = vrot.slane %v4353, 4
        %v4356 = vshll.u32 %v4052, 16
        %v4358 = vrot.slane %v4356, 5
        %v4359 = vor.u32 %v4355, %v4358
        %v4360 = vrot.slane %v4359, 4
        %v4362 = vshll.u32 %v4053, 16
        %v4364 = vrot.slane %v4362, 5
        %v4365 = vsel %vm525, %v4360, %v4364
        %v4366 = vshrl.u32 %v4053, 16
        %v4368 = vrot.slane %v4366, 4
        %v4369 = vor.u32 %v4368, %v4364
        %v4370 = vrot.slane %v4369, 4
        %v4372 = vshll.u32 %v4054, 16
        %v4374 = vrot.slane %v4372, 5
        %v4375 = vsel %vm525, %v4370, %v4374
        %v4377 = vshrl.u32 %v4055, 16
        %v4379 = vrot.slane %v4377, 4
        %v4380 = vshll.u32 %v4055, 16
        %v4382 = vrot.slane %v4380, 5
        %v4383 = vor.u32 %v4379, %v4382
        %v4384 = vrot.slane %v4383, 4
        %v4386 = vshll.u32 %v4056, 16
        %v4388 = vrot.slane %v4386, 5
        %v4389 = vsel %vm525, %v4384, %v4388
        %v4390 = vshrl.u32 %v4056, 16
        %v4392 = vrot.slane %v4390, 4
        %v4393 = vor.u32 %v4392, %v4388
        %v4394 = vrot.slane %v4393, 4
        %v4396 = vshll.u32 %v4057, 16
        %v4398 = vrot.slane %v4396, 5
        %v4399 = vsel %vm525, %v4394, %v4398
        %v4401 = vshrl.u32 %v4058, 16
        %v4403 = vrot.slane %v4401, 4
        %v4404 = vshll.u32 %v4058, 16
        %v4406 = vrot.slane %v4404, 5
        %v4407 = vor.u32 %v4403, %v4406
        %v4408 = vrot.slane %v4407, 4
        %v4410 = vshll.u32 %v4059, 16
        %v4412 = vrot.slane %v4410, 5
        %v4413 = vsel %vm525, %v4408, %v4412
        %v4414 = vshrl.u32 %v4059, 16
        %v4416 = vrot.slane %v4414, 4
        %v4417 = vor.u32 %v4416, %v4412
        %v4418 = vrot.slane %v4417, 4
        %v4420 = vshll.u32 %v4060, 16
        %v4422 = vrot.slane %v4420, 5
        %v4423 = vsel %vm525, %v4418, %v4422
        %v4425 = vshrl.u32 %v4061, 16
        %v4427 = vrot.slane %v4425, 4
        %v4428 = vshll.u32 %v4061, 16
        %v4430 = vrot.slane %v4428, 5
        %v4431 = vor.u32 %v4427, %v4430
        %v4432 = vrot.slane %v4431, 4
        %v4434 = vshll.u32 %v4062, 16
        %v4436 = vrot.slane %v4434, 5
        %v4437 = vsel %vm525, %v4432, %v4436
        %v4438 = vshrl.u32 %v4062, 16
        %v4440 = vrot.slane %v4438, 4
        %v4441 = vor.u32 %v4440, %v4436
        %v4442 = vrot.slane %v4441, 4
        %v4444 = vshll.u32 %v4063, 16
        %v4446 = vrot.slane %v4444, 5
        %v4447 = vsel %vm525, %v4442, %v4446
        %s4448 = scalar_lea.vmem %s1, 448
        %v4449 = vld [vmem:[%s4448] sm:$0xf]
        %v4450 = vld [vmem:[%s4448 + $0x4] sm:$0xf]
        %v4451 = vld [vmem:[%s4448 + $0x8] sm:$0xf]
        %v4452 = vld [vmem:[%s4448 + $0xc] sm:$0xf]
        %v4453 = vld [vmem:[%s4448 + $0x10] sm:$0xf]
        %v4454 = vld [vmem:[%s4448 + $0x14] sm:$0xf]
        %v4455 = vld [vmem:[%s4448 + $0x18] sm:$0xf]
        %v4456 = vld [vmem:[%s4448 + $0x1c] sm:$0xf]
        %v4457 = vld [vmem:[%s4448 + $0x20] sm:$0xf]
        %v4458 = vld [vmem:[%s4448 + $0x24] sm:$0xf]
        %v4459 = vld [vmem:[%s4448 + $0x28] sm:$0xf]
        %v4460 = vld [vmem:[%s4448 + $0x2c] sm:$0xf]
        %v4461 = vld [vmem:[%s4448 + $0x30] sm:$0xf]
        %v4462 = vld [vmem:[%s4448 + $0x34] sm:$0xf]
        %v4463 = vld [vmem:[%s4448 + $0x38] sm:$0xf]
        %v4464 = vld [vmem:[%s4448 + $0x3c] sm:$0xf]
        %v4465 = vunpack.c.l.b16 %v4077
        %v4466 = vunpack.c.l.b16 %v4087
        %v4467 = vunpack.c.l.b16 %v4101
        %v4468 = vunpack.c.l.b16 %v4111
        %v4469 = vunpack.c.l.b16 %v4125
        %v4470 = vunpack.c.l.b16 %v4135
        %v4471 = vunpack.c.l.b16 %v4149
        %v4472 = vunpack.c.l.b16 %v4159
        %v4473 = vunpack.c.l.b16 %v4173
        %v4474 = vunpack.c.l.b16 %v4183
        %v4475 = vunpack.c.l.b16 %v4197
        %v4476 = vunpack.c.l.b16 %v4207
        %v4477 = vunpack.c.l.b16 %v4221
        %v4478 = vunpack.c.l.b16 %v4231
        %v4479 = vunpack.c.l.b16 %v4245
        %v4480 = vunpack.c.l.b16 %v4255
        %v4481 = vunpack.c.l.b16 %v4269
        %v4482 = vunpack.c.l.b16 %v4279
        %v4483 = vunpack.c.l.b16 %v4293
        %v4484 = vunpack.c.l.b16 %v4303
        %v4485 = vunpack.c.l.b16 %v4317
        %v4486 = vunpack.c.l.b16 %v4327
        %v4487 = vunpack.c.l.b16 %v4341
        %v4488 = vunpack.c.l.b16 %v4351
        %v4489 = vunpack.c.l.b16 %v4365
        %v4490 = vunpack.c.l.b16 %v4375
        %v4491 = vunpack.c.l.b16 %v4389
        %v4492 = vunpack.c.l.b16 %v4399
        %v4493 = vunpack.c.l.b16 %v4413
        %v4494 = vunpack.c.l.b16 %v4423
        %v4495 = vunpack.c.l.b16 %v4437
        %v4496 = vunpack.c.l.b16 %v4447
        %v4497 = vpack.c.b16 %v4466, %v4465
        %v4498 = vpack.c.b16 %v4468, %v4467
        %v4499 = vpack.c.b16 %v4470, %v4469
        %v4500 = vpack.c.b16 %v4472, %v4471
        %v4501 = vpack.c.b16 %v4474, %v4473
        %v4502 = vpack.c.b16 %v4476, %v4475
        %v4503 = vpack.c.b16 %v4478, %v4477
        %v4504 = vpack.c.b16 %v4480, %v4479
        %v4505 = vpack.c.b16 %v4482, %v4481
        %v4506 = vpack.c.b16 %v4484, %v4483
        %v4507 = vpack.c.b16 %v4486, %v4485
        %v4508 = vpack.c.b16 %v4488, %v4487
        %v4509 = vpack.c.b16 %v4490, %v4489
        %v4510 = vpack.c.b16 %v4492, %v4491
        %v4511 = vpack.c.b16 %v4494, %v4493
        %v4512 = vpack.c.b16 %v4496, %v4495
        %v4545 = vunpack.c.l.b16 %v4449
        %v4546 = vunpack.c.l.b16 %v4450
        %v4547 = vunpack.c.l.b16 %v4451
        %v4548 = vunpack.c.l.b16 %v4452
        %v4549 = vunpack.c.l.b16 %v4453
        %v4550 = vunpack.c.l.b16 %v4454
        %v4551 = vunpack.c.l.b16 %v4455
        %v4552 = vunpack.c.l.b16 %v4456
        %v4553 = vunpack.c.l.b16 %v4457
        %v4554 = vunpack.c.l.b16 %v4458
        %v4555 = vunpack.c.l.b16 %v4459
        %v4556 = vunpack.c.l.b16 %v4460
        %v4557 = vunpack.c.l.b16 %v4461
        %v4558 = vunpack.c.l.b16 %v4462
        %v4559 = vunpack.c.l.b16 %v4463
        %v4560 = vunpack.c.l.b16 %v4464
        %v4561 = vpack.c.b16 %v4546, %v4545
        %v4562 = vpack.c.b16 %v4548, %v4547
        %v4563 = vpack.c.b16 %v4550, %v4549
        %v4564 = vpack.c.b16 %v4552, %v4551
        %v4565 = vpack.c.b16 %v4554, %v4553
        %v4566 = vpack.c.b16 %v4556, %v4555
        %v4567 = vpack.c.b16 %v4558, %v4557
        %v4568 = vpack.c.b16 %v4560, %v4559
        %4577 = vmatprep.subr.bf16.mxu0 0
        %4578 = vmatpush1.bf16.msra.mxu0 %v4561
        %4579 = vmatprep.subr.bf16.mxu0 0
        %4580 = vmatpush1.bf16.msra.mxu0 %v4562
        %4581 = vmatprep.subr.bf16.mxu0 0
        %4582 = vmatpush1.bf16.msra.mxu0 %v4563
        %4583 = vmatprep.subr.bf16.mxu0 0
        %4584 = vmatpush1.bf16.msra.mxu0 %v4564
        %4585 = vmatprep.subr.bf16.mxu0 0
        %4586 = vmatpush1.bf16.msra.mxu0 %v4565
        %4587 = vmatprep.subr.bf16.mxu0 0
        %4588 = vmatpush1.bf16.msra.mxu0 %v4566
        %4589 = vmatprep.subr.bf16.mxu0 0
        %4590 = vmatpush1.bf16.msra.mxu0 %v4567
        %4591 = vmatprep.subr.bf16.mxu0 0
        %4592 = vmatpush1.bf16.msra.mxu0 %v4568
        %4593 = vmatprep.subr.bf16.mxu0 0
        %4594 = vmatpush1.bf16.msra.mxu0 0
        %4595 = vmatprep.subr.bf16.mxu0 0
        %4596 = vmatpush1.bf16.msra.mxu0 0
        %4597 = vmatprep.subr.bf16.mxu0 0
        %4598 = vmatpush1.bf16.msra.mxu0 0
        %4599 = vmatprep.subr.bf16.mxu0 0
        %4600 = vmatpush1.bf16.msra.mxu0 0
        %4601 = vmatprep.subr.bf16.mxu0 0
        %4602 = vmatpush1.bf16.msra.mxu0 0
        %4603 = vmatprep.subr.bf16.mxu0 0
        %4604 = vmatpush1.bf16.msra.mxu0 0
        %4605 = vmatprep.subr.bf16.mxu0 0
        %4606 = vmatpush1.bf16.msra.mxu0 0
        %4607 = vmatprep.subr.bf16.mxu0 0
        %4608 = vmatpush1.bf16.msra.mxu0 0
        %4609 = vmatprep.mubr.bf16.mxu0 0
        %4610 = vmatmul.mubr.bf16.gmra.mrb[0].mxu0 %v4497
        %v4611 = vpop.f32.mrb[0].mxu0
        %v4612 = vadd.f32 0.0, %v4611
        %v4613 = vpop.f32.mrb[0].mxu0
        %v4614 = vpop.f32.mrb[0].mxu0
        %v4615 = vadd.f32 0.0, %v4614
        %v4616 = vpop.f32.mrb[0].mxu0
        %4617 = vmatprep.mubr.bf16.mxu0 0
        %4618 = vmatmul.mubr.bf16.gmra.mrb[0].mxu0 %v4498
        %v4619 = vpop.f32.mrb[0].mxu0
        %v4620 = vadd.f32 0.0, %v4619
        %v4621 = vpop.f32.mrb[0].mxu0
        %v4622 = vpop.f32.mrb[0].mxu0
        %v4623 = vadd.f32 0.0, %v4622
        %v4624 = vpop.f32.mrb[0].mxu0
        %4625 = vmatprep.mubr.bf16.mxu0 0
        %4626 = vmatmul.mubr.bf16.gmra.mrb[0].mxu0 %v4499
        %v4627 = vpop.f32.mrb[0].mxu0
        %v4628 = vadd.f32 0.0, %v4627
        %v4629 = vpop.f32.mrb[0].mxu0
        %v4630 = vpop.f32.mrb[0].mxu0
        %v4631 = vadd.f32 0.0, %v4630
        %v4632 = vpop.f32.mrb[0].mxu0
        %4633 = vmatprep.mubr.bf16.mxu0 0
        %4634 = vmatmul.mubr.bf16.gmra.mrb[0].mxu0 %v4500
        %v4635 = vpop.f32.mrb[0].mxu0
        %v4636 = vadd.f32 0.0, %v4635
        %v4637 = vpop.f32.mrb[0].mxu0
        %v4638 = vpop.f32.mrb[0].mxu0
        %v4639 = vadd.f32 0.0, %v4638
        %v4640 = vpop.f32.mrb[0].mxu0
        %4641 = vmatprep.mubr.bf16.mxu0 0
        %4642 = vmatmul.mubr.bf16.gmra.mrb[0].mxu0 %v4501
        %v4643 = vpop.f32.mrb[0].mxu0
        %v4644 = vadd.f32 0.0, %v4643
        %v4645 = vpop.f32.mrb[0].mxu0
        %v4646 = vpop.f32.mrb[0].mxu0
        %v4647 = vadd.f32 0.0, %v4646
        %v4648 = vpop.f32.mrb[0].mxu0
        %4649 = vmatprep.mubr.bf16.mxu0 0
        %4650 = vmatmul.mubr.bf16.gmra.mrb[0].mxu0 %v4502
        %v4651 = vpop.f32.mrb[0].mxu0
        %v4652 = vadd.f32 0.0, %v4651
        %v4653 = vpop.f32.mrb[0].mxu0
        %v4654 = vpop.f32.mrb[0].mxu0
        %v4655 = vadd.f32 0.0, %v4654
        %v4656 = vpop.f32.mrb[0].mxu0
        %4657 = vmatprep.mubr.bf16.mxu0 0
        %4658 = vmatmul.mubr.bf16.gmra.mrb[0].mxu0 %v4503
        %v4659 = vpop.f32.mrb[0].mxu0
        %v4660 = vadd.f32 0.0, %v4659
        %v4661 = vpop.f32.mrb[0].mxu0
        %v4662 = vpop.f32.mrb[0].mxu0
        %v4663 = vadd.f32 0.0, %v4662
        %v4664 = vpop.f32.mrb[0].mxu0
        %4665 = vmatprep.mubr.bf16.mxu0 0
        %4666 = vmatmul.mubr.bf16.gmra.mrb[0].mxu0 %v4504
        %v4667 = vpop.f32.mrb[0].mxu0
        %v4668 = vadd.f32 0.0, %v4667
        %v4669 = vpop.f32.mrb[0].mxu0
        %v4670 = vpop.f32.mrb[0].mxu0
        %v4671 = vadd.f32 0.0, %v4670
        %v4672 = vpop.f32.mrb[0].mxu0
        %4673 = vmatprep.mubr.bf16.mxu0 0
        %4674 = vmatmul.mubr.bf16.gmra.mrb[0].mxu0 %v4505
        %v4675 = vpop.f32.mrb[0].mxu0
        %v4676 = vadd.f32 0.0, %v4675
        %v4677 = vpop.f32.mrb[0].mxu0
        %v4678 = vpop.f32.mrb[0].mxu0
        %v4679 = vadd.f32 0.0, %v4678
        %v4680 = vpop.f32.mrb[0].mxu0
        %4681 = vmatprep.mubr.bf16.mxu0 0
        %4682 = vmatmul.mubr.bf16.gmra.mrb[0].mxu0 %v4506
        %v4683 = vpop.f32.mrb[0].mxu0
        %v4684 = vadd.f32 0.0, %v4683
        %v4685 = vpop.f32.mrb[0].mxu0
        %v4686 = vpop.f32.mrb[0].mxu0
        %v4687 = vadd.f32 0.0, %v4686
        %v4688 = vpop.f32.mrb[0].mxu0
        %4689 = vmatprep.mubr.bf16.mxu0 0
        %4690 = vmatmul.mubr.bf16.gmra.mrb[0].mxu0 %v4507
        %v4691 = vpop.f32.mrb[0].mxu0
        %v4692 = vadd.f32 0.0, %v4691
        %v4693 = vpop.f32.mrb[0].mxu0
        %v4694 = vpop.f32.mrb[0].mxu0
        %v4695 = vadd.f32 0.0, %v4694
        %v4696 = vpop.f32.mrb[0].mxu0
        %4697 = vmatprep.mubr.bf16.mxu0 0
        %4698 = vmatmul.mubr.bf16.gmra.mrb[0].mxu0 %v4508
        %v4699 = vpop.f32.mrb[0].mxu0
        %v4700 = vadd.f32 0.0, %v4699
        %v4701 = vpop.f32.mrb[0].mxu0
        %v4702 = vpop.f32.mrb[0].mxu0
        %v4703 = vadd.f32 0.0, %v4702
        %v4704 = vpop.f32.mrb[0].mxu0
        %4705 = vmatprep.mubr.bf16.mxu0 0
        %4706 = vmatmul.mubr.bf16.gmra.mrb[0].mxu0 %v4509
        %v4707 = vpop.f32.mrb[0].mxu0
        %v4708 = vadd.f32 0.0, %v4707
        %v4709 = vpop.f32.mrb[0].mxu0
        %v4710 = vpop.f32.mrb[0].mxu0
        %v4711 = vadd.f32 0.0, %v4710
        %v4712 = vpop.f32.mrb[0].mxu0
        %4713 = vmatprep.mubr.bf16.mxu0 0
        %4714 = vmatmul.mubr.bf16.gmra.mrb[0].mxu0 %v4510
        %v4715 = vpop.f32.mrb[0].mxu0
        %v4716 = vadd.f32 0.0, %v4715
        %v4717 = vpop.f32.mrb[0].mxu0
        %v4718 = vpop.f32.mrb[0].mxu0
        %v4719 = vadd.f32 0.0, %v4718
        %v4720 = vpop.f32.mrb[0].mxu0
        %4721 = vmatprep.mubr.bf16.mxu0 0
        %4722 = vmatmul.mubr.bf16.gmra.mrb[0].mxu0 %v4511
        %v4723 = vpop.f32.mrb[0].mxu0
        %v4724 = vadd.f32 0.0, %v4723
        %v4725 = vpop.f32.mrb[0].mxu0
        %v4726 = vpop.f32.mrb[0].mxu0
        %v4727 = vadd.f32 0.0, %v4726
        %v4728 = vpop.f32.mrb[0].mxu0
        %4729 = vmatprep.mubr.bf16.mxu0 0
        %4730 = vmatmul.mubr.bf16.gmra.mrb[0].mxu0 %v4512
        %v4731 = vpop.f32.mrb[0].mxu0
        %v4732 = vadd.f32 0.0, %v4731
        %v4733 = vpop.f32.mrb[0].mxu0
        %v4734 = vpop.f32.mrb[0].mxu0
        %v4735 = vadd.f32 0.0, %v4734
        %v4736 = vpop.f32.mrb[0].mxu0
        %4737 = vdwg.mxu0
        %v4738 = vadd.f32 %v3984, %v4612
        %v4739 = vadd.f32 %v3985, %v4615
        %v4740 = vadd.f32 %v3986, %v4620
        %v4741 = vadd.f32 %v3987, %v4623
        %v4742 = vadd.f32 %v3988, %v4628
        %v4743 = vadd.f32 %v3989, %v4631
        %v4744 = vadd.f32 %v3990, %v4636
        %v4745 = vadd.f32 %v3991, %v4639
        %v4746 = vadd.f32 %v3992, %v4644
        %v4747 = vadd.f32 %v3993, %v4647
        %v4748 = vadd.f32 %v3994, %v4652
        %v4749 = vadd.f32 %v3995, %v4655
        %v4750 = vadd.f32 %v3996, %v4660
        %v4751 = vadd.f32 %v3997, %v4663
        %v4752 = vadd.f32 %v3998, %v4668
        %v4753 = vadd.f32 %v3999, %v4671
        %v4754 = vadd.f32 %v4000, %v4676
        %v4755 = vadd.f32 %v4001, %v4679
        %v4756 = vadd.f32 %v4002, %v4684
        %v4757 = vadd.f32 %v4003, %v4687
        %v4758 = vadd.f32 %v4004, %v4692
        %v4759 = vadd.f32 %v4005, %v4695
        %v4760 = vadd.f32 %v4006, %v4700
        %v4761 = vadd.f32 %v4007, %v4703
        %v4762 = vadd.f32 %v4008, %v4708
        %v4763 = vadd.f32 %v4009, %v4711
        %v4764 = vadd.f32 %v4010, %v4716
        %v4765 = vadd.f32 %v4011, %v4719
        %v4766 = vadd.f32 %v4012, %v4724
        %v4767 = vadd.f32 %v4013, %v4727
        %v4768 = vadd.f32 %v4014, %v4732
        %v4769 = vadd.f32 %v4015, %v4735
        %v4770 = vld [vmem:[%s3629] sm:$0xe]
        %v4771 = vld [vmem:[%s3629 + $0xc] sm:$0xe]
        %v4772 = vld [vmem:[%s3629 + $0x18] sm:$0xe]
        %v4773 = vld [vmem:[%s3629 + $0x24] sm:$0xe]
        %v4774 = vld [vmem:[%s3629 + $0x30] sm:$0xe]
        %v4775 = vld [vmem:[%s3629 + $0x3c] sm:$0xe]
        %v4776 = vld [vmem:[%s3629 + $0x48] sm:$0xe]
        %v4777 = vld [vmem:[%s3629 + $0x54] sm:$0xe]
        %v4778 = vld [vmem:[%s3629 + $0x60] sm:$0xe]
        %v4779 = vld [vmem:[%s3629 + $0x6c] sm:$0xe]
        %v4780 = vld [vmem:[%s3629 + $0x78] sm:$0xe]
        %v4781 = vld [vmem:[%s3629 + $0x84] sm:$0xe]
        %v4782 = vld [vmem:[%s3629 + $0x90] sm:$0xe]
        %v4783 = vld [vmem:[%s3629 + $0x9c] sm:$0xe]
        %v4784 = vld [vmem:[%s3629 + $0xa8] sm:$0xe]
        %v4785 = vld [vmem:[%s3629 + $0xb4] sm:$0xe]
        %v4834 = vrot.slane %v4770, 5
        %v4835 = vrot.slane %v4834, 4
        %v4836 = vrot.slane %v4017, 5
        %v4837 = vsel %vm1555, %v4835, %v4836
        %v4838 = vrot.slane %v4836, 4
        %v4839 = vrot.slane %v4018, 5
        %v4840 = vsel %vm1555, %v4838, %v4839
        %v4841 = vrot.slane %v4771, 5
        %v4842 = vrot.slane %v4841, 4
        %v4843 = vrot.slane %v4020, 5
        %v4844 = vsel %vm1555, %v4842, %v4843
        %v4845 = vrot.slane %v4843, 4
        %v4846 = vrot.slane %v4021, 5
        %v4847 = vsel %vm1555, %v4845, %v4846
        %v4848 = vrot.slane %v4772, 5
        %v4849 = vrot.slane %v4848, 4
        %v4850 = vrot.slane %v4023, 5
        %v4851 = vsel %vm1555, %v4849, %v4850
        %v4852 = vrot.slane %v4850, 4
        %v4853 = vrot.slane %v4024, 5
        %v4854 = vsel %vm1555, %v4852, %v4853
        %v4855 = vrot.slane %v4773, 5
        %v4856 = vrot.slane %v4855, 4
        %v4857 = vrot.slane %v4026, 5
        %v4858 = vsel %vm1555, %v4856, %v4857
        %v4859 = vrot.slane %v4857, 4
        %v4860 = vrot.slane %v4027, 5
        %v4861 = vsel %vm1555, %v4859, %v4860
        %v4862 = vrot.slane %v4774, 5
        %v4863 = vrot.slane %v4862, 4
        %v4864 = vrot.slane %v4029, 5
        %v4865 = vsel %vm1555, %v4863, %v4864
        %v4866 = vrot.slane %v4864, 4
        %v4867 = vrot.slane %v4030, 5
        %v4868 = vsel %vm1555, %v4866, %v4867
        %v4869 = vrot.slane %v4775, 5
        %v4870 = vrot.slane %v4869, 4
        %v4871 = vrot.slane %v4032, 5
        %v4872 = vsel %vm1555, %v4870, %v4871
        %v4873 = vrot.slane %v4871, 4
        %v4874 = vrot.slane %v4033, 5
        %v4875 = vsel %vm1555, %v4873, %v4874
        %v4876 = vrot.slane %v4776, 5
        %v4877 = vrot.slane %v4876, 4
        %v4878 = vrot.slane %v4035, 5
        %v4879 = vsel %vm1555, %v4877, %v4878
        %v4880 = vrot.slane %v4878, 4
        %v4881 = vrot.slane %v4036, 5
        %v4882 = vsel %vm1555, %v4880, %v4881
        %v4883 = vrot.slane %v4777, 5
        %v4884 = vrot.slane %v4883, 4
        %v4885 = vrot.slane %v4038, 5
        %v4886 = vsel %vm1555, %v4884, %v4885
        %v4887 = vrot.slane %v4885, 4
        %v4888 = vrot.slane %v4039, 5
        %v4889 = vsel %vm1555, %v4887, %v4888
        %v4890 = vrot.slane %v4778, 5
        %v4891 = vrot.slane %v4890, 4
        %v4892 = vrot.slane %v4041, 5
        %v4893 = vsel %vm1555, %v4891, %v4892
        %v4894 = vrot.slane %v4892, 4
        %v4895 = vrot.slane %v4042, 5
        %v4896 = vsel %vm1555, %v4894, %v4895
        %v4897 = vrot.slane %v4779, 5
        %v4898 = vrot.slane %v4897, 4
        %v4899 = vrot.slane %v4044, 5
        %v4900 = vsel %vm1555, %v4898, %v4899
        %v4901 = vrot.slane %v4899, 4
        %v4902 = vrot.slane %v4045, 5
        %v4903 = vsel %vm1555, %v4901, %v4902
        %v4904 = vrot.slane %v4780, 5
        %v4905 = vrot.slane %v4904, 4
        %v4906 = vrot.slane %v4047, 5
        %v4907 = vsel %vm1555, %v4905, %v4906
        %v4908 = vrot.slane %v4906, 4
        %v4909 = vrot.slane %v4048, 5
        %v4910 = vsel %vm1555, %v4908, %v4909
        %v4911 = vrot.slane %v4781, 5
        %v4912 = vrot.slane %v4911, 4
        %v4913 = vrot.slane %v4050, 5
        %v4914 = vsel %vm1555, %v4912, %v4913
        %v4915 = vrot.slane %v4913, 4
        %v4916 = vrot.slane %v4051, 5
        %v4917 = vsel %vm1555, %v4915, %v4916
        %v4918 = vrot.slane %v4782, 5
        %v4919 = vrot.slane %v4918, 4
        %v4920 = vrot.slane %v4053, 5
        %v4921 = vsel %vm1555, %v4919, %v4920
        %v4922 = vrot.slane %v4920, 4
        %v4923 = vrot.slane %v4054, 5
        %v4924 = vsel %vm1555, %v4922, %v4923
        %v4925 = vrot.slane %v4783, 5
        %v4926 = vrot.slane %v4925, 4
        %v4927 = vrot.slane %v4056, 5
        %v4928 = vsel %vm1555, %v4926, %v4927
        %v4929 = vrot.slane %v4927, 4
        %v4930 = vrot.slane %v4057, 5
        %v4931 = vsel %vm1555, %v4929, %v4930
        %v4932 = vrot.slane %v4784, 5
        %v4933 = vrot.slane %v4932, 4
        %v4934 = vrot.slane %v4059, 5
        %v4935 = vsel %vm1555, %v4933, %v4934
        %v4936 = vrot.slane %v4934, 4
        %v4937 = vrot.slane %v4060, 5
        %v4938 = vsel %vm1555, %v4936, %v4937
        %v4939 = vrot.slane %v4785, 5
        %v4940 = vrot.slane %v4939, 4
        %v4941 = vrot.slane %v4062, 5
        %v4942 = vsel %vm1555, %v4940, %v4941
        %v4943 = vrot.slane %v4941, 4
        %v4944 = vrot.slane %v4063, 5
        %v4945 = vsel %vm1555, %v4943, %v4944
        %s4946 = scalar_lea.vmem %s1, 512
        %v4947 = vld [vmem:[%s4946] sm:$0xf]
        %v4948 = vld [vmem:[%s4946 + $0x4] sm:$0xf]
        %v4949 = vld [vmem:[%s4946 + $0x8] sm:$0xf]
        %v4950 = vld [vmem:[%s4946 + $0xc] sm:$0xf]
        %v4951 = vld [vmem:[%s4946 + $0x10] sm:$0xf]
        %v4952 = vld [vmem:[%s4946 + $0x14] sm:$0xf]
        %v4953 = vld [vmem:[%s4946 + $0x18] sm:$0xf]
        %v4954 = vld [vmem:[%s4946 + $0x1c] sm:$0xf]
        %v4955 = vld [vmem:[%s4946 + $0x20] sm:$0xf]
        %v4956 = vld [vmem:[%s4946 + $0x24] sm:$0xf]
        %v4957 = vld [vmem:[%s4946 + $0x28] sm:$0xf]
        %v4958 = vld [vmem:[%s4946 + $0x2c] sm:$0xf]
        %v4959 = vld [vmem:[%s4946 + $0x30] sm:$0xf]
        %v4960 = vld [vmem:[%s4946 + $0x34] sm:$0xf]
        %v4961 = vld [vmem:[%s4946 + $0x38] sm:$0xf]
        %v4962 = vld [vmem:[%s4946 + $0x3c] sm:$0xf]
        %v4963 = vunpack.c.l.b16 %v4837
        %v4964 = vunpack.c.l.b16 %v4840
        %v4965 = vunpack.c.l.b16 %v4844
        %v4966 = vunpack.c.l.b16 %v4847
        %v4967 = vunpack.c.l.b16 %v4851
        %v4968 = vunpack.c.l.b16 %v4854
        %v4969 = vunpack.c.l.b16 %v4858
        %v4970 = vunpack.c.l.b16 %v4861
        %v4971 = vunpack.c.l.b16 %v4865
        %v4972 = vunpack.c.l.b16 %v4868
        %v4973 = vunpack.c.l.b16 %v4872
        %v4974 = vunpack.c.l.b16 %v4875
        %v4975 = vunpack.c.l.b16 %v4879
        %v4976 = vunpack.c.l.b16 %v4882
        %v4977 = vunpack.c.l.b16 %v4886
        %v4978 = vunpack.c.l.b16 %v4889
        %v4979 = vunpack.c.l.b16 %v4893
        %v4980 = vunpack.c.l.b16 %v4896
        %v4981 = vunpack.c.l.b16 %v4900
        %v4982 = vunpack.c.l.b16 %v4903
        %v4983 = vunpack.c.l.b16 %v4907
        %v4984 = vunpack.c.l.b16 %v4910
        %v4985 = vunpack.c.l.b16 %v4914
        %v4986 = vunpack.c.l.b16 %v4917
        %v4987 = vunpack.c.l.b16 %v4921
        %v4988 = vunpack.c.l.b16 %v4924
        %v4989 = vunpack.c.l.b16 %v4928
        %v4990 = vunpack.c.l.b16 %v4931
        %v4991 = vunpack.c.l.b16 %v4935
        %v4992 = vunpack.c.l.b16 %v4938
        %v4993 = vunpack.c.l.b16 %v4942
        %v4994 = vunpack.c.l.b16 %v4945
        %v4995 = vpack.c.b16 %v4964, %v4963
        %v4996 = vpack.c.b16 %v4966, %v4965
        %v4997 = vpack.c.b16 %v4968, %v4967
        %v4998 = vpack.c.b16 %v4970, %v4969
        %v4999 = vpack.c.b16 %v4972, %v4971
        %v5000 = vpack.c.b16 %v4974, %v4973
        %v5001 = vpack.c.b16 %v4976, %v4975
        %v5002 = vpack.c.b16 %v4978, %v4977
        %v5003 = vpack.c.b16 %v4980, %v4979
        %v5004 = vpack.c.b16 %v4982, %v4981
        %v5005 = vpack.c.b16 %v4984, %v4983
        %v5006 = vpack.c.b16 %v4986, %v4985
        %v5007 = vpack.c.b16 %v4988, %v4987
        %v5008 = vpack.c.b16 %v4990, %v4989
        %v5009 = vpack.c.b16 %v4992, %v4991
        %v5010 = vpack.c.b16 %v4994, %v4993
        %v5043 = vunpack.c.l.b16 %v4947
        %v5044 = vunpack.c.l.b16 %v4948
        %v5045 = vunpack.c.l.b16 %v4949
        %v5046 = vunpack.c.l.b16 %v4950
        %v5047 = vunpack.c.l.b16 %v4951
        %v5048 = vunpack.c.l.b16 %v4952
        %v5049 = vunpack.c.l.b16 %v4953
        %v5050 = vunpack.c.l.b16 %v4954
        %v5051 = vunpack.c.l.b16 %v4955
        %v5052 = vunpack.c.l.b16 %v4956
        %v5053 = vunpack.c.l.b16 %v4957
        %v5054 = vunpack.c.l.b16 %v4958
        %v5055 = vunpack.c.l.b16 %v4959
        %v5056 = vunpack.c.l.b16 %v4960
        %v5057 = vunpack.c.l.b16 %v4961
        %v5058 = vunpack.c.l.b16 %v4962
        %v5059 = vpack.c.b16 %v5044, %v5043
        %v5060 = vpack.c.b16 %v5046, %v5045
        %v5061 = vpack.c.b16 %v5048, %v5047
        %v5062 = vpack.c.b16 %v5050, %v5049
        %v5063 = vpack.c.b16 %v5052, %v5051
        %v5064 = vpack.c.b16 %v5054, %v5053
        %v5065 = vpack.c.b16 %v5056, %v5055
        %v5066 = vpack.c.b16 %v5058, %v5057
        %5075 = vmatprep.subr.bf16.mxu0 0
        %5076 = vmatpush1.bf16.msra.mxu0 %v5059
        %5077 = vmatprep.subr.bf16.mxu0 0
        %5078 = vmatpush1.bf16.msra.mxu0 %v5060
        %5079 = vmatprep.subr.bf16.mxu0 0
        %5080 = vmatpush1.bf16.msra.mxu0 %v5061
        %5081 = vmatprep.subr.bf16.mxu0 0
        %5082 = vmatpush1.bf16.msra.mxu0 %v5062
        %5083 = vmatprep.subr.bf16.mxu0 0
        %5084 = vmatpush1.bf16.msra.mxu0 %v5063
        %5085 = vmatprep.subr.bf16.mxu0 0
        %5086 = vmatpush1.bf16.msra.mxu0 %v5064
        %5087 = vmatprep.subr.bf16.mxu0 0
        %5088 = vmatpush1.bf16.msra.mxu0 %v5065
        %5089 = vmatprep.subr.bf16.mxu0 0
        %5090 = vmatpush1.bf16.msra.mxu0 %v5066
        %5091 = vmatprep.subr.bf16.mxu0 0
        %5092 = vmatpush1.bf16.msra.mxu0 0
        %5093 = vmatprep.subr.bf16.mxu0 0
        %5094 = vmatpush1.bf16.msra.mxu0 0
        %5095 = vmatprep.subr.bf16.mxu0 0
        %5096 = vmatpush1.bf16.msra.mxu0 0
        %5097 = vmatprep.subr.bf16.mxu0 0
        %5098 = vmatpush1.bf16.msra.mxu0 0
        %5099 = vmatprep.subr.bf16.mxu0 0
        %5100 = vmatpush1.bf16.msra.mxu0 0
        %5101 = vmatprep.subr.bf16.mxu0 0
        %5102 = vmatpush1.bf16.msra.mxu0 0
        %5103 = vmatprep.subr.bf16.mxu0 0
        %5104 = vmatpush1.bf16.msra.mxu0 0
        %5105 = vmatprep.subr.bf16.mxu0 0
        %5106 = vmatpush1.bf16.msra.mxu0 0
        %5107 = vmatprep.mubr.bf16.mxu0 0
        %5108 = vmatmul.mubr.bf16.gmra.mrb[0].mxu0 %v4995
        %v5109 = vpop.f32.mrb[0].mxu0
        %v5110 = vadd.f32 0.0, %v5109
        %v5111 = vpop.f32.mrb[0].mxu0
        %v5112 = vpop.f32.mrb[0].mxu0
        %v5113 = vadd.f32 0.0, %v5112
        %v5114 = vpop.f32.mrb[0].mxu0
        %5115 = vmatprep.mubr.bf16.mxu0 0
        %5116 = vmatmul.mubr.bf16.gmra.mrb[0].mxu0 %v4996
        %v5117 = vpop.f32.mrb[0].mxu0
        %v5118 = vadd.f32 0.0, %v5117
        %v5119 = vpop.f32.mrb[0].mxu0
        %v5120 = vpop.f32.mrb[0].mxu0
        %v5121 = vadd.f32 0.0, %v5120
        %v5122 = vpop.f32.mrb[0].mxu0
        %5123 = vmatprep.mubr.bf16.mxu0 0
        %5124 = vmatmul.mubr.bf16.gmra.mrb[0].mxu0 %v4997
        %v5125 = vpop.f32.mrb[0].mxu0
        %v5126 = vadd.f32 0.0, %v5125
        %v5127 = vpop.f32.mrb[0].mxu0
        %v5128 = vpop.f32.mrb[0].mxu0
        %v5129 = vadd.f32 0.0, %v5128
        %v5130 = vpop.f32.mrb[0].mxu0
        %5131 = vmatprep.mubr.bf16.mxu0 0
        %5132 = vmatmul.mubr.bf16.gmra.mrb[0].mxu0 %v4998
        %v5133 = vpop.f32.mrb[0].mxu0
        %v5134 = vadd.f32 0.0, %v5133
        %v5135 = vpop.f32.mrb[0].mxu0
        %v5136 = vpop.f32.mrb[0].mxu0
        %v5137 = vadd.f32 0.0, %v5136
        %v5138 = vpop.f32.mrb[0].mxu0
        %5139 = vmatprep.mubr.bf16.mxu0 0
        %5140 = vmatmul.mubr.bf16.gmra.mrb[0].mxu0 %v4999
        %v5141 = vpop.f32.mrb[0].mxu0
        %v5142 = vadd.f32 0.0, %v5141
        %v5143 = vpop.f32.mrb[0].mxu0
        %v5144 = vpop.f32.mrb[0].mxu0
        %v5145 = vadd.f32 0.0, %v5144
        %v5146 = vpop.f32.mrb[0].mxu0
        %5147 = vmatprep.mubr.bf16.mxu0 0
        %5148 = vmatmul.mubr.bf16.gmra.mrb[0].mxu0 %v5000
        %v5149 = vpop.f32.mrb[0].mxu0
        %v5150 = vadd.f32 0.0, %v5149
        %v5151 = vpop.f32.mrb[0].mxu0
        %v5152 = vpop.f32.mrb[0].mxu0
        %v5153 = vadd.f32 0.0, %v5152
        %v5154 = vpop.f32.mrb[0].mxu0
        %5155 = vmatprep.mubr.bf16.mxu0 0
        %5156 = vmatmul.mubr.bf16.gmra.mrb[0].mxu0 %v5001
        %v5157 = vpop.f32.mrb[0].mxu0
        %v5158 = vadd.f32 0.0, %v5157
        %v5159 = vpop.f32.mrb[0].mxu0
        %v5160 = vpop.f32.mrb[0].mxu0
        %v5161 = vadd.f32 0.0, %v5160
        %v5162 = vpop.f32.mrb[0].mxu0
        %5163 = vmatprep.mubr.bf16.mxu0 0
        %5164 = vmatmul.mubr.bf16.gmra.mrb[0].mxu0 %v5002
        %v5165 = vpop.f32.mrb[0].mxu0
        %v5166 = vadd.f32 0.0, %v5165
        %v5167 = vpop.f32.mrb[0].mxu0
        %v5168 = vpop.f32.mrb[0].mxu0
        %v5169 = vadd.f32 0.0, %v5168
        %v5170 = vpop.f32.mrb[0].mxu0
        %5171 = vmatprep.mubr.bf16.mxu0 0
        %5172 = vmatmul.mubr.bf16.gmra.mrb[0].mxu0 %v5003
        %v5173 = vpop.f32.mrb[0].mxu0
        %v5174 = vadd.f32 0.0, %v5173
        %v5175 = vpop.f32.mrb[0].mxu0
        %v5176 = vpop.f32.mrb[0].mxu0
        %v5177 = vadd.f32 0.0, %v5176
        %v5178 = vpop.f32.mrb[0].mxu0
        %5179 = vmatprep.mubr.bf16.mxu0 0
        %5180 = vmatmul.mubr.bf16.gmra.mrb[0].mxu0 %v5004
        %v5181 = vpop.f32.mrb[0].mxu0
        %v5182 = vadd.f32 0.0, %v5181
        %v5183 = vpop.f32.mrb[0].mxu0
        %v5184 = vpop.f32.mrb[0].mxu0
        %v5185 = vadd.f32 0.0, %v5184
        %v5186 = vpop.f32.mrb[0].mxu0
        %5187 = vmatprep.mubr.bf16.mxu0 0
        %5188 = vmatmul.mubr.bf16.gmra.mrb[0].mxu0 %v5005
        %v5189 = vpop.f32.mrb[0].mxu0
        %v5190 = vadd.f32 0.0, %v5189
        %v5191 = vpop.f32.mrb[0].mxu0
        %v5192 = vpop.f32.mrb[0].mxu0
        %v5193 = vadd.f32 0.0, %v5192
        %v5194 = vpop.f32.mrb[0].mxu0
        %5195 = vmatprep.mubr.bf16.mxu0 0
        %5196 = vmatmul.mubr.bf16.gmra.mrb[0].mxu0 %v5006
        %v5197 = vpop.f32.mrb[0].mxu0
        %v5198 = vadd.f32 0.0, %v5197
        %v5199 = vpop.f32.mrb[0].mxu0
        %v5200 = vpop.f32.mrb[0].mxu0
        %v5201 = vadd.f32 0.0, %v5200
        %v5202 = vpop.f32.mrb[0].mxu0
        %5203 = vmatprep.mubr.bf16.mxu0 0
        %5204 = vmatmul.mubr.bf16.gmra.mrb[0].mxu0 %v5007
        %v5205 = vpop.f32.mrb[0].mxu0
        %v5206 = vadd.f32 0.0, %v5205
        %v5207 = vpop.f32.mrb[0].mxu0
        %v5208 = vpop.f32.mrb[0].mxu0
        %v5209 = vadd.f32 0.0, %v5208
        %v5210 = vpop.f32.mrb[0].mxu0
        %5211 = vmatprep.mubr.bf16.mxu0 0
        %5212 = vmatmul.mubr.bf16.gmra.mrb[0].mxu0 %v5008
        %v5213 = vpop.f32.mrb[0].mxu0
        %v5214 = vadd.f32 0.0, %v5213
        %v5215 = vpop.f32.mrb[0].mxu0
        %v5216 = vpop.f32.mrb[0].mxu0
        %v5217 = vadd.f32 0.0, %v5216
        %v5218 = vpop.f32.mrb[0].mxu0
        %5219 = vmatprep.mubr.bf16.mxu0 0
        %5220 = vmatmul.mubr.bf16.gmra.mrb[0].mxu0 %v5009
        %v5221 = vpop.f32.mrb[0].mxu0
        %v5222 = vadd.f32 0.0, %v5221
        %v5223 = vpop.f32.mrb[0].mxu0
        %v5224 = vpop.f32.mrb[0].mxu0
        %v5225 = vadd.f32 0.0, %v5224
        %v5226 = vpop.f32.mrb[0].mxu0
        %5227 = vmatprep.mubr.bf16.mxu0 0
        %5228 = vmatmul.mubr.bf16.gmra.mrb[0].mxu0 %v5010
        %v5229 = vpop.f32.mrb[0].mxu0
        %v5230 = vadd.f32 0.0, %v5229
        %v5231 = vpop.f32.mrb[0].mxu0
        %v5232 = vpop.f32.mrb[0].mxu0
        %v5233 = vadd.f32 0.0, %v5232
        %v5234 = vpop.f32.mrb[0].mxu0
        %5235 = vdwg.mxu0
        %v5236 = vadd.f32 %v4738, %v5110
        %v5237 = vadd.f32 %v4739, %v5113
        %v5238 = vadd.f32 %v4740, %v5118
        %v5239 = vadd.f32 %v4741, %v5121
        %v5240 = vadd.f32 %v4742, %v5126
        %v5241 = vadd.f32 %v4743, %v5129
        %v5242 = vadd.f32 %v4744, %v5134
        %v5243 = vadd.f32 %v4745, %v5137
        %v5244 = vadd.f32 %v4746, %v5142
        %v5245 = vadd.f32 %v4747, %v5145
        %v5246 = vadd.f32 %v4748, %v5150
        %v5247 = vadd.f32 %v4749, %v5153
        %v5248 = vadd.f32 %v4750, %v5158
        %v5249 = vadd.f32 %v4751, %v5161
        %v5250 = vadd.f32 %v4752, %v5166
        %v5251 = vadd.f32 %v4753, %v5169
        %v5252 = vadd.f32 %v4754, %v5174
        %v5253 = vadd.f32 %v4755, %v5177
        %v5254 = vadd.f32 %v4756, %v5182
        %v5255 = vadd.f32 %v4757, %v5185
        %v5256 = vadd.f32 %v4758, %v5190
        %v5257 = vadd.f32 %v4759, %v5193
        %v5258 = vadd.f32 %v4760, %v5198
        %v5259 = vadd.f32 %v4761, %v5201
        %v5260 = vadd.f32 %v4762, %v5206
        %v5261 = vadd.f32 %v4763, %v5209
        %v5262 = vadd.f32 %v4764, %v5214
        %v5263 = vadd.f32 %v4765, %v5217
        %v5264 = vadd.f32 %v4766, %v5222
        %v5265 = vadd.f32 %v4767, %v5225
        %v5266 = vadd.f32 %v4768, %v5230
        %v5267 = vadd.f32 %v4769, %v5233
        %v5268 = vld [vmem:[%s3] sm:$0x1]
        %v5270 = vlaneseq
        %v5271 = vshrl.u32 %v5270, 7
        %v5272 = vsub.s32 0, %v5271
        %v5273 = vrot.slane %v5268, %v5272
        %v5275 = vmul.f32 %v5236, %v5273
        %v5276 = vmul.f32 %v5237, %v5273
        %v5277 = vmul.f32 %v5238, %v5273
        %v5278 = vmul.f32 %v5239, %v5273
        %v5279 = vmul.f32 %v5240, %v5273
        %v5280 = vmul.f32 %v5241, %v5273
        %v5281 = vmul.f32 %v5242, %v5273
        %v5282 = vmul.f32 %v5243, %v5273
        %v5283 = vmul.f32 %v5244, %v5273
        %v5284 = vmul.f32 %v5245, %v5273
        %v5285 = vmul.f32 %v5246, %v5273
        %v5286 = vmul.f32 %v5247, %v5273
        %v5287 = vmul.f32 %v5248, %v5273
        %v5288 = vmul.f32 %v5249, %v5273
        %v5289 = vmul.f32 %v5250, %v5273
        %v5290 = vmul.f32 %v5251, %v5273
        %v5291 = vmul.f32 %v5252, %v5273
        %v5292 = vmul.f32 %v5253, %v5273
        %v5293 = vmul.f32 %v5254, %v5273
        %v5294 = vmul.f32 %v5255, %v5273
        %v5295 = vmul.f32 %v5256, %v5273
        %v5296 = vmul.f32 %v5257, %v5273
        %v5297 = vmul.f32 %v5258, %v5273
        %v5298 = vmul.f32 %v5259, %v5273
        %v5299 = vmul.f32 %v5260, %v5273
        %v5300 = vmul.f32 %v5261, %v5273
        %v5301 = vmul.f32 %v5262, %v5273
        %v5302 = vmul.f32 %v5263, %v5273
        %v5303 = vmul.f32 %v5264, %v5273
        %v5304 = vmul.f32 %v5265, %v5273
        %v5305 = vmul.f32 %v5266, %v5273
        %v5306 = vmul.f32 %v5267, %v5273
        %v5307 = vld [vmem:[%s4] sm:$0x1]
        %v5309 = vlaneseq
        %v5310 = vshrl.u32 %v5309, 7
        %v5311 = vsub.s32 0, %v5310
        %v5312 = vrot.slane %v5307, %v5311
        %v5314 = vadd.f32 %v5275, %v5312
        %v5315 = vadd.f32 %v5276, %v5312
        %v5316 = vadd.f32 %v5277, %v5312
        %v5317 = vadd.f32 %v5278, %v5312
        %v5318 = vadd.f32 %v5279, %v5312
        %v5319 = vadd.f32 %v5280, %v5312
        %v5320 = vadd.f32 %v5281, %v5312
        %v5321 = vadd.f32 %v5282, %v5312
        %v5322 = vadd.f32 %v5283, %v5312
        %v5323 = vadd.f32 %v5284, %v5312
        %v5324 = vadd.f32 %v5285, %v5312
        %v5325 = vadd.f32 %v5286, %v5312
        %v5326 = vadd.f32 %v5287, %v5312
        %v5327 = vadd.f32 %v5288, %v5312
        %v5328 = vadd.f32 %v5289, %v5312
        %v5329 = vadd.f32 %v5290, %v5312
        %v5330 = vadd.f32 %v5291, %v5312
        %v5331 = vadd.f32 %v5292, %v5312
        %v5332 = vadd.f32 %v5293, %v5312
        %v5333 = vadd.f32 %v5294, %v5312
        %v5334 = vadd.f32 %v5295, %v5312
        %v5335 = vadd.f32 %v5296, %v5312
        %v5336 = vadd.f32 %v5297, %v5312
        %v5337 = vadd.f32 %v5298, %v5312
        %v5338 = vadd.f32 %v5299, %v5312
        %v5339 = vadd.f32 %v5300, %v5312
        %v5340 = vadd.f32 %v5301, %v5312
        %v5341 = vadd.f32 %v5302, %v5312
        %v5342 = vadd.f32 %v5303, %v5312
        %v5343 = vadd.f32 %v5304, %v5312
        %v5344 = vadd.f32 %v5305, %v5312
        %v5345 = vadd.f32 %v5306, %v5312
        %v5346 = vmax.f32 %v5314, 0.0
        %v5347 = vmax.f32 %v5315, 0.0
        %v5348 = vmax.f32 %v5316, 0.0
        %v5349 = vmax.f32 %v5317, 0.0
        %v5350 = vmax.f32 %v5318, 0.0
        %v5351 = vmax.f32 %v5319, 0.0
        %v5352 = vmax.f32 %v5320, 0.0
        %v5353 = vmax.f32 %v5321, 0.0
        %v5354 = vmax.f32 %v5322, 0.0
        %v5355 = vmax.f32 %v5323, 0.0
        %v5356 = vmax.f32 %v5324, 0.0
        %v5357 = vmax.f32 %v5325, 0.0
        %v5358 = vmax.f32 %v5326, 0.0
        %v5359 = vmax.f32 %v5327, 0.0
        %v5360 = vmax.f32 %v5328, 0.0
        %v5361 = vmax.f32 %v5329, 0.0
        %v5362 = vmax.f32 %v5330, 0.0
        %v5363 = vmax.f32 %v5331, 0.0
        %v5364 = vmax.f32 %v5332, 0.0
        %v5365 = vmax.f32 %v5333, 0.0
        %v5366 = vmax.f32 %v5334, 0.0
        %v5367 = vmax.f32 %v5335, 0.0
        %v5368 = vmax.f32 %v5336, 0.0
        %v5369 = vmax.f32 %v5337, 0.0
        %v5370 = vmax.f32 %v5338, 0.0
        %v5371 = vmax.f32 %v5339, 0.0
        %v5372 = vmax.f32 %v5340, 0.0
        %v5373 = vmax.f32 %v5341, 0.0
        %v5374 = vmax.f32 %v5342, 0.0
        %v5375 = vmax.f32 %v5343, 0.0
        %v5376 = vmax.f32 %v5344, 0.0
        %v5377 = vmax.f32 %v5345, 0.0
        %5378 = vst [vmem:[#allocation3] sm:$0xf] 0
        %5379 = vst [vmem:[#allocation3 + $0x4] sm:$0xf] 0
        %5380 = vst [vmem:[#allocation3 + $0x8] sm:$0x1] 0
        %s5381 = scalar_lea.vmem [#allocation3], 204
        %5382 = vst [vmem:[%s5381] sm:$0xf] 0
        %5383 = vst [vmem:[%s5381 + $0x4] sm:$0xf] 0
        %5384 = vst [vmem:[%s5381 + $0x8] sm:$0x1] 0
        %s5385 = scalar_lea.vmem [#allocation3], 12
        %vm5386 = vcmask 1040384
        %vm5387 = vsmask.f32 256
        %vm5388 = vmand %vm5386, %vm5387
        %v5389 = vld [vmem:[%s5385] sm:$0x1]
        %v5390 = vsel %vm5388, 0, %v5389
        %5391 = vst [vmem:[%s5385] sm:$0x1] %v5390
        %v5392 = vld [vmem:[%s5385 + $0xc] sm:$0x1]
        %v5393 = vsel %vm5388, 0, %v5392
        %5394 = vst [vmem:[%s5385 + $0xc] sm:$0x1] %v5393
        %v5395 = vld [vmem:[%s5385 + $0x18] sm:$0x1]
        %v5396 = vsel %vm5388, 0, %v5395
        %5397 = vst [vmem:[%s5385 + $0x18] sm:$0x1] %v5396
        %v5398 = vld [vmem:[%s5385 + $0x24] sm:$0x1]
        %v5399 = vsel %vm5388, 0, %v5398
        %5400 = vst [vmem:[%s5385 + $0x24] sm:$0x1] %v5399
        %v5401 = vld [vmem:[%s5385 + $0x30] sm:$0x1]
        %v5402 = vsel %vm5388, 0, %v5401
        %5403 = vst [vmem:[%s5385 + $0x30] sm:$0x1] %v5402
        %v5404 = vld [vmem:[%s5385 + $0x3c] sm:$0x1]
        %v5405 = vsel %vm5388, 0, %v5404
        %5406 = vst [vmem:[%s5385 + $0x3c] sm:$0x1] %v5405
        %v5407 = vld [vmem:[%s5385 + $0x48] sm:$0x1]
        %v5408 = vsel %vm5388, 0, %v5407
        %5409 = vst [vmem:[%s5385 + $0x48] sm:$0x1] %v5408
        %v5410 = vld [vmem:[%s5385 + $0x54] sm:$0x1]
        %v5411 = vsel %vm5388, 0, %v5410
        %5412 = vst [vmem:[%s5385 + $0x54] sm:$0x1] %v5411
        %v5413 = vld [vmem:[%s5385 + $0x60] sm:$0x1]
        %v5414 = vsel %vm5388, 0, %v5413
        %5415 = vst [vmem:[%s5385 + $0x60] sm:$0x1] %v5414
        %v5416 = vld [vmem:[%s5385 + $0x6c] sm:$0x1]
        %v5417 = vsel %vm5388, 0, %v5416
        %5418 = vst [vmem:[%s5385 + $0x6c] sm:$0x1] %v5417
        %v5419 = vld [vmem:[%s5385 + $0x78] sm:$0x1]
        %v5420 = vsel %vm5388, 0, %v5419
        %5421 = vst [vmem:[%s5385 + $0x78] sm:$0x1] %v5420
        %v5422 = vld [vmem:[%s5385 + $0x84] sm:$0x1]
        %v5423 = vsel %vm5388, 0, %v5422
        %5424 = vst [vmem:[%s5385 + $0x84] sm:$0x1] %v5423
        %v5425 = vld [vmem:[%s5385 + $0x90] sm:$0x1]
        %v5426 = vsel %vm5388, 0, %v5425
        %5427 = vst [vmem:[%s5385 + $0x90] sm:$0x1] %v5426
        %v5428 = vld [vmem:[%s5385 + $0x9c] sm:$0x1]
        %v5429 = vsel %vm5388, 0, %v5428
        %5430 = vst [vmem:[%s5385 + $0x9c] sm:$0x1] %v5429
        %v5431 = vld [vmem:[%s5385 + $0xa8] sm:$0x1]
        %v5432 = vsel %vm5388, 0, %v5431
        %5433 = vst [vmem:[%s5385 + $0xa8] sm:$0x1] %v5432
        %v5434 = vld [vmem:[%s5385 + $0xb4] sm:$0x1]
        %v5435 = vsel %vm5388, 0, %v5434
        %5436 = vst [vmem:[%s5385 + $0xb4] sm:$0x1] %v5435
        %vm5437 = vsmask.f32 7938
        %vm5438 = vmand %vm5386, %vm5437
        %v5439 = vld [vmem:[%s5385 + $0x8] sm:$0x1]
        %v5440 = vsel %vm5438, 0, %v5439
        %5441 = vst [vmem:[%s5385 + $0x8] sm:$0x1] %v5440
        %v5442 = vld [vmem:[%s5385 + $0x14] sm:$0x1]
        %v5443 = vsel %vm5438, 0, %v5442
        %5444 = vst [vmem:[%s5385 + $0x14] sm:$0x1] %v5443
        %v5445 = vld [vmem:[%s5385 + $0x20] sm:$0x1]
        %v5446 = vsel %vm5438, 0, %v5445
        %5447 = vst [vmem:[%s5385 + $0x20] sm:$0x1] %v5446
        %v5448 = vld [vmem:[%s5385 + $0x2c] sm:$0x1]
        %v5449 = vsel %vm5438, 0, %v5448
        %5450 = vst [vmem:[%s5385 + $0x2c] sm:$0x1] %v5449
        %v5451 = vld [vmem:[%s5385 + $0x38] sm:$0x1]
        %v5452 = vsel %vm5438, 0, %v5451
        %5453 = vst [vmem:[%s5385 + $0x38] sm:$0x1] %v5452
        %v5454 = vld [vmem:[%s5385 + $0x44] sm:$0x1]
        %v5455 = vsel %vm5438, 0, %v5454
        %5456 = vst [vmem:[%s5385 + $0x44] sm:$0x1] %v5455
        %v5457 = vld [vmem:[%s5385 + $0x50] sm:$0x1]
        %v5458 = vsel %vm5438, 0, %v5457
        %5459 = vst [vmem:[%s5385 + $0x50] sm:$0x1] %v5458
        %v5460 = vld [vmem:[%s5385 + $0x5c] sm:$0x1]
        %v5461 = vsel %vm5438, 0, %v5460
        %5462 = vst [vmem:[%s5385 + $0x5c] sm:$0x1] %v5461
        %v5463 = vld [vmem:[%s5385 + $0x68] sm:$0x1]
        %v5464 = vsel %vm5438, 0, %v5463
        %5465 = vst [vmem:[%s5385 + $0x68] sm:$0x1] %v5464
        %v5466 = vld [vmem:[%s5385 + $0x74] sm:$0x1]
        %v5467 = vsel %vm5438, 0, %v5466
        %5468 = vst [vmem:[%s5385 + $0x74] sm:$0x1] %v5467
        %v5469 = vld [vmem:[%s5385 + $0x80] sm:$0x1]
        %v5470 = vsel %vm5438, 0, %v5469
        %5471 = vst [vmem:[%s5385 + $0x80] sm:$0x1] %v5470
        %v5472 = vld [vmem:[%s5385 + $0x8c] sm:$0x1]
        %v5473 = vsel %vm5438, 0, %v5472
        %5474 = vst [vmem:[%s5385 + $0x8c] sm:$0x1] %v5473
        %v5475 = vld [vmem:[%s5385 + $0x98] sm:$0x1]
        %v5476 = vsel %vm5438, 0, %v5475
        %5477 = vst [vmem:[%s5385 + $0x98] sm:$0x1] %v5476
        %v5478 = vld [vmem:[%s5385 + $0xa4] sm:$0x1]
        %v5479 = vsel %vm5438, 0, %v5478
        %5480 = vst [vmem:[%s5385 + $0xa4] sm:$0x1] %v5479
        %v5481 = vld [vmem:[%s5385 + $0xb0] sm:$0x1]
        %v5482 = vsel %vm5438, 0, %v5481
        %5483 = vst [vmem:[%s5385 + $0xb0] sm:$0x1] %v5482
        %v5484 = vld [vmem:[%s5385 + $0xbc] sm:$0x1]
        %v5485 = vsel %vm5438, 0, %v5484
        %5486 = vst [vmem:[%s5385 + $0xbc] sm:$0x1] %v5485
        %v5487 = vpack.c.bf16 %v5347, %v5346
        %v5488 = vpack.c.bf16 %v5349, %v5348
        %v5489 = vpack.c.bf16 %v5351, %v5350
        %v5490 = vpack.c.bf16 %v5353, %v5352
        %v5491 = vpack.c.bf16 %v5355, %v5354
        %v5492 = vpack.c.bf16 %v5357, %v5356
        %v5493 = vpack.c.bf16 %v5359, %v5358
        %v5494 = vpack.c.bf16 %v5361, %v5360
        %v5495 = vpack.c.bf16 %v5363, %v5362
        %v5496 = vpack.c.bf16 %v5365, %v5364
        %v5497 = vpack.c.bf16 %v5367, %v5366
        %v5498 = vpack.c.bf16 %v5369, %v5368
        %v5499 = vpack.c.bf16 %v5371, %v5370
        %v5500 = vpack.c.bf16 %v5373, %v5372
        %v5501 = vpack.c.bf16 %v5375, %v5374
        %v5502 = vpack.c.bf16 %v5377, %v5376
        %v5519 = vunpack.c.l.b16 %v5487
        %v5520 = vunpack.c.h.b16 %v5487
        %v5521 = vunpack.c.l.b16 %v5488
        %v5522 = vunpack.c.h.b16 %v5488
        %v5523 = vunpack.c.l.b16 %v5489
        %v5524 = vunpack.c.h.b16 %v5489
        %v5525 = vunpack.c.l.b16 %v5490
        %v5526 = vunpack.c.h.b16 %v5490
        %v5527 = vunpack.c.l.b16 %v5491
        %v5528 = vunpack.c.h.b16 %v5491
        %v5529 = vunpack.c.l.b16 %v5492
        %v5530 = vunpack.c.h.b16 %v5492
        %v5531 = vunpack.c.l.b16 %v5493
        %v5532 = vunpack.c.h.b16 %v5493
        %v5533 = vunpack.c.l.b16 %v5494
        %v5534 = vunpack.c.h.b16 %v5494
        %v5535 = vunpack.c.l.b16 %v5495
        %v5536 = vunpack.c.h.b16 %v5495
        %v5537 = vunpack.c.l.b16 %v5496
        %v5538 = vunpack.c.h.b16 %v5496
        %v5539 = vunpack.c.l.b16 %v5497
        %v5540 = vunpack.c.h.b16 %v5497
        %v5541 = vunpack.c.l.b16 %v5498
        %v5542 = vunpack.c.h.b16 %v5498
        %v5543 = vunpack.c.l.b16 %v5499
        %v5544 = vunpack.c.h.b16 %v5499
        %v5545 = vunpack.c.l.b16 %v5500
        %v5546 = vunpack.c.h.b16 %v5500
        %v5547 = vunpack.c.l.b16 %v5501
        %v5548 = vunpack.c.h.b16 %v5501
        %v5549 = vunpack.c.l.b16 %v5502
        %v5550 = vunpack.c.h.b16 %v5502
        %v5551 = vpack.c.b16 %v5519, %v5519
        %v5552 = vpack.c.b16 %v5520, %v5520
        %v5553 = vpack.c.b16 %v5521, %v5521
        %v5554 = vpack.c.b16 %v5522, %v5522
        %v5555 = vpack.c.b16 %v5523, %v5523
        %v5556 = vpack.c.b16 %v5524, %v5524
        %v5557 = vpack.c.b16 %v5525, %v5525
        %v5558 = vpack.c.b16 %v5526, %v5526
        %v5559 = vpack.c.b16 %v5527, %v5527
        %v5560 = vpack.c.b16 %v5528, %v5528
        %v5561 = vpack.c.b16 %v5529, %v5529
        %v5562 = vpack.c.b16 %v5530, %v5530
        %v5563 = vpack.c.b16 %v5531, %v5531
        %v5564 = vpack.c.b16 %v5532, %v5532
        %v5565 = vpack.c.b16 %v5533, %v5533
        %v5566 = vpack.c.b16 %v5534, %v5534
        %v5567 = vpack.c.b16 %v5535, %v5535
        %v5568 = vpack.c.b16 %v5536, %v5536
        %v5569 = vpack.c.b16 %v5537, %v5537
        %v5570 = vpack.c.b16 %v5538, %v5538
        %v5571 = vpack.c.b16 %v5539, %v5539
        %v5572 = vpack.c.b16 %v5540, %v5540
        %v5573 = vpack.c.b16 %v5541, %v5541
        %v5574 = vpack.c.b16 %v5542, %v5542
        %v5575 = vpack.c.b16 %v5543, %v5543
        %v5576 = vpack.c.b16 %v5544, %v5544
        %v5577 = vpack.c.b16 %v5545, %v5545
        %v5578 = vpack.c.b16 %v5546, %v5546
        %v5579 = vpack.c.b16 %v5547, %v5547
        %v5580 = vpack.c.b16 %v5548, %v5548
        %v5581 = vpack.c.b16 %v5549, %v5549
        %v5582 = vpack.c.b16 %v5550, %v5550
        %vm5583 = vsmask.f32 4368
        %vm5584 = vmor %vm5387, %vm5583
        %v5586 = vshrl.u32 %v5551, 16
        %v5588 = vrot.slane %v5586, 7
        %v5589 = vshll.u32 %v5551, 16
        %v5591 = vor.u32 %v5588, %v5589
        %v5592 = vrot.slane %v5588, 4
        %v5594 = vshrl.u32 %v5552, 16
        %v5596 = vrot.slane %v5594, 7
        %v5597 = vshll.u32 %v5552, 16
        %v5599 = vor.u32 %v5596, %v5597
        %v5600 = vsel %vm5584, %v5592, %v5599
        %v5601 = vrot.slane %v5596, 4
        %v5603 = vshrl.u32 %v5553, 16
        %v5605 = vrot.slane %v5603, 7
        %v5606 = vshll.u32 %v5553, 16
        %v5608 = vor.u32 %v5605, %v5606
        %v5609 = vrot.slane %v5605, 4
        %v5611 = vshrl.u32 %v5554, 16
        %v5613 = vrot.slane %v5611, 7
        %v5614 = vshll.u32 %v5554, 16
        %v5616 = vor.u32 %v5613, %v5614
        %v5617 = vsel %vm5584, %v5609, %v5616
        %v5618 = vrot.slane %v5613, 4
        %v5620 = vshrl.u32 %v5555, 16
        %v5622 = vrot.slane %v5620, 7
        %v5623 = vshll.u32 %v5555, 16
        %v5625 = vor.u32 %v5622, %v5623
        %v5626 = vrot.slane %v5622, 4
        %v5628 = vshrl.u32 %v5556, 16
        %v5630 = vrot.slane %v5628, 7
        %v5631 = vshll.u32 %v5556, 16
        %v5633 = vor.u32 %v5630, %v5631
        %v5634 = vsel %vm5584, %v5626, %v5633
        %v5635 = vrot.slane %v5630, 4
        %v5637 = vshrl.u32 %v5557, 16
        %v5639 = vrot.slane %v5637, 7
        %v5640 = vshll.u32 %v5557, 16
        %v5642 = vor.u32 %v5639, %v5640
        %v5643 = vrot.slane %v5639, 4
        %v5645 = vshrl.u32 %v5558, 16
        %v5647 = vrot.slane %v5645, 7
        %v5648 = vshll.u32 %v5558, 16
        %v5650 = vor.u32 %v5647, %v5648
        %v5651 = vsel %vm5584, %v5643, %v5650
        %v5652 = vrot.slane %v5647, 4
        %v5654 = vshrl.u32 %v5559, 16
        %v5656 = vrot.slane %v5654, 7
        %v5657 = vshll.u32 %v5559, 16
        %v5659 = vor.u32 %v5656, %v5657
        %v5660 = vrot.slane %v5656, 4
        %v5662 = vshrl.u32 %v5560, 16
        %v5664 = vrot.slane %v5662, 7
        %v5665 = vshll.u32 %v5560, 16
        %v5667 = vor.u32 %v5664, %v5665
        %v5668 = vsel %vm5584, %v5660, %v5667
        %v5669 = vrot.slane %v5664, 4
        %v5671 = vshrl.u32 %v5561, 16
        %v5673 = vrot.slane %v5671, 7
        %v5674 = vshll.u32 %v5561, 16
        %v5676 = vor.u32 %v5673, %v5674
        %v5677 = vrot.slane %v5673, 4
        %v5679 = vshrl.u32 %v5562, 16
        %v5681 = vrot.slane %v5679, 7
        %v5682 = vshll.u32 %v5562, 16
        %v5684 = vor.u32 %v5681, %v5682
        %v5685 = vsel %vm5584, %v5677, %v5684
        %v5686 = vrot.slane %v5681, 4
        %v5688 = vshrl.u32 %v5563, 16
        %v5690 = vrot.slane %v5688, 7
        %v5691 = vshll.u32 %v5563, 16
        %v5693 = vor.u32 %v5690, %v5691
        %v5694 = vrot.slane %v5690, 4
        %v5696 = vshrl.u32 %v5564, 16
        %v5698 = vrot.slane %v5696, 7
        %v5699 = vshll.u32 %v5564, 16
        %v5701 = vor.u32 %v5698, %v5699
        %v5702 = vsel %vm5584, %v5694, %v5701
        %v5703 = vrot.slane %v5698, 4
        %v5705 = vshrl.u32 %v5565, 16
        %v5707 = vrot.slane %v5705, 7
        %v5708 = vshll.u32 %v5565, 16
        %v5710 = vor.u32 %v5707, %v5708
        %v5711 = vrot.slane %v5707, 4
        %v5713 = vshrl.u32 %v5566, 16
        %v5715 = vrot.slane %v5713, 7
        %v5716 = vshll.u32 %v5566, 16
        %v5718 = vor.u32 %v5715, %v5716
        %v5719 = vsel %vm5584, %v5711, %v5718
        %v5720 = vrot.slane %v5715, 4
        %v5722 = vshrl.u32 %v5567, 16
        %v5724 = vrot.slane %v5722, 7
        %v5725 = vshll.u32 %v5567, 16
        %v5727 = vor.u32 %v5724, %v5725
        %v5728 = vrot.slane %v5724, 4
        %v5730 = vshrl.u32 %v5568, 16
        %v5732 = vrot.slane %v5730, 7
        %v5733 = vshll.u32 %v5568, 16
        %v5735 = vor.u32 %v5732, %v5733
        %v5736 = vsel %vm5584, %v5728, %v5735
        %v5737 = vrot.slane %v5732, 4
        %v5739 = vshrl.u32 %v5569, 16
        %v5741 = vrot.slane %v5739, 7
        %v5742 = vshll.u32 %v5569, 16
        %v5744 = vor.u32 %v5741, %v5742
        %v5745 = vrot.slane %v5741, 4
        %v5747 = vshrl.u32 %v5570, 16
        %v5749 = vrot.slane %v5747, 7
        %v5750 = vshll.u32 %v5570, 16
        %v5752 = vor.u32 %v5749, %v5750
        %v5753 = vsel %vm5584, %v5745, %v5752
        %v5754 = vrot.slane %v5749, 4
        %v5756 = vshrl.u32 %v5571, 16
        %v5758 = vrot.slane %v5756, 7
        %v5759 = vshll.u32 %v5571, 16
        %v5761 = vor.u32 %v5758, %v5759
        %v5762 = vrot.slane %v5758, 4
        %v5764 = vshrl.u32 %v5572, 16
        %v5766 = vrot.slane %v5764, 7
        %v5767 = vshll.u32 %v5572, 16
        %v5769 = vor.u32 %v5766, %v5767
        %v5770 = vsel %vm5584, %v5762, %v5769
        %v5771 = vrot.slane %v5766, 4
        %v5773 = vshrl.u32 %v5573, 16
        %v5775 = vrot.slane %v5773, 7
        %v5776 = vshll.u32 %v5573, 16
        %v5778 = vor.u32 %v5775, %v5776
        %v5779 = vrot.slane %v5775, 4
        %v5781 = vshrl.u32 %v5574, 16
        %v5783 = vrot.slane %v5781, 7
        %v5784 = vshll.u32 %v5574, 16
        %v5786 = vor.u32 %v5783, %v5784
        %v5787 = vsel %vm5584, %v5779, %v5786
        %v5788 = vrot.slane %v5783, 4
        %v5790 = vshrl.u32 %v5575, 16
        %v5792 = vrot.slane %v5790, 7
        %v5793 = vshll.u32 %v5575, 16
        %v5795 = vor.u32 %v5792, %v5793
        %v5796 = vrot.slane %v5792, 4
        %v5798 = vshrl.u32 %v5576, 16
        %v5800 = vrot.slane %v5798, 7
        %v5801 = vshll.u32 %v5576, 16
        %v5803 = vor.u32 %v5800, %v5801
        %v5804 = vsel %vm5584, %v5796, %v5803
        %v5805 = vrot.slane %v5800, 4
        %v5807 = vshrl.u32 %v5577, 16
        %v5809 = vrot.slane %v5807, 7
        %v5810 = vshll.u32 %v5577, 16
        %v5812 = vor.u32 %v5809, %v5810
        %v5813 = vrot.slane %v5809, 4
        %v5815 = vshrl.u32 %v5578, 16
        %v5817 = vrot.slane %v5815, 7
        %v5818 = vshll.u32 %v5578, 16
        %v5820 = vor.u32 %v5817, %v5818
        %v5821 = vsel %vm5584, %v5813, %v5820
        %v5822 = vrot.slane %v5817, 4
        %v5824 = vshrl.u32 %v5579, 16
        %v5826 = vrot.slane %v5824, 7
        %v5827 = vshll.u32 %v5579, 16
        %v5829 = vor.u32 %v5826, %v5827
        %v5830 = vrot.slane %v5826, 4
        %v5832 = vshrl.u32 %v5580, 16
        %v5834 = vrot.slane %v5832, 7
        %v5835 = vshll.u32 %v5580, 16
        %v5837 = vor.u32 %v5834, %v5835
        %v5838 = vsel %vm5584, %v5830, %v5837
        %v5839 = vrot.slane %v5834, 4
        %v5841 = vshrl.u32 %v5581, 16
        %v5843 = vrot.slane %v5841, 7
        %v5844 = vshll.u32 %v5581, 16
        %v5846 = vor.u32 %v5843, %v5844
        %v5847 = vrot.slane %v5843, 4
        %v5849 = vshrl.u32 %v5582, 16
        %v5851 = vrot.slane %v5849, 7
        %v5852 = vshll.u32 %v5582, 16
        %v5854 = vor.u32 %v5851, %v5852
        %v5855 = vsel %vm5584, %v5847, %v5854
        %v5856 = vrot.slane %v5851, 4
        %vm5905 = vcmask 1043456
        %vm5906 = vmand %vm5905, %vm5437
        %v5907 = vld [vmem:[%s5385] sm:$0xf]
        %v5908 = vsel %vm5906, %v5591, %v5907
        %5909 = vst [vmem:[%s5385] sm:$0xf] %v5908
        %5910 = vst [vmem:[%s5385 + $0x4] sm:$0xf] %v5600
        %v5911 = vld [vmem:[%s5385 + $0x8] sm:$0x1]
        %v5912 = vsel %vm5388, %v5601, %v5911
        %5913 = vst [vmem:[%s5385 + $0x8] sm:$0x1] %v5912
        %v5914 = vld [vmem:[%s5385 + $0xc] sm:$0xf]
        %v5915 = vsel %vm5906, %v5608, %v5914
        %5916 = vst [vmem:[%s5385 + $0xc] sm:$0xf] %v5915
        %5917 = vst [vmem:[%s5385 + $0x10] sm:$0xf] %v5617
        %v5918 = vld [vmem:[%s5385 + $0x14] sm:$0x1]
        %v5919 = vsel %vm5388, %v5618, %v5918
        %5920 = vst [vmem:[%s5385 + $0x14] sm:$0x1] %v5919
        %v5921 = vld [vmem:[%s5385 + $0x18] sm:$0xf]
        %v5922 = vsel %vm5906, %v5625, %v5921
        %5923 = vst [vmem:[%s5385 + $0x18] sm:$0xf] %v5922
        %5924 = vst [vmem:[%s5385 + $0x1c] sm:$0xf] %v5634
        %v5925 = vld [vmem:[%s5385 + $0x20] sm:$0x1]
        %v5926 = vsel %vm5388, %v5635, %v5925
        %5927 = vst [vmem:[%s5385 + $0x20] sm:$0x1] %v5926
        %v5928 = vld [vmem:[%s5385 + $0x24] sm:$0xf]
        %v5929 = vsel %vm5906, %v5642, %v5928
        %5930 = vst [vmem:[%s5385 + $0x24] sm:$0xf] %v5929
        %5931 = vst [vmem:[%s5385 + $0x28] sm:$0xf] %v5651
        %v5932 = vld [vmem:[%s5385 + $0x2c] sm:$0x1]
        %v5933 = vsel %vm5388, %v5652, %v5932
        %5934 = vst [vmem:[%s5385 + $0x2c] sm:$0x1] %v5933
        %v5935 = vld [vmem:[%s5385 + $0x30] sm:$0xf]
        %v5936 = vsel %vm5906, %v5659, %v5935
        %5937 = vst [vmem:[%s5385 + $0x30] sm:$0xf] %v5936
        %5938 = vst [vmem:[%s5385 + $0x34] sm:$0xf] %v5668
        %v5939 = vld [vmem:[%s5385 + $0x38] sm:$0x1]
        %v5940 = vsel %vm5388, %v5669, %v5939
        %5941 = vst [vmem:[%s5385 + $0x38] sm:$0x1] %v5940
        %v5942 = vld [vmem:[%s5385 + $0x3c] sm:$0xf]
        %v5943 = vsel %vm5906, %v5676, %v5942
        %5944 = vst [vmem:[%s5385 + $0x3c] sm:$0xf] %v5943
        %5945 = vst [vmem:[%s5385 + $0x40] sm:$0xf] %v5685
        %v5946 = vld [vmem:[%s5385 + $0x44] sm:$0x1]
        %v5947 = vsel %vm5388, %v5686, %v5946
        %5948 = vst [vmem:[%s5385 + $0x44] sm:$0x1] %v5947
        %v5949 = vld [vmem:[%s5385 + $0x48] sm:$0xf]
        %v5950 = vsel %vm5906, %v5693, %v5949
        %5951 = vst [vmem:[%s5385 + $0x48] sm:$0xf] %v5950
        %5952 = vst [vmem:[%s5385 + $0x4c] sm:$0xf] %v5702
        %v5953 = vld [vmem:[%s5385 + $0x50] sm:$0x1]
        %v5954 = vsel %vm5388, %v5703, %v5953
        %5955 = vst [vmem:[%s5385 + $0x50] sm:$0x1] %v5954
        %v5956 = vld [vmem:[%s5385 + $0x54] sm:$0xf]
        %v5957 = vsel %vm5906, %v5710, %v5956
        %5958 = vst [vmem:[%s5385 + $0x54] sm:$0xf] %v5957
        %5959 = vst [vmem:[%s5385 + $0x58] sm:$0xf] %v5719
        %v5960 = vld [vmem:[%s5385 + $0x5c] sm:$0x1]
        %v5961 = vsel %vm5388, %v5720, %v5960
        %5962 = vst [vmem:[%s5385 + $0x5c] sm:$0x1] %v5961
        %v5963 = vld [vmem:[%s5385 + $0x60] sm:$0xf]
        %v5964 = vsel %vm5906, %v5727, %v5963
        %5965 = vst [vmem:[%s5385 + $0x60] sm:$0xf] %v5964
        %5966 = vst [vmem:[%s5385 + $0x64] sm:$0xf] %v5736
        %v5967 = vld [vmem:[%s5385 + $0x68] sm:$0x1]
        %v5968 = vsel %vm5388, %v5737, %v5967
        %5969 = vst [vmem:[%s5385 + $0x68] sm:$0x1] %v5968
        %v5970 = vld [vmem:[%s5385 + $0x6c] sm:$0xf]
        %v5971 = vsel %vm5906, %v5744, %v5970
        %5972 = vst [vmem:[%s5385 + $0x6c] sm:$0xf] %v5971
        %5973 = vst [vmem:[%s5385 + $0x70] sm:$0xf] %v5753
        %v5974 = vld [vmem:[%s5385 + $0x74] sm:$0x1]
        %v5975 = vsel %vm5388, %v5754, %v5974
        %5976 = vst [vmem:[%s5385 + $0x74] sm:$0x1] %v5975
        %v5977 = vld [vmem:[%s5385 + $0x78] sm:$0xf]
        %v5978 = vsel %vm5906, %v5761, %v5977
        %5979 = vst [vmem:[%s5385 + $0x78] sm:$0xf] %v5978
        %5980 = vst [vmem:[%s5385 + $0x7c] sm:$0xf] %v5770
        %v5981 = vld [vmem:[%s5385 + $0x80] sm:$0x1]
        %v5982 = vsel %vm5388, %v5771, %v5981
        %5983 = vst [vmem:[%s5385 + $0x80] sm:$0x1] %v5982
        %v5984 = vld [vmem:[%s5385 + $0x84] sm:$0xf]
        %v5985 = vsel %vm5906, %v5778, %v5984
        %5986 = vst [vmem:[%s5385 + $0x84] sm:$0xf] %v5985
        %5987 = vst [vmem:[%s5385 + $0x88] sm:$0xf] %v5787
        %v5988 = vld [vmem:[%s5385 + $0x8c] sm:$0x1]
        %v5989 = vsel %vm5388, %v5788, %v5988
        %5990 = vst [vmem:[%s5385 + $0x8c] sm:$0x1] %v5989
        %v5991 = vld [vmem:[%s5385 + $0x90] sm:$0xf]
        %v5992 = vsel %vm5906, %v5795, %v5991
        %5993 = vst [vmem:[%s5385 + $0x90] sm:$0xf] %v5992
        %5994 = vst [vmem:[%s5385 + $0x94] sm:$0xf] %v5804
        %v5995 = vld [vmem:[%s5385 + $0x98] sm:$0x1]
        %v5996 = vsel %vm5388, %v5805, %v5995
        %5997 = vst [vmem:[%s5385 + $0x98] sm:$0x1] %v5996
        %v5998 = vld [vmem:[%s5385 + $0x9c] sm:$0xf]
        %v5999 = vsel %vm5906, %v5812, %v5998
        %6000 = vst [vmem:[%s5385 + $0x9c] sm:$0xf] %v5999
        %6001 = vst [vmem:[%s5385 + $0xa0] sm:$0xf] %v5821
        %v6002 = vld [vmem:[%s5385 + $0xa4] sm:$0x1]
        %v6003 = vsel %vm5388, %v5822, %v6002
        %6004 = vst [vmem:[%s5385 + $0xa4] sm:$0x1] %v6003
        %v6005 = vld [vmem:[%s5385 + $0xa8] sm:$0xf]
        %v6006 = vsel %vm5906, %v5829, %v6005
        %6007 = vst [vmem:[%s5385 + $0xa8] sm:$0xf] %v6006
        %6008 = vst [vmem:[%s5385 + $0xac] sm:$0xf] %v5838
        %v6009 = vld [vmem:[%s5385 + $0xb0] sm:$0x1]
        %v6010 = vsel %vm5388, %v5839, %v6009
        %6011 = vst [vmem:[%s5385 + $0xb0] sm:$0x1] %v6010
        %v6012 = vld [vmem:[%s5385 + $0xb4] sm:$0xf]
        %v6013 = vsel %vm5906, %v5846, %v6012
        %6014 = vst [vmem:[%s5385 + $0xb4] sm:$0xf] %v6013
        %6015 = vst [vmem:[%s5385 + $0xb8] sm:$0xf] %v5855
        %v6016 = vld [vmem:[%s5385 + $0xbc] sm:$0x1]
        %v6017 = vsel %vm5388, %v5856, %v6016
        %6018 = vst [vmem:[%s5385 + $0xbc] sm:$0x1] %v6017
        %v6019 = vld [vmem:[#allocation3] sm:$0xf]
        %v6020 = vld [vmem:[#allocation3 + $0x4] sm:$0xf]
        %v6021 = vld [vmem:[#allocation3 + $0xc] sm:$0xf]
        %v6022 = vld [vmem:[#allocation3 + $0x10] sm:$0xf]
        %v6023 = vld [vmem:[#allocation3 + $0x18] sm:$0xf]
        %v6024 = vld [vmem:[#allocation3 + $0x1c] sm:$0xf]
        %v6025 = vld [vmem:[#allocation3 + $0x24] sm:$0xf]
        %v6026 = vld [vmem:[#allocation3 + $0x28] sm:$0xf]
        %v6027 = vld [vmem:[#allocation3 + $0x30] sm:$0xf]
        %v6028 = vld [vmem:[#allocation3 + $0x34] sm:$0xf]
        %v6029 = vld [vmem:[#allocation3 + $0x3c] sm:$0xf]
        %v6030 = vld [vmem:[#allocation3 + $0x40] sm:$0xf]
        %v6031 = vld [vmem:[#allocation3 + $0x48] sm:$0xf]
        %v6032 = vld [vmem:[#allocation3 + $0x4c] sm:$0xf]
        %v6033 = vld [vmem:[#allocation3 + $0x54] sm:$0xf]
        %v6034 = vld [vmem:[#allocation3 + $0x58] sm:$0xf]
        %v6035 = vld [vmem:[#allocation3 + $0x60] sm:$0xf]
        %v6036 = vld [vmem:[#allocation3 + $0x64] sm:$0xf]
        %v6037 = vld [vmem:[#allocation3 + $0x6c] sm:$0xf]
        %v6038 = vld [vmem:[#allocation3 + $0x70] sm:$0xf]
        %v6039 = vld [vmem:[#allocation3 + $0x78] sm:$0xf]
        %v6040 = vld [vmem:[#allocation3 + $0x7c] sm:$0xf]
        %v6041 = vld [vmem:[#allocation3 + $0x84] sm:$0xf]
        %v6042 = vld [vmem:[#allocation3 + $0x88] sm:$0xf]
        %v6043 = vld [vmem:[#allocation3 + $0x90] sm:$0xf]
        %v6044 = vld [vmem:[#allocation3 + $0x94] sm:$0xf]
        %v6045 = vld [vmem:[#allocation3 + $0x9c] sm:$0xf]
        %v6046 = vld [vmem:[#allocation3 + $0xa0] sm:$0xf]
        %v6047 = vld [vmem:[#allocation3 + $0xa8] sm:$0xf]
        %v6048 = vld [vmem:[#allocation3 + $0xac] sm:$0xf]
        %v6049 = vld [vmem:[#allocation3 + $0xb4] sm:$0xf]
        %v6050 = vld [vmem:[#allocation3 + $0xb8] sm:$0xf]
        %v6051 = vld [vmem:[#allocation4] sm:$0xf]
        %v6052 = vld [vmem:[#allocation4 + $0x4] sm:$0xf]
        %v6053 = vld [vmem:[#allocation4 + $0x8] sm:$0xf]
        %v6054 = vld [vmem:[#allocation4 + $0xc] sm:$0xf]
        %v6055 = vld [vmem:[#allocation4 + $0x10] sm:$0xf]
        %v6056 = vld [vmem:[#allocation4 + $0x14] sm:$0xf]
        %v6057 = vld [vmem:[#allocation4 + $0x18] sm:$0xf]
        %v6058 = vld [vmem:[#allocation4 + $0x1c] sm:$0xf]
        %v6059 = vld [vmem:[#allocation4 + $0x20] sm:$0xf]
        %v6060 = vld [vmem:[#allocation4 + $0x24] sm:$0xf]
        %v6061 = vld [vmem:[#allocation4 + $0x28] sm:$0xf]
        %v6062 = vld [vmem:[#allocation4 + $0x2c] sm:$0xf]
        %v6063 = vld [vmem:[#allocation4 + $0x30] sm:$0xf]
        %v6064 = vld [vmem:[#allocation4 + $0x34] sm:$0xf]
        %v6065 = vld [vmem:[#allocation4 + $0x38] sm:$0xf]
        %v6066 = vld [vmem:[#allocation4 + $0x3c] sm:$0xf]
        %v6067 = vld [vmem:[#allocation3 + $0x8] sm:$0x1]
        %v6068 = vld [vmem:[#allocation3 + $0x14] sm:$0x1]
        %v6069 = vld [vmem:[#allocation3 + $0x20] sm:$0x1]
        %v6070 = vld [vmem:[#allocation3 + $0x2c] sm:$0x1]
        %v6071 = vld [vmem:[#allocation3 + $0x38] sm:$0x1]
        %v6072 = vld [vmem:[#allocation3 + $0x44] sm:$0x1]
        %v6073 = vld [vmem:[#allocation3 + $0x50] sm:$0x1]
        %v6074 = vld [vmem:[#allocation3 + $0x5c] sm:$0x1]
        %v6075 = vld [vmem:[#allocation3 + $0x68] sm:$0x1]
        %v6076 = vld [vmem:[#allocation3 + $0x74] sm:$0x1]
        %v6077 = vld [vmem:[#allocation3 + $0x80] sm:$0x1]
        %v6078 = vld [vmem:[#allocation3 + $0x8c] sm:$0x1]
        %v6079 = vld [vmem:[#allocation3 + $0x98] sm:$0x1]
        %v6080 = vld [vmem:[#allocation3 + $0xa4] sm:$0x1]
        %v6081 = vld [vmem:[#allocation3 + $0xb0] sm:$0x1]
        %v6082 = vld [vmem:[#allocation3 + $0xbc] sm:$0x1]
        %v6084 = vshrl.u32 %v6019, 16
        %v6086 = vrot.slane %v6084, 4
        %v6087 = vshll.u32 %v6019, 16
        %v6089 = vrot.slane %v6087, 5
        %v6090 = vor.u32 %v6086, %v6089
        %v6091 = vrot.slane %v6090, 4
        %v6093 = vshll.u32 %v6020, 16
        %v6095 = vrot.slane %v6093, 5
        %v6096 = vsel %vm525, %v6091, %v6095
        %v6097 = vshrl.u32 %v6020, 16
        %v6099 = vrot.slane %v6097, 4
        %v6100 = vor.u32 %v6099, %v6095
        %v6101 = vrot.slane %v6100, 4
        %v6103 = vshll.u32 %v6067, 16
        %v6105 = vrot.slane %v6103, 5
        %v6106 = vsel %vm525, %v6101, %v6105
        %v6108 = vshrl.u32 %v6021, 16
        %v6110 = vrot.slane %v6108, 4
        %v6111 = vshll.u32 %v6021, 16
        %v6113 = vrot.slane %v6111, 5
        %v6114 = vor.u32 %v6110, %v6113
        %v6115 = vrot.slane %v6114, 4
        %v6117 = vshll.u32 %v6022, 16
        %v6119 = vrot.slane %v6117, 5
        %v6120 = vsel %vm525, %v6115, %v6119
        %v6121 = vshrl.u32 %v6022, 16
        %v6123 = vrot.slane %v6121, 4
        %v6124 = vor.u32 %v6123, %v6119
        %v6125 = vrot.slane %v6124, 4
        %v6127 = vshll.u32 %v6068, 16
        %v6129 = vrot.slane %v6127, 5
        %v6130 = vsel %vm525, %v6125, %v6129
        %v6132 = vshrl.u32 %v6023, 16
        %v6134 = vrot.slane %v6132, 4
        %v6135 = vshll.u32 %v6023, 16
        %v6137 = vrot.slane %v6135, 5
        %v6138 = vor.u32 %v6134, %v6137
        %v6139 = vrot.slane %v6138, 4
        %v6141 = vshll.u32 %v6024, 16
        %v6143 = vrot.slane %v6141, 5
        %v6144 = vsel %vm525, %v6139, %v6143
        %v6145 = vshrl.u32 %v6024, 16
        %v6147 = vrot.slane %v6145, 4
        %v6148 = vor.u32 %v6147, %v6143
        %v6149 = vrot.slane %v6148, 4
        %v6151 = vshll.u32 %v6069, 16
        %v6153 = vrot.slane %v6151, 5
        %v6154 = vsel %vm525, %v6149, %v6153
        %v6156 = vshrl.u32 %v6025, 16
        %v6158 = vrot.slane %v6156, 4
        %v6159 = vshll.u32 %v6025, 16
        %v6161 = vrot.slane %v6159, 5
        %v6162 = vor.u32 %v6158, %v6161
        %v6163 = vrot.slane %v6162, 4
        %v6165 = vshll.u32 %v6026, 16
        %v6167 = vrot.slane %v6165, 5
        %v6168 = vsel %vm525, %v6163, %v6167
        %v6169 = vshrl.u32 %v6026, 16
        %v6171 = vrot.slane %v6169, 4
        %v6172 = vor.u32 %v6171, %v6167
        %v6173 = vrot.slane %v6172, 4
        %v6175 = vshll.u32 %v6070, 16
        %v6177 = vrot.slane %v6175, 5
        %v6178 = vsel %vm525, %v6173, %v6177
        %v6180 = vshrl.u32 %v6027, 16
        %v6182 = vrot.slane %v6180, 4
        %v6183 = vshll.u32 %v6027, 16
        %v6185 = vrot.slane %v6183, 5
        %v6186 = vor.u32 %v6182, %v6185
        %v6187 = vrot.slane %v6186, 4
        %v6189 = vshll.u32 %v6028, 16
        %v6191 = vrot.slane %v6189, 5
        %v6192 = vsel %vm525, %v6187, %v6191
        %v6193 = vshrl.u32 %v6028, 16
        %v6195 = vrot.slane %v6193, 4
        %v6196 = vor.u32 %v6195, %v6191
        %v6197 = vrot.slane %v6196, 4
        %v6199 = vshll.u32 %v6071, 16
        %v6201 = vrot.slane %v6199, 5
        %v6202 = vsel %vm525, %v6197, %v6201
        %v6204 = vshrl.u32 %v6029, 16
        %v6206 = vrot.slane %v6204, 4
        %v6207 = vshll.u32 %v6029, 16
        %v6209 = vrot.slane %v6207, 5
        %v6210 = vor.u32 %v6206, %v6209
        %v6211 = vrot.slane %v6210, 4
        %v6213 = vshll.u32 %v6030, 16
        %v6215 = vrot.slane %v6213, 5
        %v6216 = vsel %vm525, %v6211, %v6215
        %v6217 = vshrl.u32 %v6030, 16
        %v6219 = vrot.slane %v6217, 4
        %v6220 = vor.u32 %v6219, %v6215
        %v6221 = vrot.slane %v6220, 4
        %v6223 = vshll.u32 %v6072, 16
        %v6225 = vrot.slane %v6223, 5
        %v6226 = vsel %vm525, %v6221, %v6225
        %v6228 = vshrl.u32 %v6031, 16
        %v6230 = vrot.slane %v6228, 4
        %v6231 = vshll.u32 %v6031, 16
        %v6233 = vrot.slane %v6231, 5
        %v6234 = vor.u32 %v6230, %v6233
        %v6235 = vrot.slane %v6234, 4
        %v6237 = vshll.u32 %v6032, 16
        %v6239 = vrot.slane %v6237, 5
        %v6240 = vsel %vm525, %v6235, %v6239
        %v6241 = vshrl.u32 %v6032, 16
        %v6243 = vrot.slane %v6241, 4
        %v6244 = vor.u32 %v6243, %v6239
        %v6245 = vrot.slane %v6244, 4
        %v6247 = vshll.u32 %v6073, 16
        %v6249 = vrot.slane %v6247, 5
        %v6250 = vsel %vm525, %v6245, %v6249
        %v6252 = vshrl.u32 %v6033, 16
        %v6254 = vrot.slane %v6252, 4
        %v6255 = vshll.u32 %v6033, 16
        %v6257 = vrot.slane %v6255, 5
        %v6258 = vor.u32 %v6254, %v6257
        %v6259 = vrot.slane %v6258, 4
        %v6261 = vshll.u32 %v6034, 16
        %v6263 = vrot.slane %v6261, 5
        %v6264 = vsel %vm525, %v6259, %v6263
        %v6265 = vshrl.u32 %v6034, 16
        %v6267 = vrot.slane %v6265, 4
        %v6268 = vor.u32 %v6267, %v6263
        %v6269 = vrot.slane %v6268, 4
        %v6271 = vshll.u32 %v6074, 16
        %v6273 = vrot.slane %v6271, 5
        %v6274 = vsel %vm525, %v6269, %v6273
        %v6276 = vshrl.u32 %v6035, 16
        %v6278 = vrot.slane %v6276, 4
        %v6279 = vshll.u32 %v6035, 16
        %v6281 = vrot.slane %v6279, 5
        %v6282 = vor.u32 %v6278, %v6281
        %v6283 = vrot.slane %v6282, 4
        %v6285 = vshll.u32 %v6036, 16
        %v6287 = vrot.slane %v6285, 5
        %v6288 = vsel %vm525, %v6283, %v6287
        %v6289 = vshrl.u32 %v6036, 16
        %v6291 = vrot.slane %v6289, 4
        %v6292 = vor.u32 %v6291, %v6287
        %v6293 = vrot.slane %v6292, 4
        %v6295 = vshll.u32 %v6075, 16
        %v6297 = vrot.slane %v6295, 5
        %v6298 = vsel %vm525, %v6293, %v6297
        %v6300 = vshrl.u32 %v6037, 16
        %v6302 = vrot.slane %v6300, 4
        %v6303 = vshll.u32 %v6037, 16
        %v6305 = vrot.slane %v6303, 5
        %v6306 = vor.u32 %v6302, %v6305
        %v6307 = vrot.slane %v6306, 4
        %v6309 = vshll.u32 %v6038, 16
        %v6311 = vrot.slane %v6309, 5
        %v6312 = vsel %vm525, %v6307, %v6311
        %v6313 = vshrl.u32 %v6038, 16
        %v6315 = vrot.slane %v6313, 4
        %v6316 = vor.u32 %v6315, %v6311
        %v6317 = vrot.slane %v6316, 4
        %v6319 = vshll.u32 %v6076, 16
        %v6321 = vrot.slane %v6319, 5
        %v6322 = vsel %vm525, %v6317, %v6321
        %v6324 = vshrl.u32 %v6039, 16
        %v6326 = vrot.slane %v6324, 4
        %v6327 = vshll.u32 %v6039, 16
        %v6329 = vrot.slane %v6327, 5
        %v6330 = vor.u32 %v6326, %v6329
        %v6331 = vrot.slane %v6330, 4
        %v6333 = vshll.u32 %v6040, 16
        %v6335 = vrot.slane %v6333, 5
        %v6336 = vsel %vm525, %v6331, %v6335
        %v6337 = vshrl.u32 %v6040, 16
        %v6339 = vrot.slane %v6337, 4
        %v6340 = vor.u32 %v6339, %v6335
        %v6341 = vrot.slane %v6340, 4
        %v6343 = vshll.u32 %v6077, 16
        %v6345 = vrot.slane %v6343, 5
        %v6346 = vsel %vm525, %v6341, %v6345
        %v6348 = vshrl.u32 %v6041, 16
        %v6350 = vrot.slane %v6348, 4
        %v6351 = vshll.u32 %v6041, 16
        %v6353 = vrot.slane %v6351, 5
        %v6354 = vor.u32 %v6350, %v6353
        %v6355 = vrot.slane %v6354, 4
        %v6357 = vshll.u32 %v6042, 16
        %v6359 = vrot.slane %v6357, 5
        %v6360 = vsel %vm525, %v6355, %v6359
        %v6361 = vshrl.u32 %v6042, 16
        %v6363 = vrot.slane %v6361, 4
        %v6364 = vor.u32 %v6363, %v6359
        %v6365 = vrot.slane %v6364, 4
        %v6367 = vshll.u32 %v6078, 16
        %v6369 = vrot.slane %v6367, 5
        %v6370 = vsel %vm525, %v6365, %v6369
        %v6372 = vshrl.u32 %v6043, 16
        %v6374 = vrot.slane %v6372, 4
        %v6375 = vshll.u32 %v6043, 16
        %v6377 = vrot.slane %v6375, 5
        %v6378 = vor.u32 %v6374, %v6377
        %v6379 = vrot.slane %v6378, 4
        %v6381 = vshll.u32 %v6044, 16
        %v6383 = vrot.slane %v6381, 5
        %v6384 = vsel %vm525, %v6379, %v6383
        %v6385 = vshrl.u32 %v6044, 16
        %v6387 = vrot.slane %v6385, 4
        %v6388 = vor.u32 %v6387, %v6383
        %v6389 = vrot.slane %v6388, 4
        %v6391 = vshll.u32 %v6079, 16
        %v6393 = vrot.slane %v6391, 5
        %v6394 = vsel %vm525, %v6389, %v6393
        %v6396 = vshrl.u32 %v6045, 16
        %v6398 = vrot.slane %v6396, 4
        %v6399 = vshll.u32 %v6045, 16
        %v6401 = vrot.slane %v6399, 5
        %v6402 = vor.u32 %v6398, %v6401
        %v6403 = vrot.slane %v6402, 4
        %v6405 = vshll.u32 %v6046, 16
        %v6407 = vrot.slane %v6405, 5
        %v6408 = vsel %vm525, %v6403, %v6407
        %v6409 = vshrl.u32 %v6046, 16
        %v6411 = vrot.slane %v6409, 4
        %v6412 = vor.u32 %v6411, %v6407
        %v6413 = vrot.slane %v6412, 4
        %v6415 = vshll.u32 %v6080, 16
        %v6417 = vrot.slane %v6415, 5
        %v6418 = vsel %vm525, %v6413, %v6417
        %v6420 = vshrl.u32 %v6047, 16
        %v6422 = vrot.slane %v6420, 4
        %v6423 = vshll.u32 %v6047, 16
        %v6425 = vrot.slane %v6423, 5
        %v6426 = vor.u32 %v6422, %v6425
        %v6427 = vrot.slane %v6426, 4
        %v6429 = vshll.u32 %v6048, 16
        %v6431 = vrot.slane %v6429, 5
        %v6432 = vsel %vm525, %v6427, %v6431
        %v6433 = vshrl.u32 %v6048, 16
        %v6435 = vrot.slane %v6433, 4
        %v6436 = vor.u32 %v6435, %v6431
        %v6437 = vrot.slane %v6436, 4
        %v6439 = vshll.u32 %v6081, 16
        %v6441 = vrot.slane %v6439, 5
        %v6442 = vsel %vm525, %v6437, %v6441
        %v6444 = vshrl.u32 %v6049, 16
        %v6446 = vrot.slane %v6444, 4
        %v6447 = vshll.u32 %v6049, 16
        %v6449 = vrot.slane %v6447, 5
        %v6450 = vor.u32 %v6446, %v6449
        %v6451 = vrot.slane %v6450, 4
        %v6453 = vshll.u32 %v6050, 16
        %v6455 = vrot.slane %v6453, 5
        %v6456 = vsel %vm525, %v6451, %v6455
        %v6457 = vshrl.u32 %v6050, 16
        %v6459 = vrot.slane %v6457, 4
        %v6460 = vor.u32 %v6459, %v6455
        %v6461 = vrot.slane %v6460, 4
        %v6463 = vshll.u32 %v6082, 16
        %v6465 = vrot.slane %v6463, 5
        %v6466 = vsel %vm525, %v6461, %v6465
        %s6467 = scalar_lea.vmem [#allocation4], 64
        %v6468 = vld [vmem:[%s6467] sm:$0xf]
        %v6469 = vld [vmem:[%s6467 + $0x4] sm:$0xf]
        %v6470 = vld [vmem:[%s6467 + $0x8] sm:$0xf]
        %v6471 = vld [vmem:[%s6467 + $0xc] sm:$0xf]
        %v6472 = vld [vmem:[%s6467 + $0x10] sm:$0xf]
        %v6473 = vld [vmem:[%s6467 + $0x14] sm:$0xf]
        %v6474 = vld [vmem:[%s6467 + $0x18] sm:$0xf]
        %v6475 = vld [vmem:[%s6467 + $0x1c] sm:$0xf]
        %v6476 = vld [vmem:[%s6467 + $0x20] sm:$0xf]
        %v6477 = vld [vmem:[%s6467 + $0x24] sm:$0xf]
        %v6478 = vld [vmem:[%s6467 + $0x28] sm:$0xf]
        %v6479 = vld [vmem:[%s6467 + $0x2c] sm:$0xf]
        %v6480 = vld [vmem:[%s6467 + $0x30] sm:$0xf]
        %v6481 = vld [vmem:[%s6467 + $0x34] sm:$0xf]
        %v6482 = vld [vmem:[%s6467 + $0x38] sm:$0xf]
        %v6483 = vld [vmem:[%s6467 + $0x3c] sm:$0xf]
        %v6484 = vunpack.c.l.b16 %v6096
        %v6485 = vunpack.c.l.b16 %v6106
        %v6486 = vunpack.c.l.b16 %v6120
        %v6487 = vunpack.c.l.b16 %v6130
        %v6488 = vunpack.c.l.b16 %v6144
        %v6489 = vunpack.c.l.b16 %v6154
        %v6490 = vunpack.c.l.b16 %v6168
        %v6491 = vunpack.c.l.b16 %v6178
        %v6492 = vunpack.c.l.b16 %v6192
        %v6493 = vunpack.c.l.b16 %v6202
        %v6494 = vunpack.c.l.b16 %v6216
        %v6495 = vunpack.c.l.b16 %v6226
        %v6496 = vunpack.c.l.b16 %v6240
        %v6497 = vunpack.c.l.b16 %v6250
        %v6498 = vunpack.c.l.b16 %v6264
        %v6499 = vunpack.c.l.b16 %v6274
        %v6500 = vunpack.c.l.b16 %v6288
        %v6501 = vunpack.c.l.b16 %v6298
        %v6502 = vunpack.c.l.b16 %v6312
        %v6503 = vunpack.c.l.b16 %v6322
        %v6504 = vunpack.c.l.b16 %v6336
        %v6505 = vunpack.c.l.b16 %v6346
        %v6506 = vunpack.c.l.b16 %v6360
        %v6507 = vunpack.c.l.b16 %v6370
        %v6508 = vunpack.c.l.b16 %v6384
        %v6509 = vunpack.c.l.b16 %v6394
        %v6510 = vunpack.c.l.b16 %v6408
        %v6511 = vunpack.c.l.b16 %v6418
        %v6512 = vunpack.c.l.b16 %v6432
        %v6513 = vunpack.c.l.b16 %v6442
        %v6514 = vunpack.c.l.b16 %v6456
        %v6515 = vunpack.c.l.b16 %v6466
        %v6516 = vpack.c.b16 %v6485, %v6484
        %v6517 = vpack.c.b16 %v6487, %v6486
        %v6518 = vpack.c.b16 %v6489, %v6488
        %v6519 = vpack.c.b16 %v6491, %v6490
        %v6520 = vpack.c.b16 %v6493, %v6492
        %v6521 = vpack.c.b16 %v6495, %v6494
        %v6522 = vpack.c.b16 %v6497, %v6496
        %v6523 = vpack.c.b16 %v6499, %v6498
        %v6524 = vpack.c.b16 %v6501, %v6500
        %v6525 = vpack.c.b16 %v6503, %v6502
        %v6526 = vpack.c.b16 %v6505, %v6504
        %v6527 = vpack.c.b16 %v6507, %v6506
        %v6528 = vpack.c.b16 %v6509, %v6508
        %v6529 = vpack.c.b16 %v6511, %v6510
        %v6530 = vpack.c.b16 %v6513, %v6512
        %v6531 = vpack.c.b16 %v6515, %v6514
        %v6564 = vunpack.c.l.b16 %v6468
        %v6565 = vunpack.c.l.b16 %v6469
        %v6566 = vunpack.c.l.b16 %v6470
        %v6567 = vunpack.c.l.b16 %v6471
        %v6568 = vunpack.c.l.b16 %v6472
        %v6569 = vunpack.c.l.b16 %v6473
        %v6570 = vunpack.c.l.b16 %v6474
        %v6571 = vunpack.c.l.b16 %v6475
        %v6572 = vunpack.c.l.b16 %v6476
        %v6573 = vunpack.c.l.b16 %v6477
        %v6574 = vunpack.c.l.b16 %v6478
        %v6575 = vunpack.c.l.b16 %v6479
        %v6576 = vunpack.c.l.b16 %v6480
        %v6577 = vunpack.c.l.b16 %v6481
        %v6578 = vunpack.c.l.b16 %v6482
        %v6579 = vunpack.c.l.b16 %v6483
        %v6580 = vpack.c.b16 %v6565, %v6564
        %v6581 = vpack.c.b16 %v6567, %v6566
        %v6582 = vpack.c.b16 %v6569, %v6568
        %v6583 = vpack.c.b16 %v6571, %v6570
        %v6584 = vpack.c.b16 %v6573, %v6572
        %v6585 = vpack.c.b16 %v6575, %v6574
        %v6586 = vpack.c.b16 %v6577, %v6576
        %v6587 = vpack.c.b16 %v6579, %v6578
        %6596 = vmatprep.subr.bf16.mxu0 0
        %6597 = vmatpush1.bf16.msra.mxu0 %v6580
        %6598 = vmatprep.subr.bf16.mxu0 0
        %6599 = vmatpush1.bf16.msra.mxu0 %v6581
        %6600 = vmatprep.subr.bf16.mxu0 0
        %6601 = vmatpush1.bf16.msra.mxu0 %v6582
        %6602 = vmatprep.subr.bf16.mxu0 0
        %6603 = vmatpush1.bf16.msra.mxu0 %v6583
        %6604 = vmatprep.subr.bf16.mxu0 0
        %6605 = vmatpush1.bf16.msra.mxu0 %v6584
        %6606 = vmatprep.subr.bf16.mxu0 0
        %6607 = vmatpush1.bf16.msra.mxu0 %v6585
        %6608 = vmatprep.subr.bf16.mxu0 0
        %6609 = vmatpush1.bf16.msra.mxu0 %v6586
        %6610 = vmatprep.subr.bf16.mxu0 0
        %6611 = vmatpush1.bf16.msra.mxu0 %v6587
        %6612 = vmatprep.subr.bf16.mxu0 0
        %6613 = vmatpush1.bf16.msra.mxu0 0
        %6614 = vmatprep.subr.bf16.mxu0 0
        %6615 = vmatpush1.bf16.msra.mxu0 0
        %6616 = vmatprep.subr.bf16.mxu0 0
        %6617 = vmatpush1.bf16.msra.mxu0 0
        %6618 = vmatprep.subr.bf16.mxu0 0
        %6619 = vmatpush1.bf16.msra.mxu0 0
        %6620 = vmatprep.subr.bf16.mxu0 0
        %6621 = vmatpush1.bf16.msra.mxu0 0
        %6622 = vmatprep.subr.bf16.mxu0 0
        %6623 = vmatpush1.bf16.msra.mxu0 0
        %6624 = vmatprep.subr.bf16.mxu0 0
        %6625 = vmatpush1.bf16.msra.mxu0 0
        %6626 = vmatprep.subr.bf16.mxu0 0
        %6627 = vmatpush1.bf16.msra.mxu0 0
        %6628 = vmatprep.mubr.bf16.mxu0 0
        %6629 = vmatmul.mubr.bf16.gmra.mrb[0].mxu0 %v6516
        %v6630 = vpop.f32.mrb[0].mxu0
        %v6631 = vadd.f32 0.0, %v6630
        %v6632 = vpop.f32.mrb[0].mxu0
        %v6633 = vpop.f32.mrb[0].mxu0
        %v6634 = vadd.f32 0.0, %v6633
        %v6635 = vpop.f32.mrb[0].mxu0
        %6636 = vmatprep.mubr.bf16.mxu0 0
        %6637 = vmatmul.mubr.bf16.gmra.mrb[0].mxu0 %v6517
        %v6638 = vpop.f32.mrb[0].mxu0
        %v6639 = vadd.f32 0.0, %v6638
        %v6640 = vpop.f32.mrb[0].mxu0
        %v6641 = vpop.f32.mrb[0].mxu0
        %v6642 = vadd.f32 0.0, %v6641
        %v6643 = vpop.f32.mrb[0].mxu0
        %6644 = vmatprep.mubr.bf16.mxu0 0
        %6645 = vmatmul.mubr.bf16.gmra.mrb[0].mxu0 %v6518
        %v6646 = vpop.f32.mrb[0].mxu0
        %v6647 = vadd.f32 0.0, %v6646
        %v6648 = vpop.f32.mrb[0].mxu0
        %v6649 = vpop.f32.mrb[0].mxu0
        %v6650 = vadd.f32 0.0, %v6649
        %v6651 = vpop.f32.mrb[0].mxu0
        %6652 = vmatprep.mubr.bf16.mxu0 0
        %6653 = vmatmul.mubr.bf16.gmra.mrb[0].mxu0 %v6519
        %v6654 = vpop.f32.mrb[0].mxu0
        %v6655 = vadd.f32 0.0, %v6654
        %v6656 = vpop.f32.mrb[0].mxu0
        %v6657 = vpop.f32.mrb[0].mxu0
        %v6658 = vadd.f32 0.0, %v6657
        %v6659 = vpop.f32.mrb[0].mxu0
        %6660 = vmatprep.mubr.bf16.mxu0 0
        %6661 = vmatmul.mubr.bf16.gmra.mrb[0].mxu0 %v6520
        %v6662 = vpop.f32.mrb[0].mxu0
        %v6663 = vadd.f32 0.0, %v6662
        %v6664 = vpop.f32.mrb[0].mxu0
        %v6665 = vpop.f32.mrb[0].mxu0
        %v6666 = vadd.f32 0.0, %v6665
        %v6667 = vpop.f32.mrb[0].mxu0
        %6668 = vmatprep.mubr.bf16.mxu0 0
        %6669 = vmatmul.mubr.bf16.gmra.mrb[0].mxu0 %v6521
        %v6670 = vpop.f32.mrb[0].mxu0
        %v6671 = vadd.f32 0.0, %v6670
        %v6672 = vpop.f32.mrb[0].mxu0
        %v6673 = vpop.f32.mrb[0].mxu0
        %v6674 = vadd.f32 0.0, %v6673
        %v6675 = vpop.f32.mrb[0].mxu0
        %6676 = vmatprep.mubr.bf16.mxu0 0
        %6677 = vmatmul.mubr.bf16.gmra.mrb[0].mxu0 %v6522
        %v6678 = vpop.f32.mrb[0].mxu0
        %v6679 = vadd.f32 0.0, %v6678
        %v6680 = vpop.f32.mrb[0].mxu0
        %v6681 = vpop.f32.mrb[0].mxu0
        %v6682 = vadd.f32 0.0, %v6681
        %v6683 = vpop.f32.mrb[0].mxu0
        %6684 = vmatprep.mubr.bf16.mxu0 0
        %6685 = vmatmul.mubr.bf16.gmra.mrb[0].mxu0 %v6523
        %v6686 = vpop.f32.mrb[0].mxu0
        %v6687 = vadd.f32 0.0, %v6686
        %v6688 = vpop.f32.mrb[0].mxu0
        %v6689 = vpop.f32.mrb[0].mxu0
        %v6690 = vadd.f32 0.0, %v6689
        %v6691 = vpop.f32.mrb[0].mxu0
        %6692 = vmatprep.mubr.bf16.mxu0 0
        %6693 = vmatmul.mubr.bf16.gmra.mrb[0].mxu0 %v6524
        %v6694 = vpop.f32.mrb[0].mxu0
        %v6695 = vadd.f32 0.0, %v6694
        %v6696 = vpop.f32.mrb[0].mxu0
        %v6697 = vpop.f32.mrb[0].mxu0
        %v6698 = vadd.f32 0.0, %v6697
        %v6699 = vpop.f32.mrb[0].mxu0
        %6700 = vmatprep.mubr.bf16.mxu0 0
        %6701 = vmatmul.mubr.bf16.gmra.mrb[0].mxu0 %v6525
        %v6702 = vpop.f32.mrb[0].mxu0
        %v6703 = vadd.f32 0.0, %v6702
        %v6704 = vpop.f32.mrb[0].mxu0
        %v6705 = vpop.f32.mrb[0].mxu0
        %v6706 = vadd.f32 0.0, %v6705
        %v6707 = vpop.f32.mrb[0].mxu0
        %6708 = vmatprep.mubr.bf16.mxu0 0
        %6709 = vmatmul.mubr.bf16.gmra.mrb[0].mxu0 %v6526
        %v6710 = vpop.f32.mrb[0].mxu0
        %v6711 = vadd.f32 0.0, %v6710
        %v6712 = vpop.f32.mrb[0].mxu0
        %v6713 = vpop.f32.mrb[0].mxu0
        %v6714 = vadd.f32 0.0, %v6713
        %v6715 = vpop.f32.mrb[0].mxu0
        %6716 = vmatprep.mubr.bf16.mxu0 0
        %6717 = vmatmul.mubr.bf16.gmra.mrb[0].mxu0 %v6527
        %v6718 = vpop.f32.mrb[0].mxu0
        %v6719 = vadd.f32 0.0, %v6718
        %v6720 = vpop.f32.mrb[0].mxu0
        %v6721 = vpop.f32.mrb[0].mxu0
        %v6722 = vadd.f32 0.0, %v6721
        %v6723 = vpop.f32.mrb[0].mxu0
        %6724 = vmatprep.mubr.bf16.mxu0 0
        %6725 = vmatmul.mubr.bf16.gmra.mrb[0].mxu0 %v6528
        %v6726 = vpop.f32.mrb[0].mxu0
        %v6727 = vadd.f32 0.0, %v6726
        %v6728 = vpop.f32.mrb[0].mxu0
        %v6729 = vpop.f32.mrb[0].mxu0
        %v6730 = vadd.f32 0.0, %v6729
        %v6731 = vpop.f32.mrb[0].mxu0
        %6732 = vmatprep.mubr.bf16.mxu0 0
        %6733 = vmatmul.mubr.bf16.gmra.mrb[0].mxu0 %v6529
        %v6734 = vpop.f32.mrb[0].mxu0
        %v6735 = vadd.f32 0.0, %v6734
        %v6736 = vpop.f32.mrb[0].mxu0
        %v6737 = vpop.f32.mrb[0].mxu0
        %v6738 = vadd.f32 0.0, %v6737
        %v6739 = vpop.f32.mrb[0].mxu0
        %6740 = vmatprep.mubr.bf16.mxu0 0
        %6741 = vmatmul.mubr.bf16.gmra.mrb[0].mxu0 %v6530
        %v6742 = vpop.f32.mrb[0].mxu0
        %v6743 = vadd.f32 0.0, %v6742
        %v6744 = vpop.f32.mrb[0].mxu0
        %v6745 = vpop.f32.mrb[0].mxu0
        %v6746 = vadd.f32 0.0, %v6745
        %v6747 = vpop.f32.mrb[0].mxu0
        %6748 = vmatprep.mubr.bf16.mxu0 0
        %6749 = vmatmul.mubr.bf16.gmra.mrb[0].mxu0 %v6531
        %v6750 = vpop.f32.mrb[0].mxu0
        %v6751 = vadd.f32 0.0, %v6750
        %v6752 = vpop.f32.mrb[0].mxu0
        %v6753 = vpop.f32.mrb[0].mxu0
        %v6754 = vadd.f32 0.0, %v6753
        %v6755 = vpop.f32.mrb[0].mxu0
        %6756 = vdwg.mxu0
        %v6789 = vunpack.c.l.b16 %v6019
        %v6790 = vunpack.c.l.b16 %v6020
        %v6791 = vunpack.c.l.b16 %v6021
        %v6792 = vunpack.c.l.b16 %v6022
        %v6793 = vunpack.c.l.b16 %v6023
        %v6794 = vunpack.c.l.b16 %v6024
        %v6795 = vunpack.c.l.b16 %v6025
        %v6796 = vunpack.c.l.b16 %v6026
        %v6797 = vunpack.c.l.b16 %v6027
        %v6798 = vunpack.c.l.b16 %v6028
        %v6799 = vunpack.c.l.b16 %v6029
        %v6800 = vunpack.c.l.b16 %v6030
        %v6801 = vunpack.c.l.b16 %v6031
        %v6802 = vunpack.c.l.b16 %v6032
        %v6803 = vunpack.c.l.b16 %v6033
        %v6804 = vunpack.c.l.b16 %v6034
        %v6805 = vunpack.c.l.b16 %v6035
        %v6806 = vunpack.c.l.b16 %v6036
        %v6807 = vunpack.c.l.b16 %v6037
        %v6808 = vunpack.c.l.b16 %v6038
        %v6809 = vunpack.c.l.b16 %v6039
        %v6810 = vunpack.c.l.b16 %v6040
        %v6811 = vunpack.c.l.b16 %v6041
        %v6812 = vunpack.c.l.b16 %v6042
        %v6813 = vunpack.c.l.b16 %v6043
        %v6814 = vunpack.c.l.b16 %v6044
        %v6815 = vunpack.c.l.b16 %v6045
        %v6816 = vunpack.c.l.b16 %v6046
        %v6817 = vunpack.c.l.b16 %v6047
        %v6818 = vunpack.c.l.b16 %v6048
        %v6819 = vunpack.c.l.b16 %v6049
        %v6820 = vunpack.c.l.b16 %v6050
        %v6821 = vpack.c.b16 %v6790, %v6789
        %v6822 = vpack.c.b16 %v6792, %v6791
        %v6823 = vpack.c.b16 %v6794, %v6793
        %v6824 = vpack.c.b16 %v6796, %v6795
        %v6825 = vpack.c.b16 %v6798, %v6797
        %v6826 = vpack.c.b16 %v6800, %v6799
        %v6827 = vpack.c.b16 %v6802, %v6801
        %v6828 = vpack.c.b16 %v6804, %v6803
        %v6829 = vpack.c.b16 %v6806, %v6805
        %v6830 = vpack.c.b16 %v6808, %v6807
        %v6831 = vpack.c.b16 %v6810, %v6809
        %v6832 = vpack.c.b16 %v6812, %v6811
        %v6833 = vpack.c.b16 %v6814, %v6813
        %v6834 = vpack.c.b16 %v6816, %v6815
        %v6835 = vpack.c.b16 %v6818, %v6817
        %v6836 = vpack.c.b16 %v6820, %v6819
        %v6869 = vunpack.c.l.b16 %v6051
        %v6870 = vunpack.c.l.b16 %v6052
        %v6871 = vunpack.c.l.b16 %v6053
        %v6872 = vunpack.c.l.b16 %v6054
        %v6873 = vunpack.c.l.b16 %v6055
        %v6874 = vunpack.c.l.b16 %v6056
        %v6875 = vunpack.c.l.b16 %v6057
        %v6876 = vunpack.c.l.b16 %v6058
        %v6877 = vunpack.c.l.b16 %v6059
        %v6878 = vunpack.c.l.b16 %v6060
        %v6879 = vunpack.c.l.b16 %v6061
        %v6880 = vunpack.c.l.b16 %v6062
        %v6881 = vunpack.c.l.b16 %v6063
        %v6882 = vunpack.c.l.b16 %v6064
        %v6883 = vunpack.c.l.b16 %v6065
        %v6884 = vunpack.c.l.b16 %v6066
        %v6885 = vpack.c.b16 %v6870, %v6869
        %v6886 = vpack.c.b16 %v6872, %v6871
        %v6887 = vpack.c.b16 %v6874, %v6873
        %v6888 = vpack.c.b16 %v6876, %v6875
        %v6889 = vpack.c.b16 %v6878, %v6877
        %v6890 = vpack.c.b16 %v6880, %v6879
        %v6891 = vpack.c.b16 %v6882, %v6881
        %v6892 = vpack.c.b16 %v6884, %v6883
        %6901 = vmatprep.subr.bf16.mxu0 0
        %6902 = vmatpush1.bf16.msra.mxu0 %v6885
        %6903 = vmatprep.subr.bf16.mxu0 0
        %6904 = vmatpush1.bf16.msra.mxu0 %v6886
        %6905 = vmatprep.subr.bf16.mxu0 0
        %6906 = vmatpush1.bf16.msra.mxu0 %v6887
        %6907 = vmatprep.subr.bf16.mxu0 0
        %6908 = vmatpush1.bf16.msra.mxu0 %v6888
        %6909 = vmatprep.subr.bf16.mxu0 0
        %6910 = vmatpush1.bf16.msra.mxu0 %v6889
        %6911 = vmatprep.subr.bf16.mxu0 0
        %6912 = vmatpush1.bf16.msra.mxu0 %v6890
        %6913 = vmatprep.subr.bf16.mxu0 0
        %6914 = vmatpush1.bf16.msra.mxu0 %v6891
        %6915 = vmatprep.subr.bf16.mxu0 0
        %6916 = vmatpush1.bf16.msra.mxu0 %v6892
        %6917 = vmatprep.subr.bf16.mxu0 0
        %6918 = vmatpush1.bf16.msra.mxu0 0
        %6919 = vmatprep.subr.bf16.mxu0 0
        %6920 = vmatpush1.bf16.msra.mxu0 0
        %6921 = vmatprep.subr.bf16.mxu0 0
        %6922 = vmatpush1.bf16.msra.mxu0 0
        %6923 = vmatprep.subr.bf16.mxu0 0
        %6924 = vmatpush1.bf16.msra.mxu0 0
        %6925 = vmatprep.subr.bf16.mxu0 0
        %6926 = vmatpush1.bf16.msra.mxu0 0
        %6927 = vmatprep.subr.bf16.mxu0 0
        %6928 = vmatpush1.bf16.msra.mxu0 0
        %6929 = vmatprep.subr.bf16.mxu0 0
        %6930 = vmatpush1.bf16.msra.mxu0 0
        %6931 = vmatprep.subr.bf16.mxu0 0
        %6932 = vmatpush1.bf16.msra.mxu0 0
        %6933 = vmatprep.mubr.bf16.mxu0 0
        %6934 = vmatmul.mubr.bf16.gmra.mrb[0].mxu0 %v6821
        %v6935 = vpop.f32.mrb[0].mxu0
        %v6936 = vadd.f32 %v6631, %v6935
        %v6937 = vpop.f32.mrb[0].mxu0
        %v6938 = vpop.f32.mrb[0].mxu0
        %v6939 = vadd.f32 %v6634, %v6938
        %v6940 = vpop.f32.mrb[0].mxu0
        %6941 = vmatprep.mubr.bf16.mxu0 0
        %6942 = vmatmul.mubr.bf16.gmra.mrb[0].mxu0 %v6822
        %v6943 = vpop.f32.mrb[0].mxu0
        %v6944 = vadd.f32 %v6639, %v6943
        %v6945 = vpop.f32.mrb[0].mxu0
        %v6946 = vpop.f32.mrb[0].mxu0
        %v6947 = vadd.f32 %v6642, %v6946
        %v6948 = vpop.f32.mrb[0].mxu0
        %6949 = vmatprep.mubr.bf16.mxu0 0
        %6950 = vmatmul.mubr.bf16.gmra.mrb[0].mxu0 %v6823
        %v6951 = vpop.f32.mrb[0].mxu0
        %v6952 = vadd.f32 %v6647, %v6951
        %v6953 = vpop.f32.mrb[0].mxu0
        %v6954 = vpop.f32.mrb[0].mxu0
        %v6955 = vadd.f32 %v6650, %v6954
        %v6956 = vpop.f32.mrb[0].mxu0
        %6957 = vmatprep.mubr.bf16.mxu0 0
        %6958 = vmatmul.mubr.bf16.gmra.mrb[0].mxu0 %v6824
        %v6959 = vpop.f32.mrb[0].mxu0
        %v6960 = vadd.f32 %v6655, %v6959
        %v6961 = vpop.f32.mrb[0].mxu0
        %v6962 = vpop.f32.mrb[0].mxu0
        %v6963 = vadd.f32 %v6658, %v6962
        %v6964 = vpop.f32.mrb[0].mxu0
        %6965 = vmatprep.mubr.bf16.mxu0 0
        %6966 = vmatmul.mubr.bf16.gmra.mrb[0].mxu0 %v6825
        %v6967 = vpop.f32.mrb[0].mxu0
        %v6968 = vadd.f32 %v6663, %v6967
        %v6969 = vpop.f32.mrb[0].mxu0
        %v6970 = vpop.f32.mrb[0].mxu0
        %v6971 = vadd.f32 %v6666, %v6970
        %v6972 = vpop.f32.mrb[0].mxu0
        %6973 = vmatprep.mubr.bf16.mxu0 0
        %6974 = vmatmul.mubr.bf16.gmra.mrb[0].mxu0 %v6826
        %v6975 = vpop.f32.mrb[0].mxu0
        %v6976 = vadd.f32 %v6671, %v6975
        %v6977 = vpop.f32.mrb[0].mxu0
        %v6978 = vpop.f32.mrb[0].mxu0
        %v6979 = vadd.f32 %v6674, %v6978
        %v6980 = vpop.f32.mrb[0].mxu0
        %6981 = vmatprep.mubr.bf16.mxu0 0
        %6982 = vmatmul.mubr.bf16.gmra.mrb[0].mxu0 %v6827
        %v6983 = vpop.f32.mrb[0].mxu0
        %v6984 = vadd.f32 %v6679, %v6983
        %v6985 = vpop.f32.mrb[0].mxu0
        %v6986 = vpop.f32.mrb[0].mxu0
        %v6987 = vadd.f32 %v6682, %v6986
        %v6988 = vpop.f32.mrb[0].mxu0
        %6989 = vmatprep.mubr.bf16.mxu0 0
        %6990 = vmatmul.mubr.bf16.gmra.mrb[0].mxu0 %v6828
        %v6991 = vpop.f32.mrb[0].mxu0
        %v6992 = vadd.f32 %v6687, %v6991
        %v6993 = vpop.f32.mrb[0].mxu0
        %v6994 = vpop.f32.mrb[0].mxu0
        %v6995 = vadd.f32 %v6690, %v6994
        %v6996 = vpop.f32.mrb[0].mxu0
        %6997 = vmatprep.mubr.bf16.mxu0 0
        %6998 = vmatmul.mubr.bf16.gmra.mrb[0].mxu0 %v6829
        %v6999 = vpop.f32.mrb[0].mxu0
        %v7000 = vadd.f32 %v6695, %v6999
        %v7001 = vpop.f32.mrb[0].mxu0
        %v7002 = vpop.f32.mrb[0].mxu0
        %v7003 = vadd.f32 %v6698, %v7002
        %v7004 = vpop.f32.mrb[0].mxu0
        %7005 = vmatprep.mubr.bf16.mxu0 0
        %7006 = vmatmul.mubr.bf16.gmra.mrb[0].mxu0 %v6830
        %v7007 = vpop.f32.mrb[0].mxu0
        %v7008 = vadd.f32 %v6703, %v7007
        %v7009 = vpop.f32.mrb[0].mxu0
        %v7010 = vpop.f32.mrb[0].mxu0
        %v7011 = vadd.f32 %v6706, %v7010
        %v7012 = vpop.f32.mrb[0].mxu0
        %7013 = vmatprep.mubr.bf16.mxu0 0
        %7014 = vmatmul.mubr.bf16.gmra.mrb[0].mxu0 %v6831
        %v7015 = vpop.f32.mrb[0].mxu0
        %v7016 = vadd.f32 %v6711, %v7015
        %v7017 = vpop.f32.mrb[0].mxu0
        %v7018 = vpop.f32.mrb[0].mxu0
        %v7019 = vadd.f32 %v6714, %v7018
        %v7020 = vpop.f32.mrb[0].mxu0
        %7021 = vmatprep.mubr.bf16.mxu0 0
        %7022 = vmatmul.mubr.bf16.gmra.mrb[0].mxu0 %v6832
        %v7023 = vpop.f32.mrb[0].mxu0
        %v7024 = vadd.f32 %v6719, %v7023
        %v7025 = vpop.f32.mrb[0].mxu0
        %v7026 = vpop.f32.mrb[0].mxu0
        %v7027 = vadd.f32 %v6722, %v7026
        %v7028 = vpop.f32.mrb[0].mxu0
        %7029 = vmatprep.mubr.bf16.mxu0 0
        %7030 = vmatmul.mubr.bf16.gmra.mrb[0].mxu0 %v6833
        %v7031 = vpop.f32.mrb[0].mxu0
        %v7032 = vadd.f32 %v6727, %v7031
        %v7033 = vpop.f32.mrb[0].mxu0
        %v7034 = vpop.f32.mrb[0].mxu0
        %v7035 = vadd.f32 %v6730, %v7034
        %v7036 = vpop.f32.mrb[0].mxu0
        %7037 = vmatprep.mubr.bf16.mxu0 0
        %7038 = vmatmul.mubr.bf16.gmra.mrb[0].mxu0 %v6834
        %v7039 = vpop.f32.mrb[0].mxu0
        %v7040 = vadd.f32 %v6735, %v7039
        %v7041 = vpop.f32.mrb[0].mxu0
        %v7042 = vpop.f32.mrb[0].mxu0
        %v7043 = vadd.f32 %v6738, %v7042
        %v7044 = vpop.f32.mrb[0].mxu0
        %7045 = vmatprep.mubr.bf16.mxu0 0
        %7046 = vmatmul.mubr.bf16.gmra.mrb[0].mxu0 %v6835
        %v7047 = vpop.f32.mrb[0].mxu0
        %v7048 = vadd.f32 %v6743, %v7047
        %v7049 = vpop.f32.mrb[0].mxu0
        %v7050 = vpop.f32.mrb[0].mxu0
        %v7051 = vadd.f32 %v6746, %v7050
        %v7052 = vpop.f32.mrb[0].mxu0
        %7053 = vmatprep.mubr.bf16.mxu0 0
        %7054 = vmatmul.mubr.bf16.gmra.mrb[0].mxu0 %v6836
        %v7055 = vpop.f32.mrb[0].mxu0
        %v7056 = vadd.f32 %v6751, %v7055
        %v7057 = vpop.f32.mrb[0].mxu0
        %v7058 = vpop.f32.mrb[0].mxu0
        %v7059 = vadd.f32 %v6754, %v7058
        %v7060 = vpop.f32.mrb[0].mxu0
        %7061 = vdwg.mxu0
        %v7062 = vld [vmem:[#allocation3] sm:$0xe]
        %v7063 = vld [vmem:[#allocation3 + $0xc] sm:$0xe]
        %v7064 = vld [vmem:[#allocation3 + $0x18] sm:$0xe]
        %v7065 = vld [vmem:[#allocation3 + $0x24] sm:$0xe]
        %v7066 = vld [vmem:[#allocation3 + $0x30] sm:$0xe]
        %v7067 = vld [vmem:[#allocation3 + $0x3c] sm:$0xe]
        %v7068 = vld [vmem:[#allocation3 + $0x48] sm:$0xe]
        %v7069 = vld [vmem:[#allocation3 + $0x54] sm:$0xe]
        %v7070 = vld [vmem:[#allocation3 + $0x60] sm:$0xe]
        %v7071 = vld [vmem:[#allocation3 + $0x6c] sm:$0xe]
        %v7072 = vld [vmem:[#allocation3 + $0x78] sm:$0xe]
        %v7073 = vld [vmem:[#allocation3 + $0x84] sm:$0xe]
        %v7074 = vld [vmem:[#allocation3 + $0x90] sm:$0xe]
        %v7075 = vld [vmem:[#allocation3 + $0x9c] sm:$0xe]
        %v7076 = vld [vmem:[#allocation3 + $0xa8] sm:$0xe]
        %v7077 = vld [vmem:[#allocation3 + $0xb4] sm:$0xe]
        %v7110 = vrot.slane %v7062, 5
        %v7111 = vrot.slane %v7110, 4
        %v7112 = vrot.slane %v6020, 5
        %v7113 = vsel %vm1555, %v7111, %v7112
        %v7114 = vrot.slane %v7112, 4
        %v7115 = vrot.slane %v6067, 5
        %v7116 = vsel %vm1555, %v7114, %v7115
        %v7117 = vrot.slane %v7063, 5
        %v7118 = vrot.slane %v7117, 4
        %v7119 = vrot.slane %v6022, 5
        %v7120 = vsel %vm1555, %v7118, %v7119
        %v7121 = vrot.slane %v7119, 4
        %v7122 = vrot.slane %v6068, 5
        %v7123 = vsel %vm1555, %v7121, %v7122
        %v7124 = vrot.slane %v7064, 5
        %v7125 = vrot.slane %v7124, 4
        %v7126 = vrot.slane %v6024, 5
        %v7127 = vsel %vm1555, %v7125, %v7126
        %v7128 = vrot.slane %v7126, 4
        %v7129 = vrot.slane %v6069, 5
        %v7130 = vsel %vm1555, %v7128, %v7129
        %v7131 = vrot.slane %v7065, 5
        %v7132 = vrot.slane %v7131, 4
        %v7133 = vrot.slane %v6026, 5
        %v7134 = vsel %vm1555, %v7132, %v7133
        %v7135 = vrot.slane %v7133, 4
        %v7136 = vrot.slane %v6070, 5
        %v7137 = vsel %vm1555, %v7135, %v7136
        %v7138 = vrot.slane %v7066, 5
        %v7139 = vrot.slane %v7138, 4
        %v7140 = vrot.slane %v6028, 5
        %v7141 = vsel %vm1555, %v7139, %v7140
        %v7142 = vrot.slane %v7140, 4
        %v7143 = vrot.slane %v6071, 5
        %v7144 = vsel %vm1555, %v7142, %v7143
        %v7145 = vrot.slane %v7067, 5
        %v7146 = vrot.slane %v7145, 4
        %v7147 = vrot.slane %v6030, 5
        %v7148 = vsel %vm1555, %v7146, %v7147
        %v7149 = vrot.slane %v7147, 4
        %v7150 = vrot.slane %v6072, 5
        %v7151 = vsel %vm1555, %v7149, %v7150
        %v7152 = vrot.slane %v7068, 5
        %v7153 = vrot.slane %v7152, 4
        %v7154 = vrot.slane %v6032, 5
        %v7155 = vsel %vm1555, %v7153, %v7154
        %v7156 = vrot.slane %v7154, 4
        %v7157 = vrot.slane %v6073, 5
        %v7158 = vsel %vm1555, %v7156, %v7157
        %v7159 = vrot.slane %v7069, 5
        %v7160 = vrot.slane %v7159, 4
        %v7161 = vrot.slane %v6034, 5
        %v7162 = vsel %vm1555, %v7160, %v7161
        %v7163 = vrot.slane %v7161, 4
        %v7164 = vrot.slane %v6074, 5
        %v7165 = vsel %vm1555, %v7163, %v7164
        %v7166 = vrot.slane %v7070, 5
        %v7167 = vrot.slane %v7166, 4
        %v7168 = vrot.slane %v6036, 5
        %v7169 = vsel %vm1555, %v7167, %v7168
        %v7170 = vrot.slane %v7168, 4
        %v7171 = vrot.slane %v6075, 5
        %v7172 = vsel %vm1555, %v7170, %v7171
        %v7173 = vrot.slane %v7071, 5
        %v7174 = vrot.slane %v7173, 4
        %v7175 = vrot.slane %v6038, 5
        %v7176 = vsel %vm1555, %v7174, %v7175
        %v7177 = vrot.slane %v7175, 4
        %v7178 = vrot.slane %v6076, 5
        %v7179 = vsel %vm1555, %v7177, %v7178
        %v7180 = vrot.slane %v7072, 5
        %v7181 = vrot.slane %v7180, 4
        %v7182 = vrot.slane %v6040, 5
        %v7183 = vsel %vm1555, %v7181, %v7182
        %v7184 = vrot.slane %v7182, 4
        %v7185 = vrot.slane %v6077, 5
        %v7186 = vsel %vm1555, %v7184, %v7185
        %v7187 = vrot.slane %v7073, 5
        %v7188 = vrot.slane %v7187, 4
        %v7189 = vrot.slane %v6042, 5
        %v7190 = vsel %vm1555, %v7188, %v7189
        %v7191 = vrot.slane %v7189, 4
        %v7192 = vrot.slane %v6078, 5
        %v7193 = vsel %vm1555, %v7191, %v7192
        %v7194 = vrot.slane %v7074, 5
        %v7195 = vrot.slane %v7194, 4
        %v7196 = vrot.slane %v6044, 5
        %v7197 = vsel %vm1555, %v7195, %v7196
        %v7198 = vrot.slane %v7196, 4
        %v7199 = vrot.slane %v6079, 5
        %v7200 = vsel %vm1555, %v7198, %v7199
        %v7201 = vrot.slane %v7075, 5
        %v7202 = vrot.slane %v7201, 4
        %v7203 = vrot.slane %v6046, 5
        %v7204 = vsel %vm1555, %v7202, %v7203
        %v7205 = vrot.slane %v7203, 4
        %v7206 = vrot.slane %v6080, 5
        %v7207 = vsel %vm1555, %v7205, %v7206
        %v7208 = vrot.slane %v7076, 5
        %v7209 = vrot.slane %v7208, 4
        %v7210 = vrot.slane %v6048, 5
        %v7211 = vsel %vm1555, %v7209, %v7210
        %v7212 = vrot.slane %v7210, 4
        %v7213 = vrot.slane %v6081, 5
        %v7214 = vsel %vm1555, %v7212, %v7213
        %v7215 = vrot.slane %v7077, 5
        %v7216 = vrot.slane %v7215, 4
        %v7217 = vrot.slane %v6050, 5
        %v7218 = vsel %vm1555, %v7216, %v7217
        %v7219 = vrot.slane %v7217, 4
        %v7220 = vrot.slane %v6082, 5
        %v7221 = vsel %vm1555, %v7219, %v7220
        %s7222 = scalar_lea.vmem [#allocation4], 128
        %v7223 = vld [vmem:[%s7222] sm:$0xf]
        %v7224 = vld [vmem:[%s7222 + $0x4] sm:$0xf]
        %v7225 = vld [vmem:[%s7222 + $0x8] sm:$0xf]
        %v7226 = vld [vmem:[%s7222 + $0xc] sm:$0xf]
        %v7227 = vld [vmem:[%s7222 + $0x10] sm:$0xf]
        %v7228 = vld [vmem:[%s7222 + $0x14] sm:$0xf]
        %v7229 = vld [vmem:[%s7222 + $0x18] sm:$0xf]
        %v7230 = vld [vmem:[%s7222 + $0x1c] sm:$0xf]
        %v7231 = vld [vmem:[%s7222 + $0x20] sm:$0xf]
        %v7232 = vld [vmem:[%s7222 + $0x24] sm:$0xf]
        %v7233 = vld [vmem:[%s7222 + $0x28] sm:$0xf]
        %v7234 = vld [vmem:[%s7222 + $0x2c] sm:$0xf]
        %v7235 = vld [vmem:[%s7222 + $0x30] sm:$0xf]
        %v7236 = vld [vmem:[%s7222 + $0x34] sm:$0xf]
        %v7237 = vld [vmem:[%s7222 + $0x38] sm:$0xf]
        %v7238 = vld [vmem:[%s7222 + $0x3c] sm:$0xf]
        %v7239 = vunpack.c.l.b16 %v7113
        %v7240 = vunpack.c.l.b16 %v7116
        %v7241 = vunpack.c.l.b16 %v7120
        %v7242 = vunpack.c.l.b16 %v7123
        %v7243 = vunpack.c.l.b16 %v7127
        %v7244 = vunpack.c.l.b16 %v7130
        %v7245 = vunpack.c.l.b16 %v7134
        %v7246 = vunpack.c.l.b16 %v7137
        %v7247 = vunpack.c.l.b16 %v7141
        %v7248 = vunpack.c.l.b16 %v7144
        %v7249 = vunpack.c.l.b16 %v7148
        %v7250 = vunpack.c.l.b16 %v7151
        %v7251 = vunpack.c.l.b16 %v7155
        %v7252 = vunpack.c.l.b16 %v7158
        %v7253 = vunpack.c.l.b16 %v7162
        %v7254 = vunpack.c.l.b16 %v7165
        %v7255 = vunpack.c.l.b16 %v7169
        %v7256 = vunpack.c.l.b16 %v7172
        %v7257 = vunpack.c.l.b16 %v7176
        %v7258 = vunpack.c.l.b16 %v7179
        %v7259 = vunpack.c.l.b16 %v7183
        %v7260 = vunpack.c.l.b16 %v7186
        %v7261 = vunpack.c.l.b16 %v7190
        %v7262 = vunpack.c.l.b16 %v7193
        %v7263 = vunpack.c.l.b16 %v7197
        %v7264 = vunpack.c.l.b16 %v7200
        %v7265 = vunpack.c.l.b16 %v7204
        %v7266 = vunpack.c.l.b16 %v7207
        %v7267 = vunpack.c.l.b16 %v7211
        %v7268 = vunpack.c.l.b16 %v7214
        %v7269 = vunpack.c.l.b16 %v7218
        %v7270 = vunpack.c.l.b16 %v7221
        %v7271 = vpack.c.b16 %v7240, %v7239
        %v7272 = vpack.c.b16 %v7242, %v7241
        %v7273 = vpack.c.b16 %v7244, %v7243
        %v7274 = vpack.c.b16 %v7246, %v7245
        %v7275 = vpack.c.b16 %v7248, %v7247
        %v7276 = vpack.c.b16 %v7250, %v7249
        %v7277 = vpack.c.b16 %v7252, %v7251
        %v7278 = vpack.c.b16 %v7254, %v7253
        %v7279 = vpack.c.b16 %v7256, %v7255
        %v7280 = vpack.c.b16 %v7258, %v7257
        %v7281 = vpack.c.b16 %v7260, %v7259
        %v7282 = vpack.c.b16 %v7262, %v7261
        %v7283 = vpack.c.b16 %v7264, %v7263
        %v7284 = vpack.c.b16 %v7266, %v7265
        %v7285 = vpack.c.b16 %v7268, %v7267
        %v7286 = vpack.c.b16 %v7270, %v7269
        %v7319 = vunpack.c.l.b16 %v7223
        %v7320 = vunpack.c.l.b16 %v7224
        %v7321 = vunpack.c.l.b16 %v7225
        %v7322 = vunpack.c.l.b16 %v7226
        %v7323 = vunpack.c.l.b16 %v7227
        %v7324 = vunpack.c.l.b16 %v7228
        %v7325 = vunpack.c.l.b16 %v7229
        %v7326 = vunpack.c.l.b16 %v7230
        %v7327 = vunpack.c.l.b16 %v7231
        %v7328 = vunpack.c.l.b16 %v7232
        %v7329 = vunpack.c.l.b16 %v7233
        %v7330 = vunpack.c.l.b16 %v7234
        %v7331 = vunpack.c.l.b16 %v7235
        %v7332 = vunpack.c.l.b16 %v7236
        %v7333 = vunpack.c.l.b16 %v7237
        %v7334 = vunpack.c.l.b16 %v7238
        %v7335 = vpack.c.b16 %v7320, %v7319
        %v7336 = vpack.c.b16 %v7322, %v7321
        %v7337 = vpack.c.b16 %v7324, %v7323
        %v7338 = vpack.c.b16 %v7326, %v7325
        %v7339 = vpack.c.b16 %v7328, %v7327
        %v7340 = vpack.c.b16 %v7330, %v7329
        %v7341 = vpack.c.b16 %v7332, %v7331
        %v7342 = vpack.c.b16 %v7334, %v7333
        %7351 = vmatprep.subr.bf16.mxu0 0
        %7352 = vmatpush1.bf16.msra.mxu0 %v7335
        %7353 = vmatprep.subr.bf16.mxu0 0
        %7354 = vmatpush1.bf16.msra.mxu0 %v7336
        %7355 = vmatprep.subr.bf16.mxu0 0
        %7356 = vmatpush1.bf16.msra.mxu0 %v7337
        %7357 = vmatprep.subr.bf16.mxu0 0
        %7358 = vmatpush1.bf16.msra.mxu0 %v7338
        %7359 = vmatprep.subr.bf16.mxu0 0
        %7360 = vmatpush1.bf16.msra.mxu0 %v7339
        %7361 = vmatprep.subr.bf16.mxu0 0
        %7362 = vmatpush1.bf16.msra.mxu0 %v7340
        %7363 = vmatprep.subr.bf16.mxu0 0
        %7364 = vmatpush1.bf16.msra.mxu0 %v7341
        %7365 = vmatprep.subr.bf16.mxu0 0
        %7366 = vmatpush1.bf16.msra.mxu0 %v7342
        %7367 = vmatprep.subr.bf16.mxu0 0
        %7368 = vmatpush1.bf16.msra.mxu0 0
        %7369 = vmatprep.subr.bf16.mxu0 0
        %7370 = vmatpush1.bf16.msra.mxu0 0
        %7371 = vmatprep.subr.bf16.mxu0 0
        %7372 = vmatpush1.bf16.msra.mxu0 0
        %7373 = vmatprep.subr.bf16.mxu0 0
        %7374 = vmatpush1.bf16.msra.mxu0 0
        %7375 = vmatprep.subr.bf16.mxu0 0
        %7376 = vmatpush1.bf16.msra.mxu0 0
        %7377 = vmatprep.subr.bf16.mxu0 0
        %7378 = vmatpush1.bf16.msra.mxu0 0
        %7379 = vmatprep.subr.bf16.mxu0 0
        %7380 = vmatpush1.bf16.msra.mxu0 0
        %7381 = vmatprep.subr.bf16.mxu0 0
        %7382 = vmatpush1.bf16.msra.mxu0 0
        %7383 = vmatprep.mubr.bf16.mxu0 0
        %7384 = vmatmul.mubr.bf16.gmra.mrb[0].mxu0 %v7271
        %v7385 = vpop.f32.mrb[0].mxu0
        %v7386 = vadd.f32 0.0, %v7385
        %v7387 = vpop.f32.mrb[0].mxu0
        %v7388 = vpop.f32.mrb[0].mxu0
        %v7389 = vadd.f32 0.0, %v7388
        %v7390 = vpop.f32.mrb[0].mxu0
        %7391 = vmatprep.mubr.bf16.mxu0 0
        %7392 = vmatmul.mubr.bf16.gmra.mrb[0].mxu0 %v7272
        %v7393 = vpop.f32.mrb[0].mxu0
        %v7394 = vadd.f32 0.0, %v7393
        %v7395 = vpop.f32.mrb[0].mxu0
        %v7396 = vpop.f32.mrb[0].mxu0
        %v7397 = vadd.f32 0.0, %v7396
        %v7398 = vpop.f32.mrb[0].mxu0
        %7399 = vmatprep.mubr.bf16.mxu0 0
        %7400 = vmatmul.mubr.bf16.gmra.mrb[0].mxu0 %v7273
        %v7401 = vpop.f32.mrb[0].mxu0
        %v7402 = vadd.f32 0.0, %v7401
        %v7403 = vpop.f32.mrb[0].mxu0
        %v7404 = vpop.f32.mrb[0].mxu0
        %v7405 = vadd.f32 0.0, %v7404
        %v7406 = vpop.f32.mrb[0].mxu0
        %7407 = vmatprep.mubr.bf16.mxu0 0
        %7408 = vmatmul.mubr.bf16.gmra.mrb[0].mxu0 %v7274
        %v7409 = vpop.f32.mrb[0].mxu0
        %v7410 = vadd.f32 0.0, %v7409
        %v7411 = vpop.f32.mrb[0].mxu0
        %v7412 = vpop.f32.mrb[0].mxu0
        %v7413 = vadd.f32 0.0, %v7412
        %v7414 = vpop.f32.mrb[0].mxu0
        %7415 = vmatprep.mubr.bf16.mxu0 0
        %7416 = vmatmul.mubr.bf16.gmra.mrb[0].mxu0 %v7275
        %v7417 = vpop.f32.mrb[0].mxu0
        %v7418 = vadd.f32 0.0, %v7417
        %v7419 = vpop.f32.mrb[0].mxu0
        %v7420 = vpop.f32.mrb[0].mxu0
        %v7421 = vadd.f32 0.0, %v7420
        %v7422 = vpop.f32.mrb[0].mxu0
        %7423 = vmatprep.mubr.bf16.mxu0 0
        %7424 = vmatmul.mubr.bf16.gmra.mrb[0].mxu0 %v7276
        %v7425 = vpop.f32.mrb[0].mxu0
        %v7426 = vadd.f32 0.0, %v7425
        %v7427 = vpop.f32.mrb[0].mxu0
        %v7428 = vpop.f32.mrb[0].mxu0
        %v7429 = vadd.f32 0.0, %v7428
        %v7430 = vpop.f32.mrb[0].mxu0
        %7431 = vmatprep.mubr.bf16.mxu0 0
        %7432 = vmatmul.mubr.bf16.gmra.mrb[0].mxu0 %v7277
        %v7433 = vpop.f32.mrb[0].mxu0
        %v7434 = vadd.f32 0.0, %v7433
        %v7435 = vpop.f32.mrb[0].mxu0
        %v7436 = vpop.f32.mrb[0].mxu0
        %v7437 = vadd.f32 0.0, %v7436
        %v7438 = vpop.f32.mrb[0].mxu0
        %7439 = vmatprep.mubr.bf16.mxu0 0
        %7440 = vmatmul.mubr.bf16.gmra.mrb[0].mxu0 %v7278
        %v7441 = vpop.f32.mrb[0].mxu0
        %v7442 = vadd.f32 0.0, %v7441
        %v7443 = vpop.f32.mrb[0].mxu0
        %v7444 = vpop.f32.mrb[0].mxu0
        %v7445 = vadd.f32 0.0, %v7444
        %v7446 = vpop.f32.mrb[0].mxu0
        %7447 = vmatprep.mubr.bf16.mxu0 0
        %7448 = vmatmul.mubr.bf16.gmra.mrb[0].mxu0 %v7279
        %v7449 = vpop.f32.mrb[0].mxu0
        %v7450 = vadd.f32 0.0, %v7449
        %v7451 = vpop.f32.mrb[0].mxu0
        %v7452 = vpop.f32.mrb[0].mxu0
        %v7453 = vadd.f32 0.0, %v7452
        %v7454 = vpop.f32.mrb[0].mxu0
        %7455 = vmatprep.mubr.bf16.mxu0 0
        %7456 = vmatmul.mubr.bf16.gmra.mrb[0].mxu0 %v7280
        %v7457 = vpop.f32.mrb[0].mxu0
        %v7458 = vadd.f32 0.0, %v7457
        %v7459 = vpop.f32.mrb[0].mxu0
        %v7460 = vpop.f32.mrb[0].mxu0
        %v7461 = vadd.f32 0.0, %v7460
        %v7462 = vpop.f32.mrb[0].mxu0
        %7463 = vmatprep.mubr.bf16.mxu0 0
        %7464 = vmatmul.mubr.bf16.gmra.mrb[0].mxu0 %v7281
        %v7465 = vpop.f32.mrb[0].mxu0
        %v7466 = vadd.f32 0.0, %v7465
        %v7467 = vpop.f32.mrb[0].mxu0
        %v7468 = vpop.f32.mrb[0].mxu0
        %v7469 = vadd.f32 0.0, %v7468
        %v7470 = vpop.f32.mrb[0].mxu0
        %7471 = vmatprep.mubr.bf16.mxu0 0
        %7472 = vmatmul.mubr.bf16.gmra.mrb[0].mxu0 %v7282
        %v7473 = vpop.f32.mrb[0].mxu0
        %v7474 = vadd.f32 0.0, %v7473
        %v7475 = vpop.f32.mrb[0].mxu0
        %v7476 = vpop.f32.mrb[0].mxu0
        %v7477 = vadd.f32 0.0, %v7476
        %v7478 = vpop.f32.mrb[0].mxu0
        %7479 = vmatprep.mubr.bf16.mxu0 0
        %7480 = vmatmul.mubr.bf16.gmra.mrb[0].mxu0 %v7283
        %v7481 = vpop.f32.mrb[0].mxu0
        %v7482 = vadd.f32 0.0, %v7481
        %v7483 = vpop.f32.mrb[0].mxu0
        %v7484 = vpop.f32.mrb[0].mxu0
        %v7485 = vadd.f32 0.0, %v7484
        %v7486 = vpop.f32.mrb[0].mxu0
        %7487 = vmatprep.mubr.bf16.mxu0 0
        %7488 = vmatmul.mubr.bf16.gmra.mrb[0].mxu0 %v7284
        %v7489 = vpop.f32.mrb[0].mxu0
        %v7490 = vadd.f32 0.0, %v7489
        %v7491 = vpop.f32.mrb[0].mxu0
        %v7492 = vpop.f32.mrb[0].mxu0
        %v7493 = vadd.f32 0.0, %v7492
        %v7494 = vpop.f32.mrb[0].mxu0
        %7495 = vmatprep.mubr.bf16.mxu0 0
        %7496 = vmatmul.mubr.bf16.gmra.mrb[0].mxu0 %v7285
        %v7497 = vpop.f32.mrb[0].mxu0
        %v7498 = vadd.f32 0.0, %v7497
        %v7499 = vpop.f32.mrb[0].mxu0
        %v7500 = vpop.f32.mrb[0].mxu0
        %v7501 = vadd.f32 0.0, %v7500
        %v7502 = vpop.f32.mrb[0].mxu0
        %7503 = vmatprep.mubr.bf16.mxu0 0
        %7504 = vmatmul.mubr.bf16.gmra.mrb[0].mxu0 %v7286
        %v7505 = vpop.f32.mrb[0].mxu0
        %v7506 = vadd.f32 0.0, %v7505
        %v7507 = vpop.f32.mrb[0].mxu0
        %v7508 = vpop.f32.mrb[0].mxu0
        %v7509 = vadd.f32 0.0, %v7508
        %v7510 = vpop.f32.mrb[0].mxu0
        %7511 = vdwg.mxu0
        %v7512 = vadd.f32 %v6936, %v7386
        %v7513 = vadd.f32 %v6939, %v7389
        %v7514 = vadd.f32 %v6944, %v7394
        %v7515 = vadd.f32 %v6947, %v7397
        %v7516 = vadd.f32 %v6952, %v7402
        %v7517 = vadd.f32 %v6955, %v7405
        %v7518 = vadd.f32 %v6960, %v7410
        %v7519 = vadd.f32 %v6963, %v7413
        %v7520 = vadd.f32 %v6968, %v7418
        %v7521 = vadd.f32 %v6971, %v7421
        %v7522 = vadd.f32 %v6976, %v7426
        %v7523 = vadd.f32 %v6979, %v7429
        %v7524 = vadd.f32 %v6984, %v7434
        %v7525 = vadd.f32 %v6987, %v7437
        %v7526 = vadd.f32 %v6992, %v7442
        %v7527 = vadd.f32 %v6995, %v7445
        %v7528 = vadd.f32 %v7000, %v7450
        %v7529 = vadd.f32 %v7003, %v7453
        %v7530 = vadd.f32 %v7008, %v7458
        %v7531 = vadd.f32 %v7011, %v7461
        %v7532 = vadd.f32 %v7016, %v7466
        %v7533 = vadd.f32 %v7019, %v7469
        %v7534 = vadd.f32 %v7024, %v7474
        %v7535 = vadd.f32 %v7027, %v7477
        %v7536 = vadd.f32 %v7032, %v7482
        %v7537 = vadd.f32 %v7035, %v7485
        %v7538 = vadd.f32 %v7040, %v7490
        %v7539 = vadd.f32 %v7043, %v7493
        %v7540 = vadd.f32 %v7048, %v7498
        %v7541 = vadd.f32 %v7051, %v7501
        %v7542 = vadd.f32 %v7056, %v7506
        %v7543 = vadd.f32 %v7059, %v7509
        %v7544 = vld [vmem:[%s5385] sm:$0xf]
        %v7545 = vld [vmem:[%s5385 + $0x4] sm:$0xf]
        %v7546 = vld [vmem:[%s5385 + $0xc] sm:$0xf]
        %v7547 = vld [vmem:[%s5385 + $0x10] sm:$0xf]
        %v7548 = vld [vmem:[%s5385 + $0x18] sm:$0xf]
        %v7549 = vld [vmem:[%s5385 + $0x1c] sm:$0xf]
        %v7550 = vld [vmem:[%s5385 + $0x24] sm:$0xf]
        %v7551 = vld [vmem:[%s5385 + $0x28] sm:$0xf]
        %v7552 = vld [vmem:[%s5385 + $0x30] sm:$0xf]
        %v7553 = vld [vmem:[%s5385 + $0x34] sm:$0xf]
        %v7554 = vld [vmem:[%s5385 + $0x3c] sm:$0xf]
        %v7555 = vld [vmem:[%s5385 + $0x40] sm:$0xf]
        %v7556 = vld [vmem:[%s5385 + $0x48] sm:$0xf]
        %v7557 = vld [vmem:[%s5385 + $0x4c] sm:$0xf]
        %v7558 = vld [vmem:[%s5385 + $0x54] sm:$0xf]
        %v7559 = vld [vmem:[%s5385 + $0x58] sm:$0xf]
        %v7560 = vld [vmem:[%s5385 + $0x60] sm:$0xf]
        %v7561 = vld [vmem:[%s5385 + $0x64] sm:$0xf]
        %v7562 = vld [vmem:[%s5385 + $0x6c] sm:$0xf]
        %v7563 = vld [vmem:[%s5385 + $0x70] sm:$0xf]
        %v7564 = vld [vmem:[%s5385 + $0x78] sm:$0xf]
        %v7565 = vld [vmem:[%s5385 + $0x7c] sm:$0xf]
        %v7566 = vld [vmem:[%s5385 + $0x84] sm:$0xf]
        %v7567 = vld [vmem:[%s5385 + $0x88] sm:$0xf]
        %v7568 = vld [vmem:[%s5385 + $0x90] sm:$0xf]
        %v7569 = vld [vmem:[%s5385 + $0x94] sm:$0xf]
        %v7570 = vld [vmem:[%s5385 + $0x9c] sm:$0xf]
        %v7571 = vld [vmem:[%s5385 + $0xa0] sm:$0xf]
        %v7572 = vld [vmem:[%s5385 + $0xa8] sm:$0xf]
        %v7573 = vld [vmem:[%s5385 + $0xac] sm:$0xf]
        %v7574 = vld [vmem:[%s5385 + $0xb4] sm:$0xf]
        %v7575 = vld [vmem:[%s5385 + $0xb8] sm:$0xf]
        %s7576 = scalar_lea.vmem [#allocation4], 192
        %v7577 = vld [vmem:[%s7576] sm:$0xf]
        %v7578 = vld [vmem:[%s7576 + $0x4] sm:$0xf]
        %v7579 = vld [vmem:[%s7576 + $0x8] sm:$0xf]
        %v7580 = vld [vmem:[%s7576 + $0xc] sm:$0xf]
        %v7581 = vld [vmem:[%s7576 + $0x10] sm:$0xf]
        %v7582 = vld [vmem:[%s7576 + $0x14] sm:$0xf]
        %v7583 = vld [vmem:[%s7576 + $0x18] sm:$0xf]
        %v7584 = vld [vmem:[%s7576 + $0x1c] sm:$0xf]
        %v7585 = vld [vmem:[%s7576 + $0x20] sm:$0xf]
        %v7586 = vld [vmem:[%s7576 + $0x24] sm:$0xf]
        %v7587 = vld [vmem:[%s7576 + $0x28] sm:$0xf]
        %v7588 = vld [vmem:[%s7576 + $0x2c] sm:$0xf]
        %v7589 = vld [vmem:[%s7576 + $0x30] sm:$0xf]
        %v7590 = vld [vmem:[%s7576 + $0x34] sm:$0xf]
        %v7591 = vld [vmem:[%s7576 + $0x38] sm:$0xf]
        %v7592 = vld [vmem:[%s7576 + $0x3c] sm:$0xf]
        %v7625 = vunpack.c.l.b16 %v7544
        %v7626 = vunpack.c.l.b16 %v7545
        %v7627 = vunpack.c.l.b16 %v7546
        %v7628 = vunpack.c.l.b16 %v7547
        %v7629 = vunpack.c.l.b16 %v7548
        %v7630 = vunpack.c.l.b16 %v7549
        %v7631 = vunpack.c.l.b16 %v7550
        %v7632 = vunpack.c.l.b16 %v7551
        %v7633 = vunpack.c.l.b16 %v7552
        %v7634 = vunpack.c.l.b16 %v7553
        %v7635 = vunpack.c.l.b16 %v7554
        %v7636 = vunpack.c.l.b16 %v7555
        %v7637 = vunpack.c.l.b16 %v7556
        %v7638 = vunpack.c.l.b16 %v7557
        %v7639 = vunpack.c.l.b16 %v7558
        %v7640 = vunpack.c.l.b16 %v7559
        %v7641 = vunpack.c.l.b16 %v7560
        %v7642 = vunpack.c.l.b16 %v7561
        %v7643 = vunpack.c.l.b16 %v7562
        %v7644 = vunpack.c.l.b16 %v7563
        %v7645 = vunpack.c.l.b16 %v7564
        %v7646 = vunpack.c.l.b16 %v7565
        %v7647 = vunpack.c.l.b16 %v7566
        %v7648 = vunpack.c.l.b16 %v7567
        %v7649 = vunpack.c.l.b16 %v7568
        %v7650 = vunpack.c.l.b16 %v7569
        %v7651 = vunpack.c.l.b16 %v7570
        %v7652 = vunpack.c.l.b16 %v7571
        %v7653 = vunpack.c.l.b16 %v7572
        %v7654 = vunpack.c.l.b16 %v7573
        %v7655 = vunpack.c.l.b16 %v7574
        %v7656 = vunpack.c.l.b16 %v7575
        %v7657 = vpack.c.b16 %v7626, %v7625
        %v7658 = vpack.c.b16 %v7628, %v7627
        %v7659 = vpack.c.b16 %v7630, %v7629
        %v7660 = vpack.c.b16 %v7632, %v7631
        %v7661 = vpack.c.b16 %v7634, %v7633
        %v7662 = vpack.c.b16 %v7636, %v7635
        %v7663 = vpack.c.b16 %v7638, %v7637
        %v7664 = vpack.c.b16 %v7640, %v7639
        %v7665 = vpack.c.b16 %v7642, %v7641
        %v7666 = vpack.c.b16 %v7644, %v7643
        %v7667 = vpack.c.b16 %v7646, %v7645
        %v7668 = vpack.c.b16 %v7648, %v7647
        %v7669 = vpack.c.b16 %v7650, %v7649
        %v7670 = vpack.c.b16 %v7652, %v7651
        %v7671 = vpack.c.b16 %v7654, %v7653
        %v7672 = vpack.c.b16 %v7656, %v7655
        %v7705 = vunpack.c.l.b16 %v7577
        %v7706 = vunpack.c.l.b16 %v7578
        %v7707 = vunpack.c.l.b16 %v7579
        %v7708 = vunpack.c.l.b16 %v7580
        %v7709 = vunpack.c.l.b16 %v7581
        %v7710 = vunpack.c.l.b16 %v7582
        %v7711 = vunpack.c.l.b16 %v7583
        %v7712 = vunpack.c.l.b16 %v7584
        %v7713 = vunpack.c.l.b16 %v7585
        %v7714 = vunpack.c.l.b16 %v7586
        %v7715 = vunpack.c.l.b16 %v7587
        %v7716 = vunpack.c.l.b16 %v7588
        %v7717 = vunpack.c.l.b16 %v7589
        %v7718 = vunpack.c.l.b16 %v7590
        %v7719 = vunpack.c.l.b16 %v7591
        %v7720 = vunpack.c.l.b16 %v7592
        %v7721 = vpack.c.b16 %v7706, %v7705
        %v7722 = vpack.c.b16 %v7708, %v7707
        %v7723 = vpack.c.b16 %v7710, %v7709
        %v7724 = vpack.c.b16 %v7712, %v7711
        %v7725 = vpack.c.b16 %v7714, %v7713
        %v7726 = vpack.c.b16 %v7716, %v7715
        %v7727 = vpack.c.b16 %v7718, %v7717
        %v7728 = vpack.c.b16 %v7720, %v7719
        %7737 = vmatprep.subr.bf16.mxu0 0
        %7738 = vmatpush1.bf16.msra.mxu0 %v7721
        %7739 = vmatprep.subr.bf16.mxu0 0
        %7740 = vmatpush1.bf16.msra.mxu0 %v7722
        %7741 = vmatprep.subr.bf16.mxu0 0
        %7742 = vmatpush1.bf16.msra.mxu0 %v7723
        %7743 = vmatprep.subr.bf16.mxu0 0
        %7744 = vmatpush1.bf16.msra.mxu0 %v7724
        %7745 = vmatprep.subr.bf16.mxu0 0
        %7746 = vmatpush1.bf16.msra.mxu0 %v7725
        %7747 = vmatprep.subr.bf16.mxu0 0
        %7748 = vmatpush1.bf16.msra.mxu0 %v7726
        %7749 = vmatprep.subr.bf16.mxu0 0
        %7750 = vmatpush1.bf16.msra.mxu0 %v7727
        %7751 = vmatprep.subr.bf16.mxu0 0
        %7752 = vmatpush1.bf16.msra.mxu0 %v7728
        %7753 = vmatprep.subr.bf16.mxu0 0
        %7754 = vmatpush1.bf16.msra.mxu0 0
        %7755 = vmatprep.subr.bf16.mxu0 0
        %7756 = vmatpush1.bf16.msra.mxu0 0
        %7757 = vmatprep.subr.bf16.mxu0 0
        %7758 = vmatpush1.bf16.msra.mxu0 0
        %7759 = vmatprep.subr.bf16.mxu0 0
        %7760 = vmatpush1.bf16.msra.mxu0 0
        %7761 = vmatprep.subr.bf16.mxu0 0
        %7762 = vmatpush1.bf16.msra.mxu0 0
        %7763 = vmatprep.subr.bf16.mxu0 0
        %7764 = vmatpush1.bf16.msra.mxu0 0
        %7765 = vmatprep.subr.bf16.mxu0 0
        %7766 = vmatpush1.bf16.msra.mxu0 0
        %7767 = vmatprep.subr.bf16.mxu0 0
        %7768 = vmatpush1.bf16.msra.mxu0 0
        %7769 = vmatprep.mubr.bf16.mxu0 0
        %7770 = vmatmul.mubr.bf16.gmra.mrb[0].mxu0 %v7657
        %v7771 = vpop.f32.mrb[0].mxu0
        %v7772 = vadd.f32 0.0, %v7771
        %v7773 = vpop.f32.mrb[0].mxu0
        %v7774 = vpop.f32.mrb[0].mxu0
        %v7775 = vadd.f32 0.0, %v7774
        %v7776 = vpop.f32.mrb[0].mxu0
        %7777 = vmatprep.mubr.bf16.mxu0 0
        %7778 = vmatmul.mubr.bf16.gmra.mrb[0].mxu0 %v7658
        %v7779 = vpop.f32.mrb[0].mxu0
        %v7780 = vadd.f32 0.0, %v7779
        %v7781 = vpop.f32.mrb[0].mxu0
        %v7782 = vpop.f32.mrb[0].mxu0
        %v7783 = vadd.f32 0.0, %v7782
        %v7784 = vpop.f32.mrb[0].mxu0
        %7785 = vmatprep.mubr.bf16.mxu0 0
        %7786 = vmatmul.mubr.bf16.gmra.mrb[0].mxu0 %v7659
        %v7787 = vpop.f32.mrb[0].mxu0
        %v7788 = vadd.f32 0.0, %v7787
        %v7789 = vpop.f32.mrb[0].mxu0
        %v7790 = vpop.f32.mrb[0].mxu0
        %v7791 = vadd.f32 0.0, %v7790
        %v7792 = vpop.f32.mrb[0].mxu0
        %7793 = vmatprep.mubr.bf16.mxu0 0
        %7794 = vmatmul.mubr.bf16.gmra.mrb[0].mxu0 %v7660
        %v7795 = vpop.f32.mrb[0].mxu0
        %v7796 = vadd.f32 0.0, %v7795
        %v7797 = vpop.f32.mrb[0].mxu0
        %v7798 = vpop.f32.mrb[0].mxu0
        %v7799 = vadd.f32 0.0, %v7798
        %v7800 = vpop.f32.mrb[0].mxu0
        %7801 = vmatprep.mubr.bf16.mxu0 0
        %7802 = vmatmul.mubr.bf16.gmra.mrb[0].mxu0 %v7661
        %v7803 = vpop.f32.mrb[0].mxu0
        %v7804 = vadd.f32 0.0, %v7803
        %v7805 = vpop.f32.mrb[0].mxu0
        %v7806 = vpop.f32.mrb[0].mxu0
        %v7807 = vadd.f32 0.0, %v7806
        %v7808 = vpop.f32.mrb[0].mxu0
        %7809 = vmatprep.mubr.bf16.mxu0 0
        %7810 = vmatmul.mubr.bf16.gmra.mrb[0].mxu0 %v7662
        %v7811 = vpop.f32.mrb[0].mxu0
        %v7812 = vadd.f32 0.0, %v7811
        %v7813 = vpop.f32.mrb[0].mxu0
        %v7814 = vpop.f32.mrb[0].mxu0
        %v7815 = vadd.f32 0.0, %v7814
        %v7816 = vpop.f32.mrb[0].mxu0
        %7817 = vmatprep.mubr.bf16.mxu0 0
        %7818 = vmatmul.mubr.bf16.gmra.mrb[0].mxu0 %v7663
        %v7819 = vpop.f32.mrb[0].mxu0
        %v7820 = vadd.f32 0.0, %v7819
        %v7821 = vpop.f32.mrb[0].mxu0
        %v7822 = vpop.f32.mrb[0].mxu0
        %v7823 = vadd.f32 0.0, %v7822
        %v7824 = vpop.f32.mrb[0].mxu0
        %7825 = vmatprep.mubr.bf16.mxu0 0
        %7826 = vmatmul.mubr.bf16.gmra.mrb[0].mxu0 %v7664
        %v7827 = vpop.f32.mrb[0].mxu0
        %v7828 = vadd.f32 0.0, %v7827
        %v7829 = vpop.f32.mrb[0].mxu0
        %v7830 = vpop.f32.mrb[0].mxu0
        %v7831 = vadd.f32 0.0, %v7830
        %v7832 = vpop.f32.mrb[0].mxu0
        %7833 = vmatprep.mubr.bf16.mxu0 0
        %7834 = vmatmul.mubr.bf16.gmra.mrb[0].mxu0 %v7665
        %v7835 = vpop.f32.mrb[0].mxu0
        %v7836 = vadd.f32 0.0, %v7835
        %v7837 = vpop.f32.mrb[0].mxu0
        %v7838 = vpop.f32.mrb[0].mxu0
        %v7839 = vadd.f32 0.0, %v7838
        %v7840 = vpop.f32.mrb[0].mxu0
        %7841 = vmatprep.mubr.bf16.mxu0 0
        %7842 = vmatmul.mubr.bf16.gmra.mrb[0].mxu0 %v7666
        %v7843 = vpop.f32.mrb[0].mxu0
        %v7844 = vadd.f32 0.0, %v7843
        %v7845 = vpop.f32.mrb[0].mxu0
        %v7846 = vpop.f32.mrb[0].mxu0
        %v7847 = vadd.f32 0.0, %v7846
        %v7848 = vpop.f32.mrb[0].mxu0
        %7849 = vmatprep.mubr.bf16.mxu0 0
        %7850 = vmatmul.mubr.bf16.gmra.mrb[0].mxu0 %v7667
        %v7851 = vpop.f32.mrb[0].mxu0
        %v7852 = vadd.f32 0.0, %v7851
        %v7853 = vpop.f32.mrb[0].mxu0
        %v7854 = vpop.f32.mrb[0].mxu0
        %v7855 = vadd.f32 0.0, %v7854
        %v7856 = vpop.f32.mrb[0].mxu0
        %7857 = vmatprep.mubr.bf16.mxu0 0
        %7858 = vmatmul.mubr.bf16.gmra.mrb[0].mxu0 %v7668
        %v7859 = vpop.f32.mrb[0].mxu0
        %v7860 = vadd.f32 0.0, %v7859
        %v7861 = vpop.f32.mrb[0].mxu0
        %v7862 = vpop.f32.mrb[0].mxu0
        %v7863 = vadd.f32 0.0, %v7862
        %v7864 = vpop.f32.mrb[0].mxu0
        %7865 = vmatprep.mubr.bf16.mxu0 0
        %7866 = vmatmul.mubr.bf16.gmra.mrb[0].mxu0 %v7669
        %v7867 = vpop.f32.mrb[0].mxu0
        %v7868 = vadd.f32 0.0, %v7867
        %v7869 = vpop.f32.mrb[0].mxu0
        %v7870 = vpop.f32.mrb[0].mxu0
        %v7871 = vadd.f32 0.0, %v7870
        %v7872 = vpop.f32.mrb[0].mxu0
        %7873 = vmatprep.mubr.bf16.mxu0 0
        %7874 = vmatmul.mubr.bf16.gmra.mrb[0].mxu0 %v7670
        %v7875 = vpop.f32.mrb[0].mxu0
        %v7876 = vadd.f32 0.0, %v7875
        %v7877 = vpop.f32.mrb[0].mxu0
        %v7878 = vpop.f32.mrb[0].mxu0
        %v7879 = vadd.f32 0.0, %v7878
        %v7880 = vpop.f32.mrb[0].mxu0
        %7881 = vmatprep.mubr.bf16.mxu0 0
        %7882 = vmatmul.mubr.bf16.gmra.mrb[0].mxu0 %v7671
        %v7883 = vpop.f32.mrb[0].mxu0
        %v7884 = vadd.f32 0.0, %v7883
        %v7885 = vpop.f32.mrb[0].mxu0
        %v7886 = vpop.f32.mrb[0].mxu0
        %v7887 = vadd.f32 0.0, %v7886
        %v7888 = vpop.f32.mrb[0].mxu0
        %7889 = vmatprep.mubr.bf16.mxu0 0
        %7890 = vmatmul.mubr.bf16.gmra.mrb[0].mxu0 %v7672
        %v7891 = vpop.f32.mrb[0].mxu0
        %v7892 = vadd.f32 0.0, %v7891
        %v7893 = vpop.f32.mrb[0].mxu0
        %v7894 = vpop.f32.mrb[0].mxu0
        %v7895 = vadd.f32 0.0, %v7894
        %v7896 = vpop.f32.mrb[0].mxu0
        %7897 = vdwg.mxu0
        %v7898 = vadd.f32 %v7512, %v7772
        %v7899 = vadd.f32 %v7513, %v7775
        %v7900 = vadd.f32 %v7514, %v7780
        %v7901 = vadd.f32 %v7515, %v7783
        %v7902 = vadd.f32 %v7516, %v7788
        %v7903 = vadd.f32 %v7517, %v7791
        %v7904 = vadd.f32 %v7518, %v7796
        %v7905 = vadd.f32 %v7519, %v7799
        %v7906 = vadd.f32 %v7520, %v7804
        %v7907 = vadd.f32 %v7521, %v7807
        %v7908 = vadd.f32 %v7522, %v7812
        %v7909 = vadd.f32 %v7523, %v7815
        %v7910 = vadd.f32 %v7524, %v7820
        %v7911 = vadd.f32 %v7525, %v7823
        %v7912 = vadd.f32 %v7526, %v7828
        %v7913 = vadd.f32 %v7527, %v7831
        %v7914 = vadd.f32 %v7528, %v7836
        %v7915 = vadd.f32 %v7529, %v7839
        %v7916 = vadd.f32 %v7530, %v7844
        %v7917 = vadd.f32 %v7531, %v7847
        %v7918 = vadd.f32 %v7532, %v7852
        %v7919 = vadd.f32 %v7533, %v7855
        %v7920 = vadd.f32 %v7534, %v7860
        %v7921 = vadd.f32 %v7535, %v7863
        %v7922 = vadd.f32 %v7536, %v7868
        %v7923 = vadd.f32 %v7537, %v7871
        %v7924 = vadd.f32 %v7538, %v7876
        %v7925 = vadd.f32 %v7539, %v7879
        %v7926 = vadd.f32 %v7540, %v7884
        %v7927 = vadd.f32 %v7541, %v7887
        %v7928 = vadd.f32 %v7542, %v7892
        %v7929 = vadd.f32 %v7543, %v7895
        %v7930 = vld [vmem:[%s5385] sm:$0xf]
        %v7931 = vld [vmem:[%s5385 + $0x4] sm:$0xf]
        %v7932 = vld [vmem:[%s5385 + $0x8] sm:$0x1]
        %v7933 = vld [vmem:[%s5385 + $0xc] sm:$0xf]
        %v7934 = vld [vmem:[%s5385 + $0x10] sm:$0xf]
        %v7935 = vld [vmem:[%s5385 + $0x14] sm:$0x1]
        %v7936 = vld [vmem:[%s5385 + $0x18] sm:$0xf]
        %v7937 = vld [vmem:[%s5385 + $0x1c] sm:$0xf]
        %v7938 = vld [vmem:[%s5385 + $0x20] sm:$0x1]
        %v7939 = vld [vmem:[%s5385 + $0x24] sm:$0xf]
        %v7940 = vld [vmem:[%s5385 + $0x28] sm:$0xf]
        %v7941 = vld [vmem:[%s5385 + $0x2c] sm:$0x1]
        %v7942 = vld [vmem:[%s5385 + $0x30] sm:$0xf]
        %v7943 = vld [vmem:[%s5385 + $0x34] sm:$0xf]
        %v7944 = vld [vmem:[%s5385 + $0x38] sm:$0x1]
        %v7945 = vld [vmem:[%s5385 + $0x3c] sm:$0xf]
        %v7946 = vld [vmem:[%s5385 + $0x40] sm:$0xf]
        %v7947 = vld [vmem:[%s5385 + $0x44] sm:$0x1]
        %v7948 = vld [vmem:[%s5385 + $0x48] sm:$0xf]
        %v7949 = vld [vmem:[%s5385 + $0x4c] sm:$0xf]
        %v7950 = vld [vmem:[%s5385 + $0x50] sm:$0x1]
        %v7951 = vld [vmem:[%s5385 + $0x54] sm:$0xf]
        %v7952 = vld [vmem:[%s5385 + $0x58] sm:$0xf]
        %v7953 = vld [vmem:[%s5385 + $0x5c] sm:$0x1]
        %v7954 = vld [vmem:[%s5385 + $0x60] sm:$0xf]
        %v7955 = vld [vmem:[%s5385 + $0x64] sm:$0xf]
        %v7956 = vld [vmem:[%s5385 + $0x68] sm:$0x1]
        %v7957 = vld [vmem:[%s5385 + $0x6c] sm:$0xf]
        %v7958 = vld [vmem:[%s5385 + $0x70] sm:$0xf]
        %v7959 = vld [vmem:[%s5385 + $0x74] sm:$0x1]
        %v7960 = vld [vmem:[%s5385 + $0x78] sm:$0xf]
        %v7961 = vld [vmem:[%s5385 + $0x7c] sm:$0xf]
        %v7962 = vld [vmem:[%s5385 + $0x80] sm:$0x1]
        %v7963 = vld [vmem:[%s5385 + $0x84] sm:$0xf]
        %v7964 = vld [vmem:[%s5385 + $0x88] sm:$0xf]
        %v7965 = vld [vmem:[%s5385 + $0x8c] sm:$0x1]
        %v7966 = vld [vmem:[%s5385 + $0x90] sm:$0xf]
        %v7967 = vld [vmem:[%s5385 + $0x94] sm:$0xf]
        %v7968 = vld [vmem:[%s5385 + $0x98] sm:$0x1]
        %v7969 = vld [vmem:[%s5385 + $0x9c] sm:$0xf]
        %v7970 = vld [vmem:[%s5385 + $0xa0] sm:$0xf]
        %v7971 = vld [vmem:[%s5385 + $0xa4] sm:$0x1]
        %v7972 = vld [vmem:[%s5385 + $0xa8] sm:$0xf]
        %v7973 = vld [vmem:[%s5385 + $0xac] sm:$0xf]
        %v7974 = vld [vmem:[%s5385 + $0xb0] sm:$0x1]
        %v7975 = vld [vmem:[%s5385 + $0xb4] sm:$0xf]
        %v7976 = vld [vmem:[%s5385 + $0xb8] sm:$0xf]
        %v7977 = vld [vmem:[%s5385 + $0xbc] sm:$0x1]
        %v7979 = vshrl.u32 %v7930, 16
        %v7981 = vrot.slane %v7979, 4
        %v7982 = vshll.u32 %v7930, 16
        %v7984 = vrot.slane %v7982, 5
        %v7985 = vor.u32 %v7981, %v7984
        %v7986 = vrot.slane %v7985, 4
        %v7988 = vshll.u32 %v7931, 16
        %v7990 = vrot.slane %v7988, 5
        %v7991 = vsel %vm525, %v7986, %v7990
        %v7992 = vshrl.u32 %v7931, 16
        %v7994 = vrot.slane %v7992, 4
        %v7995 = vor.u32 %v7994, %v7990
        %v7996 = vrot.slane %v7995, 4
        %v7998 = vshll.u32 %v7932, 16
        %v8000 = vrot.slane %v7998, 5
        %v8001 = vsel %vm525, %v7996, %v8000
        %v8003 = vshrl.u32 %v7933, 16
        %v8005 = vrot.slane %v8003, 4
        %v8006 = vshll.u32 %v7933, 16
        %v8008 = vrot.slane %v8006, 5
        %v8009 = vor.u32 %v8005, %v8008
        %v8010 = vrot.slane %v8009, 4
        %v8012 = vshll.u32 %v7934, 16
        %v8014 = vrot.slane %v8012, 5
        %v8015 = vsel %vm525, %v8010, %v8014
        %v8016 = vshrl.u32 %v7934, 16
        %v8018 = vrot.slane %v8016, 4
        %v8019 = vor.u32 %v8018, %v8014
        %v8020 = vrot.slane %v8019, 4
        %v8022 = vshll.u32 %v7935, 16
        %v8024 = vrot.slane %v8022, 5
        %v8025 = vsel %vm525, %v8020, %v8024
        %v8027 = vshrl.u32 %v7936, 16
        %v8029 = vrot.slane %v8027, 4
        %v8030 = vshll.u32 %v7936, 16
        %v8032 = vrot.slane %v8030, 5
        %v8033 = vor.u32 %v8029, %v8032
        %v8034 = vrot.slane %v8033, 4
        %v8036 = vshll.u32 %v7937, 16
        %v8038 = vrot.slane %v8036, 5
        %v8039 = vsel %vm525, %v8034, %v8038
        %v8040 = vshrl.u32 %v7937, 16
        %v8042 = vrot.slane %v8040, 4
        %v8043 = vor.u32 %v8042, %v8038
        %v8044 = vrot.slane %v8043, 4
        %v8046 = vshll.u32 %v7938, 16
        %v8048 = vrot.slane %v8046, 5
        %v8049 = vsel %vm525, %v8044, %v8048
        %v8051 = vshrl.u32 %v7939, 16
        %v8053 = vrot.slane %v8051, 4
        %v8054 = vshll.u32 %v7939, 16
        %v8056 = vrot.slane %v8054, 5
        %v8057 = vor.u32 %v8053, %v8056
        %v8058 = vrot.slane %v8057, 4
        %v8060 = vshll.u32 %v7940, 16
        %v8062 = vrot.slane %v8060, 5
        %v8063 = vsel %vm525, %v8058, %v8062
        %v8064 = vshrl.u32 %v7940, 16
        %v8066 = vrot.slane %v8064, 4
        %v8067 = vor.u32 %v8066, %v8062
        %v8068 = vrot.slane %v8067, 4
        %v8070 = vshll.u32 %v7941, 16
        %v8072 = vrot.slane %v8070, 5
        %v8073 = vsel %vm525, %v8068, %v8072
        %v8075 = vshrl.u32 %v7942, 16
        %v8077 = vrot.slane %v8075, 4
        %v8078 = vshll.u32 %v7942, 16
        %v8080 = vrot.slane %v8078, 5
        %v8081 = vor.u32 %v8077, %v8080
        %v8082 = vrot.slane %v8081, 4
        %v8084 = vshll.u32 %v7943, 16
        %v8086 = vrot.slane %v8084, 5
        %v8087 = vsel %vm525, %v8082, %v8086
        %v8088 = vshrl.u32 %v7943, 16
        %v8090 = vrot.slane %v8088, 4
        %v8091 = vor.u32 %v8090, %v8086
        %v8092 = vrot.slane %v8091, 4
        %v8094 = vshll.u32 %v7944, 16
        %v8096 = vrot.slane %v8094, 5
        %v8097 = vsel %vm525, %v8092, %v8096
        %v8099 = vshrl.u32 %v7945, 16
        %v8101 = vrot.slane %v8099, 4
        %v8102 = vshll.u32 %v7945, 16
        %v8104 = vrot.slane %v8102, 5
        %v8105 = vor.u32 %v8101, %v8104
        %v8106 = vrot.slane %v8105, 4
        %v8108 = vshll.u32 %v7946, 16
        %v8110 = vrot.slane %v8108, 5
        %v8111 = vsel %vm525, %v8106, %v8110
        %v8112 = vshrl.u32 %v7946, 16
        %v8114 = vrot.slane %v8112, 4
        %v8115 = vor.u32 %v8114, %v8110
        %v8116 = vrot.slane %v8115, 4
        %v8118 = vshll.u32 %v7947, 16
        %v8120 = vrot.slane %v8118, 5
        %v8121 = vsel %vm525, %v8116, %v8120
        %v8123 = vshrl.u32 %v7948, 16
        %v8125 = vrot.slane %v8123, 4
        %v8126 = vshll.u32 %v7948, 16
        %v8128 = vrot.slane %v8126, 5
        %v8129 = vor.u32 %v8125, %v8128
        %v8130 = vrot.slane %v8129, 4
        %v8132 = vshll.u32 %v7949, 16
        %v8134 = vrot.slane %v8132, 5
        %v8135 = vsel %vm525, %v8130, %v8134
        %v8136 = vshrl.u32 %v7949, 16
        %v8138 = vrot.slane %v8136, 4
        %v8139 = vor.u32 %v8138, %v8134
        %v8140 = vrot.slane %v8139, 4
        %v8142 = vshll.u32 %v7950, 16
        %v8144 = vrot.slane %v8142, 5
        %v8145 = vsel %vm525, %v8140, %v8144
        %v8147 = vshrl.u32 %v7951, 16
        %v8149 = vrot.slane %v8147, 4
        %v8150 = vshll.u32 %v7951, 16
        %v8152 = vrot.slane %v8150, 5
        %v8153 = vor.u32 %v8149, %v8152
        %v8154 = vrot.slane %v8153, 4
        %v8156 = vshll.u32 %v7952, 16
        %v8158 = vrot.slane %v8156, 5
        %v8159 = vsel %vm525, %v8154, %v8158
        %v8160 = vshrl.u32 %v7952, 16
        %v8162 = vrot.slane %v8160, 4
        %v8163 = vor.u32 %v8162, %v8158
        %v8164 = vrot.slane %v8163, 4
        %v8166 = vshll.u32 %v7953, 16
        %v8168 = vrot.slane %v8166, 5
        %v8169 = vsel %vm525, %v8164, %v8168
        %v8171 = vshrl.u32 %v7954, 16
        %v8173 = vrot.slane %v8171, 4
        %v8174 = vshll.u32 %v7954, 16
        %v8176 = vrot.slane %v8174, 5
        %v8177 = vor.u32 %v8173, %v8176
        %v8178 = vrot.slane %v8177, 4
        %v8180 = vshll.u32 %v7955, 16
        %v8182 = vrot.slane %v8180, 5
        %v8183 = vsel %vm525, %v8178, %v8182
        %v8184 = vshrl.u32 %v7955, 16
        %v8186 = vrot.slane %v8184, 4
        %v8187 = vor.u32 %v8186, %v8182
        %v8188 = vrot.slane %v8187, 4
        %v8190 = vshll.u32 %v7956, 16
        %v8192 = vrot.slane %v8190, 5
        %v8193 = vsel %vm525, %v8188, %v8192
        %v8195 = vshrl.u32 %v7957, 16
        %v8197 = vrot.slane %v8195, 4
        %v8198 = vshll.u32 %v7957, 16
        %v8200 = vrot.slane %v8198, 5
        %v8201 = vor.u32 %v8197, %v8200
        %v8202 = vrot.slane %v8201, 4
        %v8204 = vshll.u32 %v7958, 16
        %v8206 = vrot.slane %v8204, 5
        %v8207 = vsel %vm525, %v8202, %v8206
        %v8208 = vshrl.u32 %v7958, 16
        %v8210 = vrot.slane %v8208, 4
        %v8211 = vor.u32 %v8210, %v8206
        %v8212 = vrot.slane %v8211, 4
        %v8214 = vshll.u32 %v7959, 16
        %v8216 = vrot.slane %v8214, 5
        %v8217 = vsel %vm525, %v8212, %v8216
        %v8219 = vshrl.u32 %v7960, 16
        %v8221 = vrot.slane %v8219, 4
        %v8222 = vshll.u32 %v7960, 16
        %v8224 = vrot.slane %v8222, 5
        %v8225 = vor.u32 %v8221, %v8224
        %v8226 = vrot.slane %v8225, 4
        %v8228 = vshll.u32 %v7961, 16
        %v8230 = vrot.slane %v8228, 5
        %v8231 = vsel %vm525, %v8226, %v8230
        %v8232 = vshrl.u32 %v7961, 16
        %v8234 = vrot.slane %v8232, 4
        %v8235 = vor.u32 %v8234, %v8230
        %v8236 = vrot.slane %v8235, 4
        %v8238 = vshll.u32 %v7962, 16
        %v8240 = vrot.slane %v8238, 5
        %v8241 = vsel %vm525, %v8236, %v8240
        %v8243 = vshrl.u32 %v7963, 16
        %v8245 = vrot.slane %v8243, 4
        %v8246 = vshll.u32 %v7963, 16
        %v8248 = vrot.slane %v8246, 5
        %v8249 = vor.u32 %v8245, %v8248
        %v8250 = vrot.slane %v8249, 4
        %v8252 = vshll.u32 %v7964, 16
        %v8254 = vrot.slane %v8252, 5
        %v8255 = vsel %vm525, %v8250, %v8254
        %v8256 = vshrl.u32 %v7964, 16
        %v8258 = vrot.slane %v8256, 4
        %v8259 = vor.u32 %v8258, %v8254
        %v8260 = vrot.slane %v8259, 4
        %v8262 = vshll.u32 %v7965, 16
        %v8264 = vrot.slane %v8262, 5
        %v8265 = vsel %vm525, %v8260, %v8264
        %v8267 = vshrl.u32 %v7966, 16
        %v8269 = vrot.slane %v8267, 4
        %v8270 = vshll.u32 %v7966, 16
        %v8272 = vrot.slane %v8270, 5
        %v8273 = vor.u32 %v8269, %v8272
        %v8274 = vrot.slane %v8273, 4
        %v8276 = vshll.u32 %v7967, 16
        %v8278 = vrot.slane %v8276, 5
        %v8279 = vsel %vm525, %v8274, %v8278
        %v8280 = vshrl.u32 %v7967, 16
        %v8282 = vrot.slane %v8280, 4
        %v8283 = vor.u32 %v8282, %v8278
        %v8284 = vrot.slane %v8283, 4
        %v8286 = vshll.u32 %v7968, 16
        %v8288 = vrot.slane %v8286, 5
        %v8289 = vsel %vm525, %v8284, %v8288
        %v8291 = vshrl.u32 %v7969, 16
        %v8293 = vrot.slane %v8291, 4
        %v8294 = vshll.u32 %v7969, 16
        %v8296 = vrot.slane %v8294, 5
        %v8297 = vor.u32 %v8293, %v8296
        %v8298 = vrot.slane %v8297, 4
        %v8300 = vshll.u32 %v7970, 16
        %v8302 = vrot.slane %v8300, 5
        %v8303 = vsel %vm525, %v8298, %v8302
        %v8304 = vshrl.u32 %v7970, 16
        %v8306 = vrot.slane %v8304, 4
        %v8307 = vor.u32 %v8306, %v8302
        %v8308 = vrot.slane %v8307, 4
        %v8310 = vshll.u32 %v7971, 16
        %v8312 = vrot.slane %v8310, 5
        %v8313 = vsel %vm525, %v8308, %v8312
        %v8315 = vshrl.u32 %v7972, 16
        %v8317 = vrot.slane %v8315, 4
        %v8318 = vshll.u32 %v7972, 16
        %v8320 = vrot.slane %v8318, 5
        %v8321 = vor.u32 %v8317, %v8320
        %v8322 = vrot.slane %v8321, 4
        %v8324 = vshll.u32 %v7973, 16
        %v8326 = vrot.slane %v8324, 5
        %v8327 = vsel %vm525, %v8322, %v8326
        %v8328 = vshrl.u32 %v7973, 16
        %v8330 = vrot.slane %v8328, 4
        %v8331 = vor.u32 %v8330, %v8326
        %v8332 = vrot.slane %v8331, 4
        %v8334 = vshll.u32 %v7974, 16
        %v8336 = vrot.slane %v8334, 5
        %v8337 = vsel %vm525, %v8332, %v8336
        %v8339 = vshrl.u32 %v7975, 16
        %v8341 = vrot.slane %v8339, 4
        %v8342 = vshll.u32 %v7975, 16
        %v8344 = vrot.slane %v8342, 5
        %v8345 = vor.u32 %v8341, %v8344
        %v8346 = vrot.slane %v8345, 4
        %v8348 = vshll.u32 %v7976, 16
        %v8350 = vrot.slane %v8348, 5
        %v8351 = vsel %vm525, %v8346, %v8350
        %v8352 = vshrl.u32 %v7976, 16
        %v8354 = vrot.slane %v8352, 4
        %v8355 = vor.u32 %v8354, %v8350
        %v8356 = vrot.slane %v8355, 4
        %v8358 = vshll.u32 %v7977, 16
        %v8360 = vrot.slane %v8358, 5
        %v8361 = vsel %vm525, %v8356, %v8360
        %s8362 = scalar_lea.vmem [#allocation4], 256
        %v8363 = vld [vmem:[%s8362] sm:$0xf]
        %v8364 = vld [vmem:[%s8362 + $0x4] sm:$0xf]
        %v8365 = vld [vmem:[%s8362 + $0x8] sm:$0xf]
        %v8366 = vld [vmem:[%s8362 + $0xc] sm:$0xf]
        %v8367 = vld [vmem:[%s8362 + $0x10] sm:$0xf]
        %v8368 = vld [vmem:[%s8362 + $0x14] sm:$0xf]
        %v8369 = vld [vmem:[%s8362 + $0x18] sm:$0xf]
        %v8370 = vld [vmem:[%s8362 + $0x1c] sm:$0xf]
        %v8371 = vld [vmem:[%s8362 + $0x20] sm:$0xf]
        %v8372 = vld [vmem:[%s8362 + $0x24] sm:$0xf]
        %v8373 = vld [vmem:[%s8362 + $0x28] sm:$0xf]
        %v8374 = vld [vmem:[%s8362 + $0x2c] sm:$0xf]
        %v8375 = vld [vmem:[%s8362 + $0x30] sm:$0xf]
        %v8376 = vld [vmem:[%s8362 + $0x34] sm:$0xf]
        %v8377 = vld [vmem:[%s8362 + $0x38] sm:$0xf]
        %v8378 = vld [vmem:[%s8362 + $0x3c] sm:$0xf]
        %v8379 = vunpack.c.l.b16 %v7991
        %v8380 = vunpack.c.l.b16 %v8001
        %v8381 = vunpack.c.l.b16 %v8015
        %v8382 = vunpack.c.l.b16 %v8025
        %v8383 = vunpack.c.l.b16 %v8039
        %v8384 = vunpack.c.l.b16 %v8049
        %v8385 = vunpack.c.l.b16 %v8063
        %v8386 = vunpack.c.l.b16 %v8073
        %v8387 = vunpack.c.l.b16 %v8087
        %v8388 = vunpack.c.l.b16 %v8097
        %v8389 = vunpack.c.l.b16 %v8111
        %v8390 = vunpack.c.l.b16 %v8121
        %v8391 = vunpack.c.l.b16 %v8135
        %v8392 = vunpack.c.l.b16 %v8145
        %v8393 = vunpack.c.l.b16 %v8159
        %v8394 = vunpack.c.l.b16 %v8169
        %v8395 = vunpack.c.l.b16 %v8183
        %v8396 = vunpack.c.l.b16 %v8193
        %v8397 = vunpack.c.l.b16 %v8207
        %v8398 = vunpack.c.l.b16 %v8217
        %v8399 = vunpack.c.l.b16 %v8231
        %v8400 = vunpack.c.l.b16 %v8241
        %v8401 = vunpack.c.l.b16 %v8255
        %v8402 = vunpack.c.l.b16 %v8265
        %v8403 = vunpack.c.l.b16 %v8279
        %v8404 = vunpack.c.l.b16 %v8289
        %v8405 = vunpack.c.l.b16 %v8303
        %v8406 = vunpack.c.l.b16 %v8313
        %v8407 = vunpack.c.l.b16 %v8327
        %v8408 = vunpack.c.l.b16 %v8337
        %v8409 = vunpack.c.l.b16 %v8351
        %v8410 = vunpack.c.l.b16 %v8361
        %v8411 = vpack.c.b16 %v8380, %v8379
        %v8412 = vpack.c.b16 %v8382, %v8381
        %v8413 = vpack.c.b16 %v8384, %v8383
        %v8414 = vpack.c.b16 %v8386, %v8385
        %v8415 = vpack.c.b16 %v8388, %v8387
        %v8416 = vpack.c.b16 %v8390, %v8389
        %v8417 = vpack.c.b16 %v8392, %v8391
        %v8418 = vpack.c.b16 %v8394, %v8393
        %v8419 = vpack.c.b16 %v8396, %v8395
        %v8420 = vpack.c.b16 %v8398, %v8397
        %v8421 = vpack.c.b16 %v8400, %v8399
        %v8422 = vpack.c.b16 %v8402, %v8401
        %v8423 = vpack.c.b16 %v8404, %v8403
        %v8424 = vpack.c.b16 %v8406, %v8405
        %v8425 = vpack.c.b16 %v8408, %v8407
        %v8426 = vpack.c.b16 %v8410, %v8409
        %v8459 = vunpack.c.l.b16 %v8363
        %v8460 = vunpack.c.l.b16 %v8364
        %v8461 = vunpack.c.l.b16 %v8365
        %v8462 = vunpack.c.l.b16 %v8366
        %v8463 = vunpack.c.l.b16 %v8367
        %v8464 = vunpack.c.l.b16 %v8368
        %v8465 = vunpack.c.l.b16 %v8369
        %v8466 = vunpack.c.l.b16 %v8370
        %v8467 = vunpack.c.l.b16 %v8371
        %v8468 = vunpack.c.l.b16 %v8372
        %v8469 = vunpack.c.l.b16 %v8373
        %v8470 = vunpack.c.l.b16 %v8374
        %v8471 = vunpack.c.l.b16 %v8375
        %v8472 = vunpack.c.l.b16 %v8376
        %v8473 = vunpack.c.l.b16 %v8377
        %v8474 = vunpack.c.l.b16 %v8378
        %v8475 = vpack.c.b16 %v8460, %v8459
        %v8476 = vpack.c.b16 %v8462, %v8461
        %v8477 = vpack.c.b16 %v8464, %v8463
        %v8478 = vpack.c.b16 %v8466, %v8465
        %v8479 = vpack.c.b16 %v8468, %v8467
        %v8480 = vpack.c.b16 %v8470, %v8469
        %v8481 = vpack.c.b16 %v8472, %v8471
        %v8482 = vpack.c.b16 %v8474, %v8473
        %8491 = vmatprep.subr.bf16.mxu0 0
        %8492 = vmatpush1.bf16.msra.mxu0 %v8475
        %8493 = vmatprep.subr.bf16.mxu0 0
        %8494 = vmatpush1.bf16.msra.mxu0 %v8476
        %8495 = vmatprep.subr.bf16.mxu0 0
        %8496 = vmatpush1.bf16.msra.mxu0 %v8477
        %8497 = vmatprep.subr.bf16.mxu0 0
        %8498 = vmatpush1.bf16.msra.mxu0 %v8478
        %8499 = vmatprep.subr.bf16.mxu0 0
        %8500 = vmatpush1.bf16.msra.mxu0 %v8479
        %8501 = vmatprep.subr.bf16.mxu0 0
        %8502 = vmatpush1.bf16.msra.mxu0 %v8480
        %8503 = vmatprep.subr.bf16.mxu0 0
        %8504 = vmatpush1.bf16.msra.mxu0 %v8481
        %8505 = vmatprep.subr.bf16.mxu0 0
        %8506 = vmatpush1.bf16.msra.mxu0 %v8482
        %8507 = vmatprep.subr.bf16.mxu0 0
        %8508 = vmatpush1.bf16.msra.mxu0 0
        %8509 = vmatprep.subr.bf16.mxu0 0
        %8510 = vmatpush1.bf16.msra.mxu0 0
        %8511 = vmatprep.subr.bf16.mxu0 0
        %8512 = vmatpush1.bf16.msra.mxu0 0
        %8513 = vmatprep.subr.bf16.mxu0 0
        %8514 = vmatpush1.bf16.msra.mxu0 0
        %8515 = vmatprep.subr.bf16.mxu0 0
        %8516 = vmatpush1.bf16.msra.mxu0 0
        %8517 = vmatprep.subr.bf16.mxu0 0
        %8518 = vmatpush1.bf16.msra.mxu0 0
        %8519 = vmatprep.subr.bf16.mxu0 0
        %8520 = vmatpush1.bf16.msra.mxu0 0
        %8521 = vmatprep.subr.bf16.mxu0 0
        %8522 = vmatpush1.bf16.msra.mxu0 0
        %8523 = vmatprep.mubr.bf16.mxu0 0
        %8524 = vmatmul.mubr.bf16.gmra.mrb[0].mxu0 %v8411
        %v8525 = vpop.f32.mrb[0].mxu0
        %v8526 = vadd.f32 0.0, %v8525
        %v8527 = vpop.f32.mrb[0].mxu0
        %v8528 = vpop.f32.mrb[0].mxu0
        %v8529 = vadd.f32 0.0, %v8528
        %v8530 = vpop.f32.mrb[0].mxu0
        %8531 = vmatprep.mubr.bf16.mxu0 0
        %8532 = vmatmul.mubr.bf16.gmra.mrb[0].mxu0 %v8412
        %v8533 = vpop.f32.mrb[0].mxu0
        %v8534 = vadd.f32 0.0, %v8533
        %v8535 = vpop.f32.mrb[0].mxu0
        %v8536 = vpop.f32.mrb[0].mxu0
        %v8537 = vadd.f32 0.0, %v8536
        %v8538 = vpop.f32.mrb[0].mxu0
        %8539 = vmatprep.mubr.bf16.mxu0 0
        %8540 = vmatmul.mubr.bf16.gmra.mrb[0].mxu0 %v8413
        %v8541 = vpop.f32.mrb[0].mxu0
        %v8542 = vadd.f32 0.0, %v8541
        %v8543 = vpop.f32.mrb[0].mxu0
        %v8544 = vpop.f32.mrb[0].mxu0
        %v8545 = vadd.f32 0.0, %v8544
        %v8546 = vpop.f32.mrb[0].mxu0
        %8547 = vmatprep.mubr.bf16.mxu0 0
        %8548 = vmatmul.mubr.bf16.gmra.mrb[0].mxu0 %v8414
        %v8549 = vpop.f32.mrb[0].mxu0
        %v8550 = vadd.f32 0.0, %v8549
        %v8551 = vpop.f32.mrb[0].mxu0
        %v8552 = vpop.f32.mrb[0].mxu0
        %v8553 = vadd.f32 0.0, %v8552
        %v8554 = vpop.f32.mrb[0].mxu0
        %8555 = vmatprep.mubr.bf16.mxu0 0
        %8556 = vmatmul.mubr.bf16.gmra.mrb[0].mxu0 %v8415
        %v8557 = vpop.f32.mrb[0].mxu0
        %v8558 = vadd.f32 0.0, %v8557
        %v8559 = vpop.f32.mrb[0].mxu0
        %v8560 = vpop.f32.mrb[0].mxu0
        %v8561 = vadd.f32 0.0, %v8560
        %v8562 = vpop.f32.mrb[0].mxu0
        %8563 = vmatprep.mubr.bf16.mxu0 0
        %8564 = vmatmul.mubr.bf16.gmra.mrb[0].mxu0 %v8416
        %v8565 = vpop.f32.mrb[0].mxu0
        %v8566 = vadd.f32 0.0, %v8565
        %v8567 = vpop.f32.mrb[0].mxu0
        %v8568 = vpop.f32.mrb[0].mxu0
        %v8569 = vadd.f32 0.0, %v8568
        %v8570 = vpop.f32.mrb[0].mxu0
        %8571 = vmatprep.mubr.bf16.mxu0 0
        %8572 = vmatmul.mubr.bf16.gmra.mrb[0].mxu0 %v8417
        %v8573 = vpop.f32.mrb[0].mxu0
        %v8574 = vadd.f32 0.0, %v8573
        %v8575 = vpop.f32.mrb[0].mxu0
        %v8576 = vpop.f32.mrb[0].mxu0
        %v8577 = vadd.f32 0.0, %v8576
        %v8578 = vpop.f32.mrb[0].mxu0
        %8579 = vmatprep.mubr.bf16.mxu0 0
        %8580 = vmatmul.mubr.bf16.gmra.mrb[0].mxu0 %v8418
        %v8581 = vpop.f32.mrb[0].mxu0
        %v8582 = vadd.f32 0.0, %v8581
        %v8583 = vpop.f32.mrb[0].mxu0
        %v8584 = vpop.f32.mrb[0].mxu0
        %v8585 = vadd.f32 0.0, %v8584
        %v8586 = vpop.f32.mrb[0].mxu0
        %8587 = vmatprep.mubr.bf16.mxu0 0
        %8588 = vmatmul.mubr.bf16.gmra.mrb[0].mxu0 %v8419
        %v8589 = vpop.f32.mrb[0].mxu0
        %v8590 = vadd.f32 0.0, %v8589
        %v8591 = vpop.f32.mrb[0].mxu0
        %v8592 = vpop.f32.mrb[0].mxu0
        %v8593 = vadd.f32 0.0, %v8592
        %v8594 = vpop.f32.mrb[0].mxu0
        %8595 = vmatprep.mubr.bf16.mxu0 0
        %8596 = vmatmul.mubr.bf16.gmra.mrb[0].mxu0 %v8420
        %v8597 = vpop.f32.mrb[0].mxu0
        %v8598 = vadd.f32 0.0, %v8597
        %v8599 = vpop.f32.mrb[0].mxu0
        %v8600 = vpop.f32.mrb[0].mxu0
        %v8601 = vadd.f32 0.0, %v8600
        %v8602 = vpop.f32.mrb[0].mxu0
        %8603 = vmatprep.mubr.bf16.mxu0 0
        %8604 = vmatmul.mubr.bf16.gmra.mrb[0].mxu0 %v8421
        %v8605 = vpop.f32.mrb[0].mxu0
        %v8606 = vadd.f32 0.0, %v8605
        %v8607 = vpop.f32.mrb[0].mxu0
        %v8608 = vpop.f32.mrb[0].mxu0
        %v8609 = vadd.f32 0.0, %v8608
        %v8610 = vpop.f32.mrb[0].mxu0
        %8611 = vmatprep.mubr.bf16.mxu0 0
        %8612 = vmatmul.mubr.bf16.gmra.mrb[0].mxu0 %v8422
        %v8613 = vpop.f32.mrb[0].mxu0
        %v8614 = vadd.f32 0.0, %v8613
        %v8615 = vpop.f32.mrb[0].mxu0
        %v8616 = vpop.f32.mrb[0].mxu0
        %v8617 = vadd.f32 0.0, %v8616
        %v8618 = vpop.f32.mrb[0].mxu0
        %8619 = vmatprep.mubr.bf16.mxu0 0
        %8620 = vmatmul.mubr.bf16.gmra.mrb[0].mxu0 %v8423
        %v8621 = vpop.f32.mrb[0].mxu0
        %v8622 = vadd.f32 0.0, %v8621
        %v8623 = vpop.f32.mrb[0].mxu0
        %v8624 = vpop.f32.mrb[0].mxu0
        %v8625 = vadd.f32 0.0, %v8624
        %v8626 = vpop.f32.mrb[0].mxu0
        %8627 = vmatprep.mubr.bf16.mxu0 0
        %8628 = vmatmul.mubr.bf16.gmra.mrb[0].mxu0 %v8424
        %v8629 = vpop.f32.mrb[0].mxu0
        %v8630 = vadd.f32 0.0, %v8629
        %v8631 = vpop.f32.mrb[0].mxu0
        %v8632 = vpop.f32.mrb[0].mxu0
        %v8633 = vadd.f32 0.0, %v8632
        %v8634 = vpop.f32.mrb[0].mxu0
        %8635 = vmatprep.mubr.bf16.mxu0 0
        %8636 = vmatmul.mubr.bf16.gmra.mrb[0].mxu0 %v8425
        %v8637 = vpop.f32.mrb[0].mxu0
        %v8638 = vadd.f32 0.0, %v8637
        %v8639 = vpop.f32.mrb[0].mxu0
        %v8640 = vpop.f32.mrb[0].mxu0
        %v8641 = vadd.f32 0.0, %v8640
        %v8642 = vpop.f32.mrb[0].mxu0
        %8643 = vmatprep.mubr.bf16.mxu0 0
        %8644 = vmatmul.mubr.bf16.gmra.mrb[0].mxu0 %v8426
        %v8645 = vpop.f32.mrb[0].mxu0
        %v8646 = vadd.f32 0.0, %v8645
        %v8647 = vpop.f32.mrb[0].mxu0
        %v8648 = vpop.f32.mrb[0].mxu0
        %v8649 = vadd.f32 0.0, %v8648
        %v8650 = vpop.f32.mrb[0].mxu0
        %8651 = vdwg.mxu0
        %v8652 = vadd.f32 %v7898, %v8526
        %v8653 = vadd.f32 %v7899, %v8529
        %v8654 = vadd.f32 %v7900, %v8534
        %v8655 = vadd.f32 %v7901, %v8537
        %v8656 = vadd.f32 %v7902, %v8542
        %v8657 = vadd.f32 %v7903, %v8545
        %v8658 = vadd.f32 %v7904, %v8550
        %v8659 = vadd.f32 %v7905, %v8553
        %v8660 = vadd.f32 %v7906, %v8558
        %v8661 = vadd.f32 %v7907, %v8561
        %v8662 = vadd.f32 %v7908, %v8566
        %v8663 = vadd.f32 %v7909, %v8569
        %v8664 = vadd.f32 %v7910, %v8574
        %v8665 = vadd.f32 %v7911, %v8577
        %v8666 = vadd.f32 %v7912, %v8582
        %v8667 = vadd.f32 %v7913, %v8585
        %v8668 = vadd.f32 %v7914, %v8590
        %v8669 = vadd.f32 %v7915, %v8593
        %v8670 = vadd.f32 %v7916, %v8598
        %v8671 = vadd.f32 %v7917, %v8601
        %v8672 = vadd.f32 %v7918, %v8606
        %v8673 = vadd.f32 %v7919, %v8609
        %v8674 = vadd.f32 %v7920, %v8614
        %v8675 = vadd.f32 %v7921, %v8617
        %v8676 = vadd.f32 %v7922, %v8622
        %v8677 = vadd.f32 %v7923, %v8625
        %v8678 = vadd.f32 %v7924, %v8630
        %v8679 = vadd.f32 %v7925, %v8633
        %v8680 = vadd.f32 %v7926, %v8638
        %v8681 = vadd.f32 %v7927, %v8641
        %v8682 = vadd.f32 %v7928, %v8646
        %v8683 = vadd.f32 %v7929, %v8649
        %v8684 = vld [vmem:[%s5385] sm:$0xe]
        %v8685 = vld [vmem:[%s5385 + $0xc] sm:$0xe]
        %v8686 = vld [vmem:[%s5385 + $0x18] sm:$0xe]
        %v8687 = vld [vmem:[%s5385 + $0x24] sm:$0xe]
        %v8688 = vld [vmem:[%s5385 + $0x30] sm:$0xe]
        %v8689 = vld [vmem:[%s5385 + $0x3c] sm:$0xe]
        %v8690 = vld [vmem:[%s5385 + $0x48] sm:$0xe]
        %v8691 = vld [vmem:[%s5385 + $0x54] sm:$0xe]
        %v8692 = vld [vmem:[%s5385 + $0x60] sm:$0xe]
        %v8693 = vld [vmem:[%s5385 + $0x6c] sm:$0xe]
        %v8694 = vld [vmem:[%s5385 + $0x78] sm:$0xe]
        %v8695 = vld [vmem:[%s5385 + $0x84] sm:$0xe]
        %v8696 = vld [vmem:[%s5385 + $0x90] sm:$0xe]
        %v8697 = vld [vmem:[%s5385 + $0x9c] sm:$0xe]
        %v8698 = vld [vmem:[%s5385 + $0xa8] sm:$0xe]
        %v8699 = vld [vmem:[%s5385 + $0xb4] sm:$0xe]
        %v8748 = vrot.slane %v8684, 5
        %v8749 = vrot.slane %v8748, 4
        %v8750 = vrot.slane %v7931, 5
        %v8751 = vsel %vm1555, %v8749, %v8750
        %v8752 = vrot.slane %v8750, 4
        %v8753 = vrot.slane %v7932, 5
        %v8754 = vsel %vm1555, %v8752, %v8753
        %v8755 = vrot.slane %v8685, 5
        %v8756 = vrot.slane %v8755, 4
        %v8757 = vrot.slane %v7934, 5
        %v8758 = vsel %vm1555, %v8756, %v8757
        %v8759 = vrot.slane %v8757, 4
        %v8760 = vrot.slane %v7935, 5
        %v8761 = vsel %vm1555, %v8759, %v8760
        %v8762 = vrot.slane %v8686, 5
        %v8763 = vrot.slane %v8762, 4
        %v8764 = vrot.slane %v7937, 5
        %v8765 = vsel %vm1555, %v8763, %v8764
        %v8766 = vrot.slane %v8764, 4
        %v8767 = vrot.slane %v7938, 5
        %v8768 = vsel %vm1555, %v8766, %v8767
        %v8769 = vrot.slane %v8687, 5
        %v8770 = vrot.slane %v8769, 4
        %v8771 = vrot.slane %v7940, 5
        %v8772 = vsel %vm1555, %v8770, %v8771
        %v8773 = vrot.slane %v8771, 4
        %v8774 = vrot.slane %v7941, 5
        %v8775 = vsel %vm1555, %v8773, %v8774
        %v8776 = vrot.slane %v8688, 5
        %v8777 = vrot.slane %v8776, 4
        %v8778 = vrot.slane %v7943, 5
        %v8779 = vsel %vm1555, %v8777, %v8778
        %v8780 = vrot.slane %v8778, 4
        %v8781 = vrot.slane %v7944, 5
        %v8782 = vsel %vm1555, %v8780, %v8781
        %v8783 = vrot.slane %v8689, 5
        %v8784 = vrot.slane %v8783, 4
        %v8785 = vrot.slane %v7946, 5
        %v8786 = vsel %vm1555, %v8784, %v8785
        %v8787 = vrot.slane %v8785, 4
        %v8788 = vrot.slane %v7947, 5
        %v8789 = vsel %vm1555, %v8787, %v8788
        %v8790 = vrot.slane %v8690, 5
        %v8791 = vrot.slane %v8790, 4
        %v8792 = vrot.slane %v7949, 5
        %v8793 = vsel %vm1555, %v8791, %v8792
        %v8794 = vrot.slane %v8792, 4
        %v8795 = vrot.slane %v7950, 5
        %v8796 = vsel %vm1555, %v8794, %v8795
        %v8797 = vrot.slane %v8691, 5
        %v8798 = vrot.slane %v8797, 4
        %v8799 = vrot.slane %v7952, 5
        %v8800 = vsel %vm1555, %v8798, %v8799
        %v8801 = vrot.slane %v8799, 4
        %v8802 = vrot.slane %v7953, 5
        %v8803 = vsel %vm1555, %v8801, %v8802
        %v8804 = vrot.slane %v8692, 5
        %v8805 = vrot.slane %v8804, 4
        %v8806 = vrot.slane %v7955, 5
        %v8807 = vsel %vm1555, %v8805, %v8806
        %v8808 = vrot.slane %v8806, 4
        %v8809 = vrot.slane %v7956, 5
        %v8810 = vsel %vm1555, %v8808, %v8809
        %v8811 = vrot.slane %v8693, 5
        %v8812 = vrot.slane %v8811, 4
        %v8813 = vrot.slane %v7958, 5
        %v8814 = vsel %vm1555, %v8812, %v8813
        %v8815 = vrot.slane %v8813, 4
        %v8816 = vrot.slane %v7959, 5
        %v8817 = vsel %vm1555, %v8815, %v8816
        %v8818 = vrot.slane %v8694, 5
        %v8819 = vrot.slane %v8818, 4
        %v8820 = vrot.slane %v7961, 5
        %v8821 = vsel %vm1555, %v8819, %v8820
        %v8822 = vrot.slane %v8820, 4
        %v8823 = vrot.slane %v7962, 5
        %v8824 = vsel %vm1555, %v8822, %v8823
        %v8825 = vrot.slane %v8695, 5
        %v8826 = vrot.slane %v8825, 4
        %v8827 = vrot.slane %v7964, 5
        %v8828 = vsel %vm1555, %v8826, %v8827
        %v8829 = vrot.slane %v8827, 4
        %v8830 = vrot.slane %v7965, 5
        %v8831 = vsel %vm1555, %v8829, %v8830
        %v8832 = vrot.slane %v8696, 5
        %v8833 = vrot.slane %v8832, 4
        %v8834 = vrot.slane %v7967, 5
        %v8835 = vsel %vm1555, %v8833, %v8834
        %v8836 = vrot.slane %v8834, 4
        %v8837 = vrot.slane %v7968, 5
        %v8838 = vsel %vm1555, %v8836, %v8837
        %v8839 = vrot.slane %v8697, 5
        %v8840 = vrot.slane %v8839, 4
        %v8841 = vrot.slane %v7970, 5
        %v8842 = vsel %vm1555, %v8840, %v8841
        %v8843 = vrot.slane %v8841, 4
        %v8844 = vrot.slane %v7971, 5
        %v8845 = vsel %vm1555, %v8843, %v8844
        %v8846 = vrot.slane %v8698, 5
        %v8847 = vrot.slane %v8846, 4
        %v8848 = vrot.slane %v7973, 5
        %v8849 = vsel %vm1555, %v8847, %v8848
        %v8850 = vrot.slane %v8848, 4
        %v8851 = vrot.slane %v7974, 5
        %v8852 = vsel %vm1555, %v8850, %v8851
        %v8853 = vrot.slane %v8699, 5
        %v8854 = vrot.slane %v8853, 4
        %v8855 = vrot.slane %v7976, 5
        %v8856 = vsel %vm1555, %v8854, %v8855
        %v8857 = vrot.slane %v8855, 4
        %v8858 = vrot.slane %v7977, 5
        %v8859 = vsel %vm1555, %v8857, %v8858
        %s8860 = scalar_lea.vmem [#allocation4], 320
        %v8861 = vld [vmem:[%s8860] sm:$0xf]
        %v8862 = vld [vmem:[%s8860 + $0x4] sm:$0xf]
        %v8863 = vld [vmem:[%s8860 + $0x8] sm:$0xf]
        %v8864 = vld [vmem:[%s8860 + $0xc] sm:$0xf]
        %v8865 = vld [vmem:[%s8860 + $0x10] sm:$0xf]
        %v8866 = vld [vmem:[%s8860 + $0x14] sm:$0xf]
        %v8867 = vld [vmem:[%s8860 + $0x18] sm:$0xf]
        %v8868 = vld [vmem:[%s8860 + $0x1c] sm:$0xf]
        %v8869 = vld [vmem:[%s8860 + $0x20] sm:$0xf]
        %v8870 = vld [vmem:[%s8860 + $0x24] sm:$0xf]
        %v8871 = vld [vmem:[%s8860 + $0x28] sm:$0xf]
        %v8872 = vld [vmem:[%s8860 + $0x2c] sm:$0xf]
        %v8873 = vld [vmem:[%s8860 + $0x30] sm:$0xf]
        %v8874 = vld [vmem:[%s8860 + $0x34] sm:$0xf]
        %v8875 = vld [vmem:[%s8860 + $0x38] sm:$0xf]
        %v8876 = vld [vmem:[%s8860 + $0x3c] sm:$0xf]
        %v8877 = vunpack.c.l.b16 %v8751
        %v8878 = vunpack.c.l.b16 %v8754
        %v8879 = vunpack.c.l.b16 %v8758
        %v8880 = vunpack.c.l.b16 %v8761
        %v8881 = vunpack.c.l.b16 %v8765
        %v8882 = vunpack.c.l.b16 %v8768
        %v8883 = vunpack.c.l.b16 %v8772
        %v8884 = vunpack.c.l.b16 %v8775
        %v8885 = vunpack.c.l.b16 %v8779
        %v8886 = vunpack.c.l.b16 %v8782
        %v8887 = vunpack.c.l.b16 %v8786
        %v8888 = vunpack.c.l.b16 %v8789
        %v8889 = vunpack.c.l.b16 %v8793
        %v8890 = vunpack.c.l.b16 %v8796
        %v8891 = vunpack.c.l.b16 %v8800
        %v8892 = vunpack.c.l.b16 %v8803
        %v8893 = vunpack.c.l.b16 %v8807
        %v8894 = vunpack.c.l.b16 %v8810
        %v8895 = vunpack.c.l.b16 %v8814
        %v8896 = vunpack.c.l.b16 %v8817
        %v8897 = vunpack.c.l.b16 %v8821
        %v8898 = vunpack.c.l.b16 %v8824
        %v8899 = vunpack.c.l.b16 %v8828
        %v8900 = vunpack.c.l.b16 %v8831
        %v8901 = vunpack.c.l.b16 %v8835
        %v8902 = vunpack.c.l.b16 %v8838
        %v8903 = vunpack.c.l.b16 %v8842
        %v8904 = vunpack.c.l.b16 %v8845
        %v8905 = vunpack.c.l.b16 %v8849
        %v8906 = vunpack.c.l.b16 %v8852
        %v8907 = vunpack.c.l.b16 %v8856
        %v8908 = vunpack.c.l.b16 %v8859
        %v8909 = vpack.c.b16 %v8878, %v8877
        %v8910 = vpack.c.b16 %v8880, %v8879
        %v8911 = vpack.c.b16 %v8882, %v8881
        %v8912 = vpack.c.b16 %v8884, %v8883
        %v8913 = vpack.c.b16 %v8886, %v8885
        %v8914 = vpack.c.b16 %v8888, %v8887
        %v8915 = vpack.c.b16 %v8890, %v8889
        %v8916 = vpack.c.b16 %v8892, %v8891
        %v8917 = vpack.c.b16 %v8894, %v8893
        %v8918 = vpack.c.b16 %v8896, %v8895
        %v8919 = vpack.c.b16 %v8898, %v8897
        %v8920 = vpack.c.b16 %v8900, %v8899
        %v8921 = vpack.c.b16 %v8902, %v8901
        %v8922 = vpack.c.b16 %v8904, %v8903
        %v8923 = vpack.c.b16 %v8906, %v8905
        %v8924 = vpack.c.b16 %v8908, %v8907
        %v8957 = vunpack.c.l.b16 %v8861
        %v8958 = vunpack.c.l.b16 %v8862
        %v8959 = vunpack.c.l.b16 %v8863
        %v8960 = vunpack.c.l.b16 %v8864
        %v8961 = vunpack.c.l.b16 %v8865
        %v8962 = vunpack.c.l.b16 %v8866
        %v8963 = vunpack.c.l.b16 %v8867
        %v8964 = vunpack.c.l.b16 %v8868
        %v8965 = vunpack.c.l.b16 %v8869
        %v8966 = vunpack.c.l.b16 %v8870
        %v8967 = vunpack.c.l.b16 %v8871
        %v8968 = vunpack.c.l.b16 %v8872
        %v8969 = vunpack.c.l.b16 %v8873
        %v8970 = vunpack.c.l.b16 %v8874
        %v8971 = vunpack.c.l.b16 %v8875
        %v8972 = vunpack.c.l.b16 %v8876
        %v8973 = vpack.c.b16 %v8958, %v8957
        %v8974 = vpack.c.b16 %v8960, %v8959
        %v8975 = vpack.c.b16 %v8962, %v8961
        %v8976 = vpack.c.b16 %v8964, %v8963
        %v8977 = vpack.c.b16 %v8966, %v8965
        %v8978 = vpack.c.b16 %v8968, %v8967
        %v8979 = vpack.c.b16 %v8970, %v8969
        %v8980 = vpack.c.b16 %v8972, %v8971
        %8989 = vmatprep.subr.bf16.mxu0 0
        %8990 = vmatpush1.bf16.msra.mxu0 %v8973
        %8991 = vmatprep.subr.bf16.mxu0 0
        %8992 = vmatpush1.bf16.msra.mxu0 %v8974
        %8993 = vmatprep.subr.bf16.mxu0 0
        %8994 = vmatpush1.bf16.msra.mxu0 %v8975
        %8995 = vmatprep.subr.bf16.mxu0 0
        %8996 = vmatpush1.bf16.msra.mxu0 %v8976
        %8997 = vmatprep.subr.bf16.mxu0 0
        %8998 = vmatpush1.bf16.msra.mxu0 %v8977
        %8999 = vmatprep.subr.bf16.mxu0 0
        %9000 = vmatpush1.bf16.msra.mxu0 %v8978
        %9001 = vmatprep.subr.bf16.mxu0 0
        %9002 = vmatpush1.bf16.msra.mxu0 %v8979
        %9003 = vmatprep.subr.bf16.mxu0 0
        %9004 = vmatpush1.bf16.msra.mxu0 %v8980
        %9005 = vmatprep.subr.bf16.mxu0 0
        %9006 = vmatpush1.bf16.msra.mxu0 0
        %9007 = vmatprep.subr.bf16.mxu0 0
        %9008 = vmatpush1.bf16.msra.mxu0 0
        %9009 = vmatprep.subr.bf16.mxu0 0
        %9010 = vmatpush1.bf16.msra.mxu0 0
        %9011 = vmatprep.subr.bf16.mxu0 0
        %9012 = vmatpush1.bf16.msra.mxu0 0
        %9013 = vmatprep.subr.bf16.mxu0 0
        %9014 = vmatpush1.bf16.msra.mxu0 0
        %9015 = vmatprep.subr.bf16.mxu0 0
        %9016 = vmatpush1.bf16.msra.mxu0 0
        %9017 = vmatprep.subr.bf16.mxu0 0
        %9018 = vmatpush1.bf16.msra.mxu0 0
        %9019 = vmatprep.subr.bf16.mxu0 0
        %9020 = vmatpush1.bf16.msra.mxu0 0
        %9021 = vmatprep.mubr.bf16.mxu0 0
        %9022 = vmatmul.mubr.bf16.gmra.mrb[0].mxu0 %v8909
        %v9023 = vpop.f32.mrb[0].mxu0
        %v9024 = vadd.f32 0.0, %v9023
        %v9025 = vpop.f32.mrb[0].mxu0
        %v9026 = vpop.f32.mrb[0].mxu0
        %v9027 = vadd.f32 0.0, %v9026
        %v9028 = vpop.f32.mrb[0].mxu0
        %9029 = vmatprep.mubr.bf16.mxu0 0
        %9030 = vmatmul.mubr.bf16.gmra.mrb[0].mxu0 %v8910
        %v9031 = vpop.f32.mrb[0].mxu0
        %v9032 = vadd.f32 0.0, %v9031
        %v9033 = vpop.f32.mrb[0].mxu0
        %v9034 = vpop.f32.mrb[0].mxu0
        %v9035 = vadd.f32 0.0, %v9034
        %v9036 = vpop.f32.mrb[0].mxu0
        %9037 = vmatprep.mubr.bf16.mxu0 0
        %9038 = vmatmul.mubr.bf16.gmra.mrb[0].mxu0 %v8911
        %v9039 = vpop.f32.mrb[0].mxu0
        %v9040 = vadd.f32 0.0, %v9039
        %v9041 = vpop.f32.mrb[0].mxu0
        %v9042 = vpop.f32.mrb[0].mxu0
        %v9043 = vadd.f32 0.0, %v9042
        %v9044 = vpop.f32.mrb[0].mxu0
        %9045 = vmatprep.mubr.bf16.mxu0 0
        %9046 = vmatmul.mubr.bf16.gmra.mrb[0].mxu0 %v8912
        %v9047 = vpop.f32.mrb[0].mxu0
        %v9048 = vadd.f32 0.0, %v9047
        %v9049 = vpop.f32.mrb[0].mxu0
        %v9050 = vpop.f32.mrb[0].mxu0
        %v9051 = vadd.f32 0.0, %v9050
        %v9052 = vpop.f32.mrb[0].mxu0
        %9053 = vmatprep.mubr.bf16.mxu0 0
        %9054 = vmatmul.mubr.bf16.gmra.mrb[0].mxu0 %v8913
        %v9055 = vpop.f32.mrb[0].mxu0
        %v9056 = vadd.f32 0.0, %v9055
        %v9057 = vpop.f32.mrb[0].mxu0
        %v9058 = vpop.f32.mrb[0].mxu0
        %v9059 = vadd.f32 0.0, %v9058
        %v9060 = vpop.f32.mrb[0].mxu0
        %9061 = vmatprep.mubr.bf16.mxu0 0
        %9062 = vmatmul.mubr.bf16.gmra.mrb[0].mxu0 %v8914
        %v9063 = vpop.f32.mrb[0].mxu0
        %v9064 = vadd.f32 0.0, %v9063
        %v9065 = vpop.f32.mrb[0].mxu0
        %v9066 = vpop.f32.mrb[0].mxu0
        %v9067 = vadd.f32 0.0, %v9066
        %v9068 = vpop.f32.mrb[0].mxu0
        %9069 = vmatprep.mubr.bf16.mxu0 0
        %9070 = vmatmul.mubr.bf16.gmra.mrb[0].mxu0 %v8915
        %v9071 = vpop.f32.mrb[0].mxu0
        %v9072 = vadd.f32 0.0, %v9071
        %v9073 = vpop.f32.mrb[0].mxu0
        %v9074 = vpop.f32.mrb[0].mxu0
        %v9075 = vadd.f32 0.0, %v9074
        %v9076 = vpop.f32.mrb[0].mxu0
        %9077 = vmatprep.mubr.bf16.mxu0 0
        %9078 = vmatmul.mubr.bf16.gmra.mrb[0].mxu0 %v8916
        %v9079 = vpop.f32.mrb[0].mxu0
        %v9080 = vadd.f32 0.0, %v9079
        %v9081 = vpop.f32.mrb[0].mxu0
        %v9082 = vpop.f32.mrb[0].mxu0
        %v9083 = vadd.f32 0.0, %v9082
        %v9084 = vpop.f32.mrb[0].mxu0
        %9085 = vmatprep.mubr.bf16.mxu0 0
        %9086 = vmatmul.mubr.bf16.gmra.mrb[0].mxu0 %v8917
        %v9087 = vpop.f32.mrb[0].mxu0
        %v9088 = vadd.f32 0.0, %v9087
        %v9089 = vpop.f32.mrb[0].mxu0
        %v9090 = vpop.f32.mrb[0].mxu0
        %v9091 = vadd.f32 0.0, %v9090
        %v9092 = vpop.f32.mrb[0].mxu0
        %9093 = vmatprep.mubr.bf16.mxu0 0
        %9094 = vmatmul.mubr.bf16.gmra.mrb[0].mxu0 %v8918
        %v9095 = vpop.f32.mrb[0].mxu0
        %v9096 = vadd.f32 0.0, %v9095
        %v9097 = vpop.f32.mrb[0].mxu0
        %v9098 = vpop.f32.mrb[0].mxu0
        %v9099 = vadd.f32 0.0, %v9098
        %v9100 = vpop.f32.mrb[0].mxu0
        %9101 = vmatprep.mubr.bf16.mxu0 0
        %9102 = vmatmul.mubr.bf16.gmra.mrb[0].mxu0 %v8919
        %v9103 = vpop.f32.mrb[0].mxu0
        %v9104 = vadd.f32 0.0, %v9103
        %v9105 = vpop.f32.mrb[0].mxu0
        %v9106 = vpop.f32.mrb[0].mxu0
        %v9107 = vadd.f32 0.0, %v9106
        %v9108 = vpop.f32.mrb[0].mxu0
        %9109 = vmatprep.mubr.bf16.mxu0 0
        %9110 = vmatmul.mubr.bf16.gmra.mrb[0].mxu0 %v8920
        %v9111 = vpop.f32.mrb[0].mxu0
        %v9112 = vadd.f32 0.0, %v9111
        %v9113 = vpop.f32.mrb[0].mxu0
        %v9114 = vpop.f32.mrb[0].mxu0
        %v9115 = vadd.f32 0.0, %v9114
        %v9116 = vpop.f32.mrb[0].mxu0
        %9117 = vmatprep.mubr.bf16.mxu0 0
        %9118 = vmatmul.mubr.bf16.gmra.mrb[0].mxu0 %v8921
        %v9119 = vpop.f32.mrb[0].mxu0
        %v9120 = vadd.f32 0.0, %v9119
        %v9121 = vpop.f32.mrb[0].mxu0
        %v9122 = vpop.f32.mrb[0].mxu0
        %v9123 = vadd.f32 0.0, %v9122
        %v9124 = vpop.f32.mrb[0].mxu0
        %9125 = vmatprep.mubr.bf16.mxu0 0
        %9126 = vmatmul.mubr.bf16.gmra.mrb[0].mxu0 %v8922
        %v9127 = vpop.f32.mrb[0].mxu0
        %v9128 = vadd.f32 0.0, %v9127
        %v9129 = vpop.f32.mrb[0].mxu0
        %v9130 = vpop.f32.mrb[0].mxu0
        %v9131 = vadd.f32 0.0, %v9130
        %v9132 = vpop.f32.mrb[0].mxu0
        %9133 = vmatprep.mubr.bf16.mxu0 0
        %9134 = vmatmul.mubr.bf16.gmra.mrb[0].mxu0 %v8923
        %v9135 = vpop.f32.mrb[0].mxu0
        %v9136 = vadd.f32 0.0, %v9135
        %v9137 = vpop.f32.mrb[0].mxu0
        %v9138 = vpop.f32.mrb[0].mxu0
        %v9139 = vadd.f32 0.0, %v9138
        %v9140 = vpop.f32.mrb[0].mxu0
        %9141 = vmatprep.mubr.bf16.mxu0 0
        %9142 = vmatmul.mubr.bf16.gmra.mrb[0].mxu0 %v8924
        %v9143 = vpop.f32.mrb[0].mxu0
        %v9144 = vadd.f32 0.0, %v9143
        %v9145 = vpop.f32.mrb[0].mxu0
        %v9146 = vpop.f32.mrb[0].mxu0
        %v9147 = vadd.f32 0.0, %v9146
        %v9148 = vpop.f32.mrb[0].mxu0
        %9149 = vdwg.mxu0
        %v9150 = vadd.f32 %v8652, %v9024
        %v9151 = vadd.f32 %v8653, %v9027
        %v9152 = vadd.f32 %v8654, %v9032
        %v9153 = vadd.f32 %v8655, %v9035
        %v9154 = vadd.f32 %v8656, %v9040
        %v9155 = vadd.f32 %v8657, %v9043
        %v9156 = vadd.f32 %v8658, %v9048
        %v9157 = vadd.f32 %v8659, %v9051
        %v9158 = vadd.f32 %v8660, %v9056
        %v9159 = vadd.f32 %v8661, %v9059
        %v9160 = vadd.f32 %v8662, %v9064
        %v9161 = vadd.f32 %v8663, %v9067
        %v9162 = vadd.f32 %v8664, %v9072
        %v9163 = vadd.f32 %v8665, %v9075
        %v9164 = vadd.f32 %v8666, %v9080
        %v9165 = vadd.f32 %v8667, %v9083
        %v9166 = vadd.f32 %v8668, %v9088
        %v9167 = vadd.f32 %v8669, %v9091
        %v9168 = vadd.f32 %v8670, %v9096
        %v9169 = vadd.f32 %v8671, %v9099
        %v9170 = vadd.f32 %v8672, %v9104
        %v9171 = vadd.f32 %v8673, %v9107
        %v9172 = vadd.f32 %v8674, %v9112
        %v9173 = vadd.f32 %v8675, %v9115
        %v9174 = vadd.f32 %v8676, %v9120
        %v9175 = vadd.f32 %v8677, %v9123
        %v9176 = vadd.f32 %v8678, %v9128
        %v9177 = vadd.f32 %v8679, %v9131
        %v9178 = vadd.f32 %v8680, %v9136
        %v9179 = vadd.f32 %v8681, %v9139
        %v9180 = vadd.f32 %v8682, %v9144
        %v9181 = vadd.f32 %v8683, %v9147
        %s9182 = scalar_lea.vmem [#allocation3], 24
        %v9183 = vld [vmem:[%s9182] sm:$0xf]
        %v9184 = vld [vmem:[%s9182 + $0x4] sm:$0xf]
        %v9185 = vld [vmem:[%s9182 + $0xc] sm:$0xf]
        %v9186 = vld [vmem:[%s9182 + $0x10] sm:$0xf]
        %v9187 = vld [vmem:[%s9182 + $0x18] sm:$0xf]
        %v9188 = vld [vmem:[%s9182 + $0x1c] sm:$0xf]
        %v9189 = vld [vmem:[%s9182 + $0x24] sm:$0xf]
        %v9190 = vld [vmem:[%s9182 + $0x28] sm:$0xf]
        %v9191 = vld [vmem:[%s9182 + $0x30] sm:$0xf]
        %v9192 = vld [vmem:[%s9182 + $0x34] sm:$0xf]
        %v9193 = vld [vmem:[%s9182 + $0x3c] sm:$0xf]
        %v9194 = vld [vmem:[%s9182 + $0x40] sm:$0xf]
        %v9195 = vld [vmem:[%s9182 + $0x48] sm:$0xf]
        %v9196 = vld [vmem:[%s9182 + $0x4c] sm:$0xf]
        %v9197 = vld [vmem:[%s9182 + $0x54] sm:$0xf]
        %v9198 = vld [vmem:[%s9182 + $0x58] sm:$0xf]
        %v9199 = vld [vmem:[%s9182 + $0x60] sm:$0xf]
        %v9200 = vld [vmem:[%s9182 + $0x64] sm:$0xf]
        %v9201 = vld [vmem:[%s9182 + $0x6c] sm:$0xf]
        %v9202 = vld [vmem:[%s9182 + $0x70] sm:$0xf]
        %v9203 = vld [vmem:[%s9182 + $0x78] sm:$0xf]
        %v9204 = vld [vmem:[%s9182 + $0x7c] sm:$0xf]
        %v9205 = vld [vmem:[%s9182 + $0x84] sm:$0xf]
        %v9206 = vld [vmem:[%s9182 + $0x88] sm:$0xf]
        %v9207 = vld [vmem:[%s9182 + $0x90] sm:$0xf]
        %v9208 = vld [vmem:[%s9182 + $0x94] sm:$0xf]
        %v9209 = vld [vmem:[%s9182 + $0x9c] sm:$0xf]
        %v9210 = vld [vmem:[%s9182 + $0xa0] sm:$0xf]
        %v9211 = vld [vmem:[%s9182 + $0xa8] sm:$0xf]
        %v9212 = vld [vmem:[%s9182 + $0xac] sm:$0xf]
        %v9213 = vld [vmem:[%s9182 + $0xb4] sm:$0xf]
        %v9214 = vld [vmem:[%s9182 + $0xb8] sm:$0xf]
        %s9215 = scalar_lea.vmem [#allocation4], 384
        %v9216 = vld [vmem:[%s9215] sm:$0xf]
        %v9217 = vld [vmem:[%s9215 + $0x4] sm:$0xf]
        %v9218 = vld [vmem:[%s9215 + $0x8] sm:$0xf]
        %v9219 = vld [vmem:[%s9215 + $0xc] sm:$0xf]
        %v9220 = vld [vmem:[%s9215 + $0x10] sm:$0xf]
        %v9221 = vld [vmem:[%s9215 + $0x14] sm:$0xf]
        %v9222 = vld [vmem:[%s9215 + $0x18] sm:$0xf]
        %v9223 = vld [vmem:[%s9215 + $0x1c] sm:$0xf]
        %v9224 = vld [vmem:[%s9215 + $0x20] sm:$0xf]
        %v9225 = vld [vmem:[%s9215 + $0x24] sm:$0xf]
        %v9226 = vld [vmem:[%s9215 + $0x28] sm:$0xf]
        %v9227 = vld [vmem:[%s9215 + $0x2c] sm:$0xf]
        %v9228 = vld [vmem:[%s9215 + $0x30] sm:$0xf]
        %v9229 = vld [vmem:[%s9215 + $0x34] sm:$0xf]
        %v9230 = vld [vmem:[%s9215 + $0x38] sm:$0xf]
        %v9231 = vld [vmem:[%s9215 + $0x3c] sm:$0xf]
        %v9264 = vunpack.c.l.b16 %v9183
        %v9265 = vunpack.c.l.b16 %v9184
        %v9266 = vunpack.c.l.b16 %v9185
        %v9267 = vunpack.c.l.b16 %v9186
        %v9268 = vunpack.c.l.b16 %v9187
        %v9269 = vunpack.c.l.b16 %v9188
        %v9270 = vunpack.c.l.b16 %v9189
        %v9271 = vunpack.c.l.b16 %v9190
        %v9272 = vunpack.c.l.b16 %v9191
        %v9273 = vunpack.c.l.b16 %v9192
        %v9274 = vunpack.c.l.b16 %v9193
        %v9275 = vunpack.c.l.b16 %v9194
        %v9276 = vunpack.c.l.b16 %v9195
        %v9277 = vunpack.c.l.b16 %v9196
        %v9278 = vunpack.c.l.b16 %v9197
        %v9279 = vunpack.c.l.b16 %v9198
        %v9280 = vunpack.c.l.b16 %v9199
        %v9281 = vunpack.c.l.b16 %v9200
        %v9282 = vunpack.c.l.b16 %v9201
        %v9283 = vunpack.c.l.b16 %v9202
        %v9284 = vunpack.c.l.b16 %v9203
        %v9285 = vunpack.c.l.b16 %v9204
        %v9286 = vunpack.c.l.b16 %v9205
        %v9287 = vunpack.c.l.b16 %v9206
        %v9288 = vunpack.c.l.b16 %v9207
        %v9289 = vunpack.c.l.b16 %v9208
        %v9290 = vunpack.c.l.b16 %v9209
        %v9291 = vunpack.c.l.b16 %v9210
        %v9292 = vunpack.c.l.b16 %v9211
        %v9293 = vunpack.c.l.b16 %v9212
        %v9294 = vunpack.c.l.b16 %v9213
        %v9295 = vunpack.c.l.b16 %v9214
        %v9296 = vpack.c.b16 %v9265, %v9264
        %v9297 = vpack.c.b16 %v9267, %v9266
        %v9298 = vpack.c.b16 %v9269, %v9268
        %v9299 = vpack.c.b16 %v9271, %v9270
        %v9300 = vpack.c.b16 %v9273, %v9272
        %v9301 = vpack.c.b16 %v9275, %v9274
        %v9302 = vpack.c.b16 %v9277, %v9276
        %v9303 = vpack.c.b16 %v9279, %v9278
        %v9304 = vpack.c.b16 %v9281, %v9280
        %v9305 = vpack.c.b16 %v9283, %v9282
        %v9306 = vpack.c.b16 %v9285, %v9284
        %v9307 = vpack.c.b16 %v9287, %v9286
        %v9308 = vpack.c.b16 %v9289, %v9288
        %v9309 = vpack.c.b16 %v9291, %v9290
        %v9310 = vpack.c.b16 %v9293, %v9292
        %v9311 = vpack.c.b16 %v9295, %v9294
        %v9344 = vunpack.c.l.b16 %v9216
        %v9345 = vunpack.c.l.b16 %v9217
        %v9346 = vunpack.c.l.b16 %v9218
        %v9347 = vunpack.c.l.b16 %v9219
        %v9348 = vunpack.c.l.b16 %v9220
        %v9349 = vunpack.c.l.b16 %v9221
        %v9350 = vunpack.c.l.b16 %v9222
        %v9351 = vunpack.c.l.b16 %v9223
        %v9352 = vunpack.c.l.b16 %v9224
        %v9353 = vunpack.c.l.b16 %v9225
        %v9354 = vunpack.c.l.b16 %v9226
        %v9355 = vunpack.c.l.b16 %v9227
        %v9356 = vunpack.c.l.b16 %v9228
        %v9357 = vunpack.c.l.b16 %v9229
        %v9358 = vunpack.c.l.b16 %v9230
        %v9359 = vunpack.c.l.b16 %v9231
        %v9360 = vpack.c.b16 %v9345, %v9344
        %v9361 = vpack.c.b16 %v9347, %v9346
        %v9362 = vpack.c.b16 %v9349, %v9348
        %v9363 = vpack.c.b16 %v9351, %v9350
        %v9364 = vpack.c.b16 %v9353, %v9352
        %v9365 = vpack.c.b16 %v9355, %v9354
        %v9366 = vpack.c.b16 %v9357, %v9356
        %v9367 = vpack.c.b16 %v9359, %v9358
        %9376 = vmatprep.subr.bf16.mxu0 0
        %9377 = vmatpush1.bf16.msra.mxu0 %v9360
        %9378 = vmatprep.subr.bf16.mxu0 0
        %9379 = vmatpush1.bf16.msra.mxu0 %v9361
        %9380 = vmatprep.subr.bf16.mxu0 0
        %9381 = vmatpush1.bf16.msra.mxu0 %v9362
        %9382 = vmatprep.subr.bf16.mxu0 0
        %9383 = vmatpush1.bf16.msra.mxu0 %v9363
        %9384 = vmatprep.subr.bf16.mxu0 0
        %9385 = vmatpush1.bf16.msra.mxu0 %v9364
        %9386 = vmatprep.subr.bf16.mxu0 0
        %9387 = vmatpush1.bf16.msra.mxu0 %v9365
        %9388 = vmatprep.subr.bf16.mxu0 0
        %9389 = vmatpush1.bf16.msra.mxu0 %v9366
        %9390 = vmatprep.subr.bf16.mxu0 0
        %9391 = vmatpush1.bf16.msra.mxu0 %v9367
        %9392 = vmatprep.subr.bf16.mxu0 0
        %9393 = vmatpush1.bf16.msra.mxu0 0
        %9394 = vmatprep.subr.bf16.mxu0 0
        %9395 = vmatpush1.bf16.msra.mxu0 0
        %9396 = vmatprep.subr.bf16.mxu0 0
        %9397 = vmatpush1.bf16.msra.mxu0 0
        %9398 = vmatprep.subr.bf16.mxu0 0
        %9399 = vmatpush1.bf16.msra.mxu0 0
        %9400 = vmatprep.subr.bf16.mxu0 0
        %9401 = vmatpush1.bf16.msra.mxu0 0
        %9402 = vmatprep.subr.bf16.mxu0 0
        %9403 = vmatpush1.bf16.msra.mxu0 0
        %9404 = vmatprep.subr.bf16.mxu0 0
        %9405 = vmatpush1.bf16.msra.mxu0 0
        %9406 = vmatprep.subr.bf16.mxu0 0
        %9407 = vmatpush1.bf16.msra.mxu0 0
        %9408 = vmatprep.mubr.bf16.mxu0 0
        %9409 = vmatmul.mubr.bf16.gmra.mrb[0].mxu0 %v9296
        %v9410 = vpop.f32.mrb[0].mxu0
        %v9411 = vadd.f32 0.0, %v9410
        %v9412 = vpop.f32.mrb[0].mxu0
        %v9413 = vpop.f32.mrb[0].mxu0
        %v9414 = vadd.f32 0.0, %v9413
        %v9415 = vpop.f32.mrb[0].mxu0
        %9416 = vmatprep.mubr.bf16.mxu0 0
        %9417 = vmatmul.mubr.bf16.gmra.mrb[0].mxu0 %v9297
        %v9418 = vpop.f32.mrb[0].mxu0
        %v9419 = vadd.f32 0.0, %v9418
        %v9420 = vpop.f32.mrb[0].mxu0
        %v9421 = vpop.f32.mrb[0].mxu0
        %v9422 = vadd.f32 0.0, %v9421
        %v9423 = vpop.f32.mrb[0].mxu0
        %9424 = vmatprep.mubr.bf16.mxu0 0
        %9425 = vmatmul.mubr.bf16.gmra.mrb[0].mxu0 %v9298
        %v9426 = vpop.f32.mrb[0].mxu0
        %v9427 = vadd.f32 0.0, %v9426
        %v9428 = vpop.f32.mrb[0].mxu0
        %v9429 = vpop.f32.mrb[0].mxu0
        %v9430 = vadd.f32 0.0, %v9429
        %v9431 = vpop.f32.mrb[0].mxu0
        %9432 = vmatprep.mubr.bf16.mxu0 0
        %9433 = vmatmul.mubr.bf16.gmra.mrb[0].mxu0 %v9299
        %v9434 = vpop.f32.mrb[0].mxu0
        %v9435 = vadd.f32 0.0, %v9434
        %v9436 = vpop.f32.mrb[0].mxu0
        %v9437 = vpop.f32.mrb[0].mxu0
        %v9438 = vadd.f32 0.0, %v9437
        %v9439 = vpop.f32.mrb[0].mxu0
        %9440 = vmatprep.mubr.bf16.mxu0 0
        %9441 = vmatmul.mubr.bf16.gmra.mrb[0].mxu0 %v9300
        %v9442 = vpop.f32.mrb[0].mxu0
        %v9443 = vadd.f32 0.0, %v9442
        %v9444 = vpop.f32.mrb[0].mxu0
        %v9445 = vpop.f32.mrb[0].mxu0
        %v9446 = vadd.f32 0.0, %v9445
        %v9447 = vpop.f32.mrb[0].mxu0
        %9448 = vmatprep.mubr.bf16.mxu0 0
        %9449 = vmatmul.mubr.bf16.gmra.mrb[0].mxu0 %v9301
        %v9450 = vpop.f32.mrb[0].mxu0
        %v9451 = vadd.f32 0.0, %v9450
        %v9452 = vpop.f32.mrb[0].mxu0
        %v9453 = vpop.f32.mrb[0].mxu0
        %v9454 = vadd.f32 0.0, %v9453
        %v9455 = vpop.f32.mrb[0].mxu0
        %9456 = vmatprep.mubr.bf16.mxu0 0
        %9457 = vmatmul.mubr.bf16.gmra.mrb[0].mxu0 %v9302
        %v9458 = vpop.f32.mrb[0].mxu0
        %v9459 = vadd.f32 0.0, %v9458
        %v9460 = vpop.f32.mrb[0].mxu0
        %v9461 = vpop.f32.mrb[0].mxu0
        %v9462 = vadd.f32 0.0, %v9461
        %v9463 = vpop.f32.mrb[0].mxu0
        %9464 = vmatprep.mubr.bf16.mxu0 0
        %9465 = vmatmul.mubr.bf16.gmra.mrb[0].mxu0 %v9303
        %v9466 = vpop.f32.mrb[0].mxu0
        %v9467 = vadd.f32 0.0, %v9466
        %v9468 = vpop.f32.mrb[0].mxu0
        %v9469 = vpop.f32.mrb[0].mxu0
        %v9470 = vadd.f32 0.0, %v9469
        %v9471 = vpop.f32.mrb[0].mxu0
        %9472 = vmatprep.mubr.bf16.mxu0 0
        %9473 = vmatmul.mubr.bf16.gmra.mrb[0].mxu0 %v9304
        %v9474 = vpop.f32.mrb[0].mxu0
        %v9475 = vadd.f32 0.0, %v9474
        %v9476 = vpop.f32.mrb[0].mxu0
        %v9477 = vpop.f32.mrb[0].mxu0
        %v9478 = vadd.f32 0.0, %v9477
        %v9479 = vpop.f32.mrb[0].mxu0
        %9480 = vmatprep.mubr.bf16.mxu0 0
        %9481 = vmatmul.mubr.bf16.gmra.mrb[0].mxu0 %v9305
        %v9482 = vpop.f32.mrb[0].mxu0
        %v9483 = vadd.f32 0.0, %v9482
        %v9484 = vpop.f32.mrb[0].mxu0
        %v9485 = vpop.f32.mrb[0].mxu0
        %v9486 = vadd.f32 0.0, %v9485
        %v9487 = vpop.f32.mrb[0].mxu0
        %9488 = vmatprep.mubr.bf16.mxu0 0
        %9489 = vmatmul.mubr.bf16.gmra.mrb[0].mxu0 %v9306
        %v9490 = vpop.f32.mrb[0].mxu0
        %v9491 = vadd.f32 0.0, %v9490
        %v9492 = vpop.f32.mrb[0].mxu0
        %v9493 = vpop.f32.mrb[0].mxu0
        %v9494 = vadd.f32 0.0, %v9493
        %v9495 = vpop.f32.mrb[0].mxu0
        %9496 = vmatprep.mubr.bf16.mxu0 0
        %9497 = vmatmul.mubr.bf16.gmra.mrb[0].mxu0 %v9307
        %v9498 = vpop.f32.mrb[0].mxu0
        %v9499 = vadd.f32 0.0, %v9498
        %v9500 = vpop.f32.mrb[0].mxu0
        %v9501 = vpop.f32.mrb[0].mxu0
        %v9502 = vadd.f32 0.0, %v9501
        %v9503 = vpop.f32.mrb[0].mxu0
        %9504 = vmatprep.mubr.bf16.mxu0 0
        %9505 = vmatmul.mubr.bf16.gmra.mrb[0].mxu0 %v9308
        %v9506 = vpop.f32.mrb[0].mxu0
        %v9507 = vadd.f32 0.0, %v9506
        %v9508 = vpop.f32.mrb[0].mxu0
        %v9509 = vpop.f32.mrb[0].mxu0
        %v9510 = vadd.f32 0.0, %v9509
        %v9511 = vpop.f32.mrb[0].mxu0
        %9512 = vmatprep.mubr.bf16.mxu0 0
        %9513 = vmatmul.mubr.bf16.gmra.mrb[0].mxu0 %v9309
        %v9514 = vpop.f32.mrb[0].mxu0
        %v9515 = vadd.f32 0.0, %v9514
        %v9516 = vpop.f32.mrb[0].mxu0
        %v9517 = vpop.f32.mrb[0].mxu0
        %v9518 = vadd.f32 0.0, %v9517
        %v9519 = vpop.f32.mrb[0].mxu0
        %9520 = vmatprep.mubr.bf16.mxu0 0
        %9521 = vmatmul.mubr.bf16.gmra.mrb[0].mxu0 %v9310
        %v9522 = vpop.f32.mrb[0].mxu0
        %v9523 = vadd.f32 0.0, %v9522
        %v9524 = vpop.f32.mrb[0].mxu0
        %v9525 = vpop.f32.mrb[0].mxu0
        %v9526 = vadd.f32 0.0, %v9525
        %v9527 = vpop.f32.mrb[0].mxu0
        %9528 = vmatprep.mubr.bf16.mxu0 0
        %9529 = vmatmul.mubr.bf16.gmra.mrb[0].mxu0 %v9311
        %v9530 = vpop.f32.mrb[0].mxu0
        %v9531 = vadd.f32 0.0, %v9530
        %v9532 = vpop.f32.mrb[0].mxu0
        %v9533 = vpop.f32.mrb[0].mxu0
        %v9534 = vadd.f32 0.0, %v9533
        %v9535 = vpop.f32.mrb[0].mxu0
        %9536 = vdwg.mxu0
        %v9537 = vadd.f32 %v9150, %v9411
        %v9538 = vadd.f32 %v9151, %v9414
        %v9539 = vadd.f32 %v9152, %v9419
        %v9540 = vadd.f32 %v9153, %v9422
        %v9541 = vadd.f32 %v9154, %v9427
        %v9542 = vadd.f32 %v9155, %v9430
        %v9543 = vadd.f32 %v9156, %v9435
        %v9544 = vadd.f32 %v9157, %v9438
        %v9545 = vadd.f32 %v9158, %v9443
        %v9546 = vadd.f32 %v9159, %v9446
        %v9547 = vadd.f32 %v9160, %v9451
        %v9548 = vadd.f32 %v9161, %v9454
        %v9549 = vadd.f32 %v9162, %v9459
        %v9550 = vadd.f32 %v9163, %v9462
        %v9551 = vadd.f32 %v9164, %v9467
        %v9552 = vadd.f32 %v9165, %v9470
        %v9553 = vadd.f32 %v9166, %v9475
        %v9554 = vadd.f32 %v9167, %v9478
        %v9555 = vadd.f32 %v9168, %v9483
        %v9556 = vadd.f32 %v9169, %v9486
        %v9557 = vadd.f32 %v9170, %v9491
        %v9558 = vadd.f32 %v9171, %v9494
        %v9559 = vadd.f32 %v9172, %v9499
        %v9560 = vadd.f32 %v9173, %v9502
        %v9561 = vadd.f32 %v9174, %v9507
        %v9562 = vadd.f32 %v9175, %v9510
        %v9563 = vadd.f32 %v9176, %v9515
        %v9564 = vadd.f32 %v9177, %v9518
        %v9565 = vadd.f32 %v9178, %v9523
        %v9566 = vadd.f32 %v9179, %v9526
        %v9567 = vadd.f32 %v9180, %v9531
        %v9568 = vadd.f32 %v9181, %v9534
        %v9569 = vld [vmem:[%s9182] sm:$0xf]
        %v9570 = vld [vmem:[%s9182 + $0x4] sm:$0xf]
        %v9571 = vld [vmem:[%s9182 + $0x8] sm:$0x1]
        %v9572 = vld [vmem:[%s9182 + $0xc] sm:$0xf]
        %v9573 = vld [vmem:[%s9182 + $0x10] sm:$0xf]
        %v9574 = vld [vmem:[%s9182 + $0x14] sm:$0x1]
        %v9575 = vld [vmem:[%s9182 + $0x18] sm:$0xf]
        %v9576 = vld [vmem:[%s9182 + $0x1c] sm:$0xf]
        %v9577 = vld [vmem:[%s9182 + $0x20] sm:$0x1]
        %v9578 = vld [vmem:[%s9182 + $0x24] sm:$0xf]
        %v9579 = vld [vmem:[%s9182 + $0x28] sm:$0xf]
        %v9580 = vld [vmem:[%s9182 + $0x2c] sm:$0x1]
        %v9581 = vld [vmem:[%s9182 + $0x30] sm:$0xf]
        %v9582 = vld [vmem:[%s9182 + $0x34] sm:$0xf]
        %v9583 = vld [vmem:[%s9182 + $0x38] sm:$0x1]
        %v9584 = vld [vmem:[%s9182 + $0x3c] sm:$0xf]
        %v9585 = vld [vmem:[%s9182 + $0x40] sm:$0xf]
        %v9586 = vld [vmem:[%s9182 + $0x44] sm:$0x1]
        %v9587 = vld [vmem:[%s9182 + $0x48] sm:$0xf]
        %v9588 = vld [vmem:[%s9182 + $0x4c] sm:$0xf]
        %v9589 = vld [vmem:[%s9182 + $0x50] sm:$0x1]
        %v9590 = vld [vmem:[%s9182 + $0x54] sm:$0xf]
        %v9591 = vld [vmem:[%s9182 + $0x58] sm:$0xf]
        %v9592 = vld [vmem:[%s9182 + $0x5c] sm:$0x1]
        %v9593 = vld [vmem:[%s9182 + $0x60] sm:$0xf]
        %v9594 = vld [vmem:[%s9182 + $0x64] sm:$0xf]
        %v9595 = vld [vmem:[%s9182 + $0x68] sm:$0x1]
        %v9596 = vld [vmem:[%s9182 + $0x6c] sm:$0xf]
        %v9597 = vld [vmem:[%s9182 + $0x70] sm:$0xf]
        %v9598 = vld [vmem:[%s9182 + $0x74] sm:$0x1]
        %v9599 = vld [vmem:[%s9182 + $0x78] sm:$0xf]
        %v9600 = vld [vmem:[%s9182 + $0x7c] sm:$0xf]
        %v9601 = vld [vmem:[%s9182 + $0x80] sm:$0x1]
        %v9602 = vld [vmem:[%s9182 + $0x84] sm:$0xf]
        %v9603 = vld [vmem:[%s9182 + $0x88] sm:$0xf]
        %v9604 = vld [vmem:[%s9182 + $0x8c] sm:$0x1]
        %v9605 = vld [vmem:[%s9182 + $0x90] sm:$0xf]
        %v9606 = vld [vmem:[%s9182 + $0x94] sm:$0xf]
        %v9607 = vld [vmem:[%s9182 + $0x98] sm:$0x1]
        %v9608 = vld [vmem:[%s9182 + $0x9c] sm:$0xf]
        %v9609 = vld [vmem:[%s9182 + $0xa0] sm:$0xf]
        %v9610 = vld [vmem:[%s9182 + $0xa4] sm:$0x1]
        %v9611 = vld [vmem:[%s9182 + $0xa8] sm:$0xf]
        %v9612 = vld [vmem:[%s9182 + $0xac] sm:$0xf]
        %v9613 = vld [vmem:[%s9182 + $0xb0] sm:$0x1]
        %v9614 = vld [vmem:[%s9182 + $0xb4] sm:$0xf]
        %v9615 = vld [vmem:[%s9182 + $0xb8] sm:$0xf]
        %v9616 = vld [vmem:[%s9182 + $0xbc] sm:$0x1]
        %v9618 = vshrl.u32 %v9569, 16
        %v9620 = vrot.slane %v9618, 4
        %v9621 = vshll.u32 %v9569, 16
        %v9623 = vrot.slane %v9621, 5
        %v9624 = vor.u32 %v9620, %v9623
        %v9625 = vrot.slane %v9624, 4
        %v9627 = vshll.u32 %v9570, 16
        %v9629 = vrot.slane %v9627, 5
        %v9630 = vsel %vm525, %v9625, %v9629
        %v9631 = vshrl.u32 %v9570, 16
        %v9633 = vrot.slane %v9631, 4
        %v9634 = vor.u32 %v9633, %v9629
        %v9635 = vrot.slane %v9634, 4
        %v9637 = vshll.u32 %v9571, 16
        %v9639 = vrot.slane %v9637, 5
        %v9640 = vsel %vm525, %v9635, %v9639
        %v9642 = vshrl.u32 %v9572, 16
        %v9644 = vrot.slane %v9642, 4
        %v9645 = vshll.u32 %v9572, 16
        %v9647 = vrot.slane %v9645, 5
        %v9648 = vor.u32 %v9644, %v9647
        %v9649 = vrot.slane %v9648, 4
        %v9651 = vshll.u32 %v9573, 16
        %v9653 = vrot.slane %v9651, 5
        %v9654 = vsel %vm525, %v9649, %v9653
        %v9655 = vshrl.u32 %v9573, 16
        %v9657 = vrot.slane %v9655, 4
        %v9658 = vor.u32 %v9657, %v9653
        %v9659 = vrot.slane %v9658, 4
        %v9661 = vshll.u32 %v9574, 16
        %v9663 = vrot.slane %v9661, 5
        %v9664 = vsel %vm525, %v9659, %v9663
        %v9666 = vshrl.u32 %v9575, 16
        %v9668 = vrot.slane %v9666, 4
        %v9669 = vshll.u32 %v9575, 16
        %v9671 = vrot.slane %v9669, 5
        %v9672 = vor.u32 %v9668, %v9671
        %v9673 = vrot.slane %v9672, 4
        %v9675 = vshll.u32 %v9576, 16
        %v9677 = vrot.slane %v9675, 5
        %v9678 = vsel %vm525, %v9673, %v9677
        %v9679 = vshrl.u32 %v9576, 16
        %v9681 = vrot.slane %v9679, 4
        %v9682 = vor.u32 %v9681, %v9677
        %v9683 = vrot.slane %v9682, 4
        %v9685 = vshll.u32 %v9577, 16
        %v9687 = vrot.slane %v9685, 5
        %v9688 = vsel %vm525, %v9683, %v9687
        %v9690 = vshrl.u32 %v9578, 16
        %v9692 = vrot.slane %v9690, 4
        %v9693 = vshll.u32 %v9578, 16
        %v9695 = vrot.slane %v9693, 5
        %v9696 = vor.u32 %v9692, %v9695
        %v9697 = vrot.slane %v9696, 4
        %v9699 = vshll.u32 %v9579, 16
        %v9701 = vrot.slane %v9699, 5
        %v9702 = vsel %vm525, %v9697, %v9701
        %v9703 = vshrl.u32 %v9579, 16
        %v9705 = vrot.slane %v9703, 4
        %v9706 = vor.u32 %v9705, %v9701
        %v9707 = vrot.slane %v9706, 4
        %v9709 = vshll.u32 %v9580, 16
        %v9711 = vrot.slane %v9709, 5
        %v9712 = vsel %vm525, %v9707, %v9711
        %v9714 = vshrl.u32 %v9581, 16
        %v9716 = vrot.slane %v9714, 4
        %v9717 = vshll.u32 %v9581, 16
        %v9719 = vrot.slane %v9717, 5
        %v9720 = vor.u32 %v9716, %v9719
        %v9721 = vrot.slane %v9720, 4
        %v9723 = vshll.u32 %v9582, 16
        %v9725 = vrot.slane %v9723, 5
        %v9726 = vsel %vm525, %v9721, %v9725
        %v9727 = vshrl.u32 %v9582, 16
        %v9729 = vrot.slane %v9727, 4
        %v9730 = vor.u32 %v9729, %v9725
        %v9731 = vrot.slane %v9730, 4
        %v9733 = vshll.u32 %v9583, 16
        %v9735 = vrot.slane %v9733, 5
        %v9736 = vsel %vm525, %v9731, %v9735
        %v9738 = vshrl.u32 %v9584, 16
        %v9740 = vrot.slane %v9738, 4
        %v9741 = vshll.u32 %v9584, 16
        %v9743 = vrot.slane %v9741, 5
        %v9744 = vor.u32 %v9740, %v9743
        %v9745 = vrot.slane %v9744, 4
        %v9747 = vshll.u32 %v9585, 16
        %v9749 = vrot.slane %v9747, 5
        %v9750 = vsel %vm525, %v9745, %v9749
        %v9751 = vshrl.u32 %v9585, 16
        %v9753 = vrot.slane %v9751, 4
        %v9754 = vor.u32 %v9753, %v9749
        %v9755 = vrot.slane %v9754, 4
        %v9757 = vshll.u32 %v9586, 16
        %v9759 = vrot.slane %v9757, 5
        %v9760 = vsel %vm525, %v9755, %v9759
        %v9762 = vshrl.u32 %v9587, 16
        %v9764 = vrot.slane %v9762, 4
        %v9765 = vshll.u32 %v9587, 16
        %v9767 = vrot.slane %v9765, 5
        %v9768 = vor.u32 %v9764, %v9767
        %v9769 = vrot.slane %v9768, 4
        %v9771 = vshll.u32 %v9588, 16
        %v9773 = vrot.slane %v9771, 5
        %v9774 = vsel %vm525, %v9769, %v9773
        %v9775 = vshrl.u32 %v9588, 16
        %v9777 = vrot.slane %v9775, 4
        %v9778 = vor.u32 %v9777, %v9773
        %v9779 = vrot.slane %v9778, 4
        %v9781 = vshll.u32 %v9589, 16
        %v9783 = vrot.slane %v9781, 5
        %v9784 = vsel %vm525, %v9779, %v9783
        %v9786 = vshrl.u32 %v9590, 16
        %v9788 = vrot.slane %v9786, 4
        %v9789 = vshll.u32 %v9590, 16
        %v9791 = vrot.slane %v9789, 5
        %v9792 = vor.u32 %v9788, %v9791
        %v9793 = vrot.slane %v9792, 4
        %v9795 = vshll.u32 %v9591, 16
        %v9797 = vrot.slane %v9795, 5
        %v9798 = vsel %vm525, %v9793, %v9797
        %v9799 = vshrl.u32 %v9591, 16
        %v9801 = vrot.slane %v9799, 4
        %v9802 = vor.u32 %v9801, %v9797
        %v9803 = vrot.slane %v9802, 4
        %v9805 = vshll.u32 %v9592, 16
        %v9807 = vrot.slane %v9805, 5
        %v9808 = vsel %vm525, %v9803, %v9807
        %v9810 = vshrl.u32 %v9593, 16
        %v9812 = vrot.slane %v9810, 4
        %v9813 = vshll.u32 %v9593, 16
        %v9815 = vrot.slane %v9813, 5
        %v9816 = vor.u32 %v9812, %v9815
        %v9817 = vrot.slane %v9816, 4
        %v9819 = vshll.u32 %v9594, 16
        %v9821 = vrot.slane %v9819, 5
        %v9822 = vsel %vm525, %v9817, %v9821
        %v9823 = vshrl.u32 %v9594, 16
        %v9825 = vrot.slane %v9823, 4
        %v9826 = vor.u32 %v9825, %v9821
        %v9827 = vrot.slane %v9826, 4
        %v9829 = vshll.u32 %v9595, 16
        %v9831 = vrot.slane %v9829, 5
        %v9832 = vsel %vm525, %v9827, %v9831
        %v9834 = vshrl.u32 %v9596, 16
        %v9836 = vrot.slane %v9834, 4
        %v9837 = vshll.u32 %v9596, 16
        %v9839 = vrot.slane %v9837, 5
        %v9840 = vor.u32 %v9836, %v9839
        %v9841 = vrot.slane %v9840, 4
        %v9843 = vshll.u32 %v9597, 16
        %v9845 = vrot.slane %v9843, 5
        %v9846 = vsel %vm525, %v9841, %v9845
        %v9847 = vshrl.u32 %v9597, 16
        %v9849 = vrot.slane %v9847, 4
        %v9850 = vor.u32 %v9849, %v9845
        %v9851 = vrot.slane %v9850, 4
        %v9853 = vshll.u32 %v9598, 16
        %v9855 = vrot.slane %v9853, 5
        %v9856 = vsel %vm525, %v9851, %v9855
        %v9858 = vshrl.u32 %v9599, 16
        %v9860 = vrot.slane %v9858, 4
        %v9861 = vshll.u32 %v9599, 16
        %v9863 = vrot.slane %v9861, 5
        %v9864 = vor.u32 %v9860, %v9863
        %v9865 = vrot.slane %v9864, 4
        %v9867 = vshll.u32 %v9600, 16
        %v9869 = vrot.slane %v9867, 5
        %v9870 = vsel %vm525, %v9865, %v9869
        %v9871 = vshrl.u32 %v9600, 16
        %v9873 = vrot.slane %v9871, 4
        %v9874 = vor.u32 %v9873, %v9869
        %v9875 = vrot.slane %v9874, 4
        %v9877 = vshll.u32 %v9601, 16
        %v9879 = vrot.slane %v9877, 5
        %v9880 = vsel %vm525, %v9875, %v9879
        %v9882 = vshrl.u32 %v9602, 16
        %v9884 = vrot.slane %v9882, 4
        %v9885 = vshll.u32 %v9602, 16
        %v9887 = vrot.slane %v9885, 5
        %v9888 = vor.u32 %v9884, %v9887
        %v9889 = vrot.slane %v9888, 4
        %v9891 = vshll.u32 %v9603, 16
        %v9893 = vrot.slane %v9891, 5
        %v9894 = vsel %vm525, %v9889, %v9893
        %v9895 = vshrl.u32 %v9603, 16
        %v9897 = vrot.slane %v9895, 4
        %v9898 = vor.u32 %v9897, %v9893
        %v9899 = vrot.slane %v9898, 4
        %v9901 = vshll.u32 %v9604, 16
        %v9903 = vrot.slane %v9901, 5
        %v9904 = vsel %vm525, %v9899, %v9903
        %v9906 = vshrl.u32 %v9605, 16
        %v9908 = vrot.slane %v9906, 4
        %v9909 = vshll.u32 %v9605, 16
        %v9911 = vrot.slane %v9909, 5
        %v9912 = vor.u32 %v9908, %v9911
        %v9913 = vrot.slane %v9912, 4
        %v9915 = vshll.u32 %v9606, 16
        %v9917 = vrot.slane %v9915, 5
        %v9918 = vsel %vm525, %v9913, %v9917
        %v9919 = vshrl.u32 %v9606, 16
        %v9921 = vrot.slane %v9919, 4
        %v9922 = vor.u32 %v9921, %v9917
        %v9923 = vrot.slane %v9922, 4
        %v9925 = vshll.u32 %v9607, 16
        %v9927 = vrot.slane %v9925, 5
        %v9928 = vsel %vm525, %v9923, %v9927
        %v9930 = vshrl.u32 %v9608, 16
        %v9932 = vrot.slane %v9930, 4
        %v9933 = vshll.u32 %v9608, 16
        %v9935 = vrot.slane %v9933, 5
        %v9936 = vor.u32 %v9932, %v9935
        %v9937 = vrot.slane %v9936, 4
        %v9939 = vshll.u32 %v9609, 16
        %v9941 = vrot.slane %v9939, 5
        %v9942 = vsel %vm525, %v9937, %v9941
        %v9943 = vshrl.u32 %v9609, 16
        %v9945 = vrot.slane %v9943, 4
        %v9946 = vor.u32 %v9945, %v9941
        %v9947 = vrot.slane %v9946, 4
        %v9949 = vshll.u32 %v9610, 16
        %v9951 = vrot.slane %v9949, 5
        %v9952 = vsel %vm525, %v9947, %v9951
        %v9954 = vshrl.u32 %v9611, 16
        %v9956 = vrot.slane %v9954, 4
        %v9957 = vshll.u32 %v9611, 16
        %v9959 = vrot.slane %v9957, 5
        %v9960 = vor.u32 %v9956, %v9959
        %v9961 = vrot.slane %v9960, 4
        %v9963 = vshll.u32 %v9612, 16
        %v9965 = vrot.slane %v9963, 5
        %v9966 = vsel %vm525, %v9961, %v9965
        %v9967 = vshrl.u32 %v9612, 16
        %v9969 = vrot.slane %v9967, 4
        %v9970 = vor.u32 %v9969, %v9965
        %v9971 = vrot.slane %v9970, 4
        %v9973 = vshll.u32 %v9613, 16
        %v9975 = vrot.slane %v9973, 5
        %v9976 = vsel %vm525, %v9971, %v9975
        %v9978 = vshrl.u32 %v9614, 16
        %v9980 = vrot.slane %v9978, 4
        %v9981 = vshll.u32 %v9614, 16
        %v9983 = vrot.slane %v9981, 5
        %v9984 = vor.u32 %v9980, %v9983
        %v9985 = vrot.slane %v9984, 4
        %v9987 = vshll.u32 %v9615, 16
        %v9989 = vrot.slane %v9987, 5
        %v9990 = vsel %vm525, %v9985, %v9989
        %v9991 = vshrl.u32 %v9615, 16
        %v9993 = vrot.slane %v9991, 4
        %v9994 = vor.u32 %v9993, %v9989
        %v9995 = vrot.slane %v9994, 4
        %v9997 = vshll.u32 %v9616, 16
        %v9999 = vrot.slane %v9997, 5
        %v10000 = vsel %vm525, %v9995, %v9999
        %s10001 = scalar_lea.vmem [#allocation4], 448
        %v10002 = vld [vmem:[%s10001] sm:$0xf]
        %v10003 = vld [vmem:[%s10001 + $0x4] sm:$0xf]
        %v10004 = vld [vmem:[%s10001 + $0x8] sm:$0xf]
        %v10005 = vld [vmem:[%s10001 + $0xc] sm:$0xf]
        %v10006 = vld [vmem:[%s10001 + $0x10] sm:$0xf]
        %v10007 = vld [vmem:[%s10001 + $0x14] sm:$0xf]
        %v10008 = vld [vmem:[%s10001 + $0x18] sm:$0xf]
        %v10009 = vld [vmem:[%s10001 + $0x1c] sm:$0xf]
        %v10010 = vld [vmem:[%s10001 + $0x20] sm:$0xf]
        %v10011 = vld [vmem:[%s10001 + $0x24] sm:$0xf]
        %v10012 = vld [vmem:[%s10001 + $0x28] sm:$0xf]
        %v10013 = vld [vmem:[%s10001 + $0x2c] sm:$0xf]
        %v10014 = vld [vmem:[%s10001 + $0x30] sm:$0xf]
        %v10015 = vld [vmem:[%s10001 + $0x34] sm:$0xf]
        %v10016 = vld [vmem:[%s10001 + $0x38] sm:$0xf]
        %v10017 = vld [vmem:[%s10001 + $0x3c] sm:$0xf]
        %v10018 = vunpack.c.l.b16 %v9630
        %v10019 = vunpack.c.l.b16 %v9640
        %v10020 = vunpack.c.l.b16 %v9654
        %v10021 = vunpack.c.l.b16 %v9664
        %v10022 = vunpack.c.l.b16 %v9678
        %v10023 = vunpack.c.l.b16 %v9688
        %v10024 = vunpack.c.l.b16 %v9702
        %v10025 = vunpack.c.l.b16 %v9712
        %v10026 = vunpack.c.l.b16 %v9726
        %v10027 = vunpack.c.l.b16 %v9736
        %v10028 = vunpack.c.l.b16 %v9750
        %v10029 = vunpack.c.l.b16 %v9760
        %v10030 = vunpack.c.l.b16 %v9774
        %v10031 = vunpack.c.l.b16 %v9784
        %v10032 = vunpack.c.l.b16 %v9798
        %v10033 = vunpack.c.l.b16 %v9808
        %v10034 = vunpack.c.l.b16 %v9822
        %v10035 = vunpack.c.l.b16 %v9832
        %v10036 = vunpack.c.l.b16 %v9846
        %v10037 = vunpack.c.l.b16 %v9856
        %v10038 = vunpack.c.l.b16 %v9870
        %v10039 = vunpack.c.l.b16 %v9880
        %v10040 = vunpack.c.l.b16 %v9894
        %v10041 = vunpack.c.l.b16 %v9904
        %v10042 = vunpack.c.l.b16 %v9918
        %v10043 = vunpack.c.l.b16 %v9928
        %v10044 = vunpack.c.l.b16 %v9942
        %v10045 = vunpack.c.l.b16 %v9952
        %v10046 = vunpack.c.l.b16 %v9966
        %v10047 = vunpack.c.l.b16 %v9976
        %v10048 = vunpack.c.l.b16 %v9990
        %v10049 = vunpack.c.l.b16 %v10000
        %v10050 = vpack.c.b16 %v10019, %v10018
        %v10051 = vpack.c.b16 %v10021, %v10020
        %v10052 = vpack.c.b16 %v10023, %v10022
        %v10053 = vpack.c.b16 %v10025, %v10024
        %v10054 = vpack.c.b16 %v10027, %v10026
        %v10055 = vpack.c.b16 %v10029, %v10028
        %v10056 = vpack.c.b16 %v10031, %v10030
        %v10057 = vpack.c.b16 %v10033, %v10032
        %v10058 = vpack.c.b16 %v10035, %v10034
        %v10059 = vpack.c.b16 %v10037, %v10036
        %v10060 = vpack.c.b16 %v10039, %v10038
        %v10061 = vpack.c.b16 %v10041, %v10040
        %v10062 = vpack.c.b16 %v10043, %v10042
        %v10063 = vpack.c.b16 %v10045, %v10044
        %v10064 = vpack.c.b16 %v10047, %v10046
        %v10065 = vpack.c.b16 %v10049, %v10048
        %v10098 = vunpack.c.l.b16 %v10002
        %v10099 = vunpack.c.l.b16 %v10003
        %v10100 = vunpack.c.l.b16 %v10004
        %v10101 = vunpack.c.l.b16 %v10005
        %v10102 = vunpack.c.l.b16 %v10006
        %v10103 = vunpack.c.l.b16 %v10007
        %v10104 = vunpack.c.l.b16 %v10008
        %v10105 = vunpack.c.l.b16 %v10009
        %v10106 = vunpack.c.l.b16 %v10010
        %v10107 = vunpack.c.l.b16 %v10011
        %v10108 = vunpack.c.l.b16 %v10012
        %v10109 = vunpack.c.l.b16 %v10013
        %v10110 = vunpack.c.l.b16 %v10014
        %v10111 = vunpack.c.l.b16 %v10015
        %v10112 = vunpack.c.l.b16 %v10016
        %v10113 = vunpack.c.l.b16 %v10017
        %v10114 = vpack.c.b16 %v10099, %v10098
        %v10115 = vpack.c.b16 %v10101, %v10100
        %v10116 = vpack.c.b16 %v10103, %v10102
        %v10117 = vpack.c.b16 %v10105, %v10104
        %v10118 = vpack.c.b16 %v10107, %v10106
        %v10119 = vpack.c.b16 %v10109, %v10108
        %v10120 = vpack.c.b16 %v10111, %v10110
        %v10121 = vpack.c.b16 %v10113, %v10112
        %10130 = vmatprep.subr.bf16.mxu0 0
        %10131 = vmatpush1.bf16.msra.mxu0 %v10114
        %10132 = vmatprep.subr.bf16.mxu0 0
        %10133 = vmatpush1.bf16.msra.mxu0 %v10115
        %10134 = vmatprep.subr.bf16.mxu0 0
        %10135 = vmatpush1.bf16.msra.mxu0 %v10116
        %10136 = vmatprep.subr.bf16.mxu0 0
        %10137 = vmatpush1.bf16.msra.mxu0 %v10117
        %10138 = vmatprep.subr.bf16.mxu0 0
        %10139 = vmatpush1.bf16.msra.mxu0 %v10118
        %10140 = vmatprep.subr.bf16.mxu0 0
        %10141 = vmatpush1.bf16.msra.mxu0 %v10119
        %10142 = vmatprep.subr.bf16.mxu0 0
        %10143 = vmatpush1.bf16.msra.mxu0 %v10120
        %10144 = vmatprep.subr.bf16.mxu0 0
        %10145 = vmatpush1.bf16.msra.mxu0 %v10121
        %10146 = vmatprep.subr.bf16.mxu0 0
        %10147 = vmatpush1.bf16.msra.mxu0 0
        %10148 = vmatprep.subr.bf16.mxu0 0
        %10149 = vmatpush1.bf16.msra.mxu0 0
        %10150 = vmatprep.subr.bf16.mxu0 0
        %10151 = vmatpush1.bf16.msra.mxu0 0
        %10152 = vmatprep.subr.bf16.mxu0 0
        %10153 = vmatpush1.bf16.msra.mxu0 0
        %10154 = vmatprep.subr.bf16.mxu0 0
        %10155 = vmatpush1.bf16.msra.mxu0 0
        %10156 = vmatprep.subr.bf16.mxu0 0
        %10157 = vmatpush1.bf16.msra.mxu0 0
        %10158 = vmatprep.subr.bf16.mxu0 0
        %10159 = vmatpush1.bf16.msra.mxu0 0
        %10160 = vmatprep.subr.bf16.mxu0 0
        %10161 = vmatpush1.bf16.msra.mxu0 0
        %10162 = vmatprep.mubr.bf16.mxu0 0
        %10163 = vmatmul.mubr.bf16.gmra.mrb[0].mxu0 %v10050
        %v10164 = vpop.f32.mrb[0].mxu0
        %v10165 = vadd.f32 0.0, %v10164
        %v10166 = vpop.f32.mrb[0].mxu0
        %v10167 = vpop.f32.mrb[0].mxu0
        %v10168 = vadd.f32 0.0, %v10167
        %v10169 = vpop.f32.mrb[0].mxu0
        %10170 = vmatprep.mubr.bf16.mxu0 0
        %10171 = vmatmul.mubr.bf16.gmra.mrb[0].mxu0 %v10051
        %v10172 = vpop.f32.mrb[0].mxu0
        %v10173 = vadd.f32 0.0, %v10172
        %v10174 = vpop.f32.mrb[0].mxu0
        %v10175 = vpop.f32.mrb[0].mxu0
        %v10176 = vadd.f32 0.0, %v10175
        %v10177 = vpop.f32.mrb[0].mxu0
        %10178 = vmatprep.mubr.bf16.mxu0 0
        %10179 = vmatmul.mubr.bf16.gmra.mrb[0].mxu0 %v10052
        %v10180 = vpop.f32.mrb[0].mxu0
        %v10181 = vadd.f32 0.0, %v10180
        %v10182 = vpop.f32.mrb[0].mxu0
        %v10183 = vpop.f32.mrb[0].mxu0
        %v10184 = vadd.f32 0.0, %v10183
        %v10185 = vpop.f32.mrb[0].mxu0
        %10186 = vmatprep.mubr.bf16.mxu0 0
        %10187 = vmatmul.mubr.bf16.gmra.mrb[0].mxu0 %v10053
        %v10188 = vpop.f32.mrb[0].mxu0
        %v10189 = vadd.f32 0.0, %v10188
        %v10190 = vpop.f32.mrb[0].mxu0
        %v10191 = vpop.f32.mrb[0].mxu0
        %v10192 = vadd.f32 0.0, %v10191
        %v10193 = vpop.f32.mrb[0].mxu0
        %10194 = vmatprep.mubr.bf16.mxu0 0
        %10195 = vmatmul.mubr.bf16.gmra.mrb[0].mxu0 %v10054
        %v10196 = vpop.f32.mrb[0].mxu0
        %v10197 = vadd.f32 0.0, %v10196
        %v10198 = vpop.f32.mrb[0].mxu0
        %v10199 = vpop.f32.mrb[0].mxu0
        %v10200 = vadd.f32 0.0, %v10199
        %v10201 = vpop.f32.mrb[0].mxu0
        %10202 = vmatprep.mubr.bf16.mxu0 0
        %10203 = vmatmul.mubr.bf16.gmra.mrb[0].mxu0 %v10055
        %v10204 = vpop.f32.mrb[0].mxu0
        %v10205 = vadd.f32 0.0, %v10204
        %v10206 = vpop.f32.mrb[0].mxu0
        %v10207 = vpop.f32.mrb[0].mxu0
        %v10208 = vadd.f32 0.0, %v10207
        %v10209 = vpop.f32.mrb[0].mxu0
        %10210 = vmatprep.mubr.bf16.mxu0 0
        %10211 = vmatmul.mubr.bf16.gmra.mrb[0].mxu0 %v10056
        %v10212 = vpop.f32.mrb[0].mxu0
        %v10213 = vadd.f32 0.0, %v10212
        %v10214 = vpop.f32.mrb[0].mxu0
        %v10215 = vpop.f32.mrb[0].mxu0
        %v10216 = vadd.f32 0.0, %v10215
        %v10217 = vpop.f32.mrb[0].mxu0
        %10218 = vmatprep.mubr.bf16.mxu0 0
        %10219 = vmatmul.mubr.bf16.gmra.mrb[0].mxu0 %v10057
        %v10220 = vpop.f32.mrb[0].mxu0
        %v10221 = vadd.f32 0.0, %v10220
        %v10222 = vpop.f32.mrb[0].mxu0
        %v10223 = vpop.f32.mrb[0].mxu0
        %v10224 = vadd.f32 0.0, %v10223
        %v10225 = vpop.f32.mrb[0].mxu0
        %10226 = vmatprep.mubr.bf16.mxu0 0
        %10227 = vmatmul.mubr.bf16.gmra.mrb[0].mxu0 %v10058
        %v10228 = vpop.f32.mrb[0].mxu0
        %v10229 = vadd.f32 0.0, %v10228
        %v10230 = vpop.f32.mrb[0].mxu0
        %v10231 = vpop.f32.mrb[0].mxu0
        %v10232 = vadd.f32 0.0, %v10231
        %v10233 = vpop.f32.mrb[0].mxu0
        %10234 = vmatprep.mubr.bf16.mxu0 0
        %10235 = vmatmul.mubr.bf16.gmra.mrb[0].mxu0 %v10059
        %v10236 = vpop.f32.mrb[0].mxu0
        %v10237 = vadd.f32 0.0, %v10236
        %v10238 = vpop.f32.mrb[0].mxu0
        %v10239 = vpop.f32.mrb[0].mxu0
        %v10240 = vadd.f32 0.0, %v10239
        %v10241 = vpop.f32.mrb[0].mxu0
        %10242 = vmatprep.mubr.bf16.mxu0 0
        %10243 = vmatmul.mubr.bf16.gmra.mrb[0].mxu0 %v10060
        %v10244 = vpop.f32.mrb[0].mxu0
        %v10245 = vadd.f32 0.0, %v10244
        %v10246 = vpop.f32.mrb[0].mxu0
        %v10247 = vpop.f32.mrb[0].mxu0
        %v10248 = vadd.f32 0.0, %v10247
        %v10249 = vpop.f32.mrb[0].mxu0
        %10250 = vmatprep.mubr.bf16.mxu0 0
        %10251 = vmatmul.mubr.bf16.gmra.mrb[0].mxu0 %v10061
        %v10252 = vpop.f32.mrb[0].mxu0
        %v10253 = vadd.f32 0.0, %v10252
        %v10254 = vpop.f32.mrb[0].mxu0
        %v10255 = vpop.f32.mrb[0].mxu0
        %v10256 = vadd.f32 0.0, %v10255
        %v10257 = vpop.f32.mrb[0].mxu0
        %10258 = vmatprep.mubr.bf16.mxu0 0
        %10259 = vmatmul.mubr.bf16.gmra.mrb[0].mxu0 %v10062
        %v10260 = vpop.f32.mrb[0].mxu0
        %v10261 = vadd.f32 0.0, %v10260
        %v10262 = vpop.f32.mrb[0].mxu0
        %v10263 = vpop.f32.mrb[0].mxu0
        %v10264 = vadd.f32 0.0, %v10263
        %v10265 = vpop.f32.mrb[0].mxu0
        %10266 = vmatprep.mubr.bf16.mxu0 0
        %10267 = vmatmul.mubr.bf16.gmra.mrb[0].mxu0 %v10063
        %v10268 = vpop.f32.mrb[0].mxu0
        %v10269 = vadd.f32 0.0, %v10268
        %v10270 = vpop.f32.mrb[0].mxu0
        %v10271 = vpop.f32.mrb[0].mxu0
        %v10272 = vadd.f32 0.0, %v10271
        %v10273 = vpop.f32.mrb[0].mxu0
        %10274 = vmatprep.mubr.bf16.mxu0 0
        %10275 = vmatmul.mubr.bf16.gmra.mrb[0].mxu0 %v10064
        %v10276 = vpop.f32.mrb[0].mxu0
        %v10277 = vadd.f32 0.0, %v10276
        %v10278 = vpop.f32.mrb[0].mxu0
        %v10279 = vpop.f32.mrb[0].mxu0
        %v10280 = vadd.f32 0.0, %v10279
        %v10281 = vpop.f32.mrb[0].mxu0
        %10282 = vmatprep.mubr.bf16.mxu0 0
        %10283 = vmatmul.mubr.bf16.gmra.mrb[0].mxu0 %v10065
        %v10284 = vpop.f32.mrb[0].mxu0
        %v10285 = vadd.f32 0.0, %v10284
        %v10286 = vpop.f32.mrb[0].mxu0
        %v10287 = vpop.f32.mrb[0].mxu0
        %v10288 = vadd.f32 0.0, %v10287
        %v10289 = vpop.f32.mrb[0].mxu0
        %10290 = vdwg.mxu0
        %v10291 = vadd.f32 %v9537, %v10165
        %v10292 = vadd.f32 %v9538, %v10168
        %v10293 = vadd.f32 %v9539, %v10173
        %v10294 = vadd.f32 %v9540, %v10176
        %v10295 = vadd.f32 %v9541, %v10181
        %v10296 = vadd.f32 %v9542, %v10184
        %v10297 = vadd.f32 %v9543, %v10189
        %v10298 = vadd.f32 %v9544, %v10192
        %v10299 = vadd.f32 %v9545, %v10197
        %v10300 = vadd.f32 %v9546, %v10200
        %v10301 = vadd.f32 %v9547, %v10205
        %v10302 = vadd.f32 %v9548, %v10208
        %v10303 = vadd.f32 %v9549, %v10213
        %v10304 = vadd.f32 %v9550, %v10216
        %v10305 = vadd.f32 %v9551, %v10221
        %v10306 = vadd.f32 %v9552, %v10224
        %v10307 = vadd.f32 %v9553, %v10229
        %v10308 = vadd.f32 %v9554, %v10232
        %v10309 = vadd.f32 %v9555, %v10237
        %v10310 = vadd.f32 %v9556, %v10240
        %v10311 = vadd.f32 %v9557, %v10245
        %v10312 = vadd.f32 %v9558, %v10248
        %v10313 = vadd.f32 %v9559, %v10253
        %v10314 = vadd.f32 %v9560, %v10256
        %v10315 = vadd.f32 %v9561, %v10261
        %v10316 = vadd.f32 %v9562, %v10264
        %v10317 = vadd.f32 %v9563, %v10269
        %v10318 = vadd.f32 %v9564, %v10272
        %v10319 = vadd.f32 %v9565, %v10277
        %v10320 = vadd.f32 %v9566, %v10280
        %v10321 = vadd.f32 %v9567, %v10285
        %v10322 = vadd.f32 %v9568, %v10288
        %v10323 = vld [vmem:[%s9182] sm:$0xe]
        %v10324 = vld [vmem:[%s9182 + $0xc] sm:$0xe]
        %v10325 = vld [vmem:[%s9182 + $0x18] sm:$0xe]
        %v10326 = vld [vmem:[%s9182 + $0x24] sm:$0xe]
        %v10327 = vld [vmem:[%s9182 + $0x30] sm:$0xe]
        %v10328 = vld [vmem:[%s9182 + $0x3c] sm:$0xe]
        %v10329 = vld [vmem:[%s9182 + $0x48] sm:$0xe]
        %v10330 = vld [vmem:[%s9182 + $0x54] sm:$0xe]
        %v10331 = vld [vmem:[%s9182 + $0x60] sm:$0xe]
        %v10332 = vld [vmem:[%s9182 + $0x6c] sm:$0xe]
        %v10333 = vld [vmem:[%s9182 + $0x78] sm:$0xe]
        %v10334 = vld [vmem:[%s9182 + $0x84] sm:$0xe]
        %v10335 = vld [vmem:[%s9182 + $0x90] sm:$0xe]
        %v10336 = vld [vmem:[%s9182 + $0x9c] sm:$0xe]
        %v10337 = vld [vmem:[%s9182 + $0xa8] sm:$0xe]
        %v10338 = vld [vmem:[%s9182 + $0xb4] sm:$0xe]
        %v10387 = vrot.slane %v10323, 5
        %v10388 = vrot.slane %v10387, 4
        %v10389 = vrot.slane %v9570, 5
        %v10390 = vsel %vm1555, %v10388, %v10389
        %v10391 = vrot.slane %v10389, 4
        %v10392 = vrot.slane %v9571, 5
        %v10393 = vsel %vm1555, %v10391, %v10392
        %v10394 = vrot.slane %v10324, 5
        %v10395 = vrot.slane %v10394, 4
        %v10396 = vrot.slane %v9573, 5
        %v10397 = vsel %vm1555, %v10395, %v10396
        %v10398 = vrot.slane %v10396, 4
        %v10399 = vrot.slane %v9574, 5
        %v10400 = vsel %vm1555, %v10398, %v10399
        %v10401 = vrot.slane %v10325, 5
        %v10402 = vrot.slane %v10401, 4
        %v10403 = vrot.slane %v9576, 5
        %v10404 = vsel %vm1555, %v10402, %v10403
        %v10405 = vrot.slane %v10403, 4
        %v10406 = vrot.slane %v9577, 5
        %v10407 = vsel %vm1555, %v10405, %v10406
        %v10408 = vrot.slane %v10326, 5
        %v10409 = vrot.slane %v10408, 4
        %v10410 = vrot.slane %v9579, 5
        %v10411 = vsel %vm1555, %v10409, %v10410
        %v10412 = vrot.slane %v10410, 4
        %v10413 = vrot.slane %v9580, 5
        %v10414 = vsel %vm1555, %v10412, %v10413
        %v10415 = vrot.slane %v10327, 5
        %v10416 = vrot.slane %v10415, 4
        %v10417 = vrot.slane %v9582, 5
        %v10418 = vsel %vm1555, %v10416, %v10417
        %v10419 = vrot.slane %v10417, 4
        %v10420 = vrot.slane %v9583, 5
        %v10421 = vsel %vm1555, %v10419, %v10420
        %v10422 = vrot.slane %v10328, 5
        %v10423 = vrot.slane %v10422, 4
        %v10424 = vrot.slane %v9585, 5
        %v10425 = vsel %vm1555, %v10423, %v10424
        %v10426 = vrot.slane %v10424, 4
        %v10427 = vrot.slane %v9586, 5
        %v10428 = vsel %vm1555, %v10426, %v10427
        %v10429 = vrot.slane %v10329, 5
        %v10430 = vrot.slane %v10429, 4
        %v10431 = vrot.slane %v9588, 5
        %v10432 = vsel %vm1555, %v10430, %v10431
        %v10433 = vrot.slane %v10431, 4
        %v10434 = vrot.slane %v9589, 5
        %v10435 = vsel %vm1555, %v10433, %v10434
        %v10436 = vrot.slane %v10330, 5
        %v10437 = vrot.slane %v10436, 4
        %v10438 = vrot.slane %v9591, 5
        %v10439 = vsel %vm1555, %v10437, %v10438
        %v10440 = vrot.slane %v10438, 4
        %v10441 = vrot.slane %v9592, 5
        %v10442 = vsel %vm1555, %v10440, %v10441
        %v10443 = vrot.slane %v10331, 5
        %v10444 = vrot.slane %v10443, 4
        %v10445 = vrot.slane %v9594, 5
        %v10446 = vsel %vm1555, %v10444, %v10445
        %v10447 = vrot.slane %v10445, 4
        %v10448 = vrot.slane %v9595, 5
        %v10449 = vsel %vm1555, %v10447, %v10448
        %v10450 = vrot.slane %v10332, 5
        %v10451 = vrot.slane %v10450, 4
        %v10452 = vrot.slane %v9597, 5
        %v10453 = vsel %vm1555, %v10451, %v10452
        %v10454 = vrot.slane %v10452, 4
        %v10455 = vrot.slane %v9598, 5
        %v10456 = vsel %vm1555, %v10454, %v10455
        %v10457 = vrot.slane %v10333, 5
        %v10458 = vrot.slane %v10457, 4
        %v10459 = vrot.slane %v9600, 5
        %v10460 = vsel %vm1555, %v10458, %v10459
        %v10461 = vrot.slane %v10459, 4
        %v10462 = vrot.slane %v9601, 5
        %v10463 = vsel %vm1555, %v10461, %v10462
        %v10464 = vrot.slane %v10334, 5
        %v10465 = vrot.slane %v10464, 4
        %v10466 = vrot.slane %v9603, 5
        %v10467 = vsel %vm1555, %v10465, %v10466
        %v10468 = vrot.slane %v10466, 4
        %v10469 = vrot.slane %v9604, 5
        %v10470 = vsel %vm1555, %v10468, %v10469
        %v10471 = vrot.slane %v10335, 5
        %v10472 = vrot.slane %v10471, 4
        %v10473 = vrot.slane %v9606, 5
        %v10474 = vsel %vm1555, %v10472, %v10473
        %v10475 = vrot.slane %v10473, 4
        %v10476 = vrot.slane %v9607, 5
        %v10477 = vsel %vm1555, %v10475, %v10476
        %v10478 = vrot.slane %v10336, 5
        %v10479 = vrot.slane %v10478, 4
        %v10480 = vrot.slane %v9609, 5
        %v10481 = vsel %vm1555, %v10479, %v10480
        %v10482 = vrot.slane %v10480, 4
        %v10483 = vrot.slane %v9610, 5
        %v10484 = vsel %vm1555, %v10482, %v10483
        %v10485 = vrot.slane %v10337, 5
        %v10486 = vrot.slane %v10485, 4
        %v10487 = vrot.slane %v9612, 5
        %v10488 = vsel %vm1555, %v10486, %v10487
        %v10489 = vrot.slane %v10487, 4
        %v10490 = vrot.slane %v9613, 5
        %v10491 = vsel %vm1555, %v10489, %v10490
        %v10492 = vrot.slane %v10338, 5
        %v10493 = vrot.slane %v10492, 4
        %v10494 = vrot.slane %v9615, 5
        %v10495 = vsel %vm1555, %v10493, %v10494
        %v10496 = vrot.slane %v10494, 4
        %v10497 = vrot.slane %v9616, 5
        %v10498 = vsel %vm1555, %v10496, %v10497
        %s10499 = scalar_lea.vmem [#allocation4], 512
        %v10500 = vld [vmem:[%s10499] sm:$0xf]
        %v10501 = vld [vmem:[%s10499 + $0x4] sm:$0xf]
        %v10502 = vld [vmem:[%s10499 + $0x8] sm:$0xf]
        %v10503 = vld [vmem:[%s10499 + $0xc] sm:$0xf]
        %v10504 = vld [vmem:[%s10499 + $0x10] sm:$0xf]
        %v10505 = vld [vmem:[%s10499 + $0x14] sm:$0xf]
        %v10506 = vld [vmem:[%s10499 + $0x18] sm:$0xf]
        %v10507 = vld [vmem:[%s10499 + $0x1c] sm:$0xf]
        %v10508 = vld [vmem:[%s10499 + $0x20] sm:$0xf]
        %v10509 = vld [vmem:[%s10499 + $0x24] sm:$0xf]
        %v10510 = vld [vmem:[%s10499 + $0x28] sm:$0xf]
        %v10511 = vld [vmem:[%s10499 + $0x2c] sm:$0xf]
        %v10512 = vld [vmem:[%s10499 + $0x30] sm:$0xf]
        %v10513 = vld [vmem:[%s10499 + $0x34] sm:$0xf]
        %v10514 = vld [vmem:[%s10499 + $0x38] sm:$0xf]
        %v10515 = vld [vmem:[%s10499 + $0x3c] sm:$0xf]
        %v10516 = vunpack.c.l.b16 %v10390
        %v10517 = vunpack.c.l.b16 %v10393
        %v10518 = vunpack.c.l.b16 %v10397
        %v10519 = vunpack.c.l.b16 %v10400
        %v10520 = vunpack.c.l.b16 %v10404
        %v10521 = vunpack.c.l.b16 %v10407
        %v10522 = vunpack.c.l.b16 %v10411
        %v10523 = vunpack.c.l.b16 %v10414
        %v10524 = vunpack.c.l.b16 %v10418
        %v10525 = vunpack.c.l.b16 %v10421
        %v10526 = vunpack.c.l.b16 %v10425
        %v10527 = vunpack.c.l.b16 %v10428
        %v10528 = vunpack.c.l.b16 %v10432
        %v10529 = vunpack.c.l.b16 %v10435
        %v10530 = vunpack.c.l.b16 %v10439
        %v10531 = vunpack.c.l.b16 %v10442
        %v10532 = vunpack.c.l.b16 %v10446
        %v10533 = vunpack.c.l.b16 %v10449
        %v10534 = vunpack.c.l.b16 %v10453
        %v10535 = vunpack.c.l.b16 %v10456
        %v10536 = vunpack.c.l.b16 %v10460
        %v10537 = vunpack.c.l.b16 %v10463
        %v10538 = vunpack.c.l.b16 %v10467
        %v10539 = vunpack.c.l.b16 %v10470
        %v10540 = vunpack.c.l.b16 %v10474
        %v10541 = vunpack.c.l.b16 %v10477
        %v10542 = vunpack.c.l.b16 %v10481
        %v10543 = vunpack.c.l.b16 %v10484
        %v10544 = vunpack.c.l.b16 %v10488
        %v10545 = vunpack.c.l.b16 %v10491
        %v10546 = vunpack.c.l.b16 %v10495
        %v10547 = vunpack.c.l.b16 %v10498
        %v10548 = vpack.c.b16 %v10517, %v10516
        %v10549 = vpack.c.b16 %v10519, %v10518
        %v10550 = vpack.c.b16 %v10521, %v10520
        %v10551 = vpack.c.b16 %v10523, %v10522
        %v10552 = vpack.c.b16 %v10525, %v10524
        %v10553 = vpack.c.b16 %v10527, %v10526
        %v10554 = vpack.c.b16 %v10529, %v10528
        %v10555 = vpack.c.b16 %v10531, %v10530
        %v10556 = vpack.c.b16 %v10533, %v10532
        %v10557 = vpack.c.b16 %v10535, %v10534
        %v10558 = vpack.c.b16 %v10537, %v10536
        %v10559 = vpack.c.b16 %v10539, %v10538
        %v10560 = vpack.c.b16 %v10541, %v10540
        %v10561 = vpack.c.b16 %v10543, %v10542
        %v10562 = vpack.c.b16 %v10545, %v10544
        %v10563 = vpack.c.b16 %v10547, %v10546
        %v10596 = vunpack.c.l.b16 %v10500
        %v10597 = vunpack.c.l.b16 %v10501
        %v10598 = vunpack.c.l.b16 %v10502
        %v10599 = vunpack.c.l.b16 %v10503
        %v10600 = vunpack.c.l.b16 %v10504
        %v10601 = vunpack.c.l.b16 %v10505
        %v10602 = vunpack.c.l.b16 %v10506
        %v10603 = vunpack.c.l.b16 %v10507
        %v10604 = vunpack.c.l.b16 %v10508
        %v10605 = vunpack.c.l.b16 %v10509
        %v10606 = vunpack.c.l.b16 %v10510
        %v10607 = vunpack.c.l.b16 %v10511
        %v10608 = vunpack.c.l.b16 %v10512
        %v10609 = vunpack.c.l.b16 %v10513
        %v10610 = vunpack.c.l.b16 %v10514
        %v10611 = vunpack.c.l.b16 %v10515
        %v10612 = vpack.c.b16 %v10597, %v10596
        %v10613 = vpack.c.b16 %v10599, %v10598
        %v10614 = vpack.c.b16 %v10601, %v10600
        %v10615 = vpack.c.b16 %v10603, %v10602
        %v10616 = vpack.c.b16 %v10605, %v10604
        %v10617 = vpack.c.b16 %v10607, %v10606
        %v10618 = vpack.c.b16 %v10609, %v10608
        %v10619 = vpack.c.b16 %v10611, %v10610
        %10628 = vmatprep.subr.bf16.mxu0 0
        %10629 = vmatpush1.bf16.msra.mxu0 %v10612
        %10630 = vmatprep.subr.bf16.mxu0 0
        %10631 = vmatpush1.bf16.msra.mxu0 %v10613
        %10632 = vmatprep.subr.bf16.mxu0 0
        %10633 = vmatpush1.bf16.msra.mxu0 %v10614
        %10634 = vmatprep.subr.bf16.mxu0 0
        %10635 = vmatpush1.bf16.msra.mxu0 %v10615
        %10636 = vmatprep.subr.bf16.mxu0 0
        %10637 = vmatpush1.bf16.msra.mxu0 %v10616
        %10638 = vmatprep.subr.bf16.mxu0 0
        %10639 = vmatpush1.bf16.msra.mxu0 %v10617
        %10640 = vmatprep.subr.bf16.mxu0 0
        %10641 = vmatpush1.bf16.msra.mxu0 %v10618
        %10642 = vmatprep.subr.bf16.mxu0 0
        %10643 = vmatpush1.bf16.msra.mxu0 %v10619
        %10644 = vmatprep.subr.bf16.mxu0 0
        %10645 = vmatpush1.bf16.msra.mxu0 0
        %10646 = vmatprep.subr.bf16.mxu0 0
        %10647 = vmatpush1.bf16.msra.mxu0 0
        %10648 = vmatprep.subr.bf16.mxu0 0
        %10649 = vmatpush1.bf16.msra.mxu0 0
        %10650 = vmatprep.subr.bf16.mxu0 0
        %10651 = vmatpush1.bf16.msra.mxu0 0
        %10652 = vmatprep.subr.bf16.mxu0 0
        %10653 = vmatpush1.bf16.msra.mxu0 0
        %10654 = vmatprep.subr.bf16.mxu0 0
        %10655 = vmatpush1.bf16.msra.mxu0 0
        %10656 = vmatprep.subr.bf16.mxu0 0
        %10657 = vmatpush1.bf16.msra.mxu0 0
        %10658 = vmatprep.subr.bf16.mxu0 0
        %10659 = vmatpush1.bf16.msra.mxu0 0
        %10660 = vmatprep.mubr.bf16.mxu0 0
        %10661 = vmatmul.mubr.bf16.gmra.mrb[0].mxu0 %v10548
        %v10662 = vpop.f32.mrb[0].mxu0
        %v10663 = vadd.f32 0.0, %v10662
        %v10664 = vpop.f32.mrb[0].mxu0
        %v10665 = vpop.f32.mrb[0].mxu0
        %v10666 = vadd.f32 0.0, %v10665
        %v10667 = vpop.f32.mrb[0].mxu0
        %10668 = vmatprep.mubr.bf16.mxu0 0
        %10669 = vmatmul.mubr.bf16.gmra.mrb[0].mxu0 %v10549
        %v10670 = vpop.f32.mrb[0].mxu0
        %v10671 = vadd.f32 0.0, %v10670
        %v10672 = vpop.f32.mrb[0].mxu0
        %v10673 = vpop.f32.mrb[0].mxu0
        %v10674 = vadd.f32 0.0, %v10673
        %v10675 = vpop.f32.mrb[0].mxu0
        %10676 = vmatprep.mubr.bf16.mxu0 0
        %10677 = vmatmul.mubr.bf16.gmra.mrb[0].mxu0 %v10550
        %v10678 = vpop.f32.mrb[0].mxu0
        %v10679 = vadd.f32 0.0, %v10678
        %v10680 = vpop.f32.mrb[0].mxu0
        %v10681 = vpop.f32.mrb[0].mxu0
        %v10682 = vadd.f32 0.0, %v10681
        %v10683 = vpop.f32.mrb[0].mxu0
        %10684 = vmatprep.mubr.bf16.mxu0 0
        %10685 = vmatmul.mubr.bf16.gmra.mrb[0].mxu0 %v10551
        %v10686 = vpop.f32.mrb[0].mxu0
        %v10687 = vadd.f32 0.0, %v10686
        %v10688 = vpop.f32.mrb[0].mxu0
        %v10689 = vpop.f32.mrb[0].mxu0
        %v10690 = vadd.f32 0.0, %v10689
        %v10691 = vpop.f32.mrb[0].mxu0
        %10692 = vmatprep.mubr.bf16.mxu0 0
        %10693 = vmatmul.mubr.bf16.gmra.mrb[0].mxu0 %v10552
        %v10694 = vpop.f32.mrb[0].mxu0
        %v10695 = vadd.f32 0.0, %v10694
        %v10696 = vpop.f32.mrb[0].mxu0
        %v10697 = vpop.f32.mrb[0].mxu0
        %v10698 = vadd.f32 0.0, %v10697
        %v10699 = vpop.f32.mrb[0].mxu0
        %10700 = vmatprep.mubr.bf16.mxu0 0
        %10701 = vmatmul.mubr.bf16.gmra.mrb[0].mxu0 %v10553
        %v10702 = vpop.f32.mrb[0].mxu0
        %v10703 = vadd.f32 0.0, %v10702
        %v10704 = vpop.f32.mrb[0].mxu0
        %v10705 = vpop.f32.mrb[0].mxu0
        %v10706 = vadd.f32 0.0, %v10705
        %v10707 = vpop.f32.mrb[0].mxu0
        %10708 = vmatprep.mubr.bf16.mxu0 0
        %10709 = vmatmul.mubr.bf16.gmra.mrb[0].mxu0 %v10554
        %v10710 = vpop.f32.mrb[0].mxu0
        %v10711 = vadd.f32 0.0, %v10710
        %v10712 = vpop.f32.mrb[0].mxu0
        %v10713 = vpop.f32.mrb[0].mxu0
        %v10714 = vadd.f32 0.0, %v10713
        %v10715 = vpop.f32.mrb[0].mxu0
        %10716 = vmatprep.mubr.bf16.mxu0 0
        %10717 = vmatmul.mubr.bf16.gmra.mrb[0].mxu0 %v10555
        %v10718 = vpop.f32.mrb[0].mxu0
        %v10719 = vadd.f32 0.0, %v10718
        %v10720 = vpop.f32.mrb[0].mxu0
        %v10721 = vpop.f32.mrb[0].mxu0
        %v10722 = vadd.f32 0.0, %v10721
        %v10723 = vpop.f32.mrb[0].mxu0
        %10724 = vmatprep.mubr.bf16.mxu0 0
        %10725 = vmatmul.mubr.bf16.gmra.mrb[0].mxu0 %v10556
        %v10726 = vpop.f32.mrb[0].mxu0
        %v10727 = vadd.f32 0.0, %v10726
        %v10728 = vpop.f32.mrb[0].mxu0
        %v10729 = vpop.f32.mrb[0].mxu0
        %v10730 = vadd.f32 0.0, %v10729
        %v10731 = vpop.f32.mrb[0].mxu0
        %10732 = vmatprep.mubr.bf16.mxu0 0
        %10733 = vmatmul.mubr.bf16.gmra.mrb[0].mxu0 %v10557
        %v10734 = vpop.f32.mrb[0].mxu0
        %v10735 = vadd.f32 0.0, %v10734
        %v10736 = vpop.f32.mrb[0].mxu0
        %v10737 = vpop.f32.mrb[0].mxu0
        %v10738 = vadd.f32 0.0, %v10737
        %v10739 = vpop.f32.mrb[0].mxu0
        %10740 = vmatprep.mubr.bf16.mxu0 0
        %10741 = vmatmul.mubr.bf16.gmra.mrb[0].mxu0 %v10558
        %v10742 = vpop.f32.mrb[0].mxu0
        %v10743 = vadd.f32 0.0, %v10742
        %v10744 = vpop.f32.mrb[0].mxu0
        %v10745 = vpop.f32.mrb[0].mxu0
        %v10746 = vadd.f32 0.0, %v10745
        %v10747 = vpop.f32.mrb[0].mxu0
        %10748 = vmatprep.mubr.bf16.mxu0 0
        %10749 = vmatmul.mubr.bf16.gmra.mrb[0].mxu0 %v10559
        %v10750 = vpop.f32.mrb[0].mxu0
        %v10751 = vadd.f32 0.0, %v10750
        %v10752 = vpop.f32.mrb[0].mxu0
        %v10753 = vpop.f32.mrb[0].mxu0
        %v10754 = vadd.f32 0.0, %v10753
        %v10755 = vpop.f32.mrb[0].mxu0
        %10756 = vmatprep.mubr.bf16.mxu0 0
        %10757 = vmatmul.mubr.bf16.gmra.mrb[0].mxu0 %v10560
        %v10758 = vpop.f32.mrb[0].mxu0
        %v10759 = vadd.f32 0.0, %v10758
        %v10760 = vpop.f32.mrb[0].mxu0
        %v10761 = vpop.f32.mrb[0].mxu0
        %v10762 = vadd.f32 0.0, %v10761
        %v10763 = vpop.f32.mrb[0].mxu0
        %10764 = vmatprep.mubr.bf16.mxu0 0
        %10765 = vmatmul.mubr.bf16.gmra.mrb[0].mxu0 %v10561
        %v10766 = vpop.f32.mrb[0].mxu0
        %v10767 = vadd.f32 0.0, %v10766
        %v10768 = vpop.f32.mrb[0].mxu0
        %v10769 = vpop.f32.mrb[0].mxu0
        %v10770 = vadd.f32 0.0, %v10769
        %v10771 = vpop.f32.mrb[0].mxu0
        %10772 = vmatprep.mubr.bf16.mxu0 0
        %10773 = vmatmul.mubr.bf16.gmra.mrb[0].mxu0 %v10562
        %v10774 = vpop.f32.mrb[0].mxu0
        %v10775 = vadd.f32 0.0, %v10774
        %v10776 = vpop.f32.mrb[0].mxu0
        %v10777 = vpop.f32.mrb[0].mxu0
        %v10778 = vadd.f32 0.0, %v10777
        %v10779 = vpop.f32.mrb[0].mxu0
        %10780 = vmatprep.mubr.bf16.mxu0 0
        %10781 = vmatmul.mubr.bf16.gmra.mrb[0].mxu0 %v10563
        %v10782 = vpop.f32.mrb[0].mxu0
        %v10783 = vadd.f32 0.0, %v10782
        %v10784 = vpop.f32.mrb[0].mxu0
        %v10785 = vpop.f32.mrb[0].mxu0
        %v10786 = vadd.f32 0.0, %v10785
        %v10787 = vpop.f32.mrb[0].mxu0
        %10788 = vdwg.mxu0
        %v10789 = vadd.f32 %v10291, %v10663
        %v10790 = vadd.f32 %v10292, %v10666
        %v10791 = vadd.f32 %v10293, %v10671
        %v10792 = vadd.f32 %v10294, %v10674
        %v10793 = vadd.f32 %v10295, %v10679
        %v10794 = vadd.f32 %v10296, %v10682
        %v10795 = vadd.f32 %v10297, %v10687
        %v10796 = vadd.f32 %v10298, %v10690
        %v10797 = vadd.f32 %v10299, %v10695
        %v10798 = vadd.f32 %v10300, %v10698
        %v10799 = vadd.f32 %v10301, %v10703
        %v10800 = vadd.f32 %v10302, %v10706
        %v10801 = vadd.f32 %v10303, %v10711
        %v10802 = vadd.f32 %v10304, %v10714
        %v10803 = vadd.f32 %v10305, %v10719
        %v10804 = vadd.f32 %v10306, %v10722
        %v10805 = vadd.f32 %v10307, %v10727
        %v10806 = vadd.f32 %v10308, %v10730
        %v10807 = vadd.f32 %v10309, %v10735
        %v10808 = vadd.f32 %v10310, %v10738
        %v10809 = vadd.f32 %v10311, %v10743
        %v10810 = vadd.f32 %v10312, %v10746
        %v10811 = vadd.f32 %v10313, %v10751
        %v10812 = vadd.f32 %v10314, %v10754
        %v10813 = vadd.f32 %v10315, %v10759
        %v10814 = vadd.f32 %v10316, %v10762
        %v10815 = vadd.f32 %v10317, %v10767
        %v10816 = vadd.f32 %v10318, %v10770
        %v10817 = vadd.f32 %v10319, %v10775
        %v10818 = vadd.f32 %v10320, %v10778
        %v10819 = vadd.f32 %v10321, %v10783
        %v10820 = vadd.f32 %v10322, %v10786
        %v10821 = vld [vmem:[%s5] sm:$0x1]
        %v10823 = vlaneseq
        %v10824 = vshrl.u32 %v10823, 7
        %v10825 = vsub.s32 0, %v10824
        %v10826 = vrot.slane %v10821, %v10825
        %v10828 = vmul.f32 %v10789, %v10826
        %v10829 = vmul.f32 %v10790, %v10826
        %v10830 = vmul.f32 %v10791, %v10826
        %v10831 = vmul.f32 %v10792, %v10826
        %v10832 = vmul.f32 %v10793, %v10826
        %v10833 = vmul.f32 %v10794, %v10826
        %v10834 = vmul.f32 %v10795, %v10826
        %v10835 = vmul.f32 %v10796, %v10826
        %v10836 = vmul.f32 %v10797, %v10826
        %v10837 = vmul.f32 %v10798, %v10826
        %v10838 = vmul.f32 %v10799, %v10826
        %v10839 = vmul.f32 %v10800, %v10826
        %v10840 = vmul.f32 %v10801, %v10826
        %v10841 = vmul.f32 %v10802, %v10826
        %v10842 = vmul.f32 %v10803, %v10826
        %v10843 = vmul.f32 %v10804, %v10826
        %v10844 = vmul.f32 %v10805, %v10826
        %v10845 = vmul.f32 %v10806, %v10826
        %v10846 = vmul.f32 %v10807, %v10826
        %v10847 = vmul.f32 %v10808, %v10826
        %v10848 = vmul.f32 %v10809, %v10826
        %v10849 = vmul.f32 %v10810, %v10826
        %v10850 = vmul.f32 %v10811, %v10826
        %v10851 = vmul.f32 %v10812, %v10826
        %v10852 = vmul.f32 %v10813, %v10826
        %v10853 = vmul.f32 %v10814, %v10826
        %v10854 = vmul.f32 %v10815, %v10826
        %v10855 = vmul.f32 %v10816, %v10826
        %v10856 = vmul.f32 %v10817, %v10826
        %v10857 = vmul.f32 %v10818, %v10826
        %v10858 = vmul.f32 %v10819, %v10826
        %v10859 = vmul.f32 %v10820, %v10826
        %v10860 = vld [vmem:[%s6] sm:$0x1]
        %v10862 = vlaneseq
        %v10863 = vshrl.u32 %v10862, 7
        %v10864 = vsub.s32 0, %v10863
        %v10865 = vrot.slane %v10860, %v10864
        %v10867 = vadd.f32 %v10828, %v10865
        %v10868 = vadd.f32 %v10829, %v10865
        %v10869 = vadd.f32 %v10830, %v10865
        %v10870 = vadd.f32 %v10831, %v10865
        %v10871 = vadd.f32 %v10832, %v10865
        %v10872 = vadd.f32 %v10833, %v10865
        %v10873 = vadd.f32 %v10834, %v10865
        %v10874 = vadd.f32 %v10835, %v10865
        %v10875 = vadd.f32 %v10836, %v10865
        %v10876 = vadd.f32 %v10837, %v10865
        %v10877 = vadd.f32 %v10838, %v10865
        %v10878 = vadd.f32 %v10839, %v10865
        %v10879 = vadd.f32 %v10840, %v10865
        %v10880 = vadd.f32 %v10841, %v10865
        %v10881 = vadd.f32 %v10842, %v10865
        %v10882 = vadd.f32 %v10843, %v10865
        %v10883 = vadd.f32 %v10844, %v10865
        %v10884 = vadd.f32 %v10845, %v10865
        %v10885 = vadd.f32 %v10846, %v10865
        %v10886 = vadd.f32 %v10847, %v10865
        %v10887 = vadd.f32 %v10848, %v10865
        %v10888 = vadd.f32 %v10849, %v10865
        %v10889 = vadd.f32 %v10850, %v10865
        %v10890 = vadd.f32 %v10851, %v10865
        %v10891 = vadd.f32 %v10852, %v10865
        %v10892 = vadd.f32 %v10853, %v10865
        %v10893 = vadd.f32 %v10854, %v10865
        %v10894 = vadd.f32 %v10855, %v10865
        %v10895 = vadd.f32 %v10856, %v10865
        %v10896 = vadd.f32 %v10857, %v10865
        %v10897 = vadd.f32 %v10858, %v10865
        %v10898 = vadd.f32 %v10859, %v10865
        %v10899 = vld [vmem:[%s1990] sm:$0xf]
        %v10900 = vld [vmem:[%s1990 + $0x4] sm:$0xf]
        %v10901 = vld [vmem:[%s1990 + $0x8] sm:$0x1]
        %v10902 = vld [vmem:[%s1990 + $0xc] sm:$0xf]
        %v10903 = vld [vmem:[%s1990 + $0x10] sm:$0xf]
        %v10904 = vld [vmem:[%s1990 + $0x14] sm:$0x1]
        %v10905 = vld [vmem:[%s1990 + $0x18] sm:$0xf]
        %v10906 = vld [vmem:[%s1990 + $0x1c] sm:$0xf]
        %v10907 = vld [vmem:[%s1990 + $0x20] sm:$0x1]
        %v10908 = vld [vmem:[%s1990 + $0x24] sm:$0xf]
        %v10909 = vld [vmem:[%s1990 + $0x28] sm:$0xf]
        %v10910 = vld [vmem:[%s1990 + $0x2c] sm:$0x1]
        %v10911 = vld [vmem:[%s1990 + $0x30] sm:$0xf]
        %v10912 = vld [vmem:[%s1990 + $0x34] sm:$0xf]
        %v10913 = vld [vmem:[%s1990 + $0x38] sm:$0x1]
        %v10914 = vld [vmem:[%s1990 + $0x3c] sm:$0xf]
        %v10915 = vld [vmem:[%s1990 + $0x40] sm:$0xf]
        %v10916 = vld [vmem:[%s1990 + $0x44] sm:$0x1]
        %v10917 = vld [vmem:[%s1990 + $0x48] sm:$0xf]
        %v10918 = vld [vmem:[%s1990 + $0x4c] sm:$0xf]
        %v10919 = vld [vmem:[%s1990 + $0x50] sm:$0x1]
        %v10920 = vld [vmem:[%s1990 + $0x54] sm:$0xf]
        %v10921 = vld [vmem:[%s1990 + $0x58] sm:$0xf]
        %v10922 = vld [vmem:[%s1990 + $0x5c] sm:$0x1]
        %v10923 = vld [vmem:[%s1990 + $0x60] sm:$0xf]
        %v10924 = vld [vmem:[%s1990 + $0x64] sm:$0xf]
        %v10925 = vld [vmem:[%s1990 + $0x68] sm:$0x1]
        %v10926 = vld [vmem:[%s1990 + $0x6c] sm:$0xf]
        %v10927 = vld [vmem:[%s1990 + $0x70] sm:$0xf]
        %v10928 = vld [vmem:[%s1990 + $0x74] sm:$0x1]
        %v10929 = vld [vmem:[%s1990 + $0x78] sm:$0xf]
        %v10930 = vld [vmem:[%s1990 + $0x7c] sm:$0xf]
        %v10931 = vld [vmem:[%s1990 + $0x80] sm:$0x1]
        %v10932 = vld [vmem:[%s1990 + $0x84] sm:$0xf]
        %v10933 = vld [vmem:[%s1990 + $0x88] sm:$0xf]
        %v10934 = vld [vmem:[%s1990 + $0x8c] sm:$0x1]
        %v10935 = vld [vmem:[%s1990 + $0x90] sm:$0xf]
        %v10936 = vld [vmem:[%s1990 + $0x94] sm:$0xf]
        %v10937 = vld [vmem:[%s1990 + $0x98] sm:$0x1]
        %v10938 = vld [vmem:[%s1990 + $0x9c] sm:$0xf]
        %v10939 = vld [vmem:[%s1990 + $0xa0] sm:$0xf]
        %v10940 = vld [vmem:[%s1990 + $0xa4] sm:$0x1]
        %v10941 = vld [vmem:[%s1990 + $0xa8] sm:$0xf]
        %v10942 = vld [vmem:[%s1990 + $0xac] sm:$0xf]
        %v10943 = vld [vmem:[%s1990 + $0xb0] sm:$0x1]
        %v10944 = vld [vmem:[%s1990 + $0xb4] sm:$0xf]
        %v10945 = vld [vmem:[%s1990 + $0xb8] sm:$0xf]
        %v10946 = vld [vmem:[%s1990 + $0xbc] sm:$0x1]
        %v10948 = vshrl.u32 %v10899, 16
        %v10950 = vrot.slane %v10948, 4
        %v10951 = vshll.u32 %v10899, 16
        %v10953 = vrot.slane %v10951, 5
        %v10954 = vor.u32 %v10950, %v10953
        %v10955 = vrot.slane %v10954, 4
        %v10957 = vshll.u32 %v10900, 16
        %v10959 = vrot.slane %v10957, 5
        %v10960 = vsel %vm525, %v10955, %v10959
        %v10961 = vshrl.u32 %v10900, 16
        %v10963 = vrot.slane %v10961, 4
        %v10964 = vor.u32 %v10963, %v10959
        %v10965 = vrot.slane %v10964, 4
        %v10967 = vshll.u32 %v10901, 16
        %v10969 = vrot.slane %v10967, 5
        %v10970 = vsel %vm525, %v10965, %v10969
        %v10972 = vshrl.u32 %v10902, 16
        %v10974 = vrot.slane %v10972, 4
        %v10975 = vshll.u32 %v10902, 16
        %v10977 = vrot.slane %v10975, 5
        %v10978 = vor.u32 %v10974, %v10977
        %v10979 = vrot.slane %v10978, 4
        %v10981 = vshll.u32 %v10903, 16
        %v10983 = vrot.slane %v10981, 5
        %v10984 = vsel %vm525, %v10979, %v10983
        %v10985 = vshrl.u32 %v10903, 16
        %v10987 = vrot.slane %v10985, 4
        %v10988 = vor.u32 %v10987, %v10983
        %v10989 = vrot.slane %v10988, 4
        %v10991 = vshll.u32 %v10904, 16
        %v10993 = vrot.slane %v10991, 5
        %v10994 = vsel %vm525, %v10989, %v10993
        %v10996 = vshrl.u32 %v10905, 16
        %v10998 = vrot.slane %v10996, 4
        %v10999 = vshll.u32 %v10905, 16
        %v11001 = vrot.slane %v10999, 5
        %v11002 = vor.u32 %v10998, %v11001
        %v11003 = vrot.slane %v11002, 4
        %v11005 = vshll.u32 %v10906, 16
        %v11007 = vrot.slane %v11005, 5
        %v11008 = vsel %vm525, %v11003, %v11007
        %v11009 = vshrl.u32 %v10906, 16
        %v11011 = vrot.slane %v11009, 4
        %v11012 = vor.u32 %v11011, %v11007
        %v11013 = vrot.slane %v11012, 4
        %v11015 = vshll.u32 %v10907, 16
        %v11017 = vrot.slane %v11015, 5
        %v11018 = vsel %vm525, %v11013, %v11017
        %v11020 = vshrl.u32 %v10908, 16
        %v11022 = vrot.slane %v11020, 4
        %v11023 = vshll.u32 %v10908, 16
        %v11025 = vrot.slane %v11023, 5
        %v11026 = vor.u32 %v11022, %v11025
        %v11027 = vrot.slane %v11026, 4
        %v11029 = vshll.u32 %v10909, 16
        %v11031 = vrot.slane %v11029, 5
        %v11032 = vsel %vm525, %v11027, %v11031
        %v11033 = vshrl.u32 %v10909, 16
        %v11035 = vrot.slane %v11033, 4
        %v11036 = vor.u32 %v11035, %v11031
        %v11037 = vrot.slane %v11036, 4
        %v11039 = vshll.u32 %v10910, 16
        %v11041 = vrot.slane %v11039, 5
        %v11042 = vsel %vm525, %v11037, %v11041
        %v11044 = vshrl.u32 %v10911, 16
        %v11046 = vrot.slane %v11044, 4
        %v11047 = vshll.u32 %v10911, 16
        %v11049 = vrot.slane %v11047, 5
        %v11050 = vor.u32 %v11046, %v11049
        %v11051 = vrot.slane %v11050, 4
        %v11053 = vshll.u32 %v10912, 16
        %v11055 = vrot.slane %v11053, 5
        %v11056 = vsel %vm525, %v11051, %v11055
        %v11057 = vshrl.u32 %v10912, 16
        %v11059 = vrot.slane %v11057, 4
        %v11060 = vor.u32 %v11059, %v11055
        %v11061 = vrot.slane %v11060, 4
        %v11063 = vshll.u32 %v10913, 16
        %v11065 = vrot.slane %v11063, 5
        %v11066 = vsel %vm525, %v11061, %v11065
        %v11068 = vshrl.u32 %v10914, 16
        %v11070 = vrot.slane %v11068, 4
        %v11071 = vshll.u32 %v10914, 16
        %v11073 = vrot.slane %v11071, 5
        %v11074 = vor.u32 %v11070, %v11073
        %v11075 = vrot.slane %v11074, 4
        %v11077 = vshll.u32 %v10915, 16
        %v11079 = vrot.slane %v11077, 5
        %v11080 = vsel %vm525, %v11075, %v11079
        %v11081 = vshrl.u32 %v10915, 16
        %v11083 = vrot.slane %v11081, 4
        %v11084 = vor.u32 %v11083, %v11079
        %v11085 = vrot.slane %v11084, 4
        %v11087 = vshll.u32 %v10916, 16
        %v11089 = vrot.slane %v11087, 5
        %v11090 = vsel %vm525, %v11085, %v11089
        %v11092 = vshrl.u32 %v10917, 16
        %v11094 = vrot.slane %v11092, 4
        %v11095 = vshll.u32 %v10917, 16
        %v11097 = vrot.slane %v11095, 5
        %v11098 = vor.u32 %v11094, %v11097
        %v11099 = vrot.slane %v11098, 4
        %v11101 = vshll.u32 %v10918, 16
        %v11103 = vrot.slane %v11101, 5
        %v11104 = vsel %vm525, %v11099, %v11103
        %v11105 = vshrl.u32 %v10918, 16
        %v11107 = vrot.slane %v11105, 4
        %v11108 = vor.u32 %v11107, %v11103
        %v11109 = vrot.slane %v11108, 4
        %v11111 = vshll.u32 %v10919, 16
        %v11113 = vrot.slane %v11111, 5
        %v11114 = vsel %vm525, %v11109, %v11113
        %v11116 = vshrl.u32 %v10920, 16
        %v11118 = vrot.slane %v11116, 4
        %v11119 = vshll.u32 %v10920, 16
        %v11121 = vrot.slane %v11119, 5
        %v11122 = vor.u32 %v11118, %v11121
        %v11123 = vrot.slane %v11122, 4
        %v11125 = vshll.u32 %v10921, 16
        %v11127 = vrot.slane %v11125, 5
        %v11128 = vsel %vm525, %v11123, %v11127
        %v11129 = vshrl.u32 %v10921, 16
        %v11131 = vrot.slane %v11129, 4
        %v11132 = vor.u32 %v11131, %v11127
        %v11133 = vrot.slane %v11132, 4
        %v11135 = vshll.u32 %v10922, 16
        %v11137 = vrot.slane %v11135, 5
        %v11138 = vsel %vm525, %v11133, %v11137
        %v11140 = vshrl.u32 %v10923, 16
        %v11142 = vrot.slane %v11140, 4
        %v11143 = vshll.u32 %v10923, 16
        %v11145 = vrot.slane %v11143, 5
        %v11146 = vor.u32 %v11142, %v11145
        %v11147 = vrot.slane %v11146, 4
        %v11149 = vshll.u32 %v10924, 16
        %v11151 = vrot.slane %v11149, 5
        %v11152 = vsel %vm525, %v11147, %v11151
        %v11153 = vshrl.u32 %v10924, 16
        %v11155 = vrot.slane %v11153, 4
        %v11156 = vor.u32 %v11155, %v11151
        %v11157 = vrot.slane %v11156, 4
        %v11159 = vshll.u32 %v10925, 16
        %v11161 = vrot.slane %v11159, 5
        %v11162 = vsel %vm525, %v11157, %v11161
        %v11164 = vshrl.u32 %v10926, 16
        %v11166 = vrot.slane %v11164, 4
        %v11167 = vshll.u32 %v10926, 16
        %v11169 = vrot.slane %v11167, 5
        %v11170 = vor.u32 %v11166, %v11169
        %v11171 = vrot.slane %v11170, 4
        %v11173 = vshll.u32 %v10927, 16
        %v11175 = vrot.slane %v11173, 5
        %v11176 = vsel %vm525, %v11171, %v11175
        %v11177 = vshrl.u32 %v10927, 16
        %v11179 = vrot.slane %v11177, 4
        %v11180 = vor.u32 %v11179, %v11175
        %v11181 = vrot.slane %v11180, 4
        %v11183 = vshll.u32 %v10928, 16
        %v11185 = vrot.slane %v11183, 5
        %v11186 = vsel %vm525, %v11181, %v11185
        %v11188 = vshrl.u32 %v10929, 16
        %v11190 = vrot.slane %v11188, 4
        %v11191 = vshll.u32 %v10929, 16
        %v11193 = vrot.slane %v11191, 5
        %v11194 = vor.u32 %v11190, %v11193
        %v11195 = vrot.slane %v11194, 4
        %v11197 = vshll.u32 %v10930, 16
        %v11199 = vrot.slane %v11197, 5
        %v11200 = vsel %vm525, %v11195, %v11199
        %v11201 = vshrl.u32 %v10930, 16
        %v11203 = vrot.slane %v11201, 4
        %v11204 = vor.u32 %v11203, %v11199
        %v11205 = vrot.slane %v11204, 4
        %v11207 = vshll.u32 %v10931, 16
        %v11209 = vrot.slane %v11207, 5
        %v11210 = vsel %vm525, %v11205, %v11209
        %v11212 = vshrl.u32 %v10932, 16
        %v11214 = vrot.slane %v11212, 4
        %v11215 = vshll.u32 %v10932, 16
        %v11217 = vrot.slane %v11215, 5
        %v11218 = vor.u32 %v11214, %v11217
        %v11219 = vrot.slane %v11218, 4
        %v11221 = vshll.u32 %v10933, 16
        %v11223 = vrot.slane %v11221, 5
        %v11224 = vsel %vm525, %v11219, %v11223
        %v11225 = vshrl.u32 %v10933, 16
        %v11227 = vrot.slane %v11225, 4
        %v11228 = vor.u32 %v11227, %v11223
        %v11229 = vrot.slane %v11228, 4
        %v11231 = vshll.u32 %v10934, 16
        %v11233 = vrot.slane %v11231, 5
        %v11234 = vsel %vm525, %v11229, %v11233
        %v11236 = vshrl.u32 %v10935, 16
        %v11238 = vrot.slane %v11236, 4
        %v11239 = vshll.u32 %v10935, 16
        %v11241 = vrot.slane %v11239, 5
        %v11242 = vor.u32 %v11238, %v11241
        %v11243 = vrot.slane %v11242, 4
        %v11245 = vshll.u32 %v10936, 16
        %v11247 = vrot.slane %v11245, 5
        %v11248 = vsel %vm525, %v11243, %v11247
        %v11249 = vshrl.u32 %v10936, 16
        %v11251 = vrot.slane %v11249, 4
        %v11252 = vor.u32 %v11251, %v11247
        %v11253 = vrot.slane %v11252, 4
        %v11255 = vshll.u32 %v10937, 16
        %v11257 = vrot.slane %v11255, 5
        %v11258 = vsel %vm525, %v11253, %v11257
        %v11260 = vshrl.u32 %v10938, 16
        %v11262 = vrot.slane %v11260, 4
        %v11263 = vshll.u32 %v10938, 16
        %v11265 = vrot.slane %v11263, 5
        %v11266 = vor.u32 %v11262, %v11265
        %v11267 = vrot.slane %v11266, 4
        %v11269 = vshll.u32 %v10939, 16
        %v11271 = vrot.slane %v11269, 5
        %v11272 = vsel %vm525, %v11267, %v11271
        %v11273 = vshrl.u32 %v10939, 16
        %v11275 = vrot.slane %v11273, 4
        %v11276 = vor.u32 %v11275, %v11271
        %v11277 = vrot.slane %v11276, 4
        %v11279 = vshll.u32 %v10940, 16
        %v11281 = vrot.slane %v11279, 5
        %v11282 = vsel %vm525, %v11277, %v11281
        %v11284 = vshrl.u32 %v10941, 16
        %v11286 = vrot.slane %v11284, 4
        %v11287 = vshll.u32 %v10941, 16
        %v11289 = vrot.slane %v11287, 5
        %v11290 = vor.u32 %v11286, %v11289
        %v11291 = vrot.slane %v11290, 4
        %v11293 = vshll.u32 %v10942, 16
        %v11295 = vrot.slane %v11293, 5
        %v11296 = vsel %vm525, %v11291, %v11295
        %v11297 = vshrl.u32 %v10942, 16
        %v11299 = vrot.slane %v11297, 4
        %v11300 = vor.u32 %v11299, %v11295
        %v11301 = vrot.slane %v11300, 4
        %v11303 = vshll.u32 %v10943, 16
        %v11305 = vrot.slane %v11303, 5
        %v11306 = vsel %vm525, %v11301, %v11305
        %v11308 = vshrl.u32 %v10944, 16
        %v11310 = vrot.slane %v11308, 4
        %v11311 = vshll.u32 %v10944, 16
        %v11313 = vrot.slane %v11311, 5
        %v11314 = vor.u32 %v11310, %v11313
        %v11315 = vrot.slane %v11314, 4
        %v11317 = vshll.u32 %v10945, 16
        %v11319 = vrot.slane %v11317, 5
        %v11320 = vsel %vm525, %v11315, %v11319
        %v11321 = vshrl.u32 %v10945, 16
        %v11323 = vrot.slane %v11321, 4
        %v11324 = vor.u32 %v11323, %v11319
        %v11325 = vrot.slane %v11324, 4
        %v11327 = vshll.u32 %v10946, 16
        %v11329 = vrot.slane %v11327, 5
        %v11330 = vsel %vm525, %v11325, %v11329
        %v11363 = vunpack.c.l.bf16 %v10960
        %v11364 = vunpack.c.l.bf16 %v10970
        %v11365 = vunpack.c.l.bf16 %v10984
        %v11366 = vunpack.c.l.bf16 %v10994
        %v11367 = vunpack.c.l.bf16 %v11008
        %v11368 = vunpack.c.l.bf16 %v11018
        %v11369 = vunpack.c.l.bf16 %v11032
        %v11370 = vunpack.c.l.bf16 %v11042
        %v11371 = vunpack.c.l.bf16 %v11056
        %v11372 = vunpack.c.l.bf16 %v11066
        %v11373 = vunpack.c.l.bf16 %v11080
        %v11374 = vunpack.c.l.bf16 %v11090
        %v11375 = vunpack.c.l.bf16 %v11104
        %v11376 = vunpack.c.l.bf16 %v11114
        %v11377 = vunpack.c.l.bf16 %v11128
        %v11378 = vunpack.c.l.bf16 %v11138
        %v11379 = vunpack.c.l.bf16 %v11152
        %v11380 = vunpack.c.l.bf16 %v11162
        %v11381 = vunpack.c.l.bf16 %v11176
        %v11382 = vunpack.c.l.bf16 %v11186
        %v11383 = vunpack.c.l.bf16 %v11200
        %v11384 = vunpack.c.l.bf16 %v11210
        %v11385 = vunpack.c.l.bf16 %v11224
        %v11386 = vunpack.c.l.bf16 %v11234
        %v11387 = vunpack.c.l.bf16 %v11248
        %v11388 = vunpack.c.l.bf16 %v11258
        %v11389 = vunpack.c.l.bf16 %v11272
        %v11390 = vunpack.c.l.bf16 %v11282
        %v11391 = vunpack.c.l.bf16 %v11296
        %v11392 = vunpack.c.l.bf16 %v11306
        %v11393 = vunpack.c.l.bf16 %v11320
        %v11394 = vunpack.c.l.bf16 %v11330
        %v11395 = vadd.f32 %v10867, %v11363
        %v11396 = vadd.f32 %v10868, %v11364
        %v11397 = vadd.f32 %v10869, %v11365
        %v11398 = vadd.f32 %v10870, %v11366
        %v11399 = vadd.f32 %v10871, %v11367
        %v11400 = vadd.f32 %v10872, %v11368
        %v11401 = vadd.f32 %v10873, %v11369
        %v11402 = vadd.f32 %v10874, %v11370
        %v11403 = vadd.f32 %v10875, %v11371
        %v11404 = vadd.f32 %v10876, %v11372
        %v11405 = vadd.f32 %v10877, %v11373
        %v11406 = vadd.f32 %v10878, %v11374
        %v11407 = vadd.f32 %v10879, %v11375
        %v11408 = vadd.f32 %v10880, %v11376
        %v11409 = vadd.f32 %v10881, %v11377
        %v11410 = vadd.f32 %v10882, %v11378
        %v11411 = vadd.f32 %v10883, %v11379
        %v11412 = vadd.f32 %v10884, %v11380
        %v11413 = vadd.f32 %v10885, %v11381
        %v11414 = vadd.f32 %v10886, %v11382
        %v11415 = vadd.f32 %v10887, %v11383
        %v11416 = vadd.f32 %v10888, %v11384
        %v11417 = vadd.f32 %v10889, %v11385
        %v11418 = vadd.f32 %v10890, %v11386
        %v11419 = vadd.f32 %v10891, %v11387
        %v11420 = vadd.f32 %v10892, %v11388
        %v11421 = vadd.f32 %v10893, %v11389
        %v11422 = vadd.f32 %v10894, %v11390
        %v11423 = vadd.f32 %v10895, %v11391
        %v11424 = vadd.f32 %v10896, %v11392
        %v11425 = vadd.f32 %v10897, %v11393
        %v11426 = vadd.f32 %v10898, %v11394
        %v11427 = vmax.f32 %v11395, 0.0
        %v11428 = vmax.f32 %v11396, 0.0
        %v11429 = vmax.f32 %v11397, 0.0
        %v11430 = vmax.f32 %v11398, 0.0
        %v11431 = vmax.f32 %v11399, 0.0
        %v11432 = vmax.f32 %v11400, 0.0
        %v11433 = vmax.f32 %v11401, 0.0
        %v11434 = vmax.f32 %v11402, 0.0
        %v11435 = vmax.f32 %v11403, 0.0
        %v11436 = vmax.f32 %v11404, 0.0
        %v11437 = vmax.f32 %v11405, 0.0
        %v11438 = vmax.f32 %v11406, 0.0
        %v11439 = vmax.f32 %v11407, 0.0
        %v11440 = vmax.f32 %v11408, 0.0
        %v11441 = vmax.f32 %v11409, 0.0
        %v11442 = vmax.f32 %v11410, 0.0
        %v11443 = vmax.f32 %v11411, 0.0
        %v11444 = vmax.f32 %v11412, 0.0
        %v11445 = vmax.f32 %v11413, 0.0
        %v11446 = vmax.f32 %v11414, 0.0
        %v11447 = vmax.f32 %v11415, 0.0
        %v11448 = vmax.f32 %v11416, 0.0
        %v11449 = vmax.f32 %v11417, 0.0
        %v11450 = vmax.f32 %v11418, 0.0
        %v11451 = vmax.f32 %v11419, 0.0
        %v11452 = vmax.f32 %v11420, 0.0
        %v11453 = vmax.f32 %v11421, 0.0
        %v11454 = vmax.f32 %v11422, 0.0
        %v11455 = vmax.f32 %v11423, 0.0
        %v11456 = vmax.f32 %v11424, 0.0
        %v11457 = vmax.f32 %v11425, 0.0
        %v11458 = vmax.f32 %v11426, 0.0
        %vm11459 = vcmask 64512
        %11460 = vst.msk [vmem:[%s293] sm:$0xff] %vm11459, %v11427
        %11461 = vst.msk [vmem:[%s293 + $0x8] sm:$0xff] %vm11459, %v11428
        %11462 = vst.msk [vmem:[%s293 + $0x10] sm:$0xff] %vm11459, %v11429
        %11463 = vst.msk [vmem:[%s293 + $0x18] sm:$0xff] %vm11459, %v11430
        %11464 = vst.msk [vmem:[%s293 + $0x20] sm:$0xff] %vm11459, %v11431
        %11465 = vst.msk [vmem:[%s293 + $0x28] sm:$0xff] %vm11459, %v11432
        %11466 = vst.msk [vmem:[%s293 + $0x30] sm:$0xff] %vm11459, %v11433
        %11467 = vst.msk [vmem:[%s293 + $0x38] sm:$0xff] %vm11459, %v11434
        %11468 = vst.msk [vmem:[%s293 + $0x40] sm:$0xff] %vm11459, %v11435
        %11469 = vst.msk [vmem:[%s293 + $0x48] sm:$0xff] %vm11459, %v11436
        %11470 = vst.msk [vmem:[%s293 + $0x50] sm:$0xff] %vm11459, %v11437
        %11471 = vst.msk [vmem:[%s293 + $0x58] sm:$0xff] %vm11459, %v11438
        %11472 = vst.msk [vmem:[%s293 + $0x60] sm:$0xff] %vm11459, %v11439
        %11473 = vst.msk [vmem:[%s293 + $0x68] sm:$0xff] %vm11459, %v11440
        %11474 = vst.msk [vmem:[%s293 + $0x70] sm:$0xff] %vm11459, %v11441
        %11475 = vst.msk [vmem:[%s293 + $0x78] sm:$0xff] %vm11459, %v11442
        %11476 = vst.msk [vmem:[%s293 + $0x80] sm:$0xff] %vm11459, %v11443
        %11477 = vst.msk [vmem:[%s293 + $0x88] sm:$0xff] %vm11459, %v11444
        %11478 = vst.msk [vmem:[%s293 + $0x90] sm:$0xff] %vm11459, %v11445
        %11479 = vst.msk [vmem:[%s293 + $0x98] sm:$0xff] %vm11459, %v11446
        %11480 = vst.msk [vmem:[%s293 + $0xa0] sm:$0xff] %vm11459, %v11447
        %11481 = vst.msk [vmem:[%s293 + $0xa8] sm:$0xff] %vm11459, %v11448
        %11482 = vst.msk [vmem:[%s293 + $0xb0] sm:$0xff] %vm11459, %v11449
        %11483 = vst.msk [vmem:[%s293 + $0xb8] sm:$0xff] %vm11459, %v11450
        %11484 = vst.msk [vmem:[%s293 + $0xc0] sm:$0xff] %vm11459, %v11451
        %11485 = vst.msk [vmem:[%s293 + $0xc8] sm:$0xff] %vm11459, %v11452
        %11486 = vst.msk [vmem:[%s293 + $0xd0] sm:$0xff] %vm11459, %v11453
        %11487 = vst.msk [vmem:[%s293 + $0xd8] sm:$0xff] %vm11459, %v11454
        %11488 = vst.msk [vmem:[%s293 + $0xe0] sm:$0xff] %vm11459, %v11455
        %11489 = vst.msk [vmem:[%s293 + $0xe8] sm:$0xff] %vm11459, %v11456
        %11490 = vst.msk [vmem:[%s293 + $0xf0] sm:$0xff] %vm11459, %v11457
        %11491 = vst.msk [vmem:[%s293 + $0xf8] sm:$0xff] %vm11459, %v11458
        %p11492 = scmp.lt.s32.totalorder %s19, 1
        %s11493 = scalar_select %p11492, %s19, 1
        %s11494 = smul.addr %s11493, 32
        %s11495 = smul.addr %s11494, 8
        %s11496 = scalar_lea.vmem %s7, %s11495
        // Predicated region
        $region53: #{tpu_custom_call.1} parent=47 // pred_check
          %p11497 = pneg %p189
        $region54: #{tpu_custom_call.1} parent=47 // pred_check_branch
          %11499 = sbr.rel (%p11497) target = $region56
        $region55: #{tpu_custom_call.1} parent=47 // pred_region
          _
        $region56: #{tpu_custom_call.1} parent=47 // pred_fallthru
          _
      $region48: #{tpu_custom_call.1} parent=5 // pred_fallthru
        _
      %p11500 = scmp.le.s32.totalorder 2, %s14
      // Predicated region
      $region57: #{tpu_custom_call.1} parent=5 // pred_check
        %p11501 = pneg %p11500
      $region58: #{tpu_custom_call.1} parent=5 // pred_check_branch
        %11503 = sbr.rel (%p11501) target = $region60
      $region59: #{tpu_custom_call.1} parent=5 // pred_region
        %s11504 = ssub.s32 %s14, 2
        // Predicated region
        $region61: #{tpu_custom_call.1} parent=59 // pred_check
          %p11505 = pneg %p195
        $region62: #{tpu_custom_call.1} parent=59 // pred_check_branch
          %11507 = sbr.rel (%p11505) target = $region64
        $region63: #{tpu_custom_call.1} parent=59 // pred_region
          %p11508 = scmp.lt.s32.totalorder %s20, 1
          %s11509 = scalar_select %p11508, %s20, 1
          %s11510 = smul.addr %s11509, 32
          %s11511 = smul.addr %s11510, 8
          %s11512 = scalar_lea.vmem %s7, %s11511
        $region64: #{tpu_custom_call.1} parent=59 // pred_fallthru
          _
      $region60: #{tpu_custom_call.1} parent=5 // pred_fallthru
        _
    $region6: #{tpu_custom_call.1} parent=1 // loop_footer
      %s18 = sadd.s32 1, %s14
    $region7: #{tpu_custom_call.1} parent=1 // loop_footer_branch
      %13 = sbr.rel target = $region3
    $region8: #{tpu_custom_call.1} parent=1 // loop_exit
      _
    %11513 = vsyncpa [#allocation5], 1
    %s11514 = scalar_lea.sflag [#allocation5], 1
    %11515 = vsyncpa %s11514, 1

</llo_original>
